<compile_context>
chip_gen: v7x
topology: tpu7x:2x2x1
jax: 0.10.0
libtpu: 0.0.40
codegen_flags: <defaults>
</compile_context>

<pallas_src>
import functools

import jax
import jax.numpy as jnp
from jax.experimental import pallas as pl
from jax.experimental.pallas import tpu as pltpu


# ----------------------------- Pallas kernel ------------------------------ #

def _matmul_bias_kernel(x_ref, w_ref, b_ref, o_ref, *, relu):
    """o = x @ w + b (optionally ReLU). x:(TM,K) bf16, w:(K,TN) bf16, b:(1,TN) f32."""
    acc = jnp.dot(x_ref[...], w_ref[...], preferred_element_type=jnp.float32)
    acc = acc + b_ref[...]                      # broadcast (1, TN) over rows
    if relu:
        acc = jnp.maximum(acc, 0.0)
    o_ref[...] = acc.astype(o_ref.dtype)


def pallas_matmul_bias(x, w, b2d, *, relu, out_dtype, tm_cap=512, tn_cap=128):
    """x:(M,K) bf16, w:(K,N) bf16, b2d:(1,N) f32 -> (M,N) out_dtype via Pallas.

    No HBM-side padding: ragged M blocks are masked by Pallas, and K/N block
    dims equal the full array dims.  N is split into 128-wide blocks only when
    N >= 256 (gives small layers a >=2-point grid for v7x megacore).
    """
    M, K = x.shape
    K2, N = w.shape
    assert K == K2, (K, K2)

    TM = M if M <= tm_cap else tm_cap           # tm_cap is a multiple of 8
    TN = N if N <= tn_cap else tn_cap           # tn_cap is a multiple of 128
    grid = (pl.cdiv(M, TM), pl.cdiv(N, TN))

    return pl.pallas_call(
        functools.partial(_matmul_bias_kernel, relu=relu),
        out_shape=jax.ShapeDtypeStruct((M, N), out_dtype),
        grid=grid,
        in_specs=[
            pl.BlockSpec((TM, K), lambda i, j: (i, 0)),
            pl.BlockSpec((K, TN), lambda i, j: (0, j)),
            pl.BlockSpec((1, TN), lambda i, j: (0, j)),
        ],
        out_specs=pl.BlockSpec((TM, TN), lambda i, j: (i, j)),
        compiler_params=pltpu.CompilerParams(
            dimension_semantics=("parallel", "parallel")),
    )(x, w, b2d)


# ------------------------------ JAX glue ---------------------------------- #

def _im2col(x_nhwc, k, s):
    """Valid-conv patches. Returns ((N*Ho*Wo, k*k*C), (N, Ho, Wo)).

    Column order is (kh, kw, c_in), matching the (K, N) weight layout built in
    init_params.
    """
    N, H, W, C = x_nhwc.shape
    Ho = (H - k) // s + 1
    Wo = (W - k) // s + 1
    cols = []
    for di in range(k):
        for dj in range(k):
            cols.append(x_nhwc[:, di:di + s * Ho:s, dj:dj + s * Wo:s, :])
    patches = jnp.concatenate(cols, axis=-1)          # (N, Ho, Wo, k*k*C)
    return patches.reshape(N * Ho * Wo, k * k * C), (N, Ho, Wo)


def init_params(key, input_resolution, input_channels, output_channels):
    """Init matches the torch module's w_init(); all layout work hoisted here."""
    k, s = 4, 2
    conv_channels = [32, 64, 128, 256]
    convs = []
    c_in = input_channels
    res = input_resolution
    for c_out in conv_channels:
        key, wk = jax.random.split(key)
        fan_in = k * k * c_in
        std = (2.0 / fan_in) ** 0.5                    # kaiming_normal_, fan_in, relu
        w = std * jax.random.normal(wk, (k, k, c_in, c_out), dtype=jnp.float32)
        # Hoisted: (kh, kw, c_in, c_out) -> (K, N) matmul layout, bf16 once.
        w2d = w.reshape(k * k * c_in, c_out).astype(jnp.bfloat16)
        b2d = jnp.zeros((1, c_out), dtype=jnp.float32)  # constant_(bias, 0)
        convs.append((w2d, b2d))
        c_in = c_out
        res = (res - k) // s + 1

    flat_dim = c_in * res * res
    key, wk = jax.random.split(key)
    std = (2.0 / output_channels) ** 0.5               # kaiming_normal_, fan_out, relu
    # Draw FC weight with rows in torch (C, H, W) flatten order, then permute
    # the rows once to (H, W, C) order so the forward pass can flatten the
    # NHWC activation directly (no per-call transpose).  Result is identical
    # to applying the original weight to an NCHW flatten.
    fc_w_chw = std * jax.random.normal(
        wk, (c_in, res, res, output_channels), dtype=jnp.float32)
    fc_w = jnp.transpose(fc_w_chw, (1, 2, 0, 3)).reshape(flat_dim, output_channels)

    return {
        "convs": convs,
        "fc_w": fc_w.astype(jnp.bfloat16),
        "fc_b": jnp.zeros((1, output_channels), dtype=jnp.float32),
    }


@functools.partial(jax.jit, static_argnames=("input_resolution", "input_channels"))
def model_image_scratch_forward(params, observation, *, input_resolution,
                                input_channels):
    """Equivalent of MODEL_IMAGE_SCRATCH.forward(observation)."""
    k, s = 4, 2
    x = observation.astype(jnp.float32).reshape(
        -1, input_channels, input_resolution, input_resolution)        # NCHW view
    x = jnp.transpose(x, (0, 2, 3, 1)).astype(jnp.bfloat16)            # NHWC bf16
    for (w2d, b2d) in params["convs"]:
        cols, (n, ho, wo) = _im2col(x, k, s)
        c_out = w2d.shape[-1]
        y = pallas_matmul_bias(cols, w2d, b2d, relu=True, out_dtype=jnp.bfloat16)
        x = y.reshape(n, ho, wo, c_out)
    # NHWC flatten; fc_w rows were pre-permuted at init to match this order.
    feat = x.reshape(x.shape[0], -1)
    return pallas_matmul_bias(feat, params["fc_w"], params["fc_b"],
                              relu=False, out_dtype=jnp.float32)


# -------------------------------- main ------------------------------------ #

if __name__ == "__main__":
    key = jax.random.PRNGKey(0)
    key, pkey, xkey = jax.random.split(key, 3)

    input_resolution = 64
    input_channels = 1
    output_channels = 64
    batch = 2

    params = init_params(pkey, input_resolution, input_channels, output_channels)
    observation = jax.random.normal(
        xkey, (batch, input_channels, input_resolution, input_resolution),
        dtype=jnp.float32)

    out = model_image_scratch_forward(
        params, observation,
        input_resolution=input_resolution, input_channels=input_channels)
    out = jax.block_until_ready(out)

    assert out.shape == (batch, output_channels), out.shape
    assert bool(jnp.all(jnp.isfinite(out)))
    print("KERNEL_OK")
</pallas_src>

<mosaic_0001>
module attributes {stable_mosaic.version = 11 : i64} {
  func.func @_matmul_bias_kernel(%arg0: i32, %arg1: i32, %arg2: memref<512x16xbf16, #tpu.memory_space<vmem>>, %arg3: memref<16x32xbf16, #tpu.memory_space<vmem>>, %arg4: memref<1x32xf32, #tpu.memory_space<vmem>>, %arg5: memref<512x32xbf16, #tpu.memory_space<vmem>>) attributes {dimension_semantics = [#tpu.dimension_semantics<parallel>, #tpu.dimension_semantics<parallel>], iteration_bounds = array<i64: 4, 1>, scalar_prefetch = 0 : i64, scratch_operands = 0 : i64, tpu.core_type = #tpu.core_type<tc>, window_params = [{transform_indices = @transform_0, window_bounds = array<i64: 512, 16>}, {transform_indices = @transform_1, window_bounds = array<i64: 16, 32>}, {transform_indices = @transform_2, window_bounds = array<i64: 1, 32>}, {transform_indices = @transform_3, window_bounds = array<i64: 512, 32>}]} {
    %c0 = arith.constant 0 : index
    %c0_0 = arith.constant 0 : index
    %0 = vector.load %arg2[%c0, %c0_0] : memref<512x16xbf16, #tpu.memory_space<vmem>>, vector<512x16xbf16>
    %c0_1 = arith.constant 0 : index
    %c0_2 = arith.constant 0 : index
    %1 = vector.load %arg3[%c0_1, %c0_2] : memref<16x32xbf16, #tpu.memory_space<vmem>>, vector<16x32xbf16>
    %cst = arith.constant dense<0.000000e+00> : vector<512x32xf32>
    %2 = tpu.matmul %0, %1, %cst {dimension_numbers = #tpu.dot_dimension_numbers<[1], [0], [0], [1], [0, 0, 1, 1], [], []>} : vector<512x16xbf16>, vector<16x32xbf16>, vector<512x32xf32> -> vector<512x32xf32>
    %c0_3 = arith.constant 0 : index
    %c0_4 = arith.constant 0 : index
    %3 = vector.load %arg4[%c0_3, %c0_4] : memref<1x32xf32, #tpu.memory_space<vmem>>, vector<1x32xf32>
    %4 = vector.broadcast %3 : vector<1x32xf32> to vector<512x32xf32>
    %5 = arith.addf %2, %4 : vector<512x32xf32>
    %cst_5 = arith.constant 0.000000e+00 : f32
    %6 = vector.broadcast %cst_5 : f32 to vector<512x32xf32>
    %7 = arith.maximumf %5, %6 : vector<512x32xf32>
    %8 = arith.truncf %7 : vector<512x32xf32> to vector<512x32xbf16>
    %c0_6 = arith.constant 0 : index
    %c0_7 = arith.constant 0 : index
    %9 = vector.load %arg5[%c0_6, %c0_7] : memref<512x32xbf16, #tpu.memory_space<vmem>>, vector<512x32xbf16>
    tpu.vector_store %arg5[%c0_6, %c0_7], %8 {strides = array<i32>} : memref<512x32xbf16, #tpu.memory_space<vmem>>, vector<512x32xbf16>,
    return
  }
  func.func @transform_0(%arg0: i32, %arg1: i32) -> (i32, i32) {
    %c0_i32 = arith.constant 0 : i32
    %c0_i32_0 = arith.constant 0 : i32
    return %arg0, %c0_i32 : i32, i32
  }
  func.func @transform_1(%arg0: i32, %arg1: i32) -> (i32, i32) {
    %c0_i32 = arith.constant 0 : i32
    %c0_i32_0 = arith.constant 0 : i32
    return %c0_i32, %arg1 : i32, i32
  }
  func.func @transform_2(%arg0: i32, %arg1: i32) -> (i32, i32) {
    %c0_i32 = arith.constant 0 : i32
    %c0_i32_0 = arith.constant 0 : i32
    return %c0_i32, %arg1 : i32, i32
  }
  func.func @transform_3(%arg0: i32, %arg1: i32) -> (i32, i32) {
    %c0_i32 = arith.constant 0 : i32
    return %arg0, %arg1 : i32, i32
  }
}

module attributes {stable_mosaic.version = 11 : i64} {
  func.func @_matmul_bias_kernel(%arg0: i32, %arg1: i32, %arg2: memref<392x512xbf16, #tpu.memory_space<vmem>>, %arg3: memref<512x64xbf16, #tpu.memory_space<vmem>>, %arg4: memref<1x64xf32, #tpu.memory_space<vmem>>, %arg5: memref<392x64xbf16, #tpu.memory_space<vmem>>) attributes {dimension_semantics = [#tpu.dimension_semantics<parallel>, #tpu.dimension_semantics<parallel>], iteration_bounds = array<i64: 1, 1>, scalar_prefetch = 0 : i64, scratch_operands = 0 : i64, tpu.core_type = #tpu.core_type<tc>, window_params = [{transform_indices = @transform_0, window_bounds = array<i64: 392, 512>}, {transform_indices = @transform_1, window_bounds = array<i64: 512, 64>}, {transform_indices = @transform_2, window_bounds = array<i64: 1, 64>}, {transform_indices = @transform_3, window_bounds = array<i64: 392, 64>}]} {
    %c0 = arith.constant 0 : index
    %c0_0 = arith.constant 0 : index
    %0 = vector.load %arg2[%c0, %c0_0] : memref<392x512xbf16, #tpu.memory_space<vmem>>, vector<392x512xbf16>
    %c0_1 = arith.constant 0 : index
    %c0_2 = arith.constant 0 : index
    %1 = vector.load %arg3[%c0_1, %c0_2] : memref<512x64xbf16, #tpu.memory_space<vmem>>, vector<512x64xbf16>
    %cst = arith.constant dense<0.000000e+00> : vector<392x64xf32>
    %2 = tpu.matmul %0, %1, %cst {dimension_numbers = #tpu.dot_dimension_numbers<[1], [0], [0], [1], [0, 0, 1, 1], [], []>} : vector<392x512xbf16>, vector<512x64xbf16>, vector<392x64xf32> -> vector<392x64xf32>
    %c0_3 = arith.constant 0 : index
    %c0_4 = arith.constant 0 : index
    %3 = vector.load %arg4[%c0_3, %c0_4] : memref<1x64xf32, #tpu.memory_space<vmem>>, vector<1x64xf32>
    %4 = vector.broadcast %3 : vector<1x64xf32> to vector<392x64xf32>
    %5 = arith.addf %2, %4 : vector<392x64xf32>
    %cst_5 = arith.constant 0.000000e+00 : f32
    %6 = vector.broadcast %cst_5 : f32 to vector<392x64xf32>
    %7 = arith.maximumf %5, %6 : vector<392x64xf32>
    %8 = arith.truncf %7 : vector<392x64xf32> to vector<392x64xbf16>
    %c0_6 = arith.constant 0 : index
    %c0_7 = arith.constant 0 : index
    %9 = vector.load %arg5[%c0_6, %c0_7] : memref<392x64xbf16, #tpu.memory_space<vmem>>, vector<392x64xbf16>
    tpu.vector_store %arg5[%c0_6, %c0_7], %8 {strides = array<i32>} : memref<392x64xbf16, #tpu.memory_space<vmem>>, vector<392x64xbf16>,
    return
  }
  func.func @transform_0(%arg0: i32, %arg1: i32) -> (i32, i32) {
    %c0_i32 = arith.constant 0 : i32
    %c0_i32_0 = arith.constant 0 : i32
    return %arg0, %c0_i32 : i32, i32
  }
  func.func @transform_1(%arg0: i32, %arg1: i32) -> (i32, i32) {
    %c0_i32 = arith.constant 0 : i32
    %c0_i32_0 = arith.constant 0 : i32
    return %c0_i32, %arg1 : i32, i32
  }
  func.func @transform_2(%arg0: i32, %arg1: i32) -> (i32, i32) {
    %c0_i32 = arith.constant 0 : i32
    %c0_i32_0 = arith.constant 0 : i32
    return %c0_i32, %arg1 : i32, i32
  }
  func.func @transform_3(%arg0: i32, %arg1: i32) -> (i32, i32) {
    %c0_i32 = arith.constant 0 : i32
    return %arg0, %arg1 : i32, i32
  }
}

module attributes {stable_mosaic.version = 11 : i64} {
  func.func @_matmul_bias_kernel(%arg0: i32, %arg1: i32, %arg2: memref<72x1024xbf16, #tpu.memory_space<vmem>>, %arg3: memref<1024x128xbf16, #tpu.memory_space<vmem>>, %arg4: memref<1x128xf32, #tpu.memory_space<vmem>>, %arg5: memref<72x128xbf16, #tpu.memory_space<vmem>>) attributes {dimension_semantics = [#tpu.dimension_semantics<parallel>, #tpu.dimension_semantics<parallel>], iteration_bounds = array<i64: 1, 1>, scalar_prefetch = 0 : i64, scratch_operands = 0 : i64, tpu.core_type = #tpu.core_type<tc>, window_params = [{transform_indices = @transform_0, window_bounds = array<i64: 72, 1024>}, {transform_indices = @transform_1, window_bounds = array<i64: 1024, 128>}, {transform_indices = @transform_2, window_bounds = array<i64: 1, 128>}, {transform_indices = @transform_3, window_bounds = array<i64: 72, 128>}]} {
    %c0 = arith.constant 0 : index
    %c0_0 = arith.constant 0 : index
    %0 = vector.load %arg2[%c0, %c0_0] : memref<72x1024xbf16, #tpu.memory_space<vmem>>, vector<72x1024xbf16>
    %c0_1 = arith.constant 0 : index
    %c0_2 = arith.constant 0 : index
    %1 = vector.load %arg3[%c0_1, %c0_2] : memref<1024x128xbf16, #tpu.memory_space<vmem>>, vector<1024x128xbf16>
    %cst = arith.constant dense<0.000000e+00> : vector<72x128xf32>
    %2 = tpu.matmul %0, %1, %cst {dimension_numbers = #tpu.dot_dimension_numbers<[1], [0], [0], [1], [0, 0, 1, 1], [], []>} : vector<72x1024xbf16>, vector<1024x128xbf16>, vector<72x128xf32> -> vector<72x128xf32>
    %c0_3 = arith.constant 0 : index
    %c0_4 = arith.constant 0 : index
    %3 = vector.load %arg4[%c0_3, %c0_4] : memref<1x128xf32, #tpu.memory_space<vmem>>, vector<1x128xf32>
    %4 = vector.broadcast %3 : vector<1x128xf32> to vector<72x128xf32>
    %5 = arith.addf %2, %4 : vector<72x128xf32>
    %cst_5 = arith.constant 0.000000e+00 : f32
    %6 = vector.broadcast %cst_5 : f32 to vector<72x128xf32>
    %7 = arith.maximumf %5, %6 : vector<72x128xf32>
    %8 = arith.truncf %7 : vector<72x128xf32> to vector<72x128xbf16>
    %c0_6 = arith.constant 0 : index
    %c0_7 = arith.constant 0 : index
    %9 = vector.load %arg5[%c0_6, %c0_7] : memref<72x128xbf16, #tpu.memory_space<vmem>>, vector<72x128xbf16>
    tpu.vector_store %arg5[%c0_6, %c0_7], %8 {strides = array<i32>} : memref<72x128xbf16, #tpu.memory_space<vmem>>, vector<72x128xbf16>,
    return
  }
  func.func @transform_0(%arg0: i32, %arg1: i32) -> (i32, i32) {
    %c0_i32 = arith.constant 0 : i32
    %c0_i32_0 = arith.constant 0 : i32
    return %arg0, %c0_i32 : i32, i32
  }
  func.func @transform_1(%arg0: i32, %arg1: i32) -> (i32, i32) {
    %c0_i32 = arith.constant 0 : i32
    %c0_i32_0 = arith.constant 0 : i32
    return %c0_i32, %arg1 : i32, i32
  }
  func.func @transform_2(%arg0: i32, %arg1: i32) -> (i32, i32) {
    %c0_i32 = arith.constant 0 : i32
    %c0_i32_0 = arith.constant 0 : i32
    return %c0_i32, %arg1 : i32, i32
  }
  func.func @transform_3(%arg0: i32, %arg1: i32) -> (i32, i32) {
    %c0_i32 = arith.constant 0 : i32
    return %arg0, %arg1 : i32, i32
  }
}

module attributes {stable_mosaic.version = 11 : i64} {
  func.func @_matmul_bias_kernel(%arg0: i32, %arg1: i32, %arg2: memref<8x2048xbf16, #tpu.memory_space<vmem>>, %arg3: memref<2048x128xbf16, #tpu.memory_space<vmem>>, %arg4: memref<1x128xf32, #tpu.memory_space<vmem>>, %arg5: memref<8x128xbf16, #tpu.memory_space<vmem>>) attributes {dimension_semantics = [#tpu.dimension_semantics<parallel>, #tpu.dimension_semantics<parallel>], iteration_bounds = array<i64: 1, 2>, scalar_prefetch = 0 : i64, scratch_operands = 0 : i64, tpu.core_type = #tpu.core_type<tc>, window_params = [{transform_indices = @transform_0, window_bounds = array<i64: 8, 2048>}, {transform_indices = @transform_1, window_bounds = array<i64: 2048, 128>}, {transform_indices = @transform_2, window_bounds = array<i64: 1, 128>}, {transform_indices = @transform_3, window_bounds = array<i64: 8, 128>}]} {
    %c0 = arith.constant 0 : index
    %c0_0 = arith.constant 0 : index
    %0 = vector.load %arg2[%c0, %c0_0] : memref<8x2048xbf16, #tpu.memory_space<vmem>>, vector<8x2048xbf16>
    %c0_1 = arith.constant 0 : index
    %c0_2 = arith.constant 0 : index
    %1 = vector.load %arg3[%c0_1, %c0_2] : memref<2048x128xbf16, #tpu.memory_space<vmem>>, vector<2048x128xbf16>
    %cst = arith.constant dense<0.000000e+00> : vector<8x128xf32>
    %2 = tpu.matmul %0, %1, %cst {dimension_numbers = #tpu.dot_dimension_numbers<[1], [0], [0], [1], [0, 0, 1, 1], [], []>} : vector<8x2048xbf16>, vector<2048x128xbf16>, vector<8x128xf32> -> vector<8x128xf32>
    %c0_3 = arith.constant 0 : index
    %c0_4 = arith.constant 0 : index
    %3 = vector.load %arg4[%c0_3, %c0_4] : memref<1x128xf32, #tpu.memory_space<vmem>>, vector<1x128xf32>
    %4 = vector.broadcast %3 : vector<1x128xf32> to vector<8x128xf32>
    %5 = arith.addf %2, %4 : vector<8x128xf32>
    %cst_5 = arith.constant 0.000000e+00 : f32
    %6 = vector.broadcast %cst_5 : f32 to vector<8x128xf32>
    %7 = arith.maximumf %5, %6 : vector<8x128xf32>
    %8 = arith.truncf %7 : vector<8x128xf32> to vector<8x128xbf16>
    %c0_6 = arith.constant 0 : index
    %c0_7 = arith.constant 0 : index
    %9 = vector.load %arg5[%c0_6, %c0_7] : memref<8x128xbf16, #tpu.memory_space<vmem>>, vector<8x128xbf16>
    tpu.vector_store %arg5[%c0_6, %c0_7], %8 {strides = array<i32>} : memref<8x128xbf16, #tpu.memory_space<vmem>>, vector<8x128xbf16>,
    return
  }
  func.func @transform_0(%arg0: i32, %arg1: i32) -> (i32, i32) {
    %c0_i32 = arith.constant 0 : i32
    %c0_i32_0 = arith.constant 0 : i32
    return %arg0, %c0_i32 : i32, i32
  }
  func.func @transform_1(%arg0: i32, %arg1: i32) -> (i32, i32) {
    %c0_i32 = arith.constant 0 : i32
    %c0_i32_0 = arith.constant 0 : i32
    return %c0_i32, %arg1 : i32, i32
  }
  func.func @transform_2(%arg0: i32, %arg1: i32) -> (i32, i32) {
    %c0_i32 = arith.constant 0 : i32
    %c0_i32_0 = arith.constant 0 : i32
    return %c0_i32, %arg1 : i32, i32
  }
  func.func @transform_3(%arg0: i32, %arg1: i32) -> (i32, i32) {
    %c0_i32 = arith.constant 0 : i32
    return %arg0, %arg1 : i32, i32
  }
}

module attributes {stable_mosaic.version = 11 : i64} {
  func.func @_matmul_bias_kernel(%arg0: i32, %arg1: i32, %arg2: memref<2x1024xbf16, #tpu.memory_space<vmem>>, %arg3: memref<1024x64xbf16, #tpu.memory_space<vmem>>, %arg4: memref<1x64xf32, #tpu.memory_space<vmem>>, %arg5: memref<2x64xf32, #tpu.memory_space<vmem>>) attributes {dimension_semantics = [#tpu.dimension_semantics<parallel>, #tpu.dimension_semantics<parallel>], iteration_bounds = array<i64: 1, 1>, scalar_prefetch = 0 : i64, scratch_operands = 0 : i64, tpu.core_type = #tpu.core_type<tc>, window_params = [{transform_indices = @transform_0, window_bounds = array<i64: 2, 1024>}, {transform_indices = @transform_1, window_bounds = array<i64: 1024, 64>}, {transform_indices = @transform_2, window_bounds = array<i64: 1, 64>}, {transform_indices = @transform_3, window_bounds = array<i64: 2, 64>}]} {
    %c0 = arith.constant 0 : index
    %c0_0 = arith.constant 0 : index
    %0 = vector.load %arg2[%c0, %c0_0] : memref<2x1024xbf16, #tpu.memory_space<vmem>>, vector<2x1024xbf16>
    %c0_1 = arith.constant 0 : index
    %c0_2 = arith.constant 0 : index
    %1 = vector.load %arg3[%c0_1, %c0_2] : memref<1024x64xbf16, #tpu.memory_space<vmem>>, vector<1024x64xbf16>
    %cst = arith.constant dense<0.000000e+00> : vector<2x64xf32>
    %2 = tpu.matmul %0, %1, %cst {dimension_numbers = #tpu.dot_dimension_numbers<[1], [0], [0], [1], [0, 0, 1, 1], [], []>} : vector<2x1024xbf16>, vector<1024x64xbf16>, vector<2x64xf32> -> vector<2x64xf32>
    %c0_3 = arith.constant 0 : index
    %c0_4 = arith.constant 0 : index
    %3 = vector.load %arg4[%c0_3, %c0_4] : memref<1x64xf32, #tpu.memory_space<vmem>>, vector<1x64xf32>
    %4 = vector.broadcast %3 : vector<1x64xf32> to vector<2x64xf32>
    %5 = arith.addf %2, %4 : vector<2x64xf32>
    %c0_5 = arith.constant 0 : index
    %c0_6 = arith.constant 0 : index
    %6 = vector.load %arg5[%c0_5, %c0_6] : memref<2x64xf32, #tpu.memory_space<vmem>>, vector<2x64xf32>
    tpu.vector_store %arg5[%c0_5, %c0_6], %5 {strides = array<i32>} : memref<2x64xf32, #tpu.memory_space<vmem>>, vector<2x64xf32>,
    return
  }
  func.func @transform_0(%arg0: i32, %arg1: i32) -> (i32, i32) {
    %c0_i32 = arith.constant 0 : i32
    %c0_i32_0 = arith.constant 0 : i32
    return %arg0, %c0_i32 : i32, i32
  }
  func.func @transform_1(%arg0: i32, %arg1: i32) -> (i32, i32) {
    %c0_i32 = arith.constant 0 : i32
    %c0_i32_0 = arith.constant 0 : i32
    return %c0_i32, %arg1 : i32, i32
  }
  func.func @transform_2(%arg0: i32, %arg1: i32) -> (i32, i32) {
    %c0_i32 = arith.constant 0 : i32
    %c0_i32_0 = arith.constant 0 : i32
    return %c0_i32, %arg1 : i32, i32
  }
  func.func @transform_3(%arg0: i32, %arg1: i32) -> (i32, i32) {
    %c0_i32 = arith.constant 0 : i32
    return %arg0, %arg1 : i32, i32
  }
}

</mosaic_0001>

<llo_original>
// kernel: model_image_scratch_forward.5
$region0: #{model_image_scratch_forward.5}
  #allocation0 [shape = 'u32[]', space=smem, size = 0x4, offset = 0x4, fixed_abs, tag = 'smem constant byte address 0x4 - core index']
  #allocation1 [shape = 'u32[144,128]{1,0:T(1,128)}', space=vmem, size = 0x12000, scoped, tag = 'internal scratch']
  %s0 = inlined_call_operand.vmem [shape: bf16[1922,16], index: 0, kind: input, shape index: {}]
  %s1 = inlined_call_operand.hbm [shape: bf16[16,32], index: 1, kind: input, shape index: {}]
  %s2 = inlined_call_operand.hbm [shape: f32[1,32], index: 2, kind: input, shape index: {}]
  %s3 = inlined_call_operand.vmem [shape: bf16[1922,32], index: 3, kind: output, shape index: {}]
  %s4 = sld [smem:[#allocation0]]
  $region97: #{model_image_scratch_forward.5} parent=0
    _
  %s6 = ssub.s32 1, %s4
  %s7 = scalar_select 0, %s6, %s4
  $region1: #{model_image_scratch_forward.5} parent=0
    #allocation2 [shape = 'u8[4096]{0}', space=vmem, size = 0x1000, scoped, tag = 'input window, operand 1, single buffered']
    #allocation3 [shape = 's32[2]{0}', space=sflag, size = 0x8, scoped, tag = 'scoped memory for model_image_scratch_forward.5']
    #allocation4 [shape = 'u8[512]{0}', space=vmem, size = 0x400, scoped, tag = 'input window, operand 2, single buffered']
    #allocation5 [shape = 's32[1]{0}', space=sflag, size = 0x4, scoped, tag = 'scoped memory for model_image_scratch_forward.5']
    #allocation6 [shape = 'u8[262144]{0}', space=vmem, size = 0x40000, scoped, tag = 'output window, operand 0']
    %8 = vsyncpa [#allocation3], 0
    %9 = vsyncpa [#allocation5], 0
    loop: start=0, step=1, limit=6
    $region2: #{model_image_scratch_forward.5} parent=1 // loop_pre_header
      _
    $region3: #{model_image_scratch_forward.5} parent=1 // loop_header
      %s11 = sphi 0, %s15
      %p12 = scmp.ge.s32.totalorder %s11, 6
      %s18 = sphi 0, %s30
      %s19 = sphi 0, %s26
      %s20 = sphi 0, %s18
      %s21 = sphi 0, %s19
      %s22 = sphi 0, %s20
      %s23 = sphi 0, %s21
      %s33 = sphi 0, %s35
      %s36 = sphi 0, %s33
      %s37 = sphi 0, %s36
      %s53 = sphi 0, %s37
      %s59 = sphi 0, %s61
      %s62 = sphi 0, %s59
      %s63 = sphi 0, %s62
      %s79 = sphi 0, %s63
      %s85 = sphi 0, %s87
      %s88 = sphi 0, %s85
      %s89 = sphi 0, %s88
      %s105 = sphi 0, %s89
      %s113 = sphi 0, %s115
      %s116 = sphi 0, %s113
      %s117 = sphi 0, %s116
      %s133 = sphi 0, %s117
    $region4: #{model_image_scratch_forward.5} parent=1 // loop_header_branch
      %14 = sbr.rel (%p12) target = $region8
    $region5: #{model_image_scratch_forward.5} parent=1 // loop_body
      %s16 = ssub.s32 %s11, 1
      %s17 = ssub.s32 %s11, 2
      %s24 = sadd.s32 1, %s19
      %p25 = scmp.ge.s32.totalorder %s24, 1
      %s26 = scalar_select %p25, 0, %s24
      %s27 = sadd.s32 1, %s18
      %s28 = scalar_select %p25, %s27, %s18
      %p29 = scmp.ge.s32.totalorder %s28, 4
      %s30 = scalar_select %p29, 0, %s28
      %s31 = ssub.s32 %s18, %s30
      %p32 = scmp.eq.s32.totalorder %s31, 0
      %s34 = sadd.s32 %s33, 1
      %s35 = scalar_select %p32, %s33, %s34
      %p38 = pneg %p32
      %p39 = scmp.eq.s32.totalorder %s11, 3
      %p40 = por %p38, %p39
      %p41 = scmp.ne.s32.totalorder %s33, %s36
      %p42 = scmp.eq.s32.totalorder %s11, 0
      %p43 = por %p41, %p42
      %p44 = scmp.ne.s32.totalorder %s33, %s36
      %p45 = scmp.eq.s32.totalorder %s16, 3
      %p46 = por %p44, %p45
      %p47 = scmp.ne.s32.totalorder %s36, %s37
      %p48 = scmp.eq.s32.totalorder %s16, 0
      %p49 = por %p47, %p48
      %p50 = scmp.ne.s32.totalorder %s36, %s37
      %p51 = scmp.eq.s32.totalorder %s17, 3
      %p52 = por %p50, %p51
      %p54 = scmp.ne.s32.totalorder %s37, %s53
      %p55 = scmp.eq.s32.totalorder %s17, 0
      %p56 = por %p54, %p55
      %s57 = ssub.s32 %s19, %s26
      %p58 = scmp.eq.s32.totalorder %s57, 0
      %s60 = sadd.s32 %s59, 1
      %s61 = scalar_select %p58, %s59, %s60
      %p64 = pneg %p58
      %p65 = scmp.eq.s32.totalorder %s11, 3
      %p66 = por %p64, %p65
      %p67 = scmp.ne.s32.totalorder %s59, %s62
      %p68 = scmp.eq.s32.totalorder %s11, 0
      %p69 = por %p67, %p68
      %p70 = scmp.ne.s32.totalorder %s59, %s62
      %p71 = scmp.eq.s32.totalorder %s16, 3
      %p72 = por %p70, %p71
      %p73 = scmp.ne.s32.totalorder %s62, %s63
      %p74 = scmp.eq.s32.totalorder %s16, 0
      %p75 = por %p73, %p74
      %p76 = scmp.ne.s32.totalorder %s62, %s63
      %p77 = scmp.eq.s32.totalorder %s17, 3
      %p78 = por %p76, %p77
      %p80 = scmp.ne.s32.totalorder %s63, %s79
      %p81 = scmp.eq.s32.totalorder %s17, 0
      %p82 = por %p80, %p81
      %s83 = ssub.s32 %s19, %s26
      %p84 = scmp.eq.s32.totalorder %s83, 0
      %s86 = sadd.s32 %s85, 1
      %s87 = scalar_select %p84, %s85, %s86
      %p90 = pneg %p84
      %p91 = scmp.eq.s32.totalorder %s11, 3
      %p92 = por %p90, %p91
      %p93 = scmp.ne.s32.totalorder %s85, %s88
      %p94 = scmp.eq.s32.totalorder %s11, 0
      %p95 = por %p93, %p94
      %p96 = scmp.ne.s32.totalorder %s85, %s88
      %p97 = scmp.eq.s32.totalorder %s16, 3
      %p98 = por %p96, %p97
      %p99 = scmp.ne.s32.totalorder %s88, %s89
      %p100 = scmp.eq.s32.totalorder %s16, 0
      %p101 = por %p99, %p100
      %p102 = scmp.ne.s32.totalorder %s88, %s89
      %p103 = scmp.eq.s32.totalorder %s17, 3
      %p104 = por %p102, %p103
      %p106 = scmp.ne.s32.totalorder %s89, %s105
      %p107 = scmp.eq.s32.totalorder %s17, 0
      %p108 = por %p106, %p107
      %s109 = ssub.s32 %s18, %s30
      %s110 = ssub.s32 %s19, %s26
      %s111 = sor.u32 %s109, %s110
      %p112 = scmp.eq.s32.totalorder %s111, 0
      %s114 = sadd.s32 %s113, 1
      %s115 = scalar_select %p112, %s113, %s114
      %p118 = pneg %p112
      %p119 = scmp.eq.s32.totalorder %s11, 3
      %p120 = por %p118, %p119
      %p121 = scmp.ne.s32.totalorder %s113, %s116
      %p122 = scmp.eq.s32.totalorder %s11, 0
      %p123 = por %p121, %p122
      %p124 = scmp.ne.s32.totalorder %s113, %s116
      %p125 = scmp.eq.s32.totalorder %s16, 3
      %p126 = por %p124, %p125
      %p127 = scmp.ne.s32.totalorder %s116, %s117
      %p128 = scmp.eq.s32.totalorder %s16, 0
      %p129 = por %p127, %p128
      %p130 = scmp.ne.s32.totalorder %s116, %s117
      %p131 = scmp.eq.s32.totalorder %s17, 3
      %p132 = por %p130, %p131
      %p134 = scmp.ne.s32.totalorder %s117, %s133
      %p135 = scmp.eq.s32.totalorder %s17, 0
      %p136 = por %p134, %p135
      %p137 = scmp.le.s32.totalorder 1, %s11
      %p138 = scmp.lt.s32.totalorder %s11, 5
      %p139 = pnand %p137, %p138
      %p140 = pneg %p139
      // Predicated region
      $region9: #{model_image_scratch_forward.5} parent=5 // pred_check
        _
      $region10: #{model_image_scratch_forward.5} parent=5 // pred_check_branch
        %142 = sbr.rel (%p139) target = $region12
      $region11: #{model_image_scratch_forward.5} parent=5 // pred_region
        %s143 = ssub.s32 %s11, 1
        // Predicated region
        $region13: #{model_image_scratch_forward.5} parent=11 // pred_check
          %p144 = pneg %p75
        $region14: #{model_image_scratch_forward.5} parent=11 // pred_check_branch
          %146 = sbr.rel (%p144) target = $region16
        $region15: #{model_image_scratch_forward.5} parent=11 // pred_region
          %s148 = ssub.s32 128, 128
          %149 = vsyncadd [#allocation3], %s148
          %s150 = smul.addr %s21, 64
          %s151 = scalar_lea.hbm %s1, %s150
          %s152 = sshll.u32 [#allocation2], 4
          %s153 = int_to_ptr.vmem [resolvable:$true] %s152
          %158 = dma.hbm_to_vmem [thread:$0]  %s151, 128, %s153, [#allocation3], 64, 64, 4
        $region16: #{model_image_scratch_forward.5} parent=11 // pred_fallthru
          _
        // Predicated region
        $region17: #{model_image_scratch_forward.5} parent=11 // pred_check
          %p159 = pneg %p101
        $region18: #{model_image_scratch_forward.5} parent=11 // pred_check_branch
          %161 = sbr.rel (%p159) target = $region20
        $region19: #{model_image_scratch_forward.5} parent=11 // pred_region
          %s163 = ssub.s32 16, 16
          %164 = vsyncadd [#allocation5], %s163
          %s165 = smul.addr %s21, 16
          %s166 = scalar_lea.hbm %s2, %s165
          %s168 = sshll.u32 [#allocation4], 4
          %s169 = int_to_ptr.vmem [resolvable:$true] %s168
          %171 = dma.hbm_to_vmem [thread:$0]  %s166, 16, %s169, [#allocation5]
        $region20: #{model_image_scratch_forward.5} parent=11 // pred_fallthru
          _
      $region12: #{model_image_scratch_forward.5} parent=5 // pred_fallthru
        _
      %p172 = scmp.lt.s32.totalorder %s11, 4
      // Predicated region
      $region21: #{model_image_scratch_forward.5} parent=5 // pred_check
        %p173 = pneg %p172
      $region22: #{model_image_scratch_forward.5} parent=5 // pred_check_branch
        %175 = sbr.rel (%p173) target = $region24
      $region23: #{model_image_scratch_forward.5} parent=5 // pred_region
        // Predicated region
        $region25: #{model_image_scratch_forward.5} parent=23 // pred_check
          %p176 = pneg %p43
        $region26: #{model_image_scratch_forward.5} parent=23 // pred_check_branch
          %178 = sbr.rel (%p176) target = $region28
        $region27: #{model_image_scratch_forward.5} parent=23 // pred_region
          %s179 = smul.u32 64, %s18
          %s180 = ssub.s32 241, %s179
          %p181 = scmp.lt.s32.totalorder %s180, 64
          %s182 = scalar_select %p181, %s180, 64
          %s183 = smul.u32 64, %s182
          %p184 = scmp.lt.s32.totalorder %s179, 240
          %s185 = scalar_select %p184, %s179, 240
          %s186 = smul.addr %s185, 4
          %s187 = scalar_lea.vmem %s0, %s186
          %s188 = smul.u32 64, %s18
          %s189 = ssub.s32 241, %s188
          %p190 = scmp.lt.s32.totalorder %s189, 64
          %s191 = scalar_select %p190, %s189, 64
          %s192 = smul.u32 64, %s191
        $region28: #{model_image_scratch_forward.5} parent=23 // pred_fallthru
          _
      $region24: #{model_image_scratch_forward.5} parent=5 // pred_fallthru
        _
      %p193 = scmp.le.s32.totalorder 1, %s11
      %p194 = scmp.lt.s32.totalorder %s11, 5
      %p195 = pnand %p193, %p194
      %p196 = pneg %p195
      // Predicated region
      $region29: #{model_image_scratch_forward.5} parent=5 // pred_check
        _
      $region30: #{model_image_scratch_forward.5} parent=5 // pred_check_branch
        %198 = sbr.rel (%p195) target = $region32
      $region31: #{model_image_scratch_forward.5} parent=5 // pred_region
        %s199 = ssub.s32 %s11, 1
        // Predicated region
        $region33: #{model_image_scratch_forward.5} parent=31 // pred_check
          %p200 = pneg %p75
        $region34: #{model_image_scratch_forward.5} parent=31 // pred_check_branch
          %202 = sbr.rel (%p200) target = $region36
        $region35: #{model_image_scratch_forward.5} parent=31 // pred_region
          %203 = dma.done [#allocation3], 128
        $region36: #{model_image_scratch_forward.5} parent=31 // pred_fallthru
          _
        // Predicated region
        $region37: #{model_image_scratch_forward.5} parent=31 // pred_check
          %p204 = pneg %p101
        $region38: #{model_image_scratch_forward.5} parent=31 // pred_check_branch
          %206 = sbr.rel (%p204) target = $region40
        $region39: #{model_image_scratch_forward.5} parent=31 // pred_region
          %207 = dma.done [#allocation5], 16
        $region40: #{model_image_scratch_forward.5} parent=31 // pred_fallthru
          _
        %s208 = smul.u32 64, %s20
        %s209 = ssub.s32 241, %s208
        %p210 = scmp.lt.s32.totalorder %s209, 64
        %s211 = scalar_select %p210, %s209, 64
        %s212 = smul.u32 64, %s211
        %p213 = scmp.lt.s32.totalorder %s208, 240
        %s214 = scalar_select %p213, %s208, 240
        %s215 = smul.addr %s214, 4
        %s216 = scalar_lea.vmem %s0, %s215
        %p217 = pneg %p49
        %p218 = pneg %p46
        %p219 = pneg %p75
        %p220 = pneg %p72
        %p221 = pneg %p101
        %p222 = pneg %p98
        %p223 = pneg %p129
        %p224 = pneg %p126
        %s225 = sand.u32 %s116, 1
        %s226 = sand.u32 %s116, 1
        %s227 = smul.addr %s226, 256
        %s228 = scalar_lea.vmem [#allocation6], %s227
        %s229 = smul.u32 64, %s20
        %s230 = ssub.s32 241, %s229
        %p231 = scmp.lt.s32.totalorder %s230, 64
        %s232 = scalar_select %p231, %s230, 64
        %s233 = smul.u32 64, %s232
        %p234 = scmp.lt.s32.totalorder %s229, 240
        %s235 = scalar_select %p234, %s229, 240
        %s236 = smul.addr %s235, 4
        %s237 = scalar_lea.vmem %s0, %s236
        %s238 = smul.u32 64, %s20
        %s239 = ssub.s32 241, %s238
        %p240 = scmp.lt.s32.totalorder %s239, 64
        %s241 = scalar_select %p240, %s239, 64
        %s242 = smul.u32 64, %s241
        %s243 = smul.u32 64, %s20
        %s244 = ssub.s32 241, %s243
        %p245 = scmp.lt.s32.totalorder %s244, 64
        %s246 = scalar_select %p245, %s244, 64
        %s247 = smul.u32 64, %s246
        %v249 = vld [vmem:[%s237] sm:$0xf]
        %v250 = vld [vmem:[%s237 + $0x4] sm:$0xf]
        %v251 = vld [vmem:[%s237 + $0x8] sm:$0xf]
        %v252 = vld [vmem:[%s237 + $0xc] sm:$0xf]
        %v253 = vld [vmem:[%s237 + $0x10] sm:$0xf]
        %v254 = vld [vmem:[%s237 + $0x14] sm:$0xf]
        %v255 = vld [vmem:[%s237 + $0x18] sm:$0xf]
        %v256 = vld [vmem:[%s237 + $0x1c] sm:$0xf]
        %v257 = vld [vmem:[%s237 + $0x20] sm:$0xf]
        %v258 = vld [vmem:[%s237 + $0x24] sm:$0xf]
        %v259 = vld [vmem:[%s237 + $0x28] sm:$0xf]
        %v260 = vld [vmem:[%s237 + $0x2c] sm:$0xf]
        %v261 = vld [vmem:[%s237 + $0x30] sm:$0xf]
        %v262 = vld [vmem:[%s237 + $0x34] sm:$0xf]
        %v263 = vld [vmem:[%s237 + $0x38] sm:$0xf]
        %v264 = vld [vmem:[%s237 + $0x3c] sm:$0xf]
        %v265 = vld [vmem:[%s237 + $0x40] sm:$0xf]
        %v266 = vld [vmem:[%s237 + $0x44] sm:$0xf]
        %v267 = vld [vmem:[%s237 + $0x48] sm:$0xf]
        %v268 = vld [vmem:[%s237 + $0x4c] sm:$0xf]
        %v269 = vld [vmem:[%s237 + $0x50] sm:$0xf]
        %v270 = vld [vmem:[%s237 + $0x54] sm:$0xf]
        %v271 = vld [vmem:[%s237 + $0x58] sm:$0xf]
        %v272 = vld [vmem:[%s237 + $0x5c] sm:$0xf]
        %v273 = vld [vmem:[%s237 + $0x60] sm:$0xf]
        %v274 = vld [vmem:[%s237 + $0x64] sm:$0xf]
        %v275 = vld [vmem:[%s237 + $0x68] sm:$0xf]
        %v276 = vld [vmem:[%s237 + $0x6c] sm:$0xf]
        %v277 = vld [vmem:[%s237 + $0x70] sm:$0xf]
        %v278 = vld [vmem:[%s237 + $0x74] sm:$0xf]
        %v279 = vld [vmem:[%s237 + $0x78] sm:$0xf]
        %v280 = vld [vmem:[%s237 + $0x7c] sm:$0xf]
        %v281 = vld [vmem:[%s237 + $0x80] sm:$0xf]
        %v282 = vld [vmem:[%s237 + $0x84] sm:$0xf]
        %v283 = vld [vmem:[%s237 + $0x88] sm:$0xf]
        %v284 = vld [vmem:[%s237 + $0x8c] sm:$0xf]
        %v285 = vld [vmem:[%s237 + $0x90] sm:$0xf]
        %v286 = vld [vmem:[%s237 + $0x94] sm:$0xf]
        %v287 = vld [vmem:[%s237 + $0x98] sm:$0xf]
        %v288 = vld [vmem:[%s237 + $0x9c] sm:$0xf]
        %v289 = vld [vmem:[%s237 + $0xa0] sm:$0xf]
        %v290 = vld [vmem:[%s237 + $0xa4] sm:$0xf]
        %v291 = vld [vmem:[%s237 + $0xa8] sm:$0xf]
        %v292 = vld [vmem:[%s237 + $0xac] sm:$0xf]
        %v293 = vld [vmem:[%s237 + $0xb0] sm:$0xf]
        %v294 = vld [vmem:[%s237 + $0xb4] sm:$0xf]
        %v295 = vld [vmem:[%s237 + $0xb8] sm:$0xf]
        %v296 = vld [vmem:[%s237 + $0xbc] sm:$0xf]
        %v297 = vld [vmem:[%s237 + $0xc0] sm:$0xf]
        %v298 = vld [vmem:[%s237 + $0xc4] sm:$0xf]
        %v299 = vld [vmem:[%s237 + $0xc8] sm:$0xf]
        %v300 = vld [vmem:[%s237 + $0xcc] sm:$0xf]
        %v301 = vld [vmem:[%s237 + $0xd0] sm:$0xf]
        %v302 = vld [vmem:[%s237 + $0xd4] sm:$0xf]
        %v303 = vld [vmem:[%s237 + $0xd8] sm:$0xf]
        %v304 = vld [vmem:[%s237 + $0xdc] sm:$0xf]
        %v305 = vld [vmem:[%s237 + $0xe0] sm:$0xf]
        %v306 = vld [vmem:[%s237 + $0xe4] sm:$0xf]
        %v307 = vld [vmem:[%s237 + $0xe8] sm:$0xf]
        %v308 = vld [vmem:[%s237 + $0xec] sm:$0xf]
        %v309 = vld [vmem:[%s237 + $0xf0] sm:$0xf]
        %v310 = vld [vmem:[%s237 + $0xf4] sm:$0xf]
        %v311 = vld [vmem:[%s237 + $0xf8] sm:$0xf]
        %v312 = vld [vmem:[%s237 + $0xfc] sm:$0xf]
        %v313 = vld [vmem:[#allocation2] sm:$0xf]
        %v314 = vld [vmem:[#allocation2 + $0x4] sm:$0xf]
        %v315 = vld [vmem:[#allocation4] sm:$0x1]
        %v317 = vlaneseq
        %v318 = vshrl.u32 %v317, 7
        %v319 = vsub.s32 0, %v318
        %v320 = vrot.slane %v315, %v319
        %v386 = vunpack.c.l.b16 %v249
        %v387 = vunpack.c.l.b16 %v250
        %v388 = vunpack.c.l.b16 %v251
        %v389 = vunpack.c.l.b16 %v252
        %v390 = vunpack.c.l.b16 %v253
        %v391 = vunpack.c.l.b16 %v254
        %v392 = vunpack.c.l.b16 %v255
        %v393 = vunpack.c.l.b16 %v256
        %v394 = vunpack.c.l.b16 %v257
        %v395 = vunpack.c.l.b16 %v258
        %v396 = vunpack.c.l.b16 %v259
        %v397 = vunpack.c.l.b16 %v260
        %v398 = vunpack.c.l.b16 %v261
        %v399 = vunpack.c.l.b16 %v262
        %v400 = vunpack.c.l.b16 %v263
        %v401 = vunpack.c.l.b16 %v264
        %v402 = vunpack.c.l.b16 %v265
        %v403 = vunpack.c.l.b16 %v266
        %v404 = vunpack.c.l.b16 %v267
        %v405 = vunpack.c.l.b16 %v268
        %v406 = vunpack.c.l.b16 %v269
        %v407 = vunpack.c.l.b16 %v270
        %v408 = vunpack.c.l.b16 %v271
        %v409 = vunpack.c.l.b16 %v272
        %v410 = vunpack.c.l.b16 %v273
        %v411 = vunpack.c.l.b16 %v274
        %v412 = vunpack.c.l.b16 %v275
        %v413 = vunpack.c.l.b16 %v276
        %v414 = vunpack.c.l.b16 %v277
        %v415 = vunpack.c.l.b16 %v278
        %v416 = vunpack.c.l.b16 %v279
        %v417 = vunpack.c.l.b16 %v280
        %v418 = vunpack.c.l.b16 %v281
        %v419 = vunpack.c.l.b16 %v282
        %v420 = vunpack.c.l.b16 %v283
        %v421 = vunpack.c.l.b16 %v284
        %v422 = vunpack.c.l.b16 %v285
        %v423 = vunpack.c.l.b16 %v286
        %v424 = vunpack.c.l.b16 %v287
        %v425 = vunpack.c.l.b16 %v288
        %v426 = vunpack.c.l.b16 %v289
        %v427 = vunpack.c.l.b16 %v290
        %v428 = vunpack.c.l.b16 %v291
        %v429 = vunpack.c.l.b16 %v292
        %v430 = vunpack.c.l.b16 %v293
        %v431 = vunpack.c.l.b16 %v294
        %v432 = vunpack.c.l.b16 %v295
        %v433 = vunpack.c.l.b16 %v296
        %v434 = vunpack.c.l.b16 %v297
        %v435 = vunpack.c.l.b16 %v298
        %v436 = vunpack.c.l.b16 %v299
        %v437 = vunpack.c.l.b16 %v300
        %v438 = vunpack.c.l.b16 %v301
        %v439 = vunpack.c.l.b16 %v302
        %v440 = vunpack.c.l.b16 %v303
        %v441 = vunpack.c.l.b16 %v304
        %v442 = vunpack.c.l.b16 %v305
        %v443 = vunpack.c.l.b16 %v306
        %v444 = vunpack.c.l.b16 %v307
        %v445 = vunpack.c.l.b16 %v308
        %v446 = vunpack.c.l.b16 %v309
        %v447 = vunpack.c.l.b16 %v310
        %v448 = vunpack.c.l.b16 %v311
        %v449 = vunpack.c.l.b16 %v312
        %v450 = vpack.c.b16 %v387, %v386
        %v451 = vpack.c.b16 %v389, %v388
        %v452 = vpack.c.b16 %v391, %v390
        %v453 = vpack.c.b16 %v393, %v392
        %v454 = vpack.c.b16 %v395, %v394
        %v455 = vpack.c.b16 %v397, %v396
        %v456 = vpack.c.b16 %v399, %v398
        %v457 = vpack.c.b16 %v401, %v400
        %v458 = vpack.c.b16 %v403, %v402
        %v459 = vpack.c.b16 %v405, %v404
        %v460 = vpack.c.b16 %v407, %v406
        %v461 = vpack.c.b16 %v409, %v408
        %v462 = vpack.c.b16 %v411, %v410
        %v463 = vpack.c.b16 %v413, %v412
        %v464 = vpack.c.b16 %v415, %v414
        %v465 = vpack.c.b16 %v417, %v416
        %v466 = vpack.c.b16 %v419, %v418
        %v467 = vpack.c.b16 %v421, %v420
        %v468 = vpack.c.b16 %v423, %v422
        %v469 = vpack.c.b16 %v425, %v424
        %v470 = vpack.c.b16 %v427, %v426
        %v471 = vpack.c.b16 %v429, %v428
        %v472 = vpack.c.b16 %v431, %v430
        %v473 = vpack.c.b16 %v433, %v432
        %v474 = vpack.c.b16 %v435, %v434
        %v475 = vpack.c.b16 %v437, %v436
        %v476 = vpack.c.b16 %v439, %v438
        %v477 = vpack.c.b16 %v441, %v440
        %v478 = vpack.c.b16 %v443, %v442
        %v479 = vpack.c.b16 %v445, %v444
        %v480 = vpack.c.b16 %v447, %v446
        %v481 = vpack.c.b16 %v449, %v448
        %v484 = vunpack.c.l.b16 %v313
        %v485 = vunpack.c.l.b16 %v314
        %v486 = vpack.c.b16 %v485, %v484
        %vm488 = vcmask 130048
        %v490 = vsel %vm488, %v450, 0
        %v493 = vsel %vm488, %v451, 0
        %v496 = vsel %vm488, %v452, 0
        %v499 = vsel %vm488, %v453, 0
        %v502 = vsel %vm488, %v454, 0
        %v505 = vsel %vm488, %v455, 0
        %v508 = vsel %vm488, %v456, 0
        %v511 = vsel %vm488, %v457, 0
        %v514 = vsel %vm488, %v458, 0
        %v517 = vsel %vm488, %v459, 0
        %v520 = vsel %vm488, %v460, 0
        %v523 = vsel %vm488, %v461, 0
        %v526 = vsel %vm488, %v462, 0
        %v529 = vsel %vm488, %v463, 0
        %v532 = vsel %vm488, %v464, 0
        %v535 = vsel %vm488, %v465, 0
        %v538 = vsel %vm488, %v466, 0
        %v541 = vsel %vm488, %v467, 0
        %v544 = vsel %vm488, %v468, 0
        %v547 = vsel %vm488, %v469, 0
        %v550 = vsel %vm488, %v470, 0
        %v553 = vsel %vm488, %v471, 0
        %v556 = vsel %vm488, %v472, 0
        %v559 = vsel %vm488, %v473, 0
        %v562 = vsel %vm488, %v474, 0
        %v565 = vsel %vm488, %v475, 0
        %v568 = vsel %vm488, %v476, 0
        %v571 = vsel %vm488, %v477, 0
        %v574 = vsel %vm488, %v478, 0
        %v577 = vsel %vm488, %v479, 0
        %v580 = vsel %vm488, %v480, 0
        %v583 = vsel %vm488, %v481, 0
        %585 = vmatprep.subr.bf16.mxu0 0
        %586 = vmatpush1.bf16.msra.mxu0 %v486
        %587 = vmatprep.subr.bf16.mxu0 0
        %588 = vmatpush1.bf16.msra.mxu0 0
        %589 = vmatprep.subr.bf16.mxu0 0
        %590 = vmatpush1.bf16.msra.mxu0 0
        %591 = vmatprep.subr.bf16.mxu0 0
        %592 = vmatpush1.bf16.msra.mxu0 0
        %593 = vmatprep.subr.bf16.mxu0 0
        %594 = vmatpush1.bf16.msra.mxu0 0
        %595 = vmatprep.subr.bf16.mxu0 0
        %596 = vmatpush1.bf16.msra.mxu0 0
        %597 = vmatprep.subr.bf16.mxu0 0
        %598 = vmatpush1.bf16.msra.mxu0 0
        %599 = vmatprep.subr.bf16.mxu0 0
        %600 = vmatpush1.bf16.msra.mxu0 0
        %601 = vmatprep.subr.bf16.mxu0 0
        %602 = vmatpush1.bf16.msra.mxu0 0
        %603 = vmatprep.subr.bf16.mxu0 0
        %604 = vmatpush1.bf16.msra.mxu0 0
        %605 = vmatprep.subr.bf16.mxu0 0
        %606 = vmatpush1.bf16.msra.mxu0 0
        %607 = vmatprep.subr.bf16.mxu0 0
        %608 = vmatpush1.bf16.msra.mxu0 0
        %609 = vmatprep.subr.bf16.mxu0 0
        %610 = vmatpush1.bf16.msra.mxu0 0
        %611 = vmatprep.subr.bf16.mxu0 0
        %612 = vmatpush1.bf16.msra.mxu0 0
        %613 = vmatprep.subr.bf16.mxu0 0
        %614 = vmatpush1.bf16.msra.mxu0 0
        %615 = vmatprep.subr.bf16.mxu0 0
        %616 = vmatpush1.bf16.msra.mxu0 0
        %617 = vmatprep.mubr.bf16.mxu0 0
        %618 = vmatmul.mubr.bf16.gmra.mrb[0].mxu0 %v490
        %v619 = vpop.f32.mrb[0].mxu0
        %v620 = vadd.f32 %v320, %v619
        %v621 = vpop.f32.mrb[0].mxu0
        %v622 = vpop.f32.mrb[0].mxu0
        %v623 = vadd.f32 %v320, %v622
        %v624 = vpop.f32.mrb[0].mxu0
        %625 = vmatprep.mubr.bf16.mxu0 0
        %626 = vmatmul.mubr.bf16.gmra.mrb[0].mxu0 %v493
        %v627 = vpop.f32.mrb[0].mxu0
        %v628 = vadd.f32 %v320, %v627
        %v629 = vpop.f32.mrb[0].mxu0
        %v630 = vpop.f32.mrb[0].mxu0
        %v631 = vadd.f32 %v320, %v630
        %v632 = vpop.f32.mrb[0].mxu0
        %633 = vmatprep.mubr.bf16.mxu0 0
        %634 = vmatmul.mubr.bf16.gmra.mrb[0].mxu0 %v496
        %v635 = vpop.f32.mrb[0].mxu0
        %v636 = vadd.f32 %v320, %v635
        %v637 = vpop.f32.mrb[0].mxu0
        %v638 = vpop.f32.mrb[0].mxu0
        %v639 = vadd.f32 %v320, %v638
        %v640 = vpop.f32.mrb[0].mxu0
        %641 = vmatprep.mubr.bf16.mxu0 0
        %642 = vmatmul.mubr.bf16.gmra.mrb[0].mxu0 %v499
        %v643 = vpop.f32.mrb[0].mxu0
        %v644 = vadd.f32 %v320, %v643
        %v645 = vpop.f32.mrb[0].mxu0
        %v646 = vpop.f32.mrb[0].mxu0
        %v647 = vadd.f32 %v320, %v646
        %v648 = vpop.f32.mrb[0].mxu0
        %649 = vmatprep.mubr.bf16.mxu0 0
        %650 = vmatmul.mubr.bf16.gmra.mrb[0].mxu0 %v502
        %v651 = vpop.f32.mrb[0].mxu0
        %v652 = vadd.f32 %v320, %v651
        %v653 = vpop.f32.mrb[0].mxu0
        %v654 = vpop.f32.mrb[0].mxu0
        %v655 = vadd.f32 %v320, %v654
        %v656 = vpop.f32.mrb[0].mxu0
        %657 = vmatprep.mubr.bf16.mxu0 0
        %658 = vmatmul.mubr.bf16.gmra.mrb[0].mxu0 %v505
        %v659 = vpop.f32.mrb[0].mxu0
        %v660 = vadd.f32 %v320, %v659
        %v661 = vpop.f32.mrb[0].mxu0
        %v662 = vpop.f32.mrb[0].mxu0
        %v663 = vadd.f32 %v320, %v662
        %v664 = vpop.f32.mrb[0].mxu0
        %665 = vmatprep.mubr.bf16.mxu0 0
        %666 = vmatmul.mubr.bf16.gmra.mrb[0].mxu0 %v508
        %v667 = vpop.f32.mrb[0].mxu0
        %v668 = vadd.f32 %v320, %v667
        %v669 = vpop.f32.mrb[0].mxu0
        %v670 = vpop.f32.mrb[0].mxu0
        %v671 = vadd.f32 %v320, %v670
        %v672 = vpop.f32.mrb[0].mxu0
        %673 = vmatprep.mubr.bf16.mxu0 0
        %674 = vmatmul.mubr.bf16.gmra.mrb[0].mxu0 %v511
        %v675 = vpop.f32.mrb[0].mxu0
        %v676 = vadd.f32 %v320, %v675
        %v677 = vpop.f32.mrb[0].mxu0
        %v678 = vpop.f32.mrb[0].mxu0
        %v679 = vadd.f32 %v320, %v678
        %v680 = vpop.f32.mrb[0].mxu0
        %681 = vmatprep.mubr.bf16.mxu0 0
        %682 = vmatmul.mubr.bf16.gmra.mrb[0].mxu0 %v514
        %v683 = vpop.f32.mrb[0].mxu0
        %v684 = vadd.f32 %v320, %v683
        %v685 = vpop.f32.mrb[0].mxu0
        %v686 = vpop.f32.mrb[0].mxu0
        %v687 = vadd.f32 %v320, %v686
        %v688 = vpop.f32.mrb[0].mxu0
        %689 = vmatprep.mubr.bf16.mxu0 0
        %690 = vmatmul.mubr.bf16.gmra.mrb[0].mxu0 %v517
        %v691 = vpop.f32.mrb[0].mxu0
        %v692 = vadd.f32 %v320, %v691
        %v693 = vpop.f32.mrb[0].mxu0
        %v694 = vpop.f32.mrb[0].mxu0
        %v695 = vadd.f32 %v320, %v694
        %v696 = vpop.f32.mrb[0].mxu0
        %697 = vmatprep.mubr.bf16.mxu0 0
        %698 = vmatmul.mubr.bf16.gmra.mrb[0].mxu0 %v520
        %v699 = vpop.f32.mrb[0].mxu0
        %v700 = vadd.f32 %v320, %v699
        %v701 = vpop.f32.mrb[0].mxu0
        %v702 = vpop.f32.mrb[0].mxu0
        %v703 = vadd.f32 %v320, %v702
        %v704 = vpop.f32.mrb[0].mxu0
        %705 = vmatprep.mubr.bf16.mxu0 0
        %706 = vmatmul.mubr.bf16.gmra.mrb[0].mxu0 %v523
        %v707 = vpop.f32.mrb[0].mxu0
        %v708 = vadd.f32 %v320, %v707
        %v709 = vpop.f32.mrb[0].mxu0
        %v710 = vpop.f32.mrb[0].mxu0
        %v711 = vadd.f32 %v320, %v710
        %v712 = vpop.f32.mrb[0].mxu0
        %713 = vmatprep.mubr.bf16.mxu0 0
        %714 = vmatmul.mubr.bf16.gmra.mrb[0].mxu0 %v526
        %v715 = vpop.f32.mrb[0].mxu0
        %v716 = vadd.f32 %v320, %v715
        %v717 = vpop.f32.mrb[0].mxu0
        %v718 = vpop.f32.mrb[0].mxu0
        %v719 = vadd.f32 %v320, %v718
        %v720 = vpop.f32.mrb[0].mxu0
        %721 = vmatprep.mubr.bf16.mxu0 0
        %722 = vmatmul.mubr.bf16.gmra.mrb[0].mxu0 %v529
        %v723 = vpop.f32.mrb[0].mxu0
        %v724 = vadd.f32 %v320, %v723
        %v725 = vpop.f32.mrb[0].mxu0
        %v726 = vpop.f32.mrb[0].mxu0
        %v727 = vadd.f32 %v320, %v726
        %v728 = vpop.f32.mrb[0].mxu0
        %729 = vmatprep.mubr.bf16.mxu0 0
        %730 = vmatmul.mubr.bf16.gmra.mrb[0].mxu0 %v532
        %v731 = vpop.f32.mrb[0].mxu0
        %v732 = vadd.f32 %v320, %v731
        %v733 = vpop.f32.mrb[0].mxu0
        %v734 = vpop.f32.mrb[0].mxu0
        %v735 = vadd.f32 %v320, %v734
        %v736 = vpop.f32.mrb[0].mxu0
        %737 = vmatprep.mubr.bf16.mxu0 0
        %738 = vmatmul.mubr.bf16.gmra.mrb[0].mxu0 %v535
        %v739 = vpop.f32.mrb[0].mxu0
        %v740 = vadd.f32 %v320, %v739
        %v741 = vpop.f32.mrb[0].mxu0
        %v742 = vpop.f32.mrb[0].mxu0
        %v743 = vadd.f32 %v320, %v742
        %v744 = vpop.f32.mrb[0].mxu0
        %745 = vmatprep.mubr.bf16.mxu0 0
        %746 = vmatmul.mubr.bf16.gmra.mrb[0].mxu0 %v538
        %v747 = vpop.f32.mrb[0].mxu0
        %v748 = vadd.f32 %v320, %v747
        %v749 = vpop.f32.mrb[0].mxu0
        %v750 = vpop.f32.mrb[0].mxu0
        %v751 = vadd.f32 %v320, %v750
        %v752 = vpop.f32.mrb[0].mxu0
        %753 = vmatprep.mubr.bf16.mxu0 0
        %754 = vmatmul.mubr.bf16.gmra.mrb[0].mxu0 %v541
        %v755 = vpop.f32.mrb[0].mxu0
        %v756 = vadd.f32 %v320, %v755
        %v757 = vpop.f32.mrb[0].mxu0
        %v758 = vpop.f32.mrb[0].mxu0
        %v759 = vadd.f32 %v320, %v758
        %v760 = vpop.f32.mrb[0].mxu0
        %761 = vmatprep.mubr.bf16.mxu0 0
        %762 = vmatmul.mubr.bf16.gmra.mrb[0].mxu0 %v544
        %v763 = vpop.f32.mrb[0].mxu0
        %v764 = vadd.f32 %v320, %v763
        %v765 = vpop.f32.mrb[0].mxu0
        %v766 = vpop.f32.mrb[0].mxu0
        %v767 = vadd.f32 %v320, %v766
        %v768 = vpop.f32.mrb[0].mxu0
        %769 = vmatprep.mubr.bf16.mxu0 0
        %770 = vmatmul.mubr.bf16.gmra.mrb[0].mxu0 %v547
        %v771 = vpop.f32.mrb[0].mxu0
        %v772 = vadd.f32 %v320, %v771
        %v773 = vpop.f32.mrb[0].mxu0
        %v774 = vpop.f32.mrb[0].mxu0
        %v775 = vadd.f32 %v320, %v774
        %v776 = vpop.f32.mrb[0].mxu0
        %777 = vmatprep.mubr.bf16.mxu0 0
        %778 = vmatmul.mubr.bf16.gmra.mrb[0].mxu0 %v550
        %v779 = vpop.f32.mrb[0].mxu0
        %v780 = vadd.f32 %v320, %v779
        %v781 = vpop.f32.mrb[0].mxu0
        %v782 = vpop.f32.mrb[0].mxu0
        %v783 = vadd.f32 %v320, %v782
        %v784 = vpop.f32.mrb[0].mxu0
        %785 = vmatprep.mubr.bf16.mxu0 0
        %786 = vmatmul.mubr.bf16.gmra.mrb[0].mxu0 %v553
        %v787 = vpop.f32.mrb[0].mxu0
        %v788 = vadd.f32 %v320, %v787
        %v789 = vpop.f32.mrb[0].mxu0
        %v790 = vpop.f32.mrb[0].mxu0
        %v791 = vadd.f32 %v320, %v790
        %v792 = vpop.f32.mrb[0].mxu0
        %793 = vmatprep.mubr.bf16.mxu0 0
        %794 = vmatmul.mubr.bf16.gmra.mrb[0].mxu0 %v556
        %v795 = vpop.f32.mrb[0].mxu0
        %v796 = vadd.f32 %v320, %v795
        %v797 = vpop.f32.mrb[0].mxu0
        %v798 = vpop.f32.mrb[0].mxu0
        %v799 = vadd.f32 %v320, %v798
        %v800 = vpop.f32.mrb[0].mxu0
        %801 = vmatprep.mubr.bf16.mxu0 0
        %802 = vmatmul.mubr.bf16.gmra.mrb[0].mxu0 %v559
        %v803 = vpop.f32.mrb[0].mxu0
        %v804 = vadd.f32 %v320, %v803
        %v805 = vpop.f32.mrb[0].mxu0
        %v806 = vpop.f32.mrb[0].mxu0
        %v807 = vadd.f32 %v320, %v806
        %v808 = vpop.f32.mrb[0].mxu0
        %809 = vmatprep.mubr.bf16.mxu0 0
        %810 = vmatmul.mubr.bf16.gmra.mrb[0].mxu0 %v562
        %v811 = vpop.f32.mrb[0].mxu0
        %v812 = vadd.f32 %v320, %v811
        %v813 = vpop.f32.mrb[0].mxu0
        %v814 = vpop.f32.mrb[0].mxu0
        %v815 = vadd.f32 %v320, %v814
        %v816 = vpop.f32.mrb[0].mxu0
        %817 = vmatprep.mubr.bf16.mxu0 0
        %818 = vmatmul.mubr.bf16.gmra.mrb[0].mxu0 %v565
        %v819 = vpop.f32.mrb[0].mxu0
        %v820 = vadd.f32 %v320, %v819
        %v821 = vpop.f32.mrb[0].mxu0
        %v822 = vpop.f32.mrb[0].mxu0
        %v823 = vadd.f32 %v320, %v822
        %v824 = vpop.f32.mrb[0].mxu0
        %825 = vmatprep.mubr.bf16.mxu0 0
        %826 = vmatmul.mubr.bf16.gmra.mrb[0].mxu0 %v568
        %v827 = vpop.f32.mrb[0].mxu0
        %v828 = vadd.f32 %v320, %v827
        %v829 = vpop.f32.mrb[0].mxu0
        %v830 = vpop.f32.mrb[0].mxu0
        %v831 = vadd.f32 %v320, %v830
        %v832 = vpop.f32.mrb[0].mxu0
        %833 = vmatprep.mubr.bf16.mxu0 0
        %834 = vmatmul.mubr.bf16.gmra.mrb[0].mxu0 %v571
        %v835 = vpop.f32.mrb[0].mxu0
        %v836 = vadd.f32 %v320, %v835
        %v837 = vpop.f32.mrb[0].mxu0
        %v838 = vpop.f32.mrb[0].mxu0
        %v839 = vadd.f32 %v320, %v838
        %v840 = vpop.f32.mrb[0].mxu0
        %841 = vmatprep.mubr.bf16.mxu0 0
        %842 = vmatmul.mubr.bf16.gmra.mrb[0].mxu0 %v574
        %v843 = vpop.f32.mrb[0].mxu0
        %v844 = vadd.f32 %v320, %v843
        %v845 = vpop.f32.mrb[0].mxu0
        %v846 = vpop.f32.mrb[0].mxu0
        %v847 = vadd.f32 %v320, %v846
        %v848 = vpop.f32.mrb[0].mxu0
        %849 = vmatprep.mubr.bf16.mxu0 0
        %850 = vmatmul.mubr.bf16.gmra.mrb[0].mxu0 %v577
        %v851 = vpop.f32.mrb[0].mxu0
        %v852 = vadd.f32 %v320, %v851
        %v853 = vpop.f32.mrb[0].mxu0
        %v854 = vpop.f32.mrb[0].mxu0
        %v855 = vadd.f32 %v320, %v854
        %v856 = vpop.f32.mrb[0].mxu0
        %857 = vmatprep.mubr.bf16.mxu0 0
        %858 = vmatmul.mubr.bf16.gmra.mrb[0].mxu0 %v580
        %v859 = vpop.f32.mrb[0].mxu0
        %v860 = vadd.f32 %v320, %v859
        %v861 = vpop.f32.mrb[0].mxu0
        %v862 = vpop.f32.mrb[0].mxu0
        %v863 = vadd.f32 %v320, %v862
        %v864 = vpop.f32.mrb[0].mxu0
        %865 = vmatprep.mubr.bf16.mxu0 0
        %866 = vmatmul.mubr.bf16.gmra.mrb[0].mxu0 %v583
        %v867 = vpop.f32.mrb[0].mxu0
        %v868 = vadd.f32 %v320, %v867
        %v869 = vpop.f32.mrb[0].mxu0
        %v870 = vpop.f32.mrb[0].mxu0
        %v871 = vadd.f32 %v320, %v870
        %v872 = vpop.f32.mrb[0].mxu0
        %873 = vdwg.mxu0
        %v874 = vmax.f32 %v620, 0.0
        %v875 = vmax.f32 %v623, 0.0
        %v876 = vmax.f32 %v628, 0.0
        %v877 = vmax.f32 %v631, 0.0
        %v878 = vmax.f32 %v636, 0.0
        %v879 = vmax.f32 %v639, 0.0
        %v880 = vmax.f32 %v644, 0.0
        %v881 = vmax.f32 %v647, 0.0
        %v882 = vmax.f32 %v652, 0.0
        %v883 = vmax.f32 %v655, 0.0
        %v884 = vmax.f32 %v660, 0.0
        %v885 = vmax.f32 %v663, 0.0
        %v886 = vmax.f32 %v668, 0.0
        %v887 = vmax.f32 %v671, 0.0
        %v888 = vmax.f32 %v676, 0.0
        %v889 = vmax.f32 %v679, 0.0
        %v890 = vmax.f32 %v684, 0.0
        %v891 = vmax.f32 %v687, 0.0
        %v892 = vmax.f32 %v692, 0.0
        %v893 = vmax.f32 %v695, 0.0
        %v894 = vmax.f32 %v700, 0.0
        %v895 = vmax.f32 %v703, 0.0
        %v896 = vmax.f32 %v708, 0.0
        %v897 = vmax.f32 %v711, 0.0
        %v898 = vmax.f32 %v716, 0.0
        %v899 = vmax.f32 %v719, 0.0
        %v900 = vmax.f32 %v724, 0.0
        %v901 = vmax.f32 %v727, 0.0
        %v902 = vmax.f32 %v732, 0.0
        %v903 = vmax.f32 %v735, 0.0
        %v904 = vmax.f32 %v740, 0.0
        %v905 = vmax.f32 %v743, 0.0
        %v906 = vmax.f32 %v748, 0.0
        %v907 = vmax.f32 %v751, 0.0
        %v908 = vmax.f32 %v756, 0.0
        %v909 = vmax.f32 %v759, 0.0
        %v910 = vmax.f32 %v764, 0.0
        %v911 = vmax.f32 %v767, 0.0
        %v912 = vmax.f32 %v772, 0.0
        %v913 = vmax.f32 %v775, 0.0
        %v914 = vmax.f32 %v780, 0.0
        %v915 = vmax.f32 %v783, 0.0
        %v916 = vmax.f32 %v788, 0.0
        %v917 = vmax.f32 %v791, 0.0
        %v918 = vmax.f32 %v796, 0.0
        %v919 = vmax.f32 %v799, 0.0
        %v920 = vmax.f32 %v804, 0.0
        %v921 = vmax.f32 %v807, 0.0
        %v922 = vmax.f32 %v812, 0.0
        %v923 = vmax.f32 %v815, 0.0
        %v924 = vmax.f32 %v820, 0.0
        %v925 = vmax.f32 %v823, 0.0
        %v926 = vmax.f32 %v828, 0.0
        %v927 = vmax.f32 %v831, 0.0
        %v928 = vmax.f32 %v836, 0.0
        %v929 = vmax.f32 %v839, 0.0
        %v930 = vmax.f32 %v844, 0.0
        %v931 = vmax.f32 %v847, 0.0
        %v932 = vmax.f32 %v852, 0.0
        %v933 = vmax.f32 %v855, 0.0
        %v934 = vmax.f32 %v860, 0.0
        %v935 = vmax.f32 %v863, 0.0
        %v936 = vmax.f32 %v868, 0.0
        %v937 = vmax.f32 %v871, 0.0
        %v938 = vpack.c.bf16 %v875, %v874
        %v939 = vpack.c.bf16 %v877, %v876
        %v940 = vpack.c.bf16 %v879, %v878
        %v941 = vpack.c.bf16 %v881, %v880
        %v942 = vpack.c.bf16 %v883, %v882
        %v943 = vpack.c.bf16 %v885, %v884
        %v944 = vpack.c.bf16 %v887, %v886
        %v945 = vpack.c.bf16 %v889, %v888
        %v946 = vpack.c.bf16 %v891, %v890
        %v947 = vpack.c.bf16 %v893, %v892
        %v948 = vpack.c.bf16 %v895, %v894
        %v949 = vpack.c.bf16 %v897, %v896
        %v950 = vpack.c.bf16 %v899, %v898
        %v951 = vpack.c.bf16 %v901, %v900
        %v952 = vpack.c.bf16 %v903, %v902
        %v953 = vpack.c.bf16 %v905, %v904
        %v954 = vpack.c.bf16 %v907, %v906
        %v955 = vpack.c.bf16 %v909, %v908
        %v956 = vpack.c.bf16 %v911, %v910
        %v957 = vpack.c.bf16 %v913, %v912
        %v958 = vpack.c.bf16 %v915, %v914
        %v959 = vpack.c.bf16 %v917, %v916
        %v960 = vpack.c.bf16 %v919, %v918
        %v961 = vpack.c.bf16 %v921, %v920
        %v962 = vpack.c.bf16 %v923, %v922
        %v963 = vpack.c.bf16 %v925, %v924
        %v964 = vpack.c.bf16 %v927, %v926
        %v965 = vpack.c.bf16 %v929, %v928
        %v966 = vpack.c.bf16 %v931, %v930
        %v967 = vpack.c.bf16 %v933, %v932
        %v968 = vpack.c.bf16 %v935, %v934
        %v969 = vpack.c.bf16 %v937, %v936
        %v1002 = vunpack.c.l.b16 %v938
        %v1003 = vunpack.c.h.b16 %v938
        %v1004 = vunpack.c.l.b16 %v939
        %v1005 = vunpack.c.h.b16 %v939
        %v1006 = vunpack.c.l.b16 %v940
        %v1007 = vunpack.c.h.b16 %v940
        %v1008 = vunpack.c.l.b16 %v941
        %v1009 = vunpack.c.h.b16 %v941
        %v1010 = vunpack.c.l.b16 %v942
        %v1011 = vunpack.c.h.b16 %v942
        %v1012 = vunpack.c.l.b16 %v943
        %v1013 = vunpack.c.h.b16 %v943
        %v1014 = vunpack.c.l.b16 %v944
        %v1015 = vunpack.c.h.b16 %v944
        %v1016 = vunpack.c.l.b16 %v945
        %v1017 = vunpack.c.h.b16 %v945
        %v1018 = vunpack.c.l.b16 %v946
        %v1019 = vunpack.c.h.b16 %v946
        %v1020 = vunpack.c.l.b16 %v947
        %v1021 = vunpack.c.h.b16 %v947
        %v1022 = vunpack.c.l.b16 %v948
        %v1023 = vunpack.c.h.b16 %v948
        %v1024 = vunpack.c.l.b16 %v949
        %v1025 = vunpack.c.h.b16 %v949
        %v1026 = vunpack.c.l.b16 %v950
        %v1027 = vunpack.c.h.b16 %v950
        %v1028 = vunpack.c.l.b16 %v951
        %v1029 = vunpack.c.h.b16 %v951
        %v1030 = vunpack.c.l.b16 %v952
        %v1031 = vunpack.c.h.b16 %v952
        %v1032 = vunpack.c.l.b16 %v953
        %v1033 = vunpack.c.h.b16 %v953
        %v1034 = vunpack.c.l.b16 %v954
        %v1035 = vunpack.c.h.b16 %v954
        %v1036 = vunpack.c.l.b16 %v955
        %v1037 = vunpack.c.h.b16 %v955
        %v1038 = vunpack.c.l.b16 %v956
        %v1039 = vunpack.c.h.b16 %v956
        %v1040 = vunpack.c.l.b16 %v957
        %v1041 = vunpack.c.h.b16 %v957
        %v1042 = vunpack.c.l.b16 %v958
        %v1043 = vunpack.c.h.b16 %v958
        %v1044 = vunpack.c.l.b16 %v959
        %v1045 = vunpack.c.h.b16 %v959
        %v1046 = vunpack.c.l.b16 %v960
        %v1047 = vunpack.c.h.b16 %v960
        %v1048 = vunpack.c.l.b16 %v961
        %v1049 = vunpack.c.h.b16 %v961
        %v1050 = vunpack.c.l.b16 %v962
        %v1051 = vunpack.c.h.b16 %v962
        %v1052 = vunpack.c.l.b16 %v963
        %v1053 = vunpack.c.h.b16 %v963
        %v1054 = vunpack.c.l.b16 %v964
        %v1055 = vunpack.c.h.b16 %v964
        %v1056 = vunpack.c.l.b16 %v965
        %v1057 = vunpack.c.h.b16 %v965
        %v1058 = vunpack.c.l.b16 %v966
        %v1059 = vunpack.c.h.b16 %v966
        %v1060 = vunpack.c.l.b16 %v967
        %v1061 = vunpack.c.h.b16 %v967
        %v1062 = vunpack.c.l.b16 %v968
        %v1063 = vunpack.c.h.b16 %v968
        %v1064 = vunpack.c.l.b16 %v969
        %v1065 = vunpack.c.h.b16 %v969
        %v1066 = vpack.c.b16 %v1002, %v1002
        %v1067 = vpack.c.b16 %v1003, %v1003
        %v1068 = vpack.c.b16 %v1004, %v1004
        %v1069 = vpack.c.b16 %v1005, %v1005
        %v1070 = vpack.c.b16 %v1006, %v1006
        %v1071 = vpack.c.b16 %v1007, %v1007
        %v1072 = vpack.c.b16 %v1008, %v1008
        %v1073 = vpack.c.b16 %v1009, %v1009
        %v1074 = vpack.c.b16 %v1010, %v1010
        %v1075 = vpack.c.b16 %v1011, %v1011
        %v1076 = vpack.c.b16 %v1012, %v1012
        %v1077 = vpack.c.b16 %v1013, %v1013
        %v1078 = vpack.c.b16 %v1014, %v1014
        %v1079 = vpack.c.b16 %v1015, %v1015
        %v1080 = vpack.c.b16 %v1016, %v1016
        %v1081 = vpack.c.b16 %v1017, %v1017
        %v1082 = vpack.c.b16 %v1018, %v1018
        %v1083 = vpack.c.b16 %v1019, %v1019
        %v1084 = vpack.c.b16 %v1020, %v1020
        %v1085 = vpack.c.b16 %v1021, %v1021
        %v1086 = vpack.c.b16 %v1022, %v1022
        %v1087 = vpack.c.b16 %v1023, %v1023
        %v1088 = vpack.c.b16 %v1024, %v1024
        %v1089 = vpack.c.b16 %v1025, %v1025
        %v1090 = vpack.c.b16 %v1026, %v1026
        %v1091 = vpack.c.b16 %v1027, %v1027
        %v1092 = vpack.c.b16 %v1028, %v1028
        %v1093 = vpack.c.b16 %v1029, %v1029
        %v1094 = vpack.c.b16 %v1030, %v1030
        %v1095 = vpack.c.b16 %v1031, %v1031
        %v1096 = vpack.c.b16 %v1032, %v1032
        %v1097 = vpack.c.b16 %v1033, %v1033
        %v1098 = vpack.c.b16 %v1034, %v1034
        %v1099 = vpack.c.b16 %v1035, %v1035
        %v1100 = vpack.c.b16 %v1036, %v1036
        %v1101 = vpack.c.b16 %v1037, %v1037
        %v1102 = vpack.c.b16 %v1038, %v1038
        %v1103 = vpack.c.b16 %v1039, %v1039
        %v1104 = vpack.c.b16 %v1040, %v1040
        %v1105 = vpack.c.b16 %v1041, %v1041
        %v1106 = vpack.c.b16 %v1042, %v1042
        %v1107 = vpack.c.b16 %v1043, %v1043
        %v1108 = vpack.c.b16 %v1044, %v1044
        %v1109 = vpack.c.b16 %v1045, %v1045
        %v1110 = vpack.c.b16 %v1046, %v1046
        %v1111 = vpack.c.b16 %v1047, %v1047
        %v1112 = vpack.c.b16 %v1048, %v1048
        %v1113 = vpack.c.b16 %v1049, %v1049
        %v1114 = vpack.c.b16 %v1050, %v1050
        %v1115 = vpack.c.b16 %v1051, %v1051
        %v1116 = vpack.c.b16 %v1052, %v1052
        %v1117 = vpack.c.b16 %v1053, %v1053
        %v1118 = vpack.c.b16 %v1054, %v1054
        %v1119 = vpack.c.b16 %v1055, %v1055
        %v1120 = vpack.c.b16 %v1056, %v1056
        %v1121 = vpack.c.b16 %v1057, %v1057
        %v1122 = vpack.c.b16 %v1058, %v1058
        %v1123 = vpack.c.b16 %v1059, %v1059
        %v1124 = vpack.c.b16 %v1060, %v1060
        %v1125 = vpack.c.b16 %v1061, %v1061
        %v1126 = vpack.c.b16 %v1062, %v1062
        %v1127 = vpack.c.b16 %v1063, %v1063
        %v1128 = vpack.c.b16 %v1064, %v1064
        %v1129 = vpack.c.b16 %v1065, %v1065
        %vm1194 = vcmask 257024
        %1195 = vst.msk [vmem:[%s228] sm:$0xf] %vm1194, %v1066
        %1196 = vst.msk [vmem:[%s228 + $0x4] sm:$0xf] %vm1194, %v1067
        %1197 = vst.msk [vmem:[%s228 + $0x8] sm:$0xf] %vm1194, %v1068
        %1198 = vst.msk [vmem:[%s228 + $0xc] sm:$0xf] %vm1194, %v1069
        %1199 = vst.msk [vmem:[%s228 + $0x10] sm:$0xf] %vm1194, %v1070
        %1200 = vst.msk [vmem:[%s228 + $0x14] sm:$0xf] %vm1194, %v1071
        %1201 = vst.msk [vmem:[%s228 + $0x18] sm:$0xf] %vm1194, %v1072
        %1202 = vst.msk [vmem:[%s228 + $0x1c] sm:$0xf] %vm1194, %v1073
        %1203 = vst.msk [vmem:[%s228 + $0x20] sm:$0xf] %vm1194, %v1074
        %1204 = vst.msk [vmem:[%s228 + $0x24] sm:$0xf] %vm1194, %v1075
        %1205 = vst.msk [vmem:[%s228 + $0x28] sm:$0xf] %vm1194, %v1076
        %1206 = vst.msk [vmem:[%s228 + $0x2c] sm:$0xf] %vm1194, %v1077
        %1207 = vst.msk [vmem:[%s228 + $0x30] sm:$0xf] %vm1194, %v1078
        %1208 = vst.msk [vmem:[%s228 + $0x34] sm:$0xf] %vm1194, %v1079
        %1209 = vst.msk [vmem:[%s228 + $0x38] sm:$0xf] %vm1194, %v1080
        %1210 = vst.msk [vmem:[%s228 + $0x3c] sm:$0xf] %vm1194, %v1081
        %1211 = vst.msk [vmem:[%s228 + $0x40] sm:$0xf] %vm1194, %v1082
        %1212 = vst.msk [vmem:[%s228 + $0x44] sm:$0xf] %vm1194, %v1083
        %1213 = vst.msk [vmem:[%s228 + $0x48] sm:$0xf] %vm1194, %v1084
        %1214 = vst.msk [vmem:[%s228 + $0x4c] sm:$0xf] %vm1194, %v1085
        %1215 = vst.msk [vmem:[%s228 + $0x50] sm:$0xf] %vm1194, %v1086
        %1216 = vst.msk [vmem:[%s228 + $0x54] sm:$0xf] %vm1194, %v1087
        %1217 = vst.msk [vmem:[%s228 + $0x58] sm:$0xf] %vm1194, %v1088
        %1218 = vst.msk [vmem:[%s228 + $0x5c] sm:$0xf] %vm1194, %v1089
        %1219 = vst.msk [vmem:[%s228 + $0x60] sm:$0xf] %vm1194, %v1090
        %1220 = vst.msk [vmem:[%s228 + $0x64] sm:$0xf] %vm1194, %v1091
        %1221 = vst.msk [vmem:[%s228 + $0x68] sm:$0xf] %vm1194, %v1092
        %1222 = vst.msk [vmem:[%s228 + $0x6c] sm:$0xf] %vm1194, %v1093
        %1223 = vst.msk [vmem:[%s228 + $0x70] sm:$0xf] %vm1194, %v1094
        %1224 = vst.msk [vmem:[%s228 + $0x74] sm:$0xf] %vm1194, %v1095
        %1225 = vst.msk [vmem:[%s228 + $0x78] sm:$0xf] %vm1194, %v1096
        %1226 = vst.msk [vmem:[%s228 + $0x7c] sm:$0xf] %vm1194, %v1097
        %1227 = vst.msk [vmem:[%s228 + $0x80] sm:$0xf] %vm1194, %v1098
        %1228 = vst.msk [vmem:[%s228 + $0x84] sm:$0xf] %vm1194, %v1099
        %1229 = vst.msk [vmem:[%s228 + $0x88] sm:$0xf] %vm1194, %v1100
        %1230 = vst.msk [vmem:[%s228 + $0x8c] sm:$0xf] %vm1194, %v1101
        %1231 = vst.msk [vmem:[%s228 + $0x90] sm:$0xf] %vm1194, %v1102
        %1232 = vst.msk [vmem:[%s228 + $0x94] sm:$0xf] %vm1194, %v1103
        %1233 = vst.msk [vmem:[%s228 + $0x98] sm:$0xf] %vm1194, %v1104
        %1234 = vst.msk [vmem:[%s228 + $0x9c] sm:$0xf] %vm1194, %v1105
        %1235 = vst.msk [vmem:[%s228 + $0xa0] sm:$0xf] %vm1194, %v1106
        %1236 = vst.msk [vmem:[%s228 + $0xa4] sm:$0xf] %vm1194, %v1107
        %1237 = vst.msk [vmem:[%s228 + $0xa8] sm:$0xf] %vm1194, %v1108
        %1238 = vst.msk [vmem:[%s228 + $0xac] sm:$0xf] %vm1194, %v1109
        %1239 = vst.msk [vmem:[%s228 + $0xb0] sm:$0xf] %vm1194, %v1110
        %1240 = vst.msk [vmem:[%s228 + $0xb4] sm:$0xf] %vm1194, %v1111
        %1241 = vst.msk [vmem:[%s228 + $0xb8] sm:$0xf] %vm1194, %v1112
        %1242 = vst.msk [vmem:[%s228 + $0xbc] sm:$0xf] %vm1194, %v1113
        %1243 = vst.msk [vmem:[%s228 + $0xc0] sm:$0xf] %vm1194, %v1114
        %1244 = vst.msk [vmem:[%s228 + $0xc4] sm:$0xf] %vm1194, %v1115
        %1245 = vst.msk [vmem:[%s228 + $0xc8] sm:$0xf] %vm1194, %v1116
        %1246 = vst.msk [vmem:[%s228 + $0xcc] sm:$0xf] %vm1194, %v1117
        %1247 = vst.msk [vmem:[%s228 + $0xd0] sm:$0xf] %vm1194, %v1118
        %1248 = vst.msk [vmem:[%s228 + $0xd4] sm:$0xf] %vm1194, %v1119
        %1249 = vst.msk [vmem:[%s228 + $0xd8] sm:$0xf] %vm1194, %v1120
        %1250 = vst.msk [vmem:[%s228 + $0xdc] sm:$0xf] %vm1194, %v1121
        %1251 = vst.msk [vmem:[%s228 + $0xe0] sm:$0xf] %vm1194, %v1122
        %1252 = vst.msk [vmem:[%s228 + $0xe4] sm:$0xf] %vm1194, %v1123
        %1253 = vst.msk [vmem:[%s228 + $0xe8] sm:$0xf] %vm1194, %v1124
        %1254 = vst.msk [vmem:[%s228 + $0xec] sm:$0xf] %vm1194, %v1125
        %1255 = vst.msk [vmem:[%s228 + $0xf0] sm:$0xf] %vm1194, %v1126
        %1256 = vst.msk [vmem:[%s228 + $0xf4] sm:$0xf] %vm1194, %v1127
        %1257 = vst.msk [vmem:[%s228 + $0xf8] sm:$0xf] %vm1194, %v1128
        %1258 = vst.msk [vmem:[%s228 + $0xfc] sm:$0xf] %vm1194, %v1129
        %s1259 = sand.u32 %s116, 1
        %s1260 = sand.u32 %s116, 1
        %s1261 = smul.addr %s1260, 256
        %s1262 = scalar_lea.vmem [#allocation6], %s1261
        // Predicated region
        $region41: #{model_image_scratch_forward.5} parent=31 // pred_check
          %p1263 = pneg %p126
        $region42: #{model_image_scratch_forward.5} parent=31 // pred_check_branch
          %1265 = sbr.rel (%p1263) target = $region44
        $region43: #{model_image_scratch_forward.5} parent=31 // pred_region
          %s1266 = smul.u32 64, %s20
          %s1267 = ssub.s32 241, %s1266
          %p1268 = scmp.lt.s32.totalorder %s1267, 64
          %s1269 = scalar_select %p1268, %s1267, 64
          %s1270 = smul.u32 64, %s1269
          %p1271 = scmp.ne.s32.totalorder 0, %s1270
          %s1272 = sadd.s32 %s21, %s1266
          %s1273 = smul.addr %s1272, 4
          %s1274 = scalar_lea.vmem %s3, %s1273
          // Predicated region
          $region45: #{model_image_scratch_forward.5} parent=43 // pred_check
            %p1275 = pneg %p1271
          $region46: #{model_image_scratch_forward.5} parent=43 // pred_check_branch
            %1277 = sbr.rel (%p1275) target = $region48
          $region47: #{model_image_scratch_forward.5} parent=43 // pred_region
            // Predicated region
            $region49: #{model_image_scratch_forward.5} parent=47 // pred_check
              _
            $region50: #{model_image_scratch_forward.5} parent=47 // pred_check_branch
              %1279 = sbr.rel target = $region52
            $region51: #{model_image_scratch_forward.5} parent=47 // pred_region
              // Predicated region
              $region71: #{model_image_scratch_forward.5} parent=51 // pred_check
                _
              $region72: #{model_image_scratch_forward.5} parent=51 // pred_check_branch
                %1454 = sbr.rel (0) target = $region74
              $region73: #{model_image_scratch_forward.5} parent=51 // pred_region
                %s1456 = sshrl.u32 %s1269, 6
                // While loop
                $region75: #{model_image_scratch_forward.5} parent=73 // loop_pre_header
                  _
                $region76: #{model_image_scratch_forward.5} parent=73 // loop_header
                  %s1458 = sphi 0, %s1460
                  %p1459 = scmp.ge.s32.totalorder %s1458, %s1456
                  %s1463 = sphi 0, %s1596
                  %s1464 = sphi %s1262, %s1599
                  %s1465 = sphi %s1274, %s1600
                $region77: #{model_image_scratch_forward.5} parent=73 // loop_header_branch
                  %1462 = sbr.rel (%p1459) target = $region81
                $region78: #{model_image_scratch_forward.5} parent=73 // loop_body
                  %v1466 = vld [vmem:[%s1464] sm:$0xf]
                  %1467 = vst [vmem:[%s1465] sm:$0xf] %v1466
                  %v1468 = vld [vmem:[%s1464 + $0x4] sm:$0xf]
                  %1469 = vst [vmem:[%s1465 + $0x4] sm:$0xf] %v1468
                  %v1470 = vld [vmem:[%s1464 + $0x8] sm:$0xf]
                  %1471 = vst [vmem:[%s1465 + $0x8] sm:$0xf] %v1470
                  %v1472 = vld [vmem:[%s1464 + $0xc] sm:$0xf]
                  %1473 = vst [vmem:[%s1465 + $0xc] sm:$0xf] %v1472
                  %v1474 = vld [vmem:[%s1464 + $0x10] sm:$0xf]
                  %1475 = vst [vmem:[%s1465 + $0x10] sm:$0xf] %v1474
                  %v1476 = vld [vmem:[%s1464 + $0x14] sm:$0xf]
                  %1477 = vst [vmem:[%s1465 + $0x14] sm:$0xf] %v1476
                  %v1478 = vld [vmem:[%s1464 + $0x18] sm:$0xf]
                  %1479 = vst [vmem:[%s1465 + $0x18] sm:$0xf] %v1478
                  %v1480 = vld [vmem:[%s1464 + $0x1c] sm:$0xf]
                  %1481 = vst [vmem:[%s1465 + $0x1c] sm:$0xf] %v1480
                  %v1482 = vld [vmem:[%s1464 + $0x20] sm:$0xf]
                  %1483 = vst [vmem:[%s1465 + $0x20] sm:$0xf] %v1482
                  %v1484 = vld [vmem:[%s1464 + $0x24] sm:$0xf]
                  %1485 = vst [vmem:[%s1465 + $0x24] sm:$0xf] %v1484
                  %v1486 = vld [vmem:[%s1464 + $0x28] sm:$0xf]
                  %1487 = vst [vmem:[%s1465 + $0x28] sm:$0xf] %v1486
                  %v1488 = vld [vmem:[%s1464 + $0x2c] sm:$0xf]
                  %1489 = vst [vmem:[%s1465 + $0x2c] sm:$0xf] %v1488
                  %v1490 = vld [vmem:[%s1464 + $0x30] sm:$0xf]
                  %1491 = vst [vmem:[%s1465 + $0x30] sm:$0xf] %v1490
                  %v1492 = vld [vmem:[%s1464 + $0x34] sm:$0xf]
                  %1493 = vst [vmem:[%s1465 + $0x34] sm:$0xf] %v1492
                  %v1494 = vld [vmem:[%s1464 + $0x38] sm:$0xf]
                  %1495 = vst [vmem:[%s1465 + $0x38] sm:$0xf] %v1494
                  %v1496 = vld [vmem:[%s1464 + $0x3c] sm:$0xf]
                  %1497 = vst [vmem:[%s1465 + $0x3c] sm:$0xf] %v1496
                  %v1498 = vld [vmem:[%s1464 + $0x40] sm:$0xf]
                  %1499 = vst [vmem:[%s1465 + $0x40] sm:$0xf] %v1498
                  %v1500 = vld [vmem:[%s1464 + $0x44] sm:$0xf]
                  %1501 = vst [vmem:[%s1465 + $0x44] sm:$0xf] %v1500
                  %v1502 = vld [vmem:[%s1464 + $0x48] sm:$0xf]
                  %1503 = vst [vmem:[%s1465 + $0x48] sm:$0xf] %v1502
                  %v1504 = vld [vmem:[%s1464 + $0x4c] sm:$0xf]
                  %1505 = vst [vmem:[%s1465 + $0x4c] sm:$0xf] %v1504
                  %v1506 = vld [vmem:[%s1464 + $0x50] sm:$0xf]
                  %1507 = vst [vmem:[%s1465 + $0x50] sm:$0xf] %v1506
                  %v1508 = vld [vmem:[%s1464 + $0x54] sm:$0xf]
                  %1509 = vst [vmem:[%s1465 + $0x54] sm:$0xf] %v1508
                  %v1510 = vld [vmem:[%s1464 + $0x58] sm:$0xf]
                  %1511 = vst [vmem:[%s1465 + $0x58] sm:$0xf] %v1510
                  %v1512 = vld [vmem:[%s1464 + $0x5c] sm:$0xf]
                  %1513 = vst [vmem:[%s1465 + $0x5c] sm:$0xf] %v1512
                  %v1514 = vld [vmem:[%s1464 + $0x60] sm:$0xf]
                  %1515 = vst [vmem:[%s1465 + $0x60] sm:$0xf] %v1514
                  %v1516 = vld [vmem:[%s1464 + $0x64] sm:$0xf]
                  %1517 = vst [vmem:[%s1465 + $0x64] sm:$0xf] %v1516
                  %v1518 = vld [vmem:[%s1464 + $0x68] sm:$0xf]
                  %1519 = vst [vmem:[%s1465 + $0x68] sm:$0xf] %v1518
                  %v1520 = vld [vmem:[%s1464 + $0x6c] sm:$0xf]
                  %1521 = vst [vmem:[%s1465 + $0x6c] sm:$0xf] %v1520
                  %v1522 = vld [vmem:[%s1464 + $0x70] sm:$0xf]
                  %1523 = vst [vmem:[%s1465 + $0x70] sm:$0xf] %v1522
                  %v1524 = vld [vmem:[%s1464 + $0x74] sm:$0xf]
                  %1525 = vst [vmem:[%s1465 + $0x74] sm:$0xf] %v1524
                  %v1526 = vld [vmem:[%s1464 + $0x78] sm:$0xf]
                  %1527 = vst [vmem:[%s1465 + $0x78] sm:$0xf] %v1526
                  %v1528 = vld [vmem:[%s1464 + $0x7c] sm:$0xf]
                  %1529 = vst [vmem:[%s1465 + $0x7c] sm:$0xf] %v1528
                  %v1530 = vld [vmem:[%s1464 + $0x80] sm:$0xf]
                  %1531 = vst [vmem:[%s1465 + $0x80] sm:$0xf] %v1530
                  %v1532 = vld [vmem:[%s1464 + $0x84] sm:$0xf]
                  %1533 = vst [vmem:[%s1465 + $0x84] sm:$0xf] %v1532
                  %v1534 = vld [vmem:[%s1464 + $0x88] sm:$0xf]
                  %1535 = vst [vmem:[%s1465 + $0x88] sm:$0xf] %v1534
                  %v1536 = vld [vmem:[%s1464 + $0x8c] sm:$0xf]
                  %1537 = vst [vmem:[%s1465 + $0x8c] sm:$0xf] %v1536
                  %v1538 = vld [vmem:[%s1464 + $0x90] sm:$0xf]
                  %1539 = vst [vmem:[%s1465 + $0x90] sm:$0xf] %v1538
                  %v1540 = vld [vmem:[%s1464 + $0x94] sm:$0xf]
                  %1541 = vst [vmem:[%s1465 + $0x94] sm:$0xf] %v1540
                  %v1542 = vld [vmem:[%s1464 + $0x98] sm:$0xf]
                  %1543 = vst [vmem:[%s1465 + $0x98] sm:$0xf] %v1542
                  %v1544 = vld [vmem:[%s1464 + $0x9c] sm:$0xf]
                  %1545 = vst [vmem:[%s1465 + $0x9c] sm:$0xf] %v1544
                  %v1546 = vld [vmem:[%s1464 + $0xa0] sm:$0xf]
                  %1547 = vst [vmem:[%s1465 + $0xa0] sm:$0xf] %v1546
                  %v1548 = vld [vmem:[%s1464 + $0xa4] sm:$0xf]
                  %1549 = vst [vmem:[%s1465 + $0xa4] sm:$0xf] %v1548
                  %v1550 = vld [vmem:[%s1464 + $0xa8] sm:$0xf]
                  %1551 = vst [vmem:[%s1465 + $0xa8] sm:$0xf] %v1550
                  %v1552 = vld [vmem:[%s1464 + $0xac] sm:$0xf]
                  %1553 = vst [vmem:[%s1465 + $0xac] sm:$0xf] %v1552
                  %v1554 = vld [vmem:[%s1464 + $0xb0] sm:$0xf]
                  %1555 = vst [vmem:[%s1465 + $0xb0] sm:$0xf] %v1554
                  %v1556 = vld [vmem:[%s1464 + $0xb4] sm:$0xf]
                  %1557 = vst [vmem:[%s1465 + $0xb4] sm:$0xf] %v1556
                  %v1558 = vld [vmem:[%s1464 + $0xb8] sm:$0xf]
                  %1559 = vst [vmem:[%s1465 + $0xb8] sm:$0xf] %v1558
                  %v1560 = vld [vmem:[%s1464 + $0xbc] sm:$0xf]
                  %1561 = vst [vmem:[%s1465 + $0xbc] sm:$0xf] %v1560
                  %v1562 = vld [vmem:[%s1464 + $0xc0] sm:$0xf]
                  %1563 = vst [vmem:[%s1465 + $0xc0] sm:$0xf] %v1562
                  %v1564 = vld [vmem:[%s1464 + $0xc4] sm:$0xf]
                  %1565 = vst [vmem:[%s1465 + $0xc4] sm:$0xf] %v1564
                  %v1566 = vld [vmem:[%s1464 + $0xc8] sm:$0xf]
                  %1567 = vst [vmem:[%s1465 + $0xc8] sm:$0xf] %v1566
                  %v1568 = vld [vmem:[%s1464 + $0xcc] sm:$0xf]
                  %1569 = vst [vmem:[%s1465 + $0xcc] sm:$0xf] %v1568
                  %v1570 = vld [vmem:[%s1464 + $0xd0] sm:$0xf]
                  %1571 = vst [vmem:[%s1465 + $0xd0] sm:$0xf] %v1570
                  %v1572 = vld [vmem:[%s1464 + $0xd4] sm:$0xf]
                  %1573 = vst [vmem:[%s1465 + $0xd4] sm:$0xf] %v1572
                  %v1574 = vld [vmem:[%s1464 + $0xd8] sm:$0xf]
                  %1575 = vst [vmem:[%s1465 + $0xd8] sm:$0xf] %v1574
                  %v1576 = vld [vmem:[%s1464 + $0xdc] sm:$0xf]
                  %1577 = vst [vmem:[%s1465 + $0xdc] sm:$0xf] %v1576
                  %v1578 = vld [vmem:[%s1464 + $0xe0] sm:$0xf]
                  %1579 = vst [vmem:[%s1465 + $0xe0] sm:$0xf] %v1578
                  %v1580 = vld [vmem:[%s1464 + $0xe4] sm:$0xf]
                  %1581 = vst [vmem:[%s1465 + $0xe4] sm:$0xf] %v1580
                  %v1582 = vld [vmem:[%s1464 + $0xe8] sm:$0xf]
                  %1583 = vst [vmem:[%s1465 + $0xe8] sm:$0xf] %v1582
                  %v1584 = vld [vmem:[%s1464 + $0xec] sm:$0xf]
                  %1585 = vst [vmem:[%s1465 + $0xec] sm:$0xf] %v1584
                  %v1586 = vld [vmem:[%s1464 + $0xf0] sm:$0xf]
                  %1587 = vst [vmem:[%s1465 + $0xf0] sm:$0xf] %v1586
                  %v1588 = vld [vmem:[%s1464 + $0xf4] sm:$0xf]
                  %1589 = vst [vmem:[%s1465 + $0xf4] sm:$0xf] %v1588
                  %v1590 = vld [vmem:[%s1464 + $0xf8] sm:$0xf]
                  %1591 = vst [vmem:[%s1465 + $0xf8] sm:$0xf] %v1590
                  %v1592 = vld [vmem:[%s1464 + $0xfc] sm:$0xf]
                  %1593 = vst [vmem:[%s1465 + $0xfc] sm:$0xf] %v1592
                  %s1594 = sadd.s32 1, %s1463
                  %p1595 = scmp.ge.s32.totalorder %s1594, %s1456
                  %s1596 = scalar_select %p1595, 0, %s1594
                  %s1597 = smul.u32 %s1596, 256
                  %s1598 = smul.u32 %s1596, 256
                  %s1599 = scalar_lea.vmem %s1262, %s1597 [#allocation6]
                  %s1600 = scalar_lea.vmem %s1274, %s1598
                $region79: #{model_image_scratch_forward.5} parent=73 // loop_footer
                  %s1460 = sadd.s32 %s1458, 1
                $region80: #{model_image_scratch_forward.5} parent=73 // loop_footer_branch
                  %1457 = sbr.rel target = $region76
                $region81: #{model_image_scratch_forward.5} parent=73 // loop_exit
                  _
                %s1601 = sshrl.u32 %s1269, 6
                %s1602 = sand.u32 %s1269, 63
                %s1603 = smul.u32 %s1601, 64
                %s1604 = smul.u32 4, %s1603
                %s1605 = scalar_lea.vmem %s1262, %s1604 [#allocation6]
                %s1606 = smul.u32 4, %s1603
                %s1607 = scalar_lea.vmem %s1274, %s1606
                // While loop
                $region82: #{model_image_scratch_forward.5} parent=73 // loop_pre_header
                  _
                $region83: #{model_image_scratch_forward.5} parent=73 // loop_header
                  %s1609 = sphi 0, %s1611
                  %p1610 = scmp.ge.s32.totalorder %s1609, %s1602
                  %s1614 = sphi 0, %s1621
                  %s1615 = sphi %s1605, %s1624
                  %s1616 = sphi %s1607, %s1625
                $region84: #{model_image_scratch_forward.5} parent=73 // loop_header_branch
                  %1613 = sbr.rel (%p1610) target = $region88
                $region85: #{model_image_scratch_forward.5} parent=73 // loop_body
                  %v1617 = vld [vmem:[%s1615] sm:$0xf]
                  %1618 = vst [vmem:[%s1616] sm:$0xf] %v1617
                  %s1619 = sadd.s32 1, %s1614
                  %p1620 = scmp.ge.s32.totalorder %s1619, %s1602
                  %s1621 = scalar_select %p1620, 0, %s1619
                  %s1622 = smul.u32 %s1621, 4
                  %s1623 = smul.u32 %s1621, 4
                  %s1624 = scalar_lea.vmem %s1605, %s1622 [#allocation6]
                  %s1625 = scalar_lea.vmem %s1607, %s1623
                $region86: #{model_image_scratch_forward.5} parent=73 // loop_footer
                  %s1611 = sadd.s32 %s1609, 1
                $region87: #{model_image_scratch_forward.5} parent=73 // loop_footer_branch
                  %1608 = sbr.rel target = $region83
                $region88: #{model_image_scratch_forward.5} parent=73 // loop_exit
                  _
              $region74: #{model_image_scratch_forward.5} parent=51 // pred_fallthru
                _
            $region52: #{model_image_scratch_forward.5} parent=47 // pred_fallthru
              _
            // Predicated region
            $region53: #{model_image_scratch_forward.5} parent=47 // pred_check
              _
            $region54: #{model_image_scratch_forward.5} parent=47 // pred_check_branch
              %1281 = sbr.rel (0) target = $region56
            $region55: #{model_image_scratch_forward.5} parent=47 // pred_region
              %s1283 = sshrl.u32 %s1269, 6
              // While loop
              $region57: #{model_image_scratch_forward.5} parent=55 // loop_pre_header
                _
              $region58: #{model_image_scratch_forward.5} parent=55 // loop_header
                %s1285 = sphi 0, %s1287
                %p1286 = scmp.ge.s32.totalorder %s1285, %s1283
                %s1290 = sphi 0, %s1423
                %s1291 = sphi %s1262, %s1426
                %s1292 = sphi %s1274, %s1427
              $region59: #{model_image_scratch_forward.5} parent=55 // loop_header_branch
                %1289 = sbr.rel (%p1286) target = $region63
              $region60: #{model_image_scratch_forward.5} parent=55 // loop_body
                %v1293 = vld [vmem:[%s1291] sm:$0xf]
                %1294 = vst [vmem:[%s1292] sm:$0xf] %v1293
                %v1295 = vld [vmem:[%s1291 + $0x4] sm:$0xf]
                %1296 = vst [vmem:[%s1292 + $0x4] sm:$0xf] %v1295
                %v1297 = vld [vmem:[%s1291 + $0x8] sm:$0xf]
                %1298 = vst [vmem:[%s1292 + $0x8] sm:$0xf] %v1297
                %v1299 = vld [vmem:[%s1291 + $0xc] sm:$0xf]
                %1300 = vst [vmem:[%s1292 + $0xc] sm:$0xf] %v1299
                %v1301 = vld [vmem:[%s1291 + $0x10] sm:$0xf]
                %1302 = vst [vmem:[%s1292 + $0x10] sm:$0xf] %v1301
                %v1303 = vld [vmem:[%s1291 + $0x14] sm:$0xf]
                %1304 = vst [vmem:[%s1292 + $0x14] sm:$0xf] %v1303
                %v1305 = vld [vmem:[%s1291 + $0x18] sm:$0xf]
                %1306 = vst [vmem:[%s1292 + $0x18] sm:$0xf] %v1305
                %v1307 = vld [vmem:[%s1291 + $0x1c] sm:$0xf]
                %1308 = vst [vmem:[%s1292 + $0x1c] sm:$0xf] %v1307
                %v1309 = vld [vmem:[%s1291 + $0x20] sm:$0xf]
                %1310 = vst [vmem:[%s1292 + $0x20] sm:$0xf] %v1309
                %v1311 = vld [vmem:[%s1291 + $0x24] sm:$0xf]
                %1312 = vst [vmem:[%s1292 + $0x24] sm:$0xf] %v1311
                %v1313 = vld [vmem:[%s1291 + $0x28] sm:$0xf]
                %1314 = vst [vmem:[%s1292 + $0x28] sm:$0xf] %v1313
                %v1315 = vld [vmem:[%s1291 + $0x2c] sm:$0xf]
                %1316 = vst [vmem:[%s1292 + $0x2c] sm:$0xf] %v1315
                %v1317 = vld [vmem:[%s1291 + $0x30] sm:$0xf]
                %1318 = vst [vmem:[%s1292 + $0x30] sm:$0xf] %v1317
                %v1319 = vld [vmem:[%s1291 + $0x34] sm:$0xf]
                %1320 = vst [vmem:[%s1292 + $0x34] sm:$0xf] %v1319
                %v1321 = vld [vmem:[%s1291 + $0x38] sm:$0xf]
                %1322 = vst [vmem:[%s1292 + $0x38] sm:$0xf] %v1321
                %v1323 = vld [vmem:[%s1291 + $0x3c] sm:$0xf]
                %1324 = vst [vmem:[%s1292 + $0x3c] sm:$0xf] %v1323
                %v1325 = vld [vmem:[%s1291 + $0x40] sm:$0xf]
                %1326 = vst [vmem:[%s1292 + $0x40] sm:$0xf] %v1325
                %v1327 = vld [vmem:[%s1291 + $0x44] sm:$0xf]
                %1328 = vst [vmem:[%s1292 + $0x44] sm:$0xf] %v1327
                %v1329 = vld [vmem:[%s1291 + $0x48] sm:$0xf]
                %1330 = vst [vmem:[%s1292 + $0x48] sm:$0xf] %v1329
                %v1331 = vld [vmem:[%s1291 + $0x4c] sm:$0xf]
                %1332 = vst [vmem:[%s1292 + $0x4c] sm:$0xf] %v1331
                %v1333 = vld [vmem:[%s1291 + $0x50] sm:$0xf]
                %1334 = vst [vmem:[%s1292 + $0x50] sm:$0xf] %v1333
                %v1335 = vld [vmem:[%s1291 + $0x54] sm:$0xf]
                %1336 = vst [vmem:[%s1292 + $0x54] sm:$0xf] %v1335
                %v1337 = vld [vmem:[%s1291 + $0x58] sm:$0xf]
                %1338 = vst [vmem:[%s1292 + $0x58] sm:$0xf] %v1337
                %v1339 = vld [vmem:[%s1291 + $0x5c] sm:$0xf]
                %1340 = vst [vmem:[%s1292 + $0x5c] sm:$0xf] %v1339
                %v1341 = vld [vmem:[%s1291 + $0x60] sm:$0xf]
                %1342 = vst [vmem:[%s1292 + $0x60] sm:$0xf] %v1341
                %v1343 = vld [vmem:[%s1291 + $0x64] sm:$0xf]
                %1344 = vst [vmem:[%s1292 + $0x64] sm:$0xf] %v1343
                %v1345 = vld [vmem:[%s1291 + $0x68] sm:$0xf]
                %1346 = vst [vmem:[%s1292 + $0x68] sm:$0xf] %v1345
                %v1347 = vld [vmem:[%s1291 + $0x6c] sm:$0xf]
                %1348 = vst [vmem:[%s1292 + $0x6c] sm:$0xf] %v1347
                %v1349 = vld [vmem:[%s1291 + $0x70] sm:$0xf]
                %1350 = vst [vmem:[%s1292 + $0x70] sm:$0xf] %v1349
                %v1351 = vld [vmem:[%s1291 + $0x74] sm:$0xf]
                %1352 = vst [vmem:[%s1292 + $0x74] sm:$0xf] %v1351
                %v1353 = vld [vmem:[%s1291 + $0x78] sm:$0xf]
                %1354 = vst [vmem:[%s1292 + $0x78] sm:$0xf] %v1353
                %v1355 = vld [vmem:[%s1291 + $0x7c] sm:$0xf]
                %1356 = vst [vmem:[%s1292 + $0x7c] sm:$0xf] %v1355
                %v1357 = vld [vmem:[%s1291 + $0x80] sm:$0xf]
                %1358 = vst [vmem:[%s1292 + $0x80] sm:$0xf] %v1357
                %v1359 = vld [vmem:[%s1291 + $0x84] sm:$0xf]
                %1360 = vst [vmem:[%s1292 + $0x84] sm:$0xf] %v1359
                %v1361 = vld [vmem:[%s1291 + $0x88] sm:$0xf]
                %1362 = vst [vmem:[%s1292 + $0x88] sm:$0xf] %v1361
                %v1363 = vld [vmem:[%s1291 + $0x8c] sm:$0xf]
                %1364 = vst [vmem:[%s1292 + $0x8c] sm:$0xf] %v1363
                %v1365 = vld [vmem:[%s1291 + $0x90] sm:$0xf]
                %1366 = vst [vmem:[%s1292 + $0x90] sm:$0xf] %v1365
                %v1367 = vld [vmem:[%s1291 + $0x94] sm:$0xf]
                %1368 = vst [vmem:[%s1292 + $0x94] sm:$0xf] %v1367
                %v1369 = vld [vmem:[%s1291 + $0x98] sm:$0xf]
                %1370 = vst [vmem:[%s1292 + $0x98] sm:$0xf] %v1369
                %v1371 = vld [vmem:[%s1291 + $0x9c] sm:$0xf]
                %1372 = vst [vmem:[%s1292 + $0x9c] sm:$0xf] %v1371
                %v1373 = vld [vmem:[%s1291 + $0xa0] sm:$0xf]
                %1374 = vst [vmem:[%s1292 + $0xa0] sm:$0xf] %v1373
                %v1375 = vld [vmem:[%s1291 + $0xa4] sm:$0xf]
                %1376 = vst [vmem:[%s1292 + $0xa4] sm:$0xf] %v1375
                %v1377 = vld [vmem:[%s1291 + $0xa8] sm:$0xf]
                %1378 = vst [vmem:[%s1292 + $0xa8] sm:$0xf] %v1377
                %v1379 = vld [vmem:[%s1291 + $0xac] sm:$0xf]
                %1380 = vst [vmem:[%s1292 + $0xac] sm:$0xf] %v1379
                %v1381 = vld [vmem:[%s1291 + $0xb0] sm:$0xf]
                %1382 = vst [vmem:[%s1292 + $0xb0] sm:$0xf] %v1381
                %v1383 = vld [vmem:[%s1291 + $0xb4] sm:$0xf]
                %1384 = vst [vmem:[%s1292 + $0xb4] sm:$0xf] %v1383
                %v1385 = vld [vmem:[%s1291 + $0xb8] sm:$0xf]
                %1386 = vst [vmem:[%s1292 + $0xb8] sm:$0xf] %v1385
                %v1387 = vld [vmem:[%s1291 + $0xbc] sm:$0xf]
                %1388 = vst [vmem:[%s1292 + $0xbc] sm:$0xf] %v1387
                %v1389 = vld [vmem:[%s1291 + $0xc0] sm:$0xf]
                %1390 = vst [vmem:[%s1292 + $0xc0] sm:$0xf] %v1389
                %v1391 = vld [vmem:[%s1291 + $0xc4] sm:$0xf]
                %1392 = vst [vmem:[%s1292 + $0xc4] sm:$0xf] %v1391
                %v1393 = vld [vmem:[%s1291 + $0xc8] sm:$0xf]
                %1394 = vst [vmem:[%s1292 + $0xc8] sm:$0xf] %v1393
                %v1395 = vld [vmem:[%s1291 + $0xcc] sm:$0xf]
                %1396 = vst [vmem:[%s1292 + $0xcc] sm:$0xf] %v1395
                %v1397 = vld [vmem:[%s1291 + $0xd0] sm:$0xf]
                %1398 = vst [vmem:[%s1292 + $0xd0] sm:$0xf] %v1397
                %v1399 = vld [vmem:[%s1291 + $0xd4] sm:$0xf]
                %1400 = vst [vmem:[%s1292 + $0xd4] sm:$0xf] %v1399
                %v1401 = vld [vmem:[%s1291 + $0xd8] sm:$0xf]
                %1402 = vst [vmem:[%s1292 + $0xd8] sm:$0xf] %v1401
                %v1403 = vld [vmem:[%s1291 + $0xdc] sm:$0xf]
                %1404 = vst [vmem:[%s1292 + $0xdc] sm:$0xf] %v1403
                %v1405 = vld [vmem:[%s1291 + $0xe0] sm:$0xf]
                %1406 = vst [vmem:[%s1292 + $0xe0] sm:$0xf] %v1405
                %v1407 = vld [vmem:[%s1291 + $0xe4] sm:$0xf]
                %1408 = vst [vmem:[%s1292 + $0xe4] sm:$0xf] %v1407
                %v1409 = vld [vmem:[%s1291 + $0xe8] sm:$0xf]
                %1410 = vst [vmem:[%s1292 + $0xe8] sm:$0xf] %v1409
                %v1411 = vld [vmem:[%s1291 + $0xec] sm:$0xf]
                %1412 = vst [vmem:[%s1292 + $0xec] sm:$0xf] %v1411
                %v1413 = vld [vmem:[%s1291 + $0xf0] sm:$0xf]
                %1414 = vst [vmem:[%s1292 + $0xf0] sm:$0xf] %v1413
                %v1415 = vld [vmem:[%s1291 + $0xf4] sm:$0xf]
                %1416 = vst [vmem:[%s1292 + $0xf4] sm:$0xf] %v1415
                %v1417 = vld [vmem:[%s1291 + $0xf8] sm:$0xf]
                %1418 = vst [vmem:[%s1292 + $0xf8] sm:$0xf] %v1417
                %v1419 = vld [vmem:[%s1291 + $0xfc] sm:$0xf]
                %1420 = vst [vmem:[%s1292 + $0xfc] sm:$0xf] %v1419
                %s1421 = sadd.s32 1, %s1290
                %p1422 = scmp.ge.s32.totalorder %s1421, %s1283
                %s1423 = scalar_select %p1422, 0, %s1421
                %s1424 = smul.u32 %s1423, 256
                %s1425 = smul.u32 %s1423, 256
                %s1426 = scalar_lea.vmem %s1262, %s1424 [#allocation6]
                %s1427 = scalar_lea.vmem %s1274, %s1425
              $region61: #{model_image_scratch_forward.5} parent=55 // loop_footer
                %s1287 = sadd.s32 %s1285, 1
              $region62: #{model_image_scratch_forward.5} parent=55 // loop_footer_branch
                %1284 = sbr.rel target = $region58
              $region63: #{model_image_scratch_forward.5} parent=55 // loop_exit
                _
              %s1428 = sshrl.u32 %s1269, 6
              %s1429 = sand.u32 %s1269, 63
              %s1430 = smul.u32 %s1428, 64
              %s1431 = smul.u32 4, %s1430
              %s1432 = scalar_lea.vmem %s1262, %s1431 [#allocation6]
              %s1433 = smul.u32 4, %s1430
              %s1434 = scalar_lea.vmem %s1274, %s1433
              // While loop
              $region64: #{model_image_scratch_forward.5} parent=55 // loop_pre_header
                _
              $region65: #{model_image_scratch_forward.5} parent=55 // loop_header
                %s1436 = sphi 0, %s1438
                %p1437 = scmp.ge.s32.totalorder %s1436, %s1429
                %s1441 = sphi 0, %s1448
                %s1442 = sphi %s1432, %s1451
                %s1443 = sphi %s1434, %s1452
              $region66: #{model_image_scratch_forward.5} parent=55 // loop_header_branch
                %1440 = sbr.rel (%p1437) target = $region70
              $region67: #{model_image_scratch_forward.5} parent=55 // loop_body
                %v1444 = vld [vmem:[%s1442] sm:$0xf]
                %1445 = vst [vmem:[%s1443] sm:$0xf] %v1444
                %s1446 = sadd.s32 1, %s1441
                %p1447 = scmp.ge.s32.totalorder %s1446, %s1429
                %s1448 = scalar_select %p1447, 0, %s1446
                %s1449 = smul.u32 %s1448, 4
                %s1450 = smul.u32 %s1448, 4
                %s1451 = scalar_lea.vmem %s1432, %s1449 [#allocation6]
                %s1452 = scalar_lea.vmem %s1434, %s1450
              $region68: #{model_image_scratch_forward.5} parent=55 // loop_footer
                %s1438 = sadd.s32 %s1436, 1
              $region69: #{model_image_scratch_forward.5} parent=55 // loop_footer_branch
                %1435 = sbr.rel target = $region65
              $region70: #{model_image_scratch_forward.5} parent=55 // loop_exit
                _
            $region56: #{model_image_scratch_forward.5} parent=47 // pred_fallthru
              _
          $region48: #{model_image_scratch_forward.5} parent=43 // pred_fallthru
            _
          %1626 = vnop
        $region44: #{model_image_scratch_forward.5} parent=31 // pred_fallthru
          _
      $region32: #{model_image_scratch_forward.5} parent=5 // pred_fallthru
        _
      %p1627 = scmp.le.s32.totalorder 2, %s11
      // Predicated region
      $region89: #{model_image_scratch_forward.5} parent=5 // pred_check
        %p1628 = pneg %p1627
      $region90: #{model_image_scratch_forward.5} parent=5 // pred_check_branch
        %1630 = sbr.rel (%p1628) target = $region92
      $region91: #{model_image_scratch_forward.5} parent=5 // pred_region
        %s1631 = ssub.s32 %s11, 2
        // Predicated region
        $region93: #{model_image_scratch_forward.5} parent=91 // pred_check
          %p1632 = pneg %p132
        $region94: #{model_image_scratch_forward.5} parent=91 // pred_check_branch
          %1634 = sbr.rel (%p1632) target = $region96
        $region95: #{model_image_scratch_forward.5} parent=91 // pred_region
          %s1635 = sand.u32 %s117, 1
          %s1636 = sand.u32 %s117, 1
          %s1637 = smul.addr %s1636, 256
          %s1638 = scalar_lea.vmem [#allocation6], %s1637
        $region96: #{model_image_scratch_forward.5} parent=91 // pred_fallthru
          _
      $region92: #{model_image_scratch_forward.5} parent=5 // pred_fallthru
        _
    $region6: #{model_image_scratch_forward.5} parent=1 // loop_footer
      %s15 = sadd.s32 1, %s11
    $region7: #{model_image_scratch_forward.5} parent=1 // loop_footer_branch
      %10 = sbr.rel target = $region3
    $region8: #{model_image_scratch_forward.5} parent=1 // loop_exit
      _
    %1639 = vsyncpa [#allocation3], 1
    %s1640 = scalar_lea.sflag [#allocation3], 1
    %1641 = vsyncpa %s1640, 1
    %1642 = vsyncpa [#allocation5], 1

// kernel: model_image_scratch_forward.6
$region0: #{model_image_scratch_forward.6}
  #allocation0 [shape = 'u32[]', space=smem, size = 0x4, offset = 0x4, fixed_abs, tag = 'smem constant byte address 0x4 - core index']
  #allocation1 [shape = 'u32[144,128]{1,0:T(1,128)}', space=vmem, size = 0x12000, scoped, tag = 'internal scratch']
  %s0 = inlined_call_operand.vmem [shape: bf16[392,512], index: 0, kind: input, shape index: {}]
  %s1 = inlined_call_operand.vmem [shape: bf16[512,64], index: 1, kind: input, shape index: {}]
  %s2 = inlined_call_operand.vmem [shape: f32[1,64], index: 2, kind: input, shape index: {}]
  %s3 = inlined_call_operand.vmem [shape: bf16[392,64], index: 3, kind: output, shape index: {}]
  %s4 = sld [smem:[#allocation0]]
  $region22: #{model_image_scratch_forward.6} parent=0
    _
  %s6 = ssub.s32 1, %s4
  %s7 = scalar_select 0, %s6, %s4
  // Predicated region
  $region2: #{model_image_scratch_forward.6} parent=0 // pred_check
    _
  $region3: #{model_image_scratch_forward.6} parent=0 // pred_check_branch
    %9 = sbr.rel (0) target = $region5
  $region4: #{model_image_scratch_forward.6} parent=0 // pred_region
    _
  $region5: #{model_image_scratch_forward.6} parent=0 // pred_fallthru
    _
  // Predicated region
  $region6: #{model_image_scratch_forward.6} parent=0 // pred_check
    _
  $region7: #{model_image_scratch_forward.6} parent=0 // pred_check_branch
    %11 = sbr.rel (0) target = $region9
  $region8: #{model_image_scratch_forward.6} parent=0 // pred_region
    _
  $region9: #{model_image_scratch_forward.6} parent=0 // pred_fallthru
    _
  // Predicated region
  $region10: #{model_image_scratch_forward.6} parent=0 // pred_check
    _
  $region11: #{model_image_scratch_forward.6} parent=0 // pred_check_branch
    %13 = sbr.rel (0) target = $region13
  $region12: #{model_image_scratch_forward.6} parent=0 // pred_region
    _
  $region13: #{model_image_scratch_forward.6} parent=0 // pred_fallthru
    _
  %v15 = vld [vmem:[%s0] sm:$0xff]
  %v16 = vld [vmem:[%s0 + $0x8] sm:$0xff]
  %v17 = vld [vmem:[%s0 + $0x10] sm:$0xff]
  %v18 = vld [vmem:[%s0 + $0x18] sm:$0xff]
  %v19 = vld [vmem:[%s0 + $0x20] sm:$0xff]
  %v20 = vld [vmem:[%s0 + $0x28] sm:$0xff]
  %v21 = vld [vmem:[%s0 + $0x30] sm:$0xff]
  %v22 = vld [vmem:[%s0 + $0x38] sm:$0xff]
  %v23 = vld [vmem:[%s0 + $0x40] sm:$0xff]
  %v24 = vld [vmem:[%s0 + $0x48] sm:$0xff]
  %v25 = vld [vmem:[%s0 + $0x50] sm:$0xff]
  %v26 = vld [vmem:[%s0 + $0x58] sm:$0xff]
  %v27 = vld [vmem:[%s0 + $0x60] sm:$0xff]
  %v28 = vld [vmem:[%s0 + $0x68] sm:$0xff]
  %v29 = vld [vmem:[%s0 + $0x70] sm:$0xff]
  %v30 = vld [vmem:[%s0 + $0x78] sm:$0xff]
  %v31 = vld [vmem:[%s0 + $0x80] sm:$0xff]
  %v32 = vld [vmem:[%s0 + $0x88] sm:$0xff]
  %v33 = vld [vmem:[%s0 + $0x90] sm:$0xff]
  %v34 = vld [vmem:[%s0 + $0x98] sm:$0xff]
  %v35 = vld [vmem:[%s0 + $0xa0] sm:$0xff]
  %v36 = vld [vmem:[%s0 + $0xa8] sm:$0xff]
  %v37 = vld [vmem:[%s0 + $0xb0] sm:$0xff]
  %v38 = vld [vmem:[%s0 + $0xb8] sm:$0xff]
  %v39 = vld [vmem:[%s0 + $0xc0] sm:$0xff]
  %v40 = vld [vmem:[%s0 + $0xc8] sm:$0xff]
  %v41 = vld [vmem:[%s0 + $0xd0] sm:$0xff]
  %v42 = vld [vmem:[%s0 + $0xd8] sm:$0xff]
  %v43 = vld [vmem:[%s0 + $0xe0] sm:$0xff]
  %v44 = vld [vmem:[%s0 + $0xe8] sm:$0xff]
  %v45 = vld [vmem:[%s0 + $0xf0] sm:$0xff]
  %v46 = vld [vmem:[%s0 + $0xf8] sm:$0xff]
  %v47 = vld [vmem:[%s0 + $0x100] sm:$0xff]
  %v48 = vld [vmem:[%s0 + $0x108] sm:$0xff]
  %v49 = vld [vmem:[%s0 + $0x110] sm:$0xff]
  %v50 = vld [vmem:[%s0 + $0x118] sm:$0xff]
  %v51 = vld [vmem:[%s0 + $0x120] sm:$0xff]
  %v52 = vld [vmem:[%s0 + $0x128] sm:$0xff]
  %v53 = vld [vmem:[%s0 + $0x130] sm:$0xff]
  %v54 = vld [vmem:[%s0 + $0x138] sm:$0xff]
  %v55 = vld [vmem:[%s0 + $0x140] sm:$0xff]
  %v56 = vld [vmem:[%s0 + $0x148] sm:$0xff]
  %v57 = vld [vmem:[%s0 + $0x150] sm:$0xff]
  %v58 = vld [vmem:[%s0 + $0x158] sm:$0xff]
  %v59 = vld [vmem:[%s0 + $0x160] sm:$0xff]
  %v60 = vld [vmem:[%s0 + $0x168] sm:$0xff]
  %v61 = vld [vmem:[%s0 + $0x170] sm:$0xff]
  %v62 = vld [vmem:[%s0 + $0x178] sm:$0xff]
  %v63 = vld [vmem:[%s0 + $0x180] sm:$0xff]
  %v64 = vld [vmem:[%s0 + $0x188] sm:$0xff]
  %v65 = vld [vmem:[%s0 + $0x190] sm:$0xff]
  %v66 = vld [vmem:[%s0 + $0x198] sm:$0xff]
  %v67 = vld [vmem:[%s0 + $0x1a0] sm:$0xff]
  %v68 = vld [vmem:[%s0 + $0x1a8] sm:$0xff]
  %v69 = vld [vmem:[%s0 + $0x1b0] sm:$0xff]
  %v70 = vld [vmem:[%s0 + $0x1b8] sm:$0xff]
  %v71 = vld [vmem:[%s0 + $0x1c0] sm:$0xff]
  %v72 = vld [vmem:[%s0 + $0x1c8] sm:$0xff]
  %v73 = vld [vmem:[%s0 + $0x1d0] sm:$0xff]
  %v74 = vld [vmem:[%s0 + $0x1d8] sm:$0xff]
  %v75 = vld [vmem:[%s0 + $0x1e0] sm:$0xff]
  %v76 = vld [vmem:[%s0 + $0x1e8] sm:$0xff]
  %v77 = vld [vmem:[%s0 + $0x1f0] sm:$0xff]
  %v78 = vld [vmem:[%s0 + $0x1f8] sm:$0xff]
  %v79 = vld [vmem:[%s0 + $0x200] sm:$0xff]
  %v80 = vld [vmem:[%s0 + $0x208] sm:$0xff]
  %v81 = vld [vmem:[%s0 + $0x210] sm:$0xff]
  %v82 = vld [vmem:[%s0 + $0x218] sm:$0xff]
  %v83 = vld [vmem:[%s0 + $0x220] sm:$0xff]
  %v84 = vld [vmem:[%s0 + $0x228] sm:$0xff]
  %v85 = vld [vmem:[%s0 + $0x230] sm:$0xff]
  %v86 = vld [vmem:[%s0 + $0x238] sm:$0xff]
  %v87 = vld [vmem:[%s0 + $0x240] sm:$0xff]
  %v88 = vld [vmem:[%s0 + $0x248] sm:$0xff]
  %v89 = vld [vmem:[%s0 + $0x250] sm:$0xff]
  %v90 = vld [vmem:[%s0 + $0x258] sm:$0xff]
  %v91 = vld [vmem:[%s0 + $0x260] sm:$0xff]
  %v92 = vld [vmem:[%s0 + $0x268] sm:$0xff]
  %v93 = vld [vmem:[%s0 + $0x270] sm:$0xff]
  %v94 = vld [vmem:[%s0 + $0x278] sm:$0xff]
  %v95 = vld [vmem:[%s0 + $0x280] sm:$0xff]
  %v96 = vld [vmem:[%s0 + $0x288] sm:$0xff]
  %v97 = vld [vmem:[%s0 + $0x290] sm:$0xff]
  %v98 = vld [vmem:[%s0 + $0x298] sm:$0xff]
  %v99 = vld [vmem:[%s0 + $0x2a0] sm:$0xff]
  %v100 = vld [vmem:[%s0 + $0x2a8] sm:$0xff]
  %v101 = vld [vmem:[%s0 + $0x2b0] sm:$0xff]
  %v102 = vld [vmem:[%s0 + $0x2b8] sm:$0xff]
  %v103 = vld [vmem:[%s0 + $0x2c0] sm:$0xff]
  %v104 = vld [vmem:[%s0 + $0x2c8] sm:$0xff]
  %v105 = vld [vmem:[%s0 + $0x2d0] sm:$0xff]
  %v106 = vld [vmem:[%s0 + $0x2d8] sm:$0xff]
  %v107 = vld [vmem:[%s0 + $0x2e0] sm:$0xff]
  %v108 = vld [vmem:[%s0 + $0x2e8] sm:$0xff]
  %v109 = vld [vmem:[%s0 + $0x2f0] sm:$0xff]
  %v110 = vld [vmem:[%s0 + $0x2f8] sm:$0xff]
  %v111 = vld [vmem:[%s0 + $0x300] sm:$0xff]
  %v112 = vld [vmem:[%s0 + $0x308] sm:$0xff]
  %v113 = vld [vmem:[%s1] sm:$0xf]
  %v114 = vld [vmem:[%s1 + $0x4] sm:$0xf]
  %v115 = vld [vmem:[%s1 + $0x8] sm:$0xf]
  %v116 = vld [vmem:[%s1 + $0xc] sm:$0xf]
  %v117 = vld [vmem:[%s1 + $0x10] sm:$0xf]
  %v118 = vld [vmem:[%s1 + $0x14] sm:$0xf]
  %v119 = vld [vmem:[%s1 + $0x18] sm:$0xf]
  %v120 = vld [vmem:[%s1 + $0x1c] sm:$0xf]
  %v121 = vld [vmem:[%s1 + $0x20] sm:$0xf]
  %v122 = vld [vmem:[%s1 + $0x24] sm:$0xf]
  %v123 = vld [vmem:[%s1 + $0x28] sm:$0xf]
  %v124 = vld [vmem:[%s1 + $0x2c] sm:$0xf]
  %v125 = vld [vmem:[%s1 + $0x30] sm:$0xf]
  %v126 = vld [vmem:[%s1 + $0x34] sm:$0xf]
  %v127 = vld [vmem:[%s1 + $0x38] sm:$0xf]
  %v128 = vld [vmem:[%s1 + $0x3c] sm:$0xf]
  %v129 = vld [vmem:[%s1 + $0x40] sm:$0xf]
  %v130 = vld [vmem:[%s1 + $0x44] sm:$0xf]
  %v131 = vld [vmem:[%s1 + $0x48] sm:$0xf]
  %v132 = vld [vmem:[%s1 + $0x4c] sm:$0xf]
  %v133 = vld [vmem:[%s1 + $0x50] sm:$0xf]
  %v134 = vld [vmem:[%s1 + $0x54] sm:$0xf]
  %v135 = vld [vmem:[%s1 + $0x58] sm:$0xf]
  %v136 = vld [vmem:[%s1 + $0x5c] sm:$0xf]
  %v137 = vld [vmem:[%s1 + $0x60] sm:$0xf]
  %v138 = vld [vmem:[%s1 + $0x64] sm:$0xf]
  %v139 = vld [vmem:[%s1 + $0x68] sm:$0xf]
  %v140 = vld [vmem:[%s1 + $0x6c] sm:$0xf]
  %v141 = vld [vmem:[%s1 + $0x70] sm:$0xf]
  %v142 = vld [vmem:[%s1 + $0x74] sm:$0xf]
  %v143 = vld [vmem:[%s1 + $0x78] sm:$0xf]
  %v144 = vld [vmem:[%s1 + $0x7c] sm:$0xf]
  %v145 = vld [vmem:[%s1 + $0x80] sm:$0xf]
  %v146 = vld [vmem:[%s1 + $0x84] sm:$0xf]
  %v147 = vld [vmem:[%s1 + $0x88] sm:$0xf]
  %v148 = vld [vmem:[%s1 + $0x8c] sm:$0xf]
  %v149 = vld [vmem:[%s1 + $0x90] sm:$0xf]
  %v150 = vld [vmem:[%s1 + $0x94] sm:$0xf]
  %v151 = vld [vmem:[%s1 + $0x98] sm:$0xf]
  %v152 = vld [vmem:[%s1 + $0x9c] sm:$0xf]
  %v153 = vld [vmem:[%s1 + $0xa0] sm:$0xf]
  %v154 = vld [vmem:[%s1 + $0xa4] sm:$0xf]
  %v155 = vld [vmem:[%s1 + $0xa8] sm:$0xf]
  %v156 = vld [vmem:[%s1 + $0xac] sm:$0xf]
  %v157 = vld [vmem:[%s1 + $0xb0] sm:$0xf]
  %v158 = vld [vmem:[%s1 + $0xb4] sm:$0xf]
  %v159 = vld [vmem:[%s1 + $0xb8] sm:$0xf]
  %v160 = vld [vmem:[%s1 + $0xbc] sm:$0xf]
  %v161 = vld [vmem:[%s1 + $0xc0] sm:$0xf]
  %v162 = vld [vmem:[%s1 + $0xc4] sm:$0xf]
  %v163 = vld [vmem:[%s1 + $0xc8] sm:$0xf]
  %v164 = vld [vmem:[%s1 + $0xcc] sm:$0xf]
  %v165 = vld [vmem:[%s1 + $0xd0] sm:$0xf]
  %v166 = vld [vmem:[%s1 + $0xd4] sm:$0xf]
  %v167 = vld [vmem:[%s1 + $0xd8] sm:$0xf]
  %v168 = vld [vmem:[%s1 + $0xdc] sm:$0xf]
  %v169 = vld [vmem:[%s1 + $0xe0] sm:$0xf]
  %v170 = vld [vmem:[%s1 + $0xe4] sm:$0xf]
  %v171 = vld [vmem:[%s1 + $0xe8] sm:$0xf]
  %v172 = vld [vmem:[%s1 + $0xec] sm:$0xf]
  %v173 = vld [vmem:[%s1 + $0xf0] sm:$0xf]
  %v174 = vld [vmem:[%s1 + $0xf4] sm:$0xf]
  %v175 = vld [vmem:[%s1 + $0xf8] sm:$0xf]
  %v176 = vld [vmem:[%s1 + $0xfc] sm:$0xf]
  %v177 = vld [vmem:[%s2] sm:$0x1]
  %v179 = vlaneseq
  %v180 = vshrl.u32 %v179, 7
  %v181 = vsub.s32 0, %v180
  %v182 = vrot.slane %v177, %v181
  %v282 = vunpack.c.l.b16 %v15
  %v283 = vunpack.c.h.b16 %v15
  %v284 = vunpack.c.l.b16 %v16
  %v285 = vunpack.c.h.b16 %v16
  %v286 = vunpack.c.l.b16 %v17
  %v287 = vunpack.c.h.b16 %v17
  %v288 = vunpack.c.l.b16 %v18
  %v289 = vunpack.c.h.b16 %v18
  %v290 = vunpack.c.l.b16 %v19
  %v291 = vunpack.c.h.b16 %v19
  %v292 = vunpack.c.l.b16 %v20
  %v293 = vunpack.c.h.b16 %v20
  %v294 = vunpack.c.l.b16 %v21
  %v295 = vunpack.c.h.b16 %v21
  %v296 = vunpack.c.l.b16 %v22
  %v297 = vunpack.c.h.b16 %v22
  %v298 = vunpack.c.l.b16 %v23
  %v299 = vunpack.c.h.b16 %v23
  %v300 = vunpack.c.l.b16 %v24
  %v301 = vunpack.c.h.b16 %v24
  %v302 = vunpack.c.l.b16 %v25
  %v303 = vunpack.c.h.b16 %v25
  %v304 = vunpack.c.l.b16 %v26
  %v305 = vunpack.c.h.b16 %v26
  %v306 = vunpack.c.l.b16 %v27
  %v307 = vunpack.c.h.b16 %v27
  %v308 = vunpack.c.l.b16 %v28
  %v309 = vunpack.c.h.b16 %v28
  %v310 = vunpack.c.l.b16 %v29
  %v311 = vunpack.c.h.b16 %v29
  %v312 = vunpack.c.l.b16 %v30
  %v313 = vunpack.c.h.b16 %v30
  %v314 = vunpack.c.l.b16 %v31
  %v315 = vunpack.c.h.b16 %v31
  %v316 = vunpack.c.l.b16 %v32
  %v317 = vunpack.c.h.b16 %v32
  %v318 = vunpack.c.l.b16 %v33
  %v319 = vunpack.c.h.b16 %v33
  %v320 = vunpack.c.l.b16 %v34
  %v321 = vunpack.c.h.b16 %v34
  %v322 = vunpack.c.l.b16 %v35
  %v323 = vunpack.c.h.b16 %v35
  %v324 = vunpack.c.l.b16 %v36
  %v325 = vunpack.c.h.b16 %v36
  %v326 = vunpack.c.l.b16 %v37
  %v327 = vunpack.c.h.b16 %v37
  %v328 = vunpack.c.l.b16 %v38
  %v329 = vunpack.c.h.b16 %v38
  %v330 = vunpack.c.l.b16 %v39
  %v331 = vunpack.c.h.b16 %v39
  %v332 = vunpack.c.l.b16 %v40
  %v333 = vunpack.c.h.b16 %v40
  %v334 = vunpack.c.l.b16 %v41
  %v335 = vunpack.c.h.b16 %v41
  %v336 = vunpack.c.l.b16 %v42
  %v337 = vunpack.c.h.b16 %v42
  %v338 = vunpack.c.l.b16 %v43
  %v339 = vunpack.c.h.b16 %v43
  %v340 = vunpack.c.l.b16 %v44
  %v341 = vunpack.c.h.b16 %v44
  %v342 = vunpack.c.l.b16 %v45
  %v343 = vunpack.c.h.b16 %v45
  %v344 = vunpack.c.l.b16 %v46
  %v345 = vunpack.c.h.b16 %v46
  %v346 = vunpack.c.l.b16 %v47
  %v347 = vunpack.c.h.b16 %v47
  %v348 = vunpack.c.l.b16 %v48
  %v349 = vunpack.c.h.b16 %v48
  %v350 = vunpack.c.l.b16 %v49
  %v351 = vunpack.c.h.b16 %v49
  %v352 = vunpack.c.l.b16 %v50
  %v353 = vunpack.c.h.b16 %v50
  %v354 = vunpack.c.l.b16 %v51
  %v355 = vunpack.c.h.b16 %v51
  %v356 = vunpack.c.l.b16 %v52
  %v357 = vunpack.c.h.b16 %v52
  %v358 = vunpack.c.l.b16 %v53
  %v359 = vunpack.c.h.b16 %v53
  %v360 = vunpack.c.l.b16 %v54
  %v361 = vunpack.c.h.b16 %v54
  %v362 = vunpack.c.l.b16 %v55
  %v363 = vunpack.c.h.b16 %v55
  %v364 = vunpack.c.l.b16 %v56
  %v365 = vunpack.c.h.b16 %v56
  %v366 = vunpack.c.l.b16 %v57
  %v367 = vunpack.c.h.b16 %v57
  %v368 = vunpack.c.l.b16 %v58
  %v369 = vunpack.c.h.b16 %v58
  %v370 = vunpack.c.l.b16 %v59
  %v371 = vunpack.c.h.b16 %v59
  %v372 = vunpack.c.l.b16 %v60
  %v373 = vunpack.c.h.b16 %v60
  %v374 = vunpack.c.l.b16 %v61
  %v375 = vunpack.c.h.b16 %v61
  %v376 = vunpack.c.l.b16 %v62
  %v377 = vunpack.c.h.b16 %v62
  %v378 = vunpack.c.l.b16 %v63
  %v379 = vunpack.c.h.b16 %v63
  %v380 = vunpack.c.l.b16 %v64
  %v381 = vunpack.c.h.b16 %v64
  %v382 = vunpack.c.l.b16 %v65
  %v383 = vunpack.c.h.b16 %v65
  %v384 = vunpack.c.l.b16 %v66
  %v385 = vunpack.c.h.b16 %v66
  %v386 = vunpack.c.l.b16 %v67
  %v387 = vunpack.c.h.b16 %v67
  %v388 = vunpack.c.l.b16 %v68
  %v389 = vunpack.c.h.b16 %v68
  %v390 = vunpack.c.l.b16 %v69
  %v391 = vunpack.c.h.b16 %v69
  %v392 = vunpack.c.l.b16 %v70
  %v393 = vunpack.c.h.b16 %v70
  %v394 = vunpack.c.l.b16 %v71
  %v395 = vunpack.c.h.b16 %v71
  %v396 = vunpack.c.l.b16 %v72
  %v397 = vunpack.c.h.b16 %v72
  %v398 = vunpack.c.l.b16 %v73
  %v399 = vunpack.c.h.b16 %v73
  %v400 = vunpack.c.l.b16 %v74
  %v401 = vunpack.c.h.b16 %v74
  %v402 = vunpack.c.l.b16 %v75
  %v403 = vunpack.c.h.b16 %v75
  %v404 = vunpack.c.l.b16 %v76
  %v405 = vunpack.c.h.b16 %v76
  %v406 = vunpack.c.l.b16 %v77
  %v407 = vunpack.c.h.b16 %v77
  %v408 = vunpack.c.l.b16 %v78
  %v409 = vunpack.c.h.b16 %v78
  %v410 = vunpack.c.l.b16 %v79
  %v411 = vunpack.c.h.b16 %v79
  %v412 = vunpack.c.l.b16 %v80
  %v413 = vunpack.c.h.b16 %v80
  %v414 = vunpack.c.l.b16 %v81
  %v415 = vunpack.c.h.b16 %v81
  %v416 = vunpack.c.l.b16 %v82
  %v417 = vunpack.c.h.b16 %v82
  %v418 = vunpack.c.l.b16 %v83
  %v419 = vunpack.c.h.b16 %v83
  %v420 = vunpack.c.l.b16 %v84
  %v421 = vunpack.c.h.b16 %v84
  %v422 = vunpack.c.l.b16 %v85
  %v423 = vunpack.c.h.b16 %v85
  %v424 = vunpack.c.l.b16 %v86
  %v425 = vunpack.c.h.b16 %v86
  %v426 = vunpack.c.l.b16 %v87
  %v427 = vunpack.c.h.b16 %v87
  %v428 = vunpack.c.l.b16 %v88
  %v429 = vunpack.c.h.b16 %v88
  %v430 = vunpack.c.l.b16 %v89
  %v431 = vunpack.c.h.b16 %v89
  %v432 = vunpack.c.l.b16 %v90
  %v433 = vunpack.c.h.b16 %v90
  %v434 = vunpack.c.l.b16 %v91
  %v435 = vunpack.c.h.b16 %v91
  %v436 = vunpack.c.l.b16 %v92
  %v437 = vunpack.c.h.b16 %v92
  %v438 = vunpack.c.l.b16 %v93
  %v439 = vunpack.c.h.b16 %v93
  %v440 = vunpack.c.l.b16 %v94
  %v441 = vunpack.c.h.b16 %v94
  %v442 = vunpack.c.l.b16 %v95
  %v443 = vunpack.c.h.b16 %v95
  %v444 = vunpack.c.l.b16 %v96
  %v445 = vunpack.c.h.b16 %v96
  %v446 = vunpack.c.l.b16 %v97
  %v447 = vunpack.c.h.b16 %v97
  %v448 = vunpack.c.l.b16 %v98
  %v449 = vunpack.c.h.b16 %v98
  %v450 = vunpack.c.l.b16 %v99
  %v451 = vunpack.c.h.b16 %v99
  %v452 = vunpack.c.l.b16 %v100
  %v453 = vunpack.c.h.b16 %v100
  %v454 = vunpack.c.l.b16 %v101
  %v455 = vunpack.c.h.b16 %v101
  %v456 = vunpack.c.l.b16 %v102
  %v457 = vunpack.c.h.b16 %v102
  %v458 = vunpack.c.l.b16 %v103
  %v459 = vunpack.c.h.b16 %v103
  %v460 = vunpack.c.l.b16 %v104
  %v461 = vunpack.c.h.b16 %v104
  %v462 = vunpack.c.l.b16 %v105
  %v463 = vunpack.c.h.b16 %v105
  %v464 = vunpack.c.l.b16 %v106
  %v465 = vunpack.c.h.b16 %v106
  %v466 = vunpack.c.l.b16 %v107
  %v467 = vunpack.c.h.b16 %v107
  %v468 = vunpack.c.l.b16 %v108
  %v469 = vunpack.c.h.b16 %v108
  %v470 = vunpack.c.l.b16 %v109
  %v471 = vunpack.c.h.b16 %v109
  %v472 = vunpack.c.l.b16 %v110
  %v473 = vunpack.c.h.b16 %v110
  %v474 = vunpack.c.l.b16 %v111
  %v475 = vunpack.c.h.b16 %v111
  %v476 = vunpack.c.l.b16 %v112
  %v477 = vunpack.c.h.b16 %v112
  %v478 = vpack.c.b16 %v286, %v282
  %v479 = vpack.c.b16 %v287, %v283
  %v480 = vpack.c.b16 %v288, %v284
  %v481 = vpack.c.b16 %v289, %v285
  %v482 = vpack.c.b16 %v294, %v290
  %v483 = vpack.c.b16 %v295, %v291
  %v484 = vpack.c.b16 %v296, %v292
  %v485 = vpack.c.b16 %v297, %v293
  %v486 = vpack.c.b16 %v302, %v298
  %v487 = vpack.c.b16 %v303, %v299
  %v488 = vpack.c.b16 %v304, %v300
  %v489 = vpack.c.b16 %v305, %v301
  %v490 = vpack.c.b16 %v310, %v306
  %v491 = vpack.c.b16 %v311, %v307
  %v492 = vpack.c.b16 %v312, %v308
  %v493 = vpack.c.b16 %v313, %v309
  %v494 = vpack.c.b16 %v318, %v314
  %v495 = vpack.c.b16 %v319, %v315
  %v496 = vpack.c.b16 %v320, %v316
  %v497 = vpack.c.b16 %v321, %v317
  %v498 = vpack.c.b16 %v326, %v322
  %v499 = vpack.c.b16 %v327, %v323
  %v500 = vpack.c.b16 %v328, %v324
  %v501 = vpack.c.b16 %v329, %v325
  %v502 = vpack.c.b16 %v334, %v330
  %v503 = vpack.c.b16 %v335, %v331
  %v504 = vpack.c.b16 %v336, %v332
  %v505 = vpack.c.b16 %v337, %v333
  %v506 = vpack.c.b16 %v342, %v338
  %v507 = vpack.c.b16 %v343, %v339
  %v508 = vpack.c.b16 %v344, %v340
  %v509 = vpack.c.b16 %v345, %v341
  %v510 = vpack.c.b16 %v350, %v346
  %v511 = vpack.c.b16 %v351, %v347
  %v512 = vpack.c.b16 %v352, %v348
  %v513 = vpack.c.b16 %v353, %v349
  %v514 = vpack.c.b16 %v358, %v354
  %v515 = vpack.c.b16 %v359, %v355
  %v516 = vpack.c.b16 %v360, %v356
  %v517 = vpack.c.b16 %v361, %v357
  %v518 = vpack.c.b16 %v366, %v362
  %v519 = vpack.c.b16 %v367, %v363
  %v520 = vpack.c.b16 %v368, %v364
  %v521 = vpack.c.b16 %v369, %v365
  %v522 = vpack.c.b16 %v374, %v370
  %v523 = vpack.c.b16 %v375, %v371
  %v524 = vpack.c.b16 %v376, %v372
  %v525 = vpack.c.b16 %v377, %v373
  %v526 = vpack.c.b16 %v382, %v378
  %v527 = vpack.c.b16 %v383, %v379
  %v528 = vpack.c.b16 %v384, %v380
  %v529 = vpack.c.b16 %v385, %v381
  %v530 = vpack.c.b16 %v390, %v386
  %v531 = vpack.c.b16 %v391, %v387
  %v532 = vpack.c.b16 %v392, %v388
  %v533 = vpack.c.b16 %v393, %v389
  %v534 = vpack.c.b16 %v398, %v394
  %v535 = vpack.c.b16 %v399, %v395
  %v536 = vpack.c.b16 %v400, %v396
  %v537 = vpack.c.b16 %v401, %v397
  %v538 = vpack.c.b16 %v406, %v402
  %v539 = vpack.c.b16 %v407, %v403
  %v540 = vpack.c.b16 %v408, %v404
  %v541 = vpack.c.b16 %v409, %v405
  %v542 = vpack.c.b16 %v414, %v410
  %v543 = vpack.c.b16 %v415, %v411
  %v544 = vpack.c.b16 %v416, %v412
  %v545 = vpack.c.b16 %v417, %v413
  %v546 = vpack.c.b16 %v422, %v418
  %v547 = vpack.c.b16 %v423, %v419
  %v548 = vpack.c.b16 %v424, %v420
  %v549 = vpack.c.b16 %v425, %v421
  %v550 = vpack.c.b16 %v430, %v426
  %v551 = vpack.c.b16 %v431, %v427
  %v552 = vpack.c.b16 %v432, %v428
  %v553 = vpack.c.b16 %v433, %v429
  %v554 = vpack.c.b16 %v438, %v434
  %v555 = vpack.c.b16 %v439, %v435
  %v556 = vpack.c.b16 %v440, %v436
  %v557 = vpack.c.b16 %v441, %v437
  %v558 = vpack.c.b16 %v446, %v442
  %v559 = vpack.c.b16 %v447, %v443
  %v560 = vpack.c.b16 %v448, %v444
  %v561 = vpack.c.b16 %v449, %v445
  %v562 = vpack.c.b16 %v454, %v450
  %v563 = vpack.c.b16 %v455, %v451
  %v564 = vpack.c.b16 %v456, %v452
  %v565 = vpack.c.b16 %v457, %v453
  %v566 = vpack.c.b16 %v462, %v458
  %v567 = vpack.c.b16 %v463, %v459
  %v568 = vpack.c.b16 %v464, %v460
  %v569 = vpack.c.b16 %v465, %v461
  %v570 = vpack.c.b16 %v470, %v466
  %v571 = vpack.c.b16 %v471, %v467
  %v572 = vpack.c.b16 %v472, %v468
  %v573 = vpack.c.b16 %v473, %v469
  %v574 = vpack.c.b16 %v474, %v474
  %v575 = vpack.c.b16 %v475, %v475
  %v576 = vpack.c.b16 %v476, %v476
  %v577 = vpack.c.b16 %v477, %v477
  %v742 = vunpack.c.l.b16 %v113
  %v743 = vunpack.c.l.b16 %v114
  %v744 = vunpack.c.l.b16 %v115
  %v745 = vunpack.c.l.b16 %v116
  %v746 = vunpack.c.l.b16 %v117
  %v747 = vunpack.c.l.b16 %v118
  %v748 = vunpack.c.l.b16 %v119
  %v749 = vunpack.c.l.b16 %v120
  %v750 = vunpack.c.l.b16 %v121
  %v751 = vunpack.c.l.b16 %v122
  %v752 = vunpack.c.l.b16 %v123
  %v753 = vunpack.c.l.b16 %v124
  %v754 = vunpack.c.l.b16 %v125
  %v755 = vunpack.c.l.b16 %v126
  %v756 = vunpack.c.l.b16 %v127
  %v757 = vunpack.c.l.b16 %v128
  %v758 = vunpack.c.l.b16 %v129
  %v759 = vunpack.c.l.b16 %v130
  %v760 = vunpack.c.l.b16 %v131
  %v761 = vunpack.c.l.b16 %v132
  %v762 = vunpack.c.l.b16 %v133
  %v763 = vunpack.c.l.b16 %v134
  %v764 = vunpack.c.l.b16 %v135
  %v765 = vunpack.c.l.b16 %v136
  %v766 = vunpack.c.l.b16 %v137
  %v767 = vunpack.c.l.b16 %v138
  %v768 = vunpack.c.l.b16 %v139
  %v769 = vunpack.c.l.b16 %v140
  %v770 = vunpack.c.l.b16 %v141
  %v771 = vunpack.c.l.b16 %v142
  %v772 = vunpack.c.l.b16 %v143
  %v773 = vunpack.c.l.b16 %v144
  %v774 = vunpack.c.l.b16 %v145
  %v775 = vunpack.c.l.b16 %v146
  %v776 = vunpack.c.l.b16 %v147
  %v777 = vunpack.c.l.b16 %v148
  %v778 = vunpack.c.l.b16 %v149
  %v779 = vunpack.c.l.b16 %v150
  %v780 = vunpack.c.l.b16 %v151
  %v781 = vunpack.c.l.b16 %v152
  %v782 = vunpack.c.l.b16 %v153
  %v783 = vunpack.c.l.b16 %v154
  %v784 = vunpack.c.l.b16 %v155
  %v785 = vunpack.c.l.b16 %v156
  %v786 = vunpack.c.l.b16 %v157
  %v787 = vunpack.c.l.b16 %v158
  %v788 = vunpack.c.l.b16 %v159
  %v789 = vunpack.c.l.b16 %v160
  %v790 = vunpack.c.l.b16 %v161
  %v791 = vunpack.c.l.b16 %v162
  %v792 = vunpack.c.l.b16 %v163
  %v793 = vunpack.c.l.b16 %v164
  %v794 = vunpack.c.l.b16 %v165
  %v795 = vunpack.c.l.b16 %v166
  %v796 = vunpack.c.l.b16 %v167
  %v797 = vunpack.c.l.b16 %v168
  %v798 = vunpack.c.l.b16 %v169
  %v799 = vunpack.c.l.b16 %v170
  %v800 = vunpack.c.l.b16 %v171
  %v801 = vunpack.c.l.b16 %v172
  %v802 = vunpack.c.l.b16 %v173
  %v803 = vunpack.c.l.b16 %v174
  %v804 = vunpack.c.l.b16 %v175
  %v805 = vunpack.c.l.b16 %v176
  %v806 = vpack.c.b16 %v743, %v742
  %v807 = vpack.c.b16 %v745, %v744
  %v808 = vpack.c.b16 %v747, %v746
  %v809 = vpack.c.b16 %v749, %v748
  %v810 = vpack.c.b16 %v751, %v750
  %v811 = vpack.c.b16 %v753, %v752
  %v812 = vpack.c.b16 %v755, %v754
  %v813 = vpack.c.b16 %v757, %v756
  %v814 = vpack.c.b16 %v759, %v758
  %v815 = vpack.c.b16 %v761, %v760
  %v816 = vpack.c.b16 %v763, %v762
  %v817 = vpack.c.b16 %v765, %v764
  %v818 = vpack.c.b16 %v767, %v766
  %v819 = vpack.c.b16 %v769, %v768
  %v820 = vpack.c.b16 %v771, %v770
  %v821 = vpack.c.b16 %v773, %v772
  %v822 = vpack.c.b16 %v775, %v774
  %v823 = vpack.c.b16 %v777, %v776
  %v824 = vpack.c.b16 %v779, %v778
  %v825 = vpack.c.b16 %v781, %v780
  %v826 = vpack.c.b16 %v783, %v782
  %v827 = vpack.c.b16 %v785, %v784
  %v828 = vpack.c.b16 %v787, %v786
  %v829 = vpack.c.b16 %v789, %v788
  %v830 = vpack.c.b16 %v791, %v790
  %v831 = vpack.c.b16 %v793, %v792
  %v832 = vpack.c.b16 %v795, %v794
  %v833 = vpack.c.b16 %v797, %v796
  %v834 = vpack.c.b16 %v799, %v798
  %v835 = vpack.c.b16 %v801, %v800
  %v836 = vpack.c.b16 %v803, %v802
  %v837 = vpack.c.b16 %v805, %v804
  %870 = vmatprep.subr.bf16.mxu0 0
  %871 = vmatpush1.bf16.msra.mxu0 %v806
  %872 = vmatprep.subr.bf16.mxu0 0
  %873 = vmatpush1.bf16.msra.mxu0 %v807
  %874 = vmatprep.subr.bf16.mxu0 0
  %875 = vmatpush1.bf16.msra.mxu0 %v808
  %876 = vmatprep.subr.bf16.mxu0 0
  %877 = vmatpush1.bf16.msra.mxu0 %v809
  %878 = vmatprep.subr.bf16.mxu0 0
  %879 = vmatpush1.bf16.msra.mxu0 %v810
  %880 = vmatprep.subr.bf16.mxu0 0
  %881 = vmatpush1.bf16.msra.mxu0 %v811
  %882 = vmatprep.subr.bf16.mxu0 0
  %883 = vmatpush1.bf16.msra.mxu0 %v812
  %884 = vmatprep.subr.bf16.mxu0 0
  %885 = vmatpush1.bf16.msra.mxu0 %v813
  %886 = vmatprep.subr.bf16.mxu0 0
  %887 = vmatpush1.bf16.msra.mxu0 %v814
  %888 = vmatprep.subr.bf16.mxu0 0
  %889 = vmatpush1.bf16.msra.mxu0 %v815
  %890 = vmatprep.subr.bf16.mxu0 0
  %891 = vmatpush1.bf16.msra.mxu0 %v816
  %892 = vmatprep.subr.bf16.mxu0 0
  %893 = vmatpush1.bf16.msra.mxu0 %v817
  %894 = vmatprep.subr.bf16.mxu0 0
  %895 = vmatpush1.bf16.msra.mxu0 %v818
  %896 = vmatprep.subr.bf16.mxu0 0
  %897 = vmatpush1.bf16.msra.mxu0 %v819
  %898 = vmatprep.subr.bf16.mxu0 0
  %899 = vmatpush1.bf16.msra.mxu0 %v820
  %900 = vmatprep.subr.bf16.mxu0 0
  %901 = vmatpush1.bf16.msra.mxu0 %v821
  %902 = vmatprep.mubr.bf16.mxu0 %v479
  %903 = vmatmul.mubr.bf16.gmra.mrb[0].mxu0 %v478
  %v904 = vpop.f32.mrb[0].mxu0
  %v905 = vadd.f32 %v182, %v904
  %v906 = vpop.f32.mrb[0].mxu0
  %v907 = vpop.f32.mrb[0].mxu0
  %v908 = vadd.f32 %v182, %v907
  %v909 = vpop.f32.mrb[0].mxu0
  %910 = vmatprep.mubr.bf16.mxu0 %v483
  %911 = vmatmul.mubr.bf16.gmra.mrb[0].mxu0 %v482
  %v912 = vpop.f32.mrb[0].mxu0
  %v913 = vadd.f32 %v182, %v912
  %v914 = vpop.f32.mrb[0].mxu0
  %v915 = vpop.f32.mrb[0].mxu0
  %v916 = vadd.f32 %v182, %v915
  %v917 = vpop.f32.mrb[0].mxu0
  %918 = vmatprep.mubr.bf16.mxu0 %v487
  %919 = vmatmul.mubr.bf16.gmra.mrb[0].mxu0 %v486
  %v920 = vpop.f32.mrb[0].mxu0
  %v921 = vadd.f32 %v182, %v920
  %v922 = vpop.f32.mrb[0].mxu0
  %v923 = vpop.f32.mrb[0].mxu0
  %v924 = vadd.f32 %v182, %v923
  %v925 = vpop.f32.mrb[0].mxu0
  %926 = vmatprep.mubr.bf16.mxu0 %v491
  %927 = vmatmul.mubr.bf16.gmra.mrb[0].mxu0 %v490
  %v928 = vpop.f32.mrb[0].mxu0
  %v929 = vadd.f32 %v182, %v928
  %v930 = vpop.f32.mrb[0].mxu0
  %v931 = vpop.f32.mrb[0].mxu0
  %v932 = vadd.f32 %v182, %v931
  %v933 = vpop.f32.mrb[0].mxu0
  %934 = vmatprep.mubr.bf16.mxu0 %v495
  %935 = vmatmul.mubr.bf16.gmra.mrb[0].mxu0 %v494
  %v936 = vpop.f32.mrb[0].mxu0
  %v937 = vadd.f32 %v182, %v936
  %v938 = vpop.f32.mrb[0].mxu0
  %v939 = vpop.f32.mrb[0].mxu0
  %v940 = vadd.f32 %v182, %v939
  %v941 = vpop.f32.mrb[0].mxu0
  %942 = vmatprep.mubr.bf16.mxu0 %v499
  %943 = vmatmul.mubr.bf16.gmra.mrb[0].mxu0 %v498
  %v944 = vpop.f32.mrb[0].mxu0
  %v945 = vadd.f32 %v182, %v944
  %v946 = vpop.f32.mrb[0].mxu0
  %v947 = vpop.f32.mrb[0].mxu0
  %v948 = vadd.f32 %v182, %v947
  %v949 = vpop.f32.mrb[0].mxu0
  %950 = vmatprep.mubr.bf16.mxu0 %v503
  %951 = vmatmul.mubr.bf16.gmra.mrb[0].mxu0 %v502
  %v952 = vpop.f32.mrb[0].mxu0
  %v953 = vadd.f32 %v182, %v952
  %v954 = vpop.f32.mrb[0].mxu0
  %v955 = vpop.f32.mrb[0].mxu0
  %v956 = vadd.f32 %v182, %v955
  %v957 = vpop.f32.mrb[0].mxu0
  %958 = vmatprep.mubr.bf16.mxu0 %v507
  %959 = vmatmul.mubr.bf16.gmra.mrb[0].mxu0 %v506
  %v960 = vpop.f32.mrb[0].mxu0
  %v961 = vadd.f32 %v182, %v960
  %v962 = vpop.f32.mrb[0].mxu0
  %v963 = vpop.f32.mrb[0].mxu0
  %v964 = vadd.f32 %v182, %v963
  %v965 = vpop.f32.mrb[0].mxu0
  %966 = vmatprep.mubr.bf16.mxu0 %v511
  %967 = vmatmul.mubr.bf16.gmra.mrb[0].mxu0 %v510
  %v968 = vpop.f32.mrb[0].mxu0
  %v969 = vadd.f32 %v182, %v968
  %v970 = vpop.f32.mrb[0].mxu0
  %v971 = vpop.f32.mrb[0].mxu0
  %v972 = vadd.f32 %v182, %v971
  %v973 = vpop.f32.mrb[0].mxu0
  %974 = vmatprep.mubr.bf16.mxu0 %v515
  %975 = vmatmul.mubr.bf16.gmra.mrb[0].mxu0 %v514
  %v976 = vpop.f32.mrb[0].mxu0
  %v977 = vadd.f32 %v182, %v976
  %v978 = vpop.f32.mrb[0].mxu0
  %v979 = vpop.f32.mrb[0].mxu0
  %v980 = vadd.f32 %v182, %v979
  %v981 = vpop.f32.mrb[0].mxu0
  %982 = vmatprep.mubr.bf16.mxu0 %v519
  %983 = vmatmul.mubr.bf16.gmra.mrb[0].mxu0 %v518
  %v984 = vpop.f32.mrb[0].mxu0
  %v985 = vadd.f32 %v182, %v984
  %v986 = vpop.f32.mrb[0].mxu0
  %v987 = vpop.f32.mrb[0].mxu0
  %v988 = vadd.f32 %v182, %v987
  %v989 = vpop.f32.mrb[0].mxu0
  %990 = vmatprep.mubr.bf16.mxu0 %v523
  %991 = vmatmul.mubr.bf16.gmra.mrb[0].mxu0 %v522
  %v992 = vpop.f32.mrb[0].mxu0
  %v993 = vadd.f32 %v182, %v992
  %v994 = vpop.f32.mrb[0].mxu0
  %v995 = vpop.f32.mrb[0].mxu0
  %v996 = vadd.f32 %v182, %v995
  %v997 = vpop.f32.mrb[0].mxu0
  %998 = vmatprep.mubr.bf16.mxu0 %v527
  %999 = vmatmul.mubr.bf16.gmra.mrb[0].mxu0 %v526
  %v1000 = vpop.f32.mrb[0].mxu0
  %v1001 = vadd.f32 %v182, %v1000
  %v1002 = vpop.f32.mrb[0].mxu0
  %v1003 = vpop.f32.mrb[0].mxu0
  %v1004 = vadd.f32 %v182, %v1003
  %v1005 = vpop.f32.mrb[0].mxu0
  %1006 = vmatprep.mubr.bf16.mxu0 %v531
  %1007 = vmatmul.mubr.bf16.gmra.mrb[0].mxu0 %v530
  %v1008 = vpop.f32.mrb[0].mxu0
  %v1009 = vadd.f32 %v182, %v1008
  %v1010 = vpop.f32.mrb[0].mxu0
  %v1011 = vpop.f32.mrb[0].mxu0
  %v1012 = vadd.f32 %v182, %v1011
  %v1013 = vpop.f32.mrb[0].mxu0
  %1014 = vmatprep.mubr.bf16.mxu0 %v535
  %1015 = vmatmul.mubr.bf16.gmra.mrb[0].mxu0 %v534
  %v1016 = vpop.f32.mrb[0].mxu0
  %v1017 = vadd.f32 %v182, %v1016
  %v1018 = vpop.f32.mrb[0].mxu0
  %v1019 = vpop.f32.mrb[0].mxu0
  %v1020 = vadd.f32 %v182, %v1019
  %v1021 = vpop.f32.mrb[0].mxu0
  %1022 = vmatprep.mubr.bf16.mxu0 %v539
  %1023 = vmatmul.mubr.bf16.gmra.mrb[0].mxu0 %v538
  %v1024 = vpop.f32.mrb[0].mxu0
  %v1025 = vadd.f32 %v182, %v1024
  %v1026 = vpop.f32.mrb[0].mxu0
  %v1027 = vpop.f32.mrb[0].mxu0
  %v1028 = vadd.f32 %v182, %v1027
  %v1029 = vpop.f32.mrb[0].mxu0
  %1030 = vmatprep.mubr.bf16.mxu0 %v543
  %1031 = vmatmul.mubr.bf16.gmra.mrb[0].mxu0 %v542
  %v1032 = vpop.f32.mrb[0].mxu0
  %v1033 = vadd.f32 %v182, %v1032
  %v1034 = vpop.f32.mrb[0].mxu0
  %v1035 = vpop.f32.mrb[0].mxu0
  %v1036 = vadd.f32 %v182, %v1035
  %v1037 = vpop.f32.mrb[0].mxu0
  %1038 = vmatprep.mubr.bf16.mxu0 %v547
  %1039 = vmatmul.mubr.bf16.gmra.mrb[0].mxu0 %v546
  %v1040 = vpop.f32.mrb[0].mxu0
  %v1041 = vadd.f32 %v182, %v1040
  %v1042 = vpop.f32.mrb[0].mxu0
  %v1043 = vpop.f32.mrb[0].mxu0
  %v1044 = vadd.f32 %v182, %v1043
  %v1045 = vpop.f32.mrb[0].mxu0
  %1046 = vmatprep.mubr.bf16.mxu0 %v551
  %1047 = vmatmul.mubr.bf16.gmra.mrb[0].mxu0 %v550
  %v1048 = vpop.f32.mrb[0].mxu0
  %v1049 = vadd.f32 %v182, %v1048
  %v1050 = vpop.f32.mrb[0].mxu0
  %v1051 = vpop.f32.mrb[0].mxu0
  %v1052 = vadd.f32 %v182, %v1051
  %v1053 = vpop.f32.mrb[0].mxu0
  %1054 = vmatprep.mubr.bf16.mxu0 %v555
  %1055 = vmatmul.mubr.bf16.gmra.mrb[0].mxu0 %v554
  %v1056 = vpop.f32.mrb[0].mxu0
  %v1057 = vadd.f32 %v182, %v1056
  %v1058 = vpop.f32.mrb[0].mxu0
  %v1059 = vpop.f32.mrb[0].mxu0
  %v1060 = vadd.f32 %v182, %v1059
  %v1061 = vpop.f32.mrb[0].mxu0
  %1062 = vmatprep.mubr.bf16.mxu0 %v559
  %1063 = vmatmul.mubr.bf16.gmra.mrb[0].mxu0 %v558
  %v1064 = vpop.f32.mrb[0].mxu0
  %v1065 = vadd.f32 %v182, %v1064
  %v1066 = vpop.f32.mrb[0].mxu0
  %v1067 = vpop.f32.mrb[0].mxu0
  %v1068 = vadd.f32 %v182, %v1067
  %v1069 = vpop.f32.mrb[0].mxu0
  %1070 = vmatprep.mubr.bf16.mxu0 %v563
  %1071 = vmatmul.mubr.bf16.gmra.mrb[0].mxu0 %v562
  %v1072 = vpop.f32.mrb[0].mxu0
  %v1073 = vadd.f32 %v182, %v1072
  %v1074 = vpop.f32.mrb[0].mxu0
  %v1075 = vpop.f32.mrb[0].mxu0
  %v1076 = vadd.f32 %v182, %v1075
  %v1077 = vpop.f32.mrb[0].mxu0
  %1078 = vmatprep.mubr.bf16.mxu0 %v567
  %1079 = vmatmul.mubr.bf16.gmra.mrb[0].mxu0 %v566
  %v1080 = vpop.f32.mrb[0].mxu0
  %v1081 = vadd.f32 %v182, %v1080
  %v1082 = vpop.f32.mrb[0].mxu0
  %v1083 = vpop.f32.mrb[0].mxu0
  %v1084 = vadd.f32 %v182, %v1083
  %v1085 = vpop.f32.mrb[0].mxu0
  %1086 = vmatprep.mubr.bf16.mxu0 %v571
  %1087 = vmatmul.mubr.bf16.gmra.mrb[0].mxu0 %v570
  %v1088 = vpop.f32.mrb[0].mxu0
  %v1089 = vadd.f32 %v182, %v1088
  %v1090 = vpop.f32.mrb[0].mxu0
  %v1091 = vpop.f32.mrb[0].mxu0
  %v1092 = vadd.f32 %v182, %v1091
  %v1093 = vpop.f32.mrb[0].mxu0
  %1094 = vmatprep.mubr.bf16.mxu0 %v575
  %1095 = vmatmul.mubr.bf16.gmra.mrb[0].mxu0 %v574
  %v1096 = vpop.f32.mrb[0].mxu0
  %v1097 = vadd.f32 %v182, %v1096
  %v1098 = vpop.f32.mrb[0].mxu0
  %v1099 = vpop.f32.mrb[0].mxu0
  %v1100 = vpop.f32.mrb[0].mxu0
  %1101 = vdwg.mxu0
  %1102 = vmatprep.subr.bf16.mxu0 0
  %1103 = vmatpush1.bf16.msra.mxu0 %v822
  %1104 = vmatprep.subr.bf16.mxu0 0
  %1105 = vmatpush1.bf16.msra.mxu0 %v823
  %1106 = vmatprep.subr.bf16.mxu0 0
  %1107 = vmatpush1.bf16.msra.mxu0 %v824
  %1108 = vmatprep.subr.bf16.mxu0 0
  %1109 = vmatpush1.bf16.msra.mxu0 %v825
  %1110 = vmatprep.subr.bf16.mxu0 0
  %1111 = vmatpush1.bf16.msra.mxu0 %v826
  %1112 = vmatprep.subr.bf16.mxu0 0
  %1113 = vmatpush1.bf16.msra.mxu0 %v827
  %1114 = vmatprep.subr.bf16.mxu0 0
  %1115 = vmatpush1.bf16.msra.mxu0 %v828
  %1116 = vmatprep.subr.bf16.mxu0 0
  %1117 = vmatpush1.bf16.msra.mxu0 %v829
  %1118 = vmatprep.subr.bf16.mxu0 0
  %1119 = vmatpush1.bf16.msra.mxu0 %v830
  %1120 = vmatprep.subr.bf16.mxu0 0
  %1121 = vmatpush1.bf16.msra.mxu0 %v831
  %1122 = vmatprep.subr.bf16.mxu0 0
  %1123 = vmatpush1.bf16.msra.mxu0 %v832
  %1124 = vmatprep.subr.bf16.mxu0 0
  %1125 = vmatpush1.bf16.msra.mxu0 %v833
  %1126 = vmatprep.subr.bf16.mxu0 0
  %1127 = vmatpush1.bf16.msra.mxu0 %v834
  %1128 = vmatprep.subr.bf16.mxu0 0
  %1129 = vmatpush1.bf16.msra.mxu0 %v835
  %1130 = vmatprep.subr.bf16.mxu0 0
  %1131 = vmatpush1.bf16.msra.mxu0 %v836
  %1132 = vmatprep.subr.bf16.mxu0 0
  %1133 = vmatpush1.bf16.msra.mxu0 %v837
  %1134 = vmatprep.mubr.bf16.mxu0 %v481
  %1135 = vmatmul.mubr.bf16.gmra.mrb[0].mxu0 %v480
  %v1136 = vpop.f32.mrb[0].mxu0
  %v1137 = vadd.f32 %v905, %v1136
  %v1138 = vpop.f32.mrb[0].mxu0
  %v1139 = vpop.f32.mrb[0].mxu0
  %v1140 = vadd.f32 %v908, %v1139
  %v1141 = vpop.f32.mrb[0].mxu0
  %1142 = vmatprep.mubr.bf16.mxu0 %v485
  %1143 = vmatmul.mubr.bf16.gmra.mrb[0].mxu0 %v484
  %v1144 = vpop.f32.mrb[0].mxu0
  %v1145 = vadd.f32 %v913, %v1144
  %v1146 = vpop.f32.mrb[0].mxu0
  %v1147 = vpop.f32.mrb[0].mxu0
  %v1148 = vadd.f32 %v916, %v1147
  %v1149 = vpop.f32.mrb[0].mxu0
  %1150 = vmatprep.mubr.bf16.mxu0 %v489
  %1151 = vmatmul.mubr.bf16.gmra.mrb[0].mxu0 %v488
  %v1152 = vpop.f32.mrb[0].mxu0
  %v1153 = vadd.f32 %v921, %v1152
  %v1154 = vpop.f32.mrb[0].mxu0
  %v1155 = vpop.f32.mrb[0].mxu0
  %v1156 = vadd.f32 %v924, %v1155
  %v1157 = vpop.f32.mrb[0].mxu0
  %1158 = vmatprep.mubr.bf16.mxu0 %v493
  %1159 = vmatmul.mubr.bf16.gmra.mrb[0].mxu0 %v492
  %v1160 = vpop.f32.mrb[0].mxu0
  %v1161 = vadd.f32 %v929, %v1160
  %v1162 = vpop.f32.mrb[0].mxu0
  %v1163 = vpop.f32.mrb[0].mxu0
  %v1164 = vadd.f32 %v932, %v1163
  %v1165 = vpop.f32.mrb[0].mxu0
  %1166 = vmatprep.mubr.bf16.mxu0 %v497
  %1167 = vmatmul.mubr.bf16.gmra.mrb[0].mxu0 %v496
  %v1168 = vpop.f32.mrb[0].mxu0
  %v1169 = vadd.f32 %v937, %v1168
  %v1170 = vpop.f32.mrb[0].mxu0
  %v1171 = vpop.f32.mrb[0].mxu0
  %v1172 = vadd.f32 %v940, %v1171
  %v1173 = vpop.f32.mrb[0].mxu0
  %1174 = vmatprep.mubr.bf16.mxu0 %v501
  %1175 = vmatmul.mubr.bf16.gmra.mrb[0].mxu0 %v500
  %v1176 = vpop.f32.mrb[0].mxu0
  %v1177 = vadd.f32 %v945, %v1176
  %v1178 = vpop.f32.mrb[0].mxu0
  %v1179 = vpop.f32.mrb[0].mxu0
  %v1180 = vadd.f32 %v948, %v1179
  %v1181 = vpop.f32.mrb[0].mxu0
  %1182 = vmatprep.mubr.bf16.mxu0 %v505
  %1183 = vmatmul.mubr.bf16.gmra.mrb[0].mxu0 %v504
  %v1184 = vpop.f32.mrb[0].mxu0
  %v1185 = vadd.f32 %v953, %v1184
  %v1186 = vpop.f32.mrb[0].mxu0
  %v1187 = vpop.f32.mrb[0].mxu0
  %v1188 = vadd.f32 %v956, %v1187
  %v1189 = vpop.f32.mrb[0].mxu0
  %1190 = vmatprep.mubr.bf16.mxu0 %v509
  %1191 = vmatmul.mubr.bf16.gmra.mrb[0].mxu0 %v508
  %v1192 = vpop.f32.mrb[0].mxu0
  %v1193 = vadd.f32 %v961, %v1192
  %v1194 = vpop.f32.mrb[0].mxu0
  %v1195 = vpop.f32.mrb[0].mxu0
  %v1196 = vadd.f32 %v964, %v1195
  %v1197 = vpop.f32.mrb[0].mxu0
  %1198 = vmatprep.mubr.bf16.mxu0 %v513
  %1199 = vmatmul.mubr.bf16.gmra.mrb[0].mxu0 %v512
  %v1200 = vpop.f32.mrb[0].mxu0
  %v1201 = vadd.f32 %v969, %v1200
  %v1202 = vpop.f32.mrb[0].mxu0
  %v1203 = vpop.f32.mrb[0].mxu0
  %v1204 = vadd.f32 %v972, %v1203
  %v1205 = vpop.f32.mrb[0].mxu0
  %1206 = vmatprep.mubr.bf16.mxu0 %v517
  %1207 = vmatmul.mubr.bf16.gmra.mrb[0].mxu0 %v516
  %v1208 = vpop.f32.mrb[0].mxu0
  %v1209 = vadd.f32 %v977, %v1208
  %v1210 = vpop.f32.mrb[0].mxu0
  %v1211 = vpop.f32.mrb[0].mxu0
  %v1212 = vadd.f32 %v980, %v1211
  %v1213 = vpop.f32.mrb[0].mxu0
  %1214 = vmatprep.mubr.bf16.mxu0 %v521
  %1215 = vmatmul.mubr.bf16.gmra.mrb[0].mxu0 %v520
  %v1216 = vpop.f32.mrb[0].mxu0
  %v1217 = vadd.f32 %v985, %v1216
  %v1218 = vpop.f32.mrb[0].mxu0
  %v1219 = vpop.f32.mrb[0].mxu0
  %v1220 = vadd.f32 %v988, %v1219
  %v1221 = vpop.f32.mrb[0].mxu0
  %1222 = vmatprep.mubr.bf16.mxu0 %v525
  %1223 = vmatmul.mubr.bf16.gmra.mrb[0].mxu0 %v524
  %v1224 = vpop.f32.mrb[0].mxu0
  %v1225 = vadd.f32 %v993, %v1224
  %v1226 = vpop.f32.mrb[0].mxu0
  %v1227 = vpop.f32.mrb[0].mxu0
  %v1228 = vadd.f32 %v996, %v1227
  %v1229 = vpop.f32.mrb[0].mxu0
  %1230 = vmatprep.mubr.bf16.mxu0 %v529
  %1231 = vmatmul.mubr.bf16.gmra.mrb[0].mxu0 %v528
  %v1232 = vpop.f32.mrb[0].mxu0
  %v1233 = vadd.f32 %v1001, %v1232
  %v1234 = vpop.f32.mrb[0].mxu0
  %v1235 = vpop.f32.mrb[0].mxu0
  %v1236 = vadd.f32 %v1004, %v1235
  %v1237 = vpop.f32.mrb[0].mxu0
  %1238 = vmatprep.mubr.bf16.mxu0 %v533
  %1239 = vmatmul.mubr.bf16.gmra.mrb[0].mxu0 %v532
  %v1240 = vpop.f32.mrb[0].mxu0
  %v1241 = vadd.f32 %v1009, %v1240
  %v1242 = vpop.f32.mrb[0].mxu0
  %v1243 = vpop.f32.mrb[0].mxu0
  %v1244 = vadd.f32 %v1012, %v1243
  %v1245 = vpop.f32.mrb[0].mxu0
  %1246 = vmatprep.mubr.bf16.mxu0 %v537
  %1247 = vmatmul.mubr.bf16.gmra.mrb[0].mxu0 %v536
  %v1248 = vpop.f32.mrb[0].mxu0
  %v1249 = vadd.f32 %v1017, %v1248
  %v1250 = vpop.f32.mrb[0].mxu0
  %v1251 = vpop.f32.mrb[0].mxu0
  %v1252 = vadd.f32 %v1020, %v1251
  %v1253 = vpop.f32.mrb[0].mxu0
  %1254 = vmatprep.mubr.bf16.mxu0 %v541
  %1255 = vmatmul.mubr.bf16.gmra.mrb[0].mxu0 %v540
  %v1256 = vpop.f32.mrb[0].mxu0
  %v1257 = vadd.f32 %v1025, %v1256
  %v1258 = vpop.f32.mrb[0].mxu0
  %v1259 = vpop.f32.mrb[0].mxu0
  %v1260 = vadd.f32 %v1028, %v1259
  %v1261 = vpop.f32.mrb[0].mxu0
  %1262 = vmatprep.mubr.bf16.mxu0 %v545
  %1263 = vmatmul.mubr.bf16.gmra.mrb[0].mxu0 %v544
  %v1264 = vpop.f32.mrb[0].mxu0
  %v1265 = vadd.f32 %v1033, %v1264
  %v1266 = vpop.f32.mrb[0].mxu0
  %v1267 = vpop.f32.mrb[0].mxu0
  %v1268 = vadd.f32 %v1036, %v1267
  %v1269 = vpop.f32.mrb[0].mxu0
  %1270 = vmatprep.mubr.bf16.mxu0 %v549
  %1271 = vmatmul.mubr.bf16.gmra.mrb[0].mxu0 %v548
  %v1272 = vpop.f32.mrb[0].mxu0
  %v1273 = vadd.f32 %v1041, %v1272
  %v1274 = vpop.f32.mrb[0].mxu0
  %v1275 = vpop.f32.mrb[0].mxu0
  %v1276 = vadd.f32 %v1044, %v1275
  %v1277 = vpop.f32.mrb[0].mxu0
  %1278 = vmatprep.mubr.bf16.mxu0 %v553
  %1279 = vmatmul.mubr.bf16.gmra.mrb[0].mxu0 %v552
  %v1280 = vpop.f32.mrb[0].mxu0
  %v1281 = vadd.f32 %v1049, %v1280
  %v1282 = vpop.f32.mrb[0].mxu0
  %v1283 = vpop.f32.mrb[0].mxu0
  %v1284 = vadd.f32 %v1052, %v1283
  %v1285 = vpop.f32.mrb[0].mxu0
  %1286 = vmatprep.mubr.bf16.mxu0 %v557
  %1287 = vmatmul.mubr.bf16.gmra.mrb[0].mxu0 %v556
  %v1288 = vpop.f32.mrb[0].mxu0
  %v1289 = vadd.f32 %v1057, %v1288
  %v1290 = vpop.f32.mrb[0].mxu0
  %v1291 = vpop.f32.mrb[0].mxu0
  %v1292 = vadd.f32 %v1060, %v1291
  %v1293 = vpop.f32.mrb[0].mxu0
  %1294 = vmatprep.mubr.bf16.mxu0 %v561
  %1295 = vmatmul.mubr.bf16.gmra.mrb[0].mxu0 %v560
  %v1296 = vpop.f32.mrb[0].mxu0
  %v1297 = vadd.f32 %v1065, %v1296
  %v1298 = vpop.f32.mrb[0].mxu0
  %v1299 = vpop.f32.mrb[0].mxu0
  %v1300 = vadd.f32 %v1068, %v1299
  %v1301 = vpop.f32.mrb[0].mxu0
  %1302 = vmatprep.mubr.bf16.mxu0 %v565
  %1303 = vmatmul.mubr.bf16.gmra.mrb[0].mxu0 %v564
  %v1304 = vpop.f32.mrb[0].mxu0
  %v1305 = vadd.f32 %v1073, %v1304
  %v1306 = vpop.f32.mrb[0].mxu0
  %v1307 = vpop.f32.mrb[0].mxu0
  %v1308 = vadd.f32 %v1076, %v1307
  %v1309 = vpop.f32.mrb[0].mxu0
  %1310 = vmatprep.mubr.bf16.mxu0 %v569
  %1311 = vmatmul.mubr.bf16.gmra.mrb[0].mxu0 %v568
  %v1312 = vpop.f32.mrb[0].mxu0
  %v1313 = vadd.f32 %v1081, %v1312
  %v1314 = vpop.f32.mrb[0].mxu0
  %v1315 = vpop.f32.mrb[0].mxu0
  %v1316 = vadd.f32 %v1084, %v1315
  %v1317 = vpop.f32.mrb[0].mxu0
  %1318 = vmatprep.mubr.bf16.mxu0 %v573
  %1319 = vmatmul.mubr.bf16.gmra.mrb[0].mxu0 %v572
  %v1320 = vpop.f32.mrb[0].mxu0
  %v1321 = vadd.f32 %v1089, %v1320
  %v1322 = vpop.f32.mrb[0].mxu0
  %v1323 = vpop.f32.mrb[0].mxu0
  %v1324 = vadd.f32 %v1092, %v1323
  %v1325 = vpop.f32.mrb[0].mxu0
  %1326 = vmatprep.mubr.bf16.mxu0 %v577
  %1327 = vmatmul.mubr.bf16.gmra.mrb[0].mxu0 %v576
  %v1328 = vpop.f32.mrb[0].mxu0
  %v1329 = vadd.f32 %v1097, %v1328
  %v1330 = vpop.f32.mrb[0].mxu0
  %v1331 = vpop.f32.mrb[0].mxu0
  %v1332 = vpop.f32.mrb[0].mxu0
  %1333 = vdwg.mxu0
  %v1334 = vmax.f32 %v1137, 0.0
  %v1335 = vmax.f32 %v1140, 0.0
  %v1336 = vmax.f32 %v1145, 0.0
  %v1337 = vmax.f32 %v1148, 0.0
  %v1338 = vmax.f32 %v1153, 0.0
  %v1339 = vmax.f32 %v1156, 0.0
  %v1340 = vmax.f32 %v1161, 0.0
  %v1341 = vmax.f32 %v1164, 0.0
  %v1342 = vmax.f32 %v1169, 0.0
  %v1343 = vmax.f32 %v1172, 0.0
  %v1344 = vmax.f32 %v1177, 0.0
  %v1345 = vmax.f32 %v1180, 0.0
  %v1346 = vmax.f32 %v1185, 0.0
  %v1347 = vmax.f32 %v1188, 0.0
  %v1348 = vmax.f32 %v1193, 0.0
  %v1349 = vmax.f32 %v1196, 0.0
  %v1350 = vmax.f32 %v1201, 0.0
  %v1351 = vmax.f32 %v1204, 0.0
  %v1352 = vmax.f32 %v1209, 0.0
  %v1353 = vmax.f32 %v1212, 0.0
  %v1354 = vmax.f32 %v1217, 0.0
  %v1355 = vmax.f32 %v1220, 0.0
  %v1356 = vmax.f32 %v1225, 0.0
  %v1357 = vmax.f32 %v1228, 0.0
  %v1358 = vmax.f32 %v1233, 0.0
  %v1359 = vmax.f32 %v1236, 0.0
  %v1360 = vmax.f32 %v1241, 0.0
  %v1361 = vmax.f32 %v1244, 0.0
  %v1362 = vmax.f32 %v1249, 0.0
  %v1363 = vmax.f32 %v1252, 0.0
  %v1364 = vmax.f32 %v1257, 0.0
  %v1365 = vmax.f32 %v1260, 0.0
  %v1366 = vmax.f32 %v1265, 0.0
  %v1367 = vmax.f32 %v1268, 0.0
  %v1368 = vmax.f32 %v1273, 0.0
  %v1369 = vmax.f32 %v1276, 0.0
  %v1370 = vmax.f32 %v1281, 0.0
  %v1371 = vmax.f32 %v1284, 0.0
  %v1372 = vmax.f32 %v1289, 0.0
  %v1373 = vmax.f32 %v1292, 0.0
  %v1374 = vmax.f32 %v1297, 0.0
  %v1375 = vmax.f32 %v1300, 0.0
  %v1376 = vmax.f32 %v1305, 0.0
  %v1377 = vmax.f32 %v1308, 0.0
  %v1378 = vmax.f32 %v1313, 0.0
  %v1379 = vmax.f32 %v1316, 0.0
  %v1380 = vmax.f32 %v1321, 0.0
  %v1381 = vmax.f32 %v1324, 0.0
  %v1382 = vmax.f32 %v1329, 0.0
  %v1383 = vpack.c.bf16 %v1335, %v1334
  %v1384 = vpack.c.bf16 %v1337, %v1336
  %v1385 = vpack.c.bf16 %v1339, %v1338
  %v1386 = vpack.c.bf16 %v1341, %v1340
  %v1387 = vpack.c.bf16 %v1343, %v1342
  %v1388 = vpack.c.bf16 %v1345, %v1344
  %v1389 = vpack.c.bf16 %v1347, %v1346
  %v1390 = vpack.c.bf16 %v1349, %v1348
  %v1391 = vpack.c.bf16 %v1351, %v1350
  %v1392 = vpack.c.bf16 %v1353, %v1352
  %v1393 = vpack.c.bf16 %v1355, %v1354
  %v1394 = vpack.c.bf16 %v1357, %v1356
  %v1395 = vpack.c.bf16 %v1359, %v1358
  %v1396 = vpack.c.bf16 %v1361, %v1360
  %v1397 = vpack.c.bf16 %v1363, %v1362
  %v1398 = vpack.c.bf16 %v1365, %v1364
  %v1399 = vpack.c.bf16 %v1367, %v1366
  %v1400 = vpack.c.bf16 %v1369, %v1368
  %v1401 = vpack.c.bf16 %v1371, %v1370
  %v1402 = vpack.c.bf16 %v1373, %v1372
  %v1403 = vpack.c.bf16 %v1375, %v1374
  %v1404 = vpack.c.bf16 %v1377, %v1376
  %v1405 = vpack.c.bf16 %v1379, %v1378
  %v1406 = vpack.c.bf16 %v1381, %v1380
  %v1407 = vpack.c.bf16 %v1382, %v1382
  %v1433 = vunpack.c.l.b16 %v1383
  %v1434 = vunpack.c.h.b16 %v1383
  %v1435 = vunpack.c.l.b16 %v1384
  %v1436 = vunpack.c.h.b16 %v1384
  %v1437 = vunpack.c.l.b16 %v1385
  %v1438 = vunpack.c.h.b16 %v1385
  %v1439 = vunpack.c.l.b16 %v1386
  %v1440 = vunpack.c.h.b16 %v1386
  %v1441 = vunpack.c.l.b16 %v1387
  %v1442 = vunpack.c.h.b16 %v1387
  %v1443 = vunpack.c.l.b16 %v1388
  %v1444 = vunpack.c.h.b16 %v1388
  %v1445 = vunpack.c.l.b16 %v1389
  %v1446 = vunpack.c.h.b16 %v1389
  %v1447 = vunpack.c.l.b16 %v1390
  %v1448 = vunpack.c.h.b16 %v1390
  %v1449 = vunpack.c.l.b16 %v1391
  %v1450 = vunpack.c.h.b16 %v1391
  %v1451 = vunpack.c.l.b16 %v1392
  %v1452 = vunpack.c.h.b16 %v1392
  %v1453 = vunpack.c.l.b16 %v1393
  %v1454 = vunpack.c.h.b16 %v1393
  %v1455 = vunpack.c.l.b16 %v1394
  %v1456 = vunpack.c.h.b16 %v1394
  %v1457 = vunpack.c.l.b16 %v1395
  %v1458 = vunpack.c.h.b16 %v1395
  %v1459 = vunpack.c.l.b16 %v1396
  %v1460 = vunpack.c.h.b16 %v1396
  %v1461 = vunpack.c.l.b16 %v1397
  %v1462 = vunpack.c.h.b16 %v1397
  %v1463 = vunpack.c.l.b16 %v1398
  %v1464 = vunpack.c.h.b16 %v1398
  %v1465 = vunpack.c.l.b16 %v1399
  %v1466 = vunpack.c.h.b16 %v1399
  %v1467 = vunpack.c.l.b16 %v1400
  %v1468 = vunpack.c.h.b16 %v1400
  %v1469 = vunpack.c.l.b16 %v1401
  %v1470 = vunpack.c.h.b16 %v1401
  %v1471 = vunpack.c.l.b16 %v1402
  %v1472 = vunpack.c.h.b16 %v1402
  %v1473 = vunpack.c.l.b16 %v1403
  %v1474 = vunpack.c.h.b16 %v1403
  %v1475 = vunpack.c.l.b16 %v1404
  %v1476 = vunpack.c.h.b16 %v1404
  %v1477 = vunpack.c.l.b16 %v1405
  %v1478 = vunpack.c.h.b16 %v1405
  %v1479 = vunpack.c.l.b16 %v1406
  %v1480 = vunpack.c.h.b16 %v1406
  %v1481 = vunpack.c.l.b16 %v1407
  %v1482 = vpack.c.b16 %v1433, %v1433
  %v1483 = vpack.c.b16 %v1434, %v1434
  %v1484 = vpack.c.b16 %v1435, %v1435
  %v1485 = vpack.c.b16 %v1436, %v1436
  %v1486 = vpack.c.b16 %v1437, %v1437
  %v1487 = vpack.c.b16 %v1438, %v1438
  %v1488 = vpack.c.b16 %v1439, %v1439
  %v1489 = vpack.c.b16 %v1440, %v1440
  %v1490 = vpack.c.b16 %v1441, %v1441
  %v1491 = vpack.c.b16 %v1442, %v1442
  %v1492 = vpack.c.b16 %v1443, %v1443
  %v1493 = vpack.c.b16 %v1444, %v1444
  %v1494 = vpack.c.b16 %v1445, %v1445
  %v1495 = vpack.c.b16 %v1446, %v1446
  %v1496 = vpack.c.b16 %v1447, %v1447
  %v1497 = vpack.c.b16 %v1448, %v1448
  %v1498 = vpack.c.b16 %v1449, %v1449
  %v1499 = vpack.c.b16 %v1450, %v1450
  %v1500 = vpack.c.b16 %v1451, %v1451
  %v1501 = vpack.c.b16 %v1452, %v1452
  %v1502 = vpack.c.b16 %v1453, %v1453
  %v1503 = vpack.c.b16 %v1454, %v1454
  %v1504 = vpack.c.b16 %v1455, %v1455
  %v1505 = vpack.c.b16 %v1456, %v1456
  %v1506 = vpack.c.b16 %v1457, %v1457
  %v1507 = vpack.c.b16 %v1458, %v1458
  %v1508 = vpack.c.b16 %v1459, %v1459
  %v1509 = vpack.c.b16 %v1460, %v1460
  %v1510 = vpack.c.b16 %v1461, %v1461
  %v1511 = vpack.c.b16 %v1462, %v1462
  %v1512 = vpack.c.b16 %v1463, %v1463
  %v1513 = vpack.c.b16 %v1464, %v1464
  %v1514 = vpack.c.b16 %v1465, %v1465
  %v1515 = vpack.c.b16 %v1466, %v1466
  %v1516 = vpack.c.b16 %v1467, %v1467
  %v1517 = vpack.c.b16 %v1468, %v1468
  %v1518 = vpack.c.b16 %v1469, %v1469
  %v1519 = vpack.c.b16 %v1470, %v1470
  %v1520 = vpack.c.b16 %v1471, %v1471
  %v1521 = vpack.c.b16 %v1472, %v1472
  %v1522 = vpack.c.b16 %v1473, %v1473
  %v1523 = vpack.c.b16 %v1474, %v1474
  %v1524 = vpack.c.b16 %v1475, %v1475
  %v1525 = vpack.c.b16 %v1476, %v1476
  %v1526 = vpack.c.b16 %v1477, %v1477
  %v1527 = vpack.c.b16 %v1478, %v1478
  %v1528 = vpack.c.b16 %v1479, %v1479
  %v1529 = vpack.c.b16 %v1480, %v1480
  %v1530 = vpack.c.b16 %v1481, %v1481
  %vm1580 = vcmask 519168
  %1581 = vst.msk [vmem:[%s3] sm:$0xf] %vm1580, %v1482
  %1582 = vst.msk [vmem:[%s3 + $0x4] sm:$0xf] %vm1580, %v1483
  %1583 = vst.msk [vmem:[%s3 + $0x8] sm:$0xf] %vm1580, %v1484
  %1584 = vst.msk [vmem:[%s3 + $0xc] sm:$0xf] %vm1580, %v1485
  %1585 = vst.msk [vmem:[%s3 + $0x10] sm:$0xf] %vm1580, %v1486
  %1586 = vst.msk [vmem:[%s3 + $0x14] sm:$0xf] %vm1580, %v1487
  %1587 = vst.msk [vmem:[%s3 + $0x18] sm:$0xf] %vm1580, %v1488
  %1588 = vst.msk [vmem:[%s3 + $0x1c] sm:$0xf] %vm1580, %v1489
  %1589 = vst.msk [vmem:[%s3 + $0x20] sm:$0xf] %vm1580, %v1490
  %1590 = vst.msk [vmem:[%s3 + $0x24] sm:$0xf] %vm1580, %v1491
  %1591 = vst.msk [vmem:[%s3 + $0x28] sm:$0xf] %vm1580, %v1492
  %1592 = vst.msk [vmem:[%s3 + $0x2c] sm:$0xf] %vm1580, %v1493
  %1593 = vst.msk [vmem:[%s3 + $0x30] sm:$0xf] %vm1580, %v1494
  %1594 = vst.msk [vmem:[%s3 + $0x34] sm:$0xf] %vm1580, %v1495
  %1595 = vst.msk [vmem:[%s3 + $0x38] sm:$0xf] %vm1580, %v1496
  %1596 = vst.msk [vmem:[%s3 + $0x3c] sm:$0xf] %vm1580, %v1497
  %1597 = vst.msk [vmem:[%s3 + $0x40] sm:$0xf] %vm1580, %v1498
  %1598 = vst.msk [vmem:[%s3 + $0x44] sm:$0xf] %vm1580, %v1499
  %1599 = vst.msk [vmem:[%s3 + $0x48] sm:$0xf] %vm1580, %v1500
  %1600 = vst.msk [vmem:[%s3 + $0x4c] sm:$0xf] %vm1580, %v1501
  %1601 = vst.msk [vmem:[%s3 + $0x50] sm:$0xf] %vm1580, %v1502
  %1602 = vst.msk [vmem:[%s3 + $0x54] sm:$0xf] %vm1580, %v1503
  %1603 = vst.msk [vmem:[%s3 + $0x58] sm:$0xf] %vm1580, %v1504
  %1604 = vst.msk [vmem:[%s3 + $0x5c] sm:$0xf] %vm1580, %v1505
  %1605 = vst.msk [vmem:[%s3 + $0x60] sm:$0xf] %vm1580, %v1506
  %1606 = vst.msk [vmem:[%s3 + $0x64] sm:$0xf] %vm1580, %v1507
  %1607 = vst.msk [vmem:[%s3 + $0x68] sm:$0xf] %vm1580, %v1508
  %1608 = vst.msk [vmem:[%s3 + $0x6c] sm:$0xf] %vm1580, %v1509
  %1609 = vst.msk [vmem:[%s3 + $0x70] sm:$0xf] %vm1580, %v1510
  %1610 = vst.msk [vmem:[%s3 + $0x74] sm:$0xf] %vm1580, %v1511
  %1611 = vst.msk [vmem:[%s3 + $0x78] sm:$0xf] %vm1580, %v1512
  %1612 = vst.msk [vmem:[%s3 + $0x7c] sm:$0xf] %vm1580, %v1513
  %1613 = vst.msk [vmem:[%s3 + $0x80] sm:$0xf] %vm1580, %v1514
  %1614 = vst.msk [vmem:[%s3 + $0x84] sm:$0xf] %vm1580, %v1515
  %1615 = vst.msk [vmem:[%s3 + $0x88] sm:$0xf] %vm1580, %v1516
  %1616 = vst.msk [vmem:[%s3 + $0x8c] sm:$0xf] %vm1580, %v1517
  %1617 = vst.msk [vmem:[%s3 + $0x90] sm:$0xf] %vm1580, %v1518
  %1618 = vst.msk [vmem:[%s3 + $0x94] sm:$0xf] %vm1580, %v1519
  %1619 = vst.msk [vmem:[%s3 + $0x98] sm:$0xf] %vm1580, %v1520
  %1620 = vst.msk [vmem:[%s3 + $0x9c] sm:$0xf] %vm1580, %v1521
  %1621 = vst.msk [vmem:[%s3 + $0xa0] sm:$0xf] %vm1580, %v1522
  %1622 = vst.msk [vmem:[%s3 + $0xa4] sm:$0xf] %vm1580, %v1523
  %1623 = vst.msk [vmem:[%s3 + $0xa8] sm:$0xf] %vm1580, %v1524
  %1624 = vst.msk [vmem:[%s3 + $0xac] sm:$0xf] %vm1580, %v1525
  %1625 = vst.msk [vmem:[%s3 + $0xb0] sm:$0xf] %vm1580, %v1526
  %1626 = vst.msk [vmem:[%s3 + $0xb4] sm:$0xf] %vm1580, %v1527
  %1627 = vst.msk [vmem:[%s3 + $0xb8] sm:$0xf] %vm1580, %v1528
  %1628 = vst.msk [vmem:[%s3 + $0xbc] sm:$0xf] %vm1580, %v1529
  %1629 = vst.msk [vmem:[%s3 + $0xc0] sm:$0xf] %vm1580, %v1530
  // Predicated region
  $region14: #{model_image_scratch_forward.6} parent=0 // pred_check
    _
  $region15: #{model_image_scratch_forward.6} parent=0 // pred_check_branch
    %1631 = sbr.rel (0) target = $region17
  $region16: #{model_image_scratch_forward.6} parent=0 // pred_region
    _
  $region17: #{model_image_scratch_forward.6} parent=0 // pred_fallthru
    _
  // Predicated region
  $region18: #{model_image_scratch_forward.6} parent=0 // pred_check
    _
  $region19: #{model_image_scratch_forward.6} parent=0 // pred_check_branch
    %1633 = sbr.rel (0) target = $region21
  $region20: #{model_image_scratch_forward.6} parent=0 // pred_region
    _
  $region21: #{model_image_scratch_forward.6} parent=0 // pred_fallthru
    _

// kernel: model_image_scratch_forward.7
$region0: #{model_image_scratch_forward.7}
  #allocation0 [shape = 'u32[]', space=smem, size = 0x4, offset = 0x4, fixed_abs, tag = 'smem constant byte address 0x4 - core index']
  #allocation1 [shape = 'u32[144,128]{1,0:T(1,128)}', space=vmem, size = 0x12000, scoped, tag = 'internal scratch']
  %s0 = inlined_call_operand.vmem [shape: bf16[72,1024], index: 0, kind: input, shape index: {}]
  %s1 = inlined_call_operand.vmem [shape: bf16[1024,128], index: 1, kind: input, shape index: {}]
  %s2 = inlined_call_operand.vmem [shape: f32[1,128], index: 2, kind: input, shape index: {}]
  %s3 = inlined_call_operand.vmem [shape: bf16[72,128], index: 3, kind: output, shape index: {}]
  %s4 = sld [smem:[#allocation0]]
  $region22: #{model_image_scratch_forward.7} parent=0
    _
  %s6 = ssub.s32 1, %s4
  %s7 = scalar_select 0, %s6, %s4
  // Predicated region
  $region2: #{model_image_scratch_forward.7} parent=0 // pred_check
    _
  $region3: #{model_image_scratch_forward.7} parent=0 // pred_check_branch
    %9 = sbr.rel (0) target = $region5
  $region4: #{model_image_scratch_forward.7} parent=0 // pred_region
    _
  $region5: #{model_image_scratch_forward.7} parent=0 // pred_fallthru
    _
  // Predicated region
  $region6: #{model_image_scratch_forward.7} parent=0 // pred_check
    _
  $region7: #{model_image_scratch_forward.7} parent=0 // pred_check_branch
    %11 = sbr.rel (0) target = $region9
  $region8: #{model_image_scratch_forward.7} parent=0 // pred_region
    _
  $region9: #{model_image_scratch_forward.7} parent=0 // pred_fallthru
    _
  // Predicated region
  $region10: #{model_image_scratch_forward.7} parent=0 // pred_check
    _
  $region11: #{model_image_scratch_forward.7} parent=0 // pred_check_branch
    %13 = sbr.rel (0) target = $region13
  $region12: #{model_image_scratch_forward.7} parent=0 // pred_region
    _
  $region13: #{model_image_scratch_forward.7} parent=0 // pred_fallthru
    _
  %v15 = vld [vmem:[%s0] sm:$0xff]
  %v16 = vld [vmem:[%s0 + $0x8] sm:$0xff]
  %v17 = vld [vmem:[%s0 + $0x10] sm:$0xff]
  %v18 = vld [vmem:[%s0 + $0x18] sm:$0xff]
  %v19 = vld [vmem:[%s0 + $0x20] sm:$0xff]
  %v20 = vld [vmem:[%s0 + $0x28] sm:$0xff]
  %v21 = vld [vmem:[%s0 + $0x30] sm:$0xff]
  %v22 = vld [vmem:[%s0 + $0x38] sm:$0xff]
  %v23 = vld [vmem:[%s0 + $0x40] sm:$0xff]
  %v24 = vld [vmem:[%s0 + $0x48] sm:$0xff]
  %v25 = vld [vmem:[%s0 + $0x50] sm:$0xff]
  %v26 = vld [vmem:[%s0 + $0x58] sm:$0xff]
  %v27 = vld [vmem:[%s0 + $0x60] sm:$0xff]
  %v28 = vld [vmem:[%s0 + $0x68] sm:$0xff]
  %v29 = vld [vmem:[%s0 + $0x70] sm:$0xff]
  %v30 = vld [vmem:[%s0 + $0x78] sm:$0xff]
  %v31 = vld [vmem:[%s0 + $0x80] sm:$0xff]
  %v32 = vld [vmem:[%s0 + $0x88] sm:$0xff]
  %v33 = vld [vmem:[%s0 + $0x90] sm:$0xff]
  %v34 = vld [vmem:[%s0 + $0x98] sm:$0xff]
  %v35 = vld [vmem:[%s0 + $0xa0] sm:$0xff]
  %v36 = vld [vmem:[%s0 + $0xa8] sm:$0xff]
  %v37 = vld [vmem:[%s0 + $0xb0] sm:$0xff]
  %v38 = vld [vmem:[%s0 + $0xb8] sm:$0xff]
  %v39 = vld [vmem:[%s0 + $0xc0] sm:$0xff]
  %v40 = vld [vmem:[%s0 + $0xc8] sm:$0xff]
  %v41 = vld [vmem:[%s0 + $0xd0] sm:$0xff]
  %v42 = vld [vmem:[%s0 + $0xd8] sm:$0xff]
  %v43 = vld [vmem:[%s0 + $0xe0] sm:$0xff]
  %v44 = vld [vmem:[%s0 + $0xe8] sm:$0xff]
  %v45 = vld [vmem:[%s0 + $0xf0] sm:$0xff]
  %v46 = vld [vmem:[%s0 + $0xf8] sm:$0xff]
  %v47 = vld [vmem:[%s0 + $0x100] sm:$0xff]
  %v48 = vld [vmem:[%s0 + $0x108] sm:$0xff]
  %v49 = vld [vmem:[%s0 + $0x110] sm:$0xff]
  %v50 = vld [vmem:[%s0 + $0x118] sm:$0xff]
  %v51 = vld [vmem:[%s1] sm:$0xf]
  %v52 = vld [vmem:[%s1 + $0x4] sm:$0xf]
  %v53 = vld [vmem:[%s1 + $0x8] sm:$0xf]
  %v54 = vld [vmem:[%s1 + $0xc] sm:$0xf]
  %v55 = vld [vmem:[%s1 + $0x10] sm:$0xf]
  %v56 = vld [vmem:[%s1 + $0x14] sm:$0xf]
  %v57 = vld [vmem:[%s1 + $0x18] sm:$0xf]
  %v58 = vld [vmem:[%s1 + $0x1c] sm:$0xf]
  %v59 = vld [vmem:[%s1 + $0x20] sm:$0xf]
  %v60 = vld [vmem:[%s1 + $0x24] sm:$0xf]
  %v61 = vld [vmem:[%s1 + $0x28] sm:$0xf]
  %v62 = vld [vmem:[%s1 + $0x2c] sm:$0xf]
  %v63 = vld [vmem:[%s1 + $0x30] sm:$0xf]
  %v64 = vld [vmem:[%s1 + $0x34] sm:$0xf]
  %v65 = vld [vmem:[%s1 + $0x38] sm:$0xf]
  %v66 = vld [vmem:[%s1 + $0x3c] sm:$0xf]
  %v67 = vld [vmem:[%s1 + $0x40] sm:$0xf]
  %v68 = vld [vmem:[%s1 + $0x44] sm:$0xf]
  %v69 = vld [vmem:[%s1 + $0x48] sm:$0xf]
  %v70 = vld [vmem:[%s1 + $0x4c] sm:$0xf]
  %v71 = vld [vmem:[%s1 + $0x50] sm:$0xf]
  %v72 = vld [vmem:[%s1 + $0x54] sm:$0xf]
  %v73 = vld [vmem:[%s1 + $0x58] sm:$0xf]
  %v74 = vld [vmem:[%s1 + $0x5c] sm:$0xf]
  %v75 = vld [vmem:[%s1 + $0x60] sm:$0xf]
  %v76 = vld [vmem:[%s1 + $0x64] sm:$0xf]
  %v77 = vld [vmem:[%s1 + $0x68] sm:$0xf]
  %v78 = vld [vmem:[%s1 + $0x6c] sm:$0xf]
  %v79 = vld [vmem:[%s1 + $0x70] sm:$0xf]
  %v80 = vld [vmem:[%s1 + $0x74] sm:$0xf]
  %v81 = vld [vmem:[%s1 + $0x78] sm:$0xf]
  %v82 = vld [vmem:[%s1 + $0x7c] sm:$0xf]
  %v83 = vld [vmem:[%s1 + $0x80] sm:$0xf]
  %v84 = vld [vmem:[%s1 + $0x84] sm:$0xf]
  %v85 = vld [vmem:[%s1 + $0x88] sm:$0xf]
  %v86 = vld [vmem:[%s1 + $0x8c] sm:$0xf]
  %v87 = vld [vmem:[%s1 + $0x90] sm:$0xf]
  %v88 = vld [vmem:[%s1 + $0x94] sm:$0xf]
  %v89 = vld [vmem:[%s1 + $0x98] sm:$0xf]
  %v90 = vld [vmem:[%s1 + $0x9c] sm:$0xf]
  %v91 = vld [vmem:[%s1 + $0xa0] sm:$0xf]
  %v92 = vld [vmem:[%s1 + $0xa4] sm:$0xf]
  %v93 = vld [vmem:[%s1 + $0xa8] sm:$0xf]
  %v94 = vld [vmem:[%s1 + $0xac] sm:$0xf]
  %v95 = vld [vmem:[%s1 + $0xb0] sm:$0xf]
  %v96 = vld [vmem:[%s1 + $0xb4] sm:$0xf]
  %v97 = vld [vmem:[%s1 + $0xb8] sm:$0xf]
  %v98 = vld [vmem:[%s1 + $0xbc] sm:$0xf]
  %v99 = vld [vmem:[%s1 + $0xc0] sm:$0xf]
  %v100 = vld [vmem:[%s1 + $0xc4] sm:$0xf]
  %v101 = vld [vmem:[%s1 + $0xc8] sm:$0xf]
  %v102 = vld [vmem:[%s1 + $0xcc] sm:$0xf]
  %v103 = vld [vmem:[%s1 + $0xd0] sm:$0xf]
  %v104 = vld [vmem:[%s1 + $0xd4] sm:$0xf]
  %v105 = vld [vmem:[%s1 + $0xd8] sm:$0xf]
  %v106 = vld [vmem:[%s1 + $0xdc] sm:$0xf]
  %v107 = vld [vmem:[%s1 + $0xe0] sm:$0xf]
  %v108 = vld [vmem:[%s1 + $0xe4] sm:$0xf]
  %v109 = vld [vmem:[%s1 + $0xe8] sm:$0xf]
  %v110 = vld [vmem:[%s1 + $0xec] sm:$0xf]
  %v111 = vld [vmem:[%s1 + $0xf0] sm:$0xf]
  %v112 = vld [vmem:[%s1 + $0xf4] sm:$0xf]
  %v113 = vld [vmem:[%s1 + $0xf8] sm:$0xf]
  %v114 = vld [vmem:[%s1 + $0xfc] sm:$0xf]
  %v115 = vld [vmem:[%s1 + $0x100] sm:$0xf]
  %v116 = vld [vmem:[%s1 + $0x104] sm:$0xf]
  %v117 = vld [vmem:[%s1 + $0x108] sm:$0xf]
  %v118 = vld [vmem:[%s1 + $0x10c] sm:$0xf]
  %v119 = vld [vmem:[%s1 + $0x110] sm:$0xf]
  %v120 = vld [vmem:[%s1 + $0x114] sm:$0xf]
  %v121 = vld [vmem:[%s1 + $0x118] sm:$0xf]
  %v122 = vld [vmem:[%s1 + $0x11c] sm:$0xf]
  %v123 = vld [vmem:[%s1 + $0x120] sm:$0xf]
  %v124 = vld [vmem:[%s1 + $0x124] sm:$0xf]
  %v125 = vld [vmem:[%s1 + $0x128] sm:$0xf]
  %v126 = vld [vmem:[%s1 + $0x12c] sm:$0xf]
  %v127 = vld [vmem:[%s1 + $0x130] sm:$0xf]
  %v128 = vld [vmem:[%s1 + $0x134] sm:$0xf]
  %v129 = vld [vmem:[%s1 + $0x138] sm:$0xf]
  %v130 = vld [vmem:[%s1 + $0x13c] sm:$0xf]
  %v131 = vld [vmem:[%s1 + $0x140] sm:$0xf]
  %v132 = vld [vmem:[%s1 + $0x144] sm:$0xf]
  %v133 = vld [vmem:[%s1 + $0x148] sm:$0xf]
  %v134 = vld [vmem:[%s1 + $0x14c] sm:$0xf]
  %v135 = vld [vmem:[%s1 + $0x150] sm:$0xf]
  %v136 = vld [vmem:[%s1 + $0x154] sm:$0xf]
  %v137 = vld [vmem:[%s1 + $0x158] sm:$0xf]
  %v138 = vld [vmem:[%s1 + $0x15c] sm:$0xf]
  %v139 = vld [vmem:[%s1 + $0x160] sm:$0xf]
  %v140 = vld [vmem:[%s1 + $0x164] sm:$0xf]
  %v141 = vld [vmem:[%s1 + $0x168] sm:$0xf]
  %v142 = vld [vmem:[%s1 + $0x16c] sm:$0xf]
  %v143 = vld [vmem:[%s1 + $0x170] sm:$0xf]
  %v144 = vld [vmem:[%s1 + $0x174] sm:$0xf]
  %v145 = vld [vmem:[%s1 + $0x178] sm:$0xf]
  %v146 = vld [vmem:[%s1 + $0x17c] sm:$0xf]
  %v147 = vld [vmem:[%s1 + $0x180] sm:$0xf]
  %v148 = vld [vmem:[%s1 + $0x184] sm:$0xf]
  %v149 = vld [vmem:[%s1 + $0x188] sm:$0xf]
  %v150 = vld [vmem:[%s1 + $0x18c] sm:$0xf]
  %v151 = vld [vmem:[%s1 + $0x190] sm:$0xf]
  %v152 = vld [vmem:[%s1 + $0x194] sm:$0xf]
  %v153 = vld [vmem:[%s1 + $0x198] sm:$0xf]
  %v154 = vld [vmem:[%s1 + $0x19c] sm:$0xf]
  %v155 = vld [vmem:[%s1 + $0x1a0] sm:$0xf]
  %v156 = vld [vmem:[%s1 + $0x1a4] sm:$0xf]
  %v157 = vld [vmem:[%s1 + $0x1a8] sm:$0xf]
  %v158 = vld [vmem:[%s1 + $0x1ac] sm:$0xf]
  %v159 = vld [vmem:[%s1 + $0x1b0] sm:$0xf]
  %v160 = vld [vmem:[%s1 + $0x1b4] sm:$0xf]
  %v161 = vld [vmem:[%s1 + $0x1b8] sm:$0xf]
  %v162 = vld [vmem:[%s1 + $0x1bc] sm:$0xf]
  %v163 = vld [vmem:[%s1 + $0x1c0] sm:$0xf]
  %v164 = vld [vmem:[%s1 + $0x1c4] sm:$0xf]
  %v165 = vld [vmem:[%s1 + $0x1c8] sm:$0xf]
  %v166 = vld [vmem:[%s1 + $0x1cc] sm:$0xf]
  %v167 = vld [vmem:[%s1 + $0x1d0] sm:$0xf]
  %v168 = vld [vmem:[%s1 + $0x1d4] sm:$0xf]
  %v169 = vld [vmem:[%s1 + $0x1d8] sm:$0xf]
  %v170 = vld [vmem:[%s1 + $0x1dc] sm:$0xf]
  %v171 = vld [vmem:[%s1 + $0x1e0] sm:$0xf]
  %v172 = vld [vmem:[%s1 + $0x1e4] sm:$0xf]
  %v173 = vld [vmem:[%s1 + $0x1e8] sm:$0xf]
  %v174 = vld [vmem:[%s1 + $0x1ec] sm:$0xf]
  %v175 = vld [vmem:[%s1 + $0x1f0] sm:$0xf]
  %v176 = vld [vmem:[%s1 + $0x1f4] sm:$0xf]
  %v177 = vld [vmem:[%s1 + $0x1f8] sm:$0xf]
  %v178 = vld [vmem:[%s1 + $0x1fc] sm:$0xf]
  %v179 = vld [vmem:[%s2] sm:$0x1]
  %v181 = vlaneseq
  %v182 = vshrl.u32 %v181, 7
  %v183 = vsub.s32 0, %v182
  %v184 = vrot.slane %v179, %v183
  %v222 = vunpack.c.l.b16 %v15
  %v223 = vunpack.c.h.b16 %v15
  %v224 = vunpack.c.l.b16 %v16
  %v225 = vunpack.c.h.b16 %v16
  %v226 = vunpack.c.l.b16 %v17
  %v227 = vunpack.c.h.b16 %v17
  %v228 = vunpack.c.l.b16 %v18
  %v229 = vunpack.c.h.b16 %v18
  %v230 = vunpack.c.l.b16 %v19
  %v231 = vunpack.c.h.b16 %v19
  %v232 = vunpack.c.l.b16 %v20
  %v233 = vunpack.c.h.b16 %v20
  %v234 = vunpack.c.l.b16 %v21
  %v235 = vunpack.c.h.b16 %v21
  %v236 = vunpack.c.l.b16 %v22
  %v237 = vunpack.c.h.b16 %v22
  %v238 = vunpack.c.l.b16 %v23
  %v239 = vunpack.c.h.b16 %v23
  %v240 = vunpack.c.l.b16 %v24
  %v241 = vunpack.c.h.b16 %v24
  %v242 = vunpack.c.l.b16 %v25
  %v243 = vunpack.c.h.b16 %v25
  %v244 = vunpack.c.l.b16 %v26
  %v245 = vunpack.c.h.b16 %v26
  %v246 = vunpack.c.l.b16 %v27
  %v247 = vunpack.c.h.b16 %v27
  %v248 = vunpack.c.l.b16 %v28
  %v249 = vunpack.c.h.b16 %v28
  %v250 = vunpack.c.l.b16 %v29
  %v251 = vunpack.c.h.b16 %v29
  %v252 = vunpack.c.l.b16 %v30
  %v253 = vunpack.c.h.b16 %v30
  %v254 = vunpack.c.l.b16 %v31
  %v255 = vunpack.c.h.b16 %v31
  %v256 = vunpack.c.l.b16 %v32
  %v257 = vunpack.c.h.b16 %v32
  %v258 = vunpack.c.l.b16 %v33
  %v259 = vunpack.c.h.b16 %v33
  %v260 = vunpack.c.l.b16 %v34
  %v261 = vunpack.c.h.b16 %v34
  %v262 = vunpack.c.l.b16 %v35
  %v263 = vunpack.c.h.b16 %v35
  %v264 = vunpack.c.l.b16 %v36
  %v265 = vunpack.c.h.b16 %v36
  %v266 = vunpack.c.l.b16 %v37
  %v267 = vunpack.c.h.b16 %v37
  %v268 = vunpack.c.l.b16 %v38
  %v269 = vunpack.c.h.b16 %v38
  %v270 = vunpack.c.l.b16 %v39
  %v271 = vunpack.c.h.b16 %v39
  %v272 = vunpack.c.l.b16 %v40
  %v273 = vunpack.c.h.b16 %v40
  %v274 = vunpack.c.l.b16 %v41
  %v275 = vunpack.c.h.b16 %v41
  %v276 = vunpack.c.l.b16 %v42
  %v277 = vunpack.c.h.b16 %v42
  %v278 = vunpack.c.l.b16 %v43
  %v279 = vunpack.c.h.b16 %v43
  %v280 = vunpack.c.l.b16 %v44
  %v281 = vunpack.c.h.b16 %v44
  %v282 = vunpack.c.l.b16 %v45
  %v283 = vunpack.c.h.b16 %v45
  %v284 = vunpack.c.l.b16 %v46
  %v285 = vunpack.c.h.b16 %v46
  %v286 = vunpack.c.l.b16 %v47
  %v287 = vunpack.c.h.b16 %v47
  %v288 = vunpack.c.l.b16 %v48
  %v289 = vunpack.c.h.b16 %v48
  %v290 = vunpack.c.l.b16 %v49
  %v291 = vunpack.c.h.b16 %v49
  %v292 = vunpack.c.l.b16 %v50
  %v293 = vunpack.c.h.b16 %v50
  %v294 = vpack.c.b16 %v230, %v222
  %v295 = vpack.c.b16 %v231, %v223
  %v296 = vpack.c.b16 %v232, %v224
  %v297 = vpack.c.b16 %v233, %v225
  %v298 = vpack.c.b16 %v234, %v226
  %v299 = vpack.c.b16 %v235, %v227
  %v300 = vpack.c.b16 %v236, %v228
  %v301 = vpack.c.b16 %v237, %v229
  %v302 = vpack.c.b16 %v246, %v238
  %v303 = vpack.c.b16 %v247, %v239
  %v304 = vpack.c.b16 %v248, %v240
  %v305 = vpack.c.b16 %v249, %v241
  %v306 = vpack.c.b16 %v250, %v242
  %v307 = vpack.c.b16 %v251, %v243
  %v308 = vpack.c.b16 %v252, %v244
  %v309 = vpack.c.b16 %v253, %v245
  %v310 = vpack.c.b16 %v262, %v254
  %v311 = vpack.c.b16 %v263, %v255
  %v312 = vpack.c.b16 %v264, %v256
  %v313 = vpack.c.b16 %v265, %v257
  %v314 = vpack.c.b16 %v266, %v258
  %v315 = vpack.c.b16 %v267, %v259
  %v316 = vpack.c.b16 %v268, %v260
  %v317 = vpack.c.b16 %v269, %v261
  %v318 = vpack.c.b16 %v278, %v270
  %v319 = vpack.c.b16 %v279, %v271
  %v320 = vpack.c.b16 %v280, %v272
  %v321 = vpack.c.b16 %v281, %v273
  %v322 = vpack.c.b16 %v282, %v274
  %v323 = vpack.c.b16 %v283, %v275
  %v324 = vpack.c.b16 %v284, %v276
  %v325 = vpack.c.b16 %v285, %v277
  %v326 = vpack.c.b16 %v286, %v286
  %v327 = vpack.c.b16 %v287, %v287
  %v328 = vpack.c.b16 %v288, %v288
  %v329 = vpack.c.b16 %v289, %v289
  %v330 = vpack.c.b16 %v290, %v290
  %v331 = vpack.c.b16 %v291, %v291
  %v332 = vpack.c.b16 %v292, %v292
  %v333 = vpack.c.b16 %v293, %v293
  %v502 = vunpack.c.l.b16 %v51
  %v503 = vunpack.c.l.b16 %v52
  %v504 = vunpack.c.l.b16 %v53
  %v505 = vunpack.c.l.b16 %v54
  %v506 = vunpack.c.l.b16 %v55
  %v507 = vunpack.c.l.b16 %v56
  %v508 = vunpack.c.l.b16 %v57
  %v509 = vunpack.c.l.b16 %v58
  %v510 = vunpack.c.l.b16 %v59
  %v511 = vunpack.c.l.b16 %v60
  %v512 = vunpack.c.l.b16 %v61
  %v513 = vunpack.c.l.b16 %v62
  %v514 = vunpack.c.l.b16 %v63
  %v515 = vunpack.c.l.b16 %v64
  %v516 = vunpack.c.l.b16 %v65
  %v517 = vunpack.c.l.b16 %v66
  %v518 = vunpack.c.l.b16 %v67
  %v519 = vunpack.c.l.b16 %v68
  %v520 = vunpack.c.l.b16 %v69
  %v521 = vunpack.c.l.b16 %v70
  %v522 = vunpack.c.l.b16 %v71
  %v523 = vunpack.c.l.b16 %v72
  %v524 = vunpack.c.l.b16 %v73
  %v525 = vunpack.c.l.b16 %v74
  %v526 = vunpack.c.l.b16 %v75
  %v527 = vunpack.c.l.b16 %v76
  %v528 = vunpack.c.l.b16 %v77
  %v529 = vunpack.c.l.b16 %v78
  %v530 = vunpack.c.l.b16 %v79
  %v531 = vunpack.c.l.b16 %v80
  %v532 = vunpack.c.l.b16 %v81
  %v533 = vunpack.c.l.b16 %v82
  %v534 = vunpack.c.l.b16 %v83
  %v535 = vunpack.c.l.b16 %v84
  %v536 = vunpack.c.l.b16 %v85
  %v537 = vunpack.c.l.b16 %v86
  %v538 = vunpack.c.l.b16 %v87
  %v539 = vunpack.c.l.b16 %v88
  %v540 = vunpack.c.l.b16 %v89
  %v541 = vunpack.c.l.b16 %v90
  %v542 = vunpack.c.l.b16 %v91
  %v543 = vunpack.c.l.b16 %v92
  %v544 = vunpack.c.l.b16 %v93
  %v545 = vunpack.c.l.b16 %v94
  %v546 = vunpack.c.l.b16 %v95
  %v547 = vunpack.c.l.b16 %v96
  %v548 = vunpack.c.l.b16 %v97
  %v549 = vunpack.c.l.b16 %v98
  %v550 = vunpack.c.l.b16 %v99
  %v551 = vunpack.c.l.b16 %v100
  %v552 = vunpack.c.l.b16 %v101
  %v553 = vunpack.c.l.b16 %v102
  %v554 = vunpack.c.l.b16 %v103
  %v555 = vunpack.c.l.b16 %v104
  %v556 = vunpack.c.l.b16 %v105
  %v557 = vunpack.c.l.b16 %v106
  %v558 = vunpack.c.l.b16 %v107
  %v559 = vunpack.c.l.b16 %v108
  %v560 = vunpack.c.l.b16 %v109
  %v561 = vunpack.c.l.b16 %v110
  %v562 = vunpack.c.l.b16 %v111
  %v563 = vunpack.c.l.b16 %v112
  %v564 = vunpack.c.l.b16 %v113
  %v565 = vunpack.c.l.b16 %v114
  %v566 = vunpack.c.l.b16 %v115
  %v567 = vunpack.c.l.b16 %v116
  %v568 = vunpack.c.l.b16 %v117
  %v569 = vunpack.c.l.b16 %v118
  %v570 = vunpack.c.l.b16 %v119
  %v571 = vunpack.c.l.b16 %v120
  %v572 = vunpack.c.l.b16 %v121
  %v573 = vunpack.c.l.b16 %v122
  %v574 = vunpack.c.l.b16 %v123
  %v575 = vunpack.c.l.b16 %v124
  %v576 = vunpack.c.l.b16 %v125
  %v577 = vunpack.c.l.b16 %v126
  %v578 = vunpack.c.l.b16 %v127
  %v579 = vunpack.c.l.b16 %v128
  %v580 = vunpack.c.l.b16 %v129
  %v581 = vunpack.c.l.b16 %v130
  %v582 = vunpack.c.l.b16 %v131
  %v583 = vunpack.c.l.b16 %v132
  %v584 = vunpack.c.l.b16 %v133
  %v585 = vunpack.c.l.b16 %v134
  %v586 = vunpack.c.l.b16 %v135
  %v587 = vunpack.c.l.b16 %v136
  %v588 = vunpack.c.l.b16 %v137
  %v589 = vunpack.c.l.b16 %v138
  %v590 = vunpack.c.l.b16 %v139
  %v591 = vunpack.c.l.b16 %v140
  %v592 = vunpack.c.l.b16 %v141
  %v593 = vunpack.c.l.b16 %v142
  %v594 = vunpack.c.l.b16 %v143
  %v595 = vunpack.c.l.b16 %v144
  %v596 = vunpack.c.l.b16 %v145
  %v597 = vunpack.c.l.b16 %v146
  %v598 = vunpack.c.l.b16 %v147
  %v599 = vunpack.c.l.b16 %v148
  %v600 = vunpack.c.l.b16 %v149
  %v601 = vunpack.c.l.b16 %v150
  %v602 = vunpack.c.l.b16 %v151
  %v603 = vunpack.c.l.b16 %v152
  %v604 = vunpack.c.l.b16 %v153
  %v605 = vunpack.c.l.b16 %v154
  %v606 = vunpack.c.l.b16 %v155
  %v607 = vunpack.c.l.b16 %v156
  %v608 = vunpack.c.l.b16 %v157
  %v609 = vunpack.c.l.b16 %v158
  %v610 = vunpack.c.l.b16 %v159
  %v611 = vunpack.c.l.b16 %v160
  %v612 = vunpack.c.l.b16 %v161
  %v613 = vunpack.c.l.b16 %v162
  %v614 = vunpack.c.l.b16 %v163
  %v615 = vunpack.c.l.b16 %v164
  %v616 = vunpack.c.l.b16 %v165
  %v617 = vunpack.c.l.b16 %v166
  %v618 = vunpack.c.l.b16 %v167
  %v619 = vunpack.c.l.b16 %v168
  %v620 = vunpack.c.l.b16 %v169
  %v621 = vunpack.c.l.b16 %v170
  %v622 = vunpack.c.l.b16 %v171
  %v623 = vunpack.c.l.b16 %v172
  %v624 = vunpack.c.l.b16 %v173
  %v625 = vunpack.c.l.b16 %v174
  %v626 = vunpack.c.l.b16 %v175
  %v627 = vunpack.c.l.b16 %v176
  %v628 = vunpack.c.l.b16 %v177
  %v629 = vunpack.c.l.b16 %v178
  %v630 = vpack.c.b16 %v503, %v502
  %v631 = vpack.c.b16 %v505, %v504
  %v632 = vpack.c.b16 %v507, %v506
  %v633 = vpack.c.b16 %v509, %v508
  %v634 = vpack.c.b16 %v511, %v510
  %v635 = vpack.c.b16 %v513, %v512
  %v636 = vpack.c.b16 %v515, %v514
  %v637 = vpack.c.b16 %v517, %v516
  %v638 = vpack.c.b16 %v519, %v518
  %v639 = vpack.c.b16 %v521, %v520
  %v640 = vpack.c.b16 %v523, %v522
  %v641 = vpack.c.b16 %v525, %v524
  %v642 = vpack.c.b16 %v527, %v526
  %v643 = vpack.c.b16 %v529, %v528
  %v644 = vpack.c.b16 %v531, %v530
  %v645 = vpack.c.b16 %v533, %v532
  %v646 = vpack.c.b16 %v535, %v534
  %v647 = vpack.c.b16 %v537, %v536
  %v648 = vpack.c.b16 %v539, %v538
  %v649 = vpack.c.b16 %v541, %v540
  %v650 = vpack.c.b16 %v543, %v542
  %v651 = vpack.c.b16 %v545, %v544
  %v652 = vpack.c.b16 %v547, %v546
  %v653 = vpack.c.b16 %v549, %v548
  %v654 = vpack.c.b16 %v551, %v550
  %v655 = vpack.c.b16 %v553, %v552
  %v656 = vpack.c.b16 %v555, %v554
  %v657 = vpack.c.b16 %v557, %v556
  %v658 = vpack.c.b16 %v559, %v558
  %v659 = vpack.c.b16 %v561, %v560
  %v660 = vpack.c.b16 %v563, %v562
  %v661 = vpack.c.b16 %v565, %v564
  %v662 = vpack.c.b16 %v567, %v566
  %v663 = vpack.c.b16 %v569, %v568
  %v664 = vpack.c.b16 %v571, %v570
  %v665 = vpack.c.b16 %v573, %v572
  %v666 = vpack.c.b16 %v575, %v574
  %v667 = vpack.c.b16 %v577, %v576
  %v668 = vpack.c.b16 %v579, %v578
  %v669 = vpack.c.b16 %v581, %v580
  %v670 = vpack.c.b16 %v583, %v582
  %v671 = vpack.c.b16 %v585, %v584
  %v672 = vpack.c.b16 %v587, %v586
  %v673 = vpack.c.b16 %v589, %v588
  %v674 = vpack.c.b16 %v591, %v590
  %v675 = vpack.c.b16 %v593, %v592
  %v676 = vpack.c.b16 %v595, %v594
  %v677 = vpack.c.b16 %v597, %v596
  %v678 = vpack.c.b16 %v599, %v598
  %v679 = vpack.c.b16 %v601, %v600
  %v680 = vpack.c.b16 %v603, %v602
  %v681 = vpack.c.b16 %v605, %v604
  %v682 = vpack.c.b16 %v607, %v606
  %v683 = vpack.c.b16 %v609, %v608
  %v684 = vpack.c.b16 %v611, %v610
  %v685 = vpack.c.b16 %v613, %v612
  %v686 = vpack.c.b16 %v615, %v614
  %v687 = vpack.c.b16 %v617, %v616
  %v688 = vpack.c.b16 %v619, %v618
  %v689 = vpack.c.b16 %v621, %v620
  %v690 = vpack.c.b16 %v623, %v622
  %v691 = vpack.c.b16 %v625, %v624
  %v692 = vpack.c.b16 %v627, %v626
  %v693 = vpack.c.b16 %v629, %v628
  %758 = vmatprep.subr.bf16.mxu0 0
  %759 = vmatpush1.bf16.msra.mxu0 %v630
  %760 = vmatprep.subr.bf16.mxu0 0
  %761 = vmatpush1.bf16.msra.mxu0 %v631
  %762 = vmatprep.subr.bf16.mxu0 0
  %763 = vmatpush1.bf16.msra.mxu0 %v632
  %764 = vmatprep.subr.bf16.mxu0 0
  %765 = vmatpush1.bf16.msra.mxu0 %v633
  %766 = vmatprep.subr.bf16.mxu0 0
  %767 = vmatpush1.bf16.msra.mxu0 %v634
  %768 = vmatprep.subr.bf16.mxu0 0
  %769 = vmatpush1.bf16.msra.mxu0 %v635
  %770 = vmatprep.subr.bf16.mxu0 0
  %771 = vmatpush1.bf16.msra.mxu0 %v636
  %772 = vmatprep.subr.bf16.mxu0 0
  %773 = vmatpush1.bf16.msra.mxu0 %v637
  %774 = vmatprep.subr.bf16.mxu0 0
  %775 = vmatpush1.bf16.msra.mxu0 %v638
  %776 = vmatprep.subr.bf16.mxu0 0
  %777 = vmatpush1.bf16.msra.mxu0 %v639
  %778 = vmatprep.subr.bf16.mxu0 0
  %779 = vmatpush1.bf16.msra.mxu0 %v640
  %780 = vmatprep.subr.bf16.mxu0 0
  %781 = vmatpush1.bf16.msra.mxu0 %v641
  %782 = vmatprep.subr.bf16.mxu0 0
  %783 = vmatpush1.bf16.msra.mxu0 %v642
  %784 = vmatprep.subr.bf16.mxu0 0
  %785 = vmatpush1.bf16.msra.mxu0 %v643
  %786 = vmatprep.subr.bf16.mxu0 0
  %787 = vmatpush1.bf16.msra.mxu0 %v644
  %788 = vmatprep.subr.bf16.mxu0 0
  %789 = vmatpush1.bf16.msra.mxu0 %v645
  %790 = vmatprep.mubr.bf16.mxu0 %v295
  %791 = vmatmul.mubr.bf16.gmra.mrb[0].mxu0 %v294
  %v792 = vpop.f32.mrb[0].mxu0
  %v793 = vadd.f32 %v184, %v792
  %v794 = vpop.f32.mrb[0].mxu0
  %v795 = vpop.f32.mrb[0].mxu0
  %v796 = vadd.f32 %v184, %v795
  %v797 = vpop.f32.mrb[0].mxu0
  %798 = vmatprep.mubr.bf16.mxu0 %v303
  %799 = vmatmul.mubr.bf16.gmra.mrb[0].mxu0 %v302
  %v800 = vpop.f32.mrb[0].mxu0
  %v801 = vadd.f32 %v184, %v800
  %v802 = vpop.f32.mrb[0].mxu0
  %v803 = vpop.f32.mrb[0].mxu0
  %v804 = vadd.f32 %v184, %v803
  %v805 = vpop.f32.mrb[0].mxu0
  %806 = vmatprep.mubr.bf16.mxu0 %v311
  %807 = vmatmul.mubr.bf16.gmra.mrb[0].mxu0 %v310
  %v808 = vpop.f32.mrb[0].mxu0
  %v809 = vadd.f32 %v184, %v808
  %v810 = vpop.f32.mrb[0].mxu0
  %v811 = vpop.f32.mrb[0].mxu0
  %v812 = vadd.f32 %v184, %v811
  %v813 = vpop.f32.mrb[0].mxu0
  %814 = vmatprep.mubr.bf16.mxu0 %v319
  %815 = vmatmul.mubr.bf16.gmra.mrb[0].mxu0 %v318
  %v816 = vpop.f32.mrb[0].mxu0
  %v817 = vadd.f32 %v184, %v816
  %v818 = vpop.f32.mrb[0].mxu0
  %v819 = vpop.f32.mrb[0].mxu0
  %v820 = vadd.f32 %v184, %v819
  %v821 = vpop.f32.mrb[0].mxu0
  %822 = vmatprep.mubr.bf16.mxu0 %v327
  %823 = vmatmul.mubr.bf16.gmra.mrb[0].mxu0 %v326
  %v824 = vpop.f32.mrb[0].mxu0
  %v825 = vadd.f32 %v184, %v824
  %v826 = vpop.f32.mrb[0].mxu0
  %v827 = vpop.f32.mrb[0].mxu0
  %v828 = vpop.f32.mrb[0].mxu0
  %829 = vdwg.mxu0
  %830 = vmatprep.subr.bf16.mxu0 0
  %831 = vmatpush1.bf16.msra.mxu0 %v646
  %832 = vmatprep.subr.bf16.mxu0 0
  %833 = vmatpush1.bf16.msra.mxu0 %v647
  %834 = vmatprep.subr.bf16.mxu0 0
  %835 = vmatpush1.bf16.msra.mxu0 %v648
  %836 = vmatprep.subr.bf16.mxu0 0
  %837 = vmatpush1.bf16.msra.mxu0 %v649
  %838 = vmatprep.subr.bf16.mxu0 0
  %839 = vmatpush1.bf16.msra.mxu0 %v650
  %840 = vmatprep.subr.bf16.mxu0 0
  %841 = vmatpush1.bf16.msra.mxu0 %v651
  %842 = vmatprep.subr.bf16.mxu0 0
  %843 = vmatpush1.bf16.msra.mxu0 %v652
  %844 = vmatprep.subr.bf16.mxu0 0
  %845 = vmatpush1.bf16.msra.mxu0 %v653
  %846 = vmatprep.subr.bf16.mxu0 0
  %847 = vmatpush1.bf16.msra.mxu0 %v654
  %848 = vmatprep.subr.bf16.mxu0 0
  %849 = vmatpush1.bf16.msra.mxu0 %v655
  %850 = vmatprep.subr.bf16.mxu0 0
  %851 = vmatpush1.bf16.msra.mxu0 %v656
  %852 = vmatprep.subr.bf16.mxu0 0
  %853 = vmatpush1.bf16.msra.mxu0 %v657
  %854 = vmatprep.subr.bf16.mxu0 0
  %855 = vmatpush1.bf16.msra.mxu0 %v658
  %856 = vmatprep.subr.bf16.mxu0 0
  %857 = vmatpush1.bf16.msra.mxu0 %v659
  %858 = vmatprep.subr.bf16.mxu0 0
  %859 = vmatpush1.bf16.msra.mxu0 %v660
  %860 = vmatprep.subr.bf16.mxu0 0
  %861 = vmatpush1.bf16.msra.mxu0 %v661
  %862 = vmatprep.mubr.bf16.mxu0 %v297
  %863 = vmatmul.mubr.bf16.gmra.mrb[0].mxu0 %v296
  %v864 = vpop.f32.mrb[0].mxu0
  %v865 = vadd.f32 %v793, %v864
  %v866 = vpop.f32.mrb[0].mxu0
  %v867 = vpop.f32.mrb[0].mxu0
  %v868 = vadd.f32 %v796, %v867
  %v869 = vpop.f32.mrb[0].mxu0
  %870 = vmatprep.mubr.bf16.mxu0 %v305
  %871 = vmatmul.mubr.bf16.gmra.mrb[0].mxu0 %v304
  %v872 = vpop.f32.mrb[0].mxu0
  %v873 = vadd.f32 %v801, %v872
  %v874 = vpop.f32.mrb[0].mxu0
  %v875 = vpop.f32.mrb[0].mxu0
  %v876 = vadd.f32 %v804, %v875
  %v877 = vpop.f32.mrb[0].mxu0
  %878 = vmatprep.mubr.bf16.mxu0 %v313
  %879 = vmatmul.mubr.bf16.gmra.mrb[0].mxu0 %v312
  %v880 = vpop.f32.mrb[0].mxu0
  %v881 = vadd.f32 %v809, %v880
  %v882 = vpop.f32.mrb[0].mxu0
  %v883 = vpop.f32.mrb[0].mxu0
  %v884 = vadd.f32 %v812, %v883
  %v885 = vpop.f32.mrb[0].mxu0
  %886 = vmatprep.mubr.bf16.mxu0 %v321
  %887 = vmatmul.mubr.bf16.gmra.mrb[0].mxu0 %v320
  %v888 = vpop.f32.mrb[0].mxu0
  %v889 = vadd.f32 %v817, %v888
  %v890 = vpop.f32.mrb[0].mxu0
  %v891 = vpop.f32.mrb[0].mxu0
  %v892 = vadd.f32 %v820, %v891
  %v893 = vpop.f32.mrb[0].mxu0
  %894 = vmatprep.mubr.bf16.mxu0 %v329
  %895 = vmatmul.mubr.bf16.gmra.mrb[0].mxu0 %v328
  %v896 = vpop.f32.mrb[0].mxu0
  %v897 = vadd.f32 %v825, %v896
  %v898 = vpop.f32.mrb[0].mxu0
  %v899 = vpop.f32.mrb[0].mxu0
  %v900 = vpop.f32.mrb[0].mxu0
  %901 = vdwg.mxu0
  %902 = vmatprep.subr.bf16.mxu0 0
  %903 = vmatpush1.bf16.msra.mxu0 %v662
  %904 = vmatprep.subr.bf16.mxu0 0
  %905 = vmatpush1.bf16.msra.mxu0 %v663
  %906 = vmatprep.subr.bf16.mxu0 0
  %907 = vmatpush1.bf16.msra.mxu0 %v664
  %908 = vmatprep.subr.bf16.mxu0 0
  %909 = vmatpush1.bf16.msra.mxu0 %v665
  %910 = vmatprep.subr.bf16.mxu0 0
  %911 = vmatpush1.bf16.msra.mxu0 %v666
  %912 = vmatprep.subr.bf16.mxu0 0
  %913 = vmatpush1.bf16.msra.mxu0 %v667
  %914 = vmatprep.subr.bf16.mxu0 0
  %915 = vmatpush1.bf16.msra.mxu0 %v668
  %916 = vmatprep.subr.bf16.mxu0 0
  %917 = vmatpush1.bf16.msra.mxu0 %v669
  %918 = vmatprep.subr.bf16.mxu0 0
  %919 = vmatpush1.bf16.msra.mxu0 %v670
  %920 = vmatprep.subr.bf16.mxu0 0
  %921 = vmatpush1.bf16.msra.mxu0 %v671
  %922 = vmatprep.subr.bf16.mxu0 0
  %923 = vmatpush1.bf16.msra.mxu0 %v672
  %924 = vmatprep.subr.bf16.mxu0 0
  %925 = vmatpush1.bf16.msra.mxu0 %v673
  %926 = vmatprep.subr.bf16.mxu0 0
  %927 = vmatpush1.bf16.msra.mxu0 %v674
  %928 = vmatprep.subr.bf16.mxu0 0
  %929 = vmatpush1.bf16.msra.mxu0 %v675
  %930 = vmatprep.subr.bf16.mxu0 0
  %931 = vmatpush1.bf16.msra.mxu0 %v676
  %932 = vmatprep.subr.bf16.mxu0 0
  %933 = vmatpush1.bf16.msra.mxu0 %v677
  %934 = vmatprep.mubr.bf16.mxu0 %v299
  %935 = vmatmul.mubr.bf16.gmra.mrb[0].mxu0 %v298
  %v936 = vpop.f32.mrb[0].mxu0
  %v937 = vadd.f32 %v865, %v936
  %v938 = vpop.f32.mrb[0].mxu0
  %v939 = vpop.f32.mrb[0].mxu0
  %v940 = vadd.f32 %v868, %v939
  %v941 = vpop.f32.mrb[0].mxu0
  %942 = vmatprep.mubr.bf16.mxu0 %v307
  %943 = vmatmul.mubr.bf16.gmra.mrb[0].mxu0 %v306
  %v944 = vpop.f32.mrb[0].mxu0
  %v945 = vadd.f32 %v873, %v944
  %v946 = vpop.f32.mrb[0].mxu0
  %v947 = vpop.f32.mrb[0].mxu0
  %v948 = vadd.f32 %v876, %v947
  %v949 = vpop.f32.mrb[0].mxu0
  %950 = vmatprep.mubr.bf16.mxu0 %v315
  %951 = vmatmul.mubr.bf16.gmra.mrb[0].mxu0 %v314
  %v952 = vpop.f32.mrb[0].mxu0
  %v953 = vadd.f32 %v881, %v952
  %v954 = vpop.f32.mrb[0].mxu0
  %v955 = vpop.f32.mrb[0].mxu0
  %v956 = vadd.f32 %v884, %v955
  %v957 = vpop.f32.mrb[0].mxu0
  %958 = vmatprep.mubr.bf16.mxu0 %v323
  %959 = vmatmul.mubr.bf16.gmra.mrb[0].mxu0 %v322
  %v960 = vpop.f32.mrb[0].mxu0
  %v961 = vadd.f32 %v889, %v960
  %v962 = vpop.f32.mrb[0].mxu0
  %v963 = vpop.f32.mrb[0].mxu0
  %v964 = vadd.f32 %v892, %v963
  %v965 = vpop.f32.mrb[0].mxu0
  %966 = vmatprep.mubr.bf16.mxu0 %v331
  %967 = vmatmul.mubr.bf16.gmra.mrb[0].mxu0 %v330
  %v968 = vpop.f32.mrb[0].mxu0
  %v969 = vadd.f32 %v897, %v968
  %v970 = vpop.f32.mrb[0].mxu0
  %v971 = vpop.f32.mrb[0].mxu0
  %v972 = vpop.f32.mrb[0].mxu0
  %973 = vdwg.mxu0
  %974 = vmatprep.subr.bf16.mxu0 0
  %975 = vmatpush1.bf16.msra.mxu0 %v678
  %976 = vmatprep.subr.bf16.mxu0 0
  %977 = vmatpush1.bf16.msra.mxu0 %v679
  %978 = vmatprep.subr.bf16.mxu0 0
  %979 = vmatpush1.bf16.msra.mxu0 %v680
  %980 = vmatprep.subr.bf16.mxu0 0
  %981 = vmatpush1.bf16.msra.mxu0 %v681
  %982 = vmatprep.subr.bf16.mxu0 0
  %983 = vmatpush1.bf16.msra.mxu0 %v682
  %984 = vmatprep.subr.bf16.mxu0 0
  %985 = vmatpush1.bf16.msra.mxu0 %v683
  %986 = vmatprep.subr.bf16.mxu0 0
  %987 = vmatpush1.bf16.msra.mxu0 %v684
  %988 = vmatprep.subr.bf16.mxu0 0
  %989 = vmatpush1.bf16.msra.mxu0 %v685
  %990 = vmatprep.subr.bf16.mxu0 0
  %991 = vmatpush1.bf16.msra.mxu0 %v686
  %992 = vmatprep.subr.bf16.mxu0 0
  %993 = vmatpush1.bf16.msra.mxu0 %v687
  %994 = vmatprep.subr.bf16.mxu0 0
  %995 = vmatpush1.bf16.msra.mxu0 %v688
  %996 = vmatprep.subr.bf16.mxu0 0
  %997 = vmatpush1.bf16.msra.mxu0 %v689
  %998 = vmatprep.subr.bf16.mxu0 0
  %999 = vmatpush1.bf16.msra.mxu0 %v690
  %1000 = vmatprep.subr.bf16.mxu0 0
  %1001 = vmatpush1.bf16.msra.mxu0 %v691
  %1002 = vmatprep.subr.bf16.mxu0 0
  %1003 = vmatpush1.bf16.msra.mxu0 %v692
  %1004 = vmatprep.subr.bf16.mxu0 0
  %1005 = vmatpush1.bf16.msra.mxu0 %v693
  %1006 = vmatprep.mubr.bf16.mxu0 %v301
  %1007 = vmatmul.mubr.bf16.gmra.mrb[0].mxu0 %v300
  %v1008 = vpop.f32.mrb[0].mxu0
  %v1009 = vadd.f32 %v937, %v1008
  %v1010 = vpop.f32.mrb[0].mxu0
  %v1011 = vpop.f32.mrb[0].mxu0
  %v1012 = vadd.f32 %v940, %v1011
  %v1013 = vpop.f32.mrb[0].mxu0
  %1014 = vmatprep.mubr.bf16.mxu0 %v309
  %1015 = vmatmul.mubr.bf16.gmra.mrb[0].mxu0 %v308
  %v1016 = vpop.f32.mrb[0].mxu0
  %v1017 = vadd.f32 %v945, %v1016
  %v1018 = vpop.f32.mrb[0].mxu0
  %v1019 = vpop.f32.mrb[0].mxu0
  %v1020 = vadd.f32 %v948, %v1019
  %v1021 = vpop.f32.mrb[0].mxu0
  %1022 = vmatprep.mubr.bf16.mxu0 %v317
  %1023 = vmatmul.mubr.bf16.gmra.mrb[0].mxu0 %v316
  %v1024 = vpop.f32.mrb[0].mxu0
  %v1025 = vadd.f32 %v953, %v1024
  %v1026 = vpop.f32.mrb[0].mxu0
  %v1027 = vpop.f32.mrb[0].mxu0
  %v1028 = vadd.f32 %v956, %v1027
  %v1029 = vpop.f32.mrb[0].mxu0
  %1030 = vmatprep.mubr.bf16.mxu0 %v325
  %1031 = vmatmul.mubr.bf16.gmra.mrb[0].mxu0 %v324
  %v1032 = vpop.f32.mrb[0].mxu0
  %v1033 = vadd.f32 %v961, %v1032
  %v1034 = vpop.f32.mrb[0].mxu0
  %v1035 = vpop.f32.mrb[0].mxu0
  %v1036 = vadd.f32 %v964, %v1035
  %v1037 = vpop.f32.mrb[0].mxu0
  %1038 = vmatprep.mubr.bf16.mxu0 %v333
  %1039 = vmatmul.mubr.bf16.gmra.mrb[0].mxu0 %v332
  %v1040 = vpop.f32.mrb[0].mxu0
  %v1041 = vadd.f32 %v969, %v1040
  %v1042 = vpop.f32.mrb[0].mxu0
  %v1043 = vpop.f32.mrb[0].mxu0
  %v1044 = vpop.f32.mrb[0].mxu0
  %1045 = vdwg.mxu0
  %v1046 = vmax.f32 %v1009, 0.0
  %v1047 = vmax.f32 %v1012, 0.0
  %v1048 = vmax.f32 %v1017, 0.0
  %v1049 = vmax.f32 %v1020, 0.0
  %v1050 = vmax.f32 %v1025, 0.0
  %v1051 = vmax.f32 %v1028, 0.0
  %v1052 = vmax.f32 %v1033, 0.0
  %v1053 = vmax.f32 %v1036, 0.0
  %v1054 = vmax.f32 %v1041, 0.0
  %v1055 = vpack.c.bf16 %v1047, %v1046
  %v1056 = vpack.c.bf16 %v1049, %v1048
  %v1057 = vpack.c.bf16 %v1051, %v1050
  %v1058 = vpack.c.bf16 %v1053, %v1052
  %v1059 = vpack.c.bf16 %v1054, %v1054
  %v1065 = vunpack.c.l.b16 %v1055
  %v1066 = vunpack.c.h.b16 %v1055
  %v1067 = vunpack.c.l.b16 %v1056
  %v1068 = vunpack.c.h.b16 %v1056
  %v1069 = vunpack.c.l.b16 %v1057
  %v1070 = vunpack.c.h.b16 %v1057
  %v1071 = vunpack.c.l.b16 %v1058
  %v1072 = vunpack.c.h.b16 %v1058
  %v1073 = vunpack.c.l.b16 %v1059
  %v1074 = vpack.c.b16 %v1065, %v1065
  %v1075 = vpack.c.b16 %v1066, %v1066
  %v1076 = vpack.c.b16 %v1067, %v1067
  %v1077 = vpack.c.b16 %v1068, %v1068
  %v1078 = vpack.c.b16 %v1069, %v1069
  %v1079 = vpack.c.b16 %v1070, %v1070
  %v1080 = vpack.c.b16 %v1071, %v1071
  %v1081 = vpack.c.b16 %v1072, %v1072
  %v1082 = vpack.c.b16 %v1073, %v1073
  %1092 = vst [vmem:[%s3] sm:$0xf] %v1074
  %1093 = vst [vmem:[%s3 + $0x4] sm:$0xf] %v1075
  %1094 = vst [vmem:[%s3 + $0x8] sm:$0xf] %v1076
  %1095 = vst [vmem:[%s3 + $0xc] sm:$0xf] %v1077
  %1096 = vst [vmem:[%s3 + $0x10] sm:$0xf] %v1078
  %1097 = vst [vmem:[%s3 + $0x14] sm:$0xf] %v1079
  %1098 = vst [vmem:[%s3 + $0x18] sm:$0xf] %v1080
  %1099 = vst [vmem:[%s3 + $0x1c] sm:$0xf] %v1081
  %1100 = vst [vmem:[%s3 + $0x20] sm:$0xf] %v1082
  // Predicated region
  $region14: #{model_image_scratch_forward.7} parent=0 // pred_check
    _
  $region15: #{model_image_scratch_forward.7} parent=0 // pred_check_branch
    %1102 = sbr.rel (0) target = $region17
  $region16: #{model_image_scratch_forward.7} parent=0 // pred_region
    _
  $region17: #{model_image_scratch_forward.7} parent=0 // pred_fallthru
    _
  // Predicated region
  $region18: #{model_image_scratch_forward.7} parent=0 // pred_check
    _
  $region19: #{model_image_scratch_forward.7} parent=0 // pred_check_branch
    %1104 = sbr.rel (0) target = $region21
  $region20: #{model_image_scratch_forward.7} parent=0 // pred_region
    _
  $region21: #{model_image_scratch_forward.7} parent=0 // pred_fallthru
    _

// kernel: model_image_scratch_forward.9
$region0: #{model_image_scratch_forward.9}
  #allocation0 [shape = 'u32[]', space=smem, size = 0x4, offset = 0x4, fixed_abs, tag = 'smem constant byte address 0x4 - core index']
  #allocation1 [shape = 'u32[144,128]{1,0:T(1,128)}', space=vmem, size = 0x12000, scoped, tag = 'internal scratch']
  %s0 = inlined_call_operand.vmem [shape: bf16[2,1024], index: 0, kind: input, shape index: {}]
  %s1 = inlined_call_operand.vmem [shape: bf16[1024,64], index: 1, kind: input, shape index: {}]
  %s2 = inlined_call_operand.vmem [shape: f32[1,64], index: 2, kind: input, shape index: {}]
  %s3 = inlined_call_operand.hbm [shape: f32[2,64], index: 3, kind: output, shape index: {}]
  %s4 = sld [smem:[#allocation0]]
  $region22: #{model_image_scratch_forward.9} parent=0
    _
  %s6 = ssub.s32 1, %s4
  %s7 = scalar_select 0, %s6, %s4
  $region1: #{model_image_scratch_forward.9} parent=0
    #allocation2 [shape = 'u8[1024]{0}', space=vmem, size = 0x400, scoped, tag = 'output window, operand 0, single buffered']
    #allocation3 [shape = 's32[1]{0}', space=sflag, size = 0x4, scoped, tag = 'scoped memory for model_image_scratch_forward.9']
    %8 = vsyncpa [#allocation3], 0
    // Predicated region
    $region2: #{model_image_scratch_forward.9} parent=1 // pred_check
      _
    $region3: #{model_image_scratch_forward.9} parent=1 // pred_check_branch
      %10 = sbr.rel (0) target = $region5
    $region4: #{model_image_scratch_forward.9} parent=1 // pred_region
      _
    $region5: #{model_image_scratch_forward.9} parent=1 // pred_fallthru
      _
    // Predicated region
    $region6: #{model_image_scratch_forward.9} parent=1 // pred_check
      _
    $region7: #{model_image_scratch_forward.9} parent=1 // pred_check_branch
      %12 = sbr.rel (0) target = $region9
    $region8: #{model_image_scratch_forward.9} parent=1 // pred_region
      _
    $region9: #{model_image_scratch_forward.9} parent=1 // pred_fallthru
      _
    // Predicated region
    $region10: #{model_image_scratch_forward.9} parent=1 // pred_check
      _
    $region11: #{model_image_scratch_forward.9} parent=1 // pred_check_branch
      %14 = sbr.rel (0) target = $region13
    $region12: #{model_image_scratch_forward.9} parent=1 // pred_region
      _
    $region13: #{model_image_scratch_forward.9} parent=1 // pred_fallthru
      _
    %v16 = vld [vmem:[%s0] sm:$0xff]
    %v17 = vld [vmem:[%s1] sm:$0xf]
    %v18 = vld [vmem:[%s1 + $0x4] sm:$0xf]
    %v19 = vld [vmem:[%s1 + $0x8] sm:$0xf]
    %v20 = vld [vmem:[%s1 + $0xc] sm:$0xf]
    %v21 = vld [vmem:[%s1 + $0x10] sm:$0xf]
    %v22 = vld [vmem:[%s1 + $0x14] sm:$0xf]
    %v23 = vld [vmem:[%s1 + $0x18] sm:$0xf]
    %v24 = vld [vmem:[%s1 + $0x1c] sm:$0xf]
    %v25 = vld [vmem:[%s1 + $0x20] sm:$0xf]
    %v26 = vld [vmem:[%s1 + $0x24] sm:$0xf]
    %v27 = vld [vmem:[%s1 + $0x28] sm:$0xf]
    %v28 = vld [vmem:[%s1 + $0x2c] sm:$0xf]
    %v29 = vld [vmem:[%s1 + $0x30] sm:$0xf]
    %v30 = vld [vmem:[%s1 + $0x34] sm:$0xf]
    %v31 = vld [vmem:[%s1 + $0x38] sm:$0xf]
    %v32 = vld [vmem:[%s1 + $0x3c] sm:$0xf]
    %v33 = vld [vmem:[%s1 + $0x40] sm:$0xf]
    %v34 = vld [vmem:[%s1 + $0x44] sm:$0xf]
    %v35 = vld [vmem:[%s1 + $0x48] sm:$0xf]
    %v36 = vld [vmem:[%s1 + $0x4c] sm:$0xf]
    %v37 = vld [vmem:[%s1 + $0x50] sm:$0xf]
    %v38 = vld [vmem:[%s1 + $0x54] sm:$0xf]
    %v39 = vld [vmem:[%s1 + $0x58] sm:$0xf]
    %v40 = vld [vmem:[%s1 + $0x5c] sm:$0xf]
    %v41 = vld [vmem:[%s1 + $0x60] sm:$0xf]
    %v42 = vld [vmem:[%s1 + $0x64] sm:$0xf]
    %v43 = vld [vmem:[%s1 + $0x68] sm:$0xf]
    %v44 = vld [vmem:[%s1 + $0x6c] sm:$0xf]
    %v45 = vld [vmem:[%s1 + $0x70] sm:$0xf]
    %v46 = vld [vmem:[%s1 + $0x74] sm:$0xf]
    %v47 = vld [vmem:[%s1 + $0x78] sm:$0xf]
    %v48 = vld [vmem:[%s1 + $0x7c] sm:$0xf]
    %v49 = vld [vmem:[%s1 + $0x80] sm:$0xf]
    %v50 = vld [vmem:[%s1 + $0x84] sm:$0xf]
    %v51 = vld [vmem:[%s1 + $0x88] sm:$0xf]
    %v52 = vld [vmem:[%s1 + $0x8c] sm:$0xf]
    %v53 = vld [vmem:[%s1 + $0x90] sm:$0xf]
    %v54 = vld [vmem:[%s1 + $0x94] sm:$0xf]
    %v55 = vld [vmem:[%s1 + $0x98] sm:$0xf]
    %v56 = vld [vmem:[%s1 + $0x9c] sm:$0xf]
    %v57 = vld [vmem:[%s1 + $0xa0] sm:$0xf]
    %v58 = vld [vmem:[%s1 + $0xa4] sm:$0xf]
    %v59 = vld [vmem:[%s1 + $0xa8] sm:$0xf]
    %v60 = vld [vmem:[%s1 + $0xac] sm:$0xf]
    %v61 = vld [vmem:[%s1 + $0xb0] sm:$0xf]
    %v62 = vld [vmem:[%s1 + $0xb4] sm:$0xf]
    %v63 = vld [vmem:[%s1 + $0xb8] sm:$0xf]
    %v64 = vld [vmem:[%s1 + $0xbc] sm:$0xf]
    %v65 = vld [vmem:[%s1 + $0xc0] sm:$0xf]
    %v66 = vld [vmem:[%s1 + $0xc4] sm:$0xf]
    %v67 = vld [vmem:[%s1 + $0xc8] sm:$0xf]
    %v68 = vld [vmem:[%s1 + $0xcc] sm:$0xf]
    %v69 = vld [vmem:[%s1 + $0xd0] sm:$0xf]
    %v70 = vld [vmem:[%s1 + $0xd4] sm:$0xf]
    %v71 = vld [vmem:[%s1 + $0xd8] sm:$0xf]
    %v72 = vld [vmem:[%s1 + $0xdc] sm:$0xf]
    %v73 = vld [vmem:[%s1 + $0xe0] sm:$0xf]
    %v74 = vld [vmem:[%s1 + $0xe4] sm:$0xf]
    %v75 = vld [vmem:[%s1 + $0xe8] sm:$0xf]
    %v76 = vld [vmem:[%s1 + $0xec] sm:$0xf]
    %v77 = vld [vmem:[%s1 + $0xf0] sm:$0xf]
    %v78 = vld [vmem:[%s1 + $0xf4] sm:$0xf]
    %v79 = vld [vmem:[%s1 + $0xf8] sm:$0xf]
    %v80 = vld [vmem:[%s1 + $0xfc] sm:$0xf]
    %v81 = vld [vmem:[%s1 + $0x100] sm:$0xf]
    %v82 = vld [vmem:[%s1 + $0x104] sm:$0xf]
    %v83 = vld [vmem:[%s1 + $0x108] sm:$0xf]
    %v84 = vld [vmem:[%s1 + $0x10c] sm:$0xf]
    %v85 = vld [vmem:[%s1 + $0x110] sm:$0xf]
    %v86 = vld [vmem:[%s1 + $0x114] sm:$0xf]
    %v87 = vld [vmem:[%s1 + $0x118] sm:$0xf]
    %v88 = vld [vmem:[%s1 + $0x11c] sm:$0xf]
    %v89 = vld [vmem:[%s1 + $0x120] sm:$0xf]
    %v90 = vld [vmem:[%s1 + $0x124] sm:$0xf]
    %v91 = vld [vmem:[%s1 + $0x128] sm:$0xf]
    %v92 = vld [vmem:[%s1 + $0x12c] sm:$0xf]
    %v93 = vld [vmem:[%s1 + $0x130] sm:$0xf]
    %v94 = vld [vmem:[%s1 + $0x134] sm:$0xf]
    %v95 = vld [vmem:[%s1 + $0x138] sm:$0xf]
    %v96 = vld [vmem:[%s1 + $0x13c] sm:$0xf]
    %v97 = vld [vmem:[%s1 + $0x140] sm:$0xf]
    %v98 = vld [vmem:[%s1 + $0x144] sm:$0xf]
    %v99 = vld [vmem:[%s1 + $0x148] sm:$0xf]
    %v100 = vld [vmem:[%s1 + $0x14c] sm:$0xf]
    %v101 = vld [vmem:[%s1 + $0x150] sm:$0xf]
    %v102 = vld [vmem:[%s1 + $0x154] sm:$0xf]
    %v103 = vld [vmem:[%s1 + $0x158] sm:$0xf]
    %v104 = vld [vmem:[%s1 + $0x15c] sm:$0xf]
    %v105 = vld [vmem:[%s1 + $0x160] sm:$0xf]
    %v106 = vld [vmem:[%s1 + $0x164] sm:$0xf]
    %v107 = vld [vmem:[%s1 + $0x168] sm:$0xf]
    %v108 = vld [vmem:[%s1 + $0x16c] sm:$0xf]
    %v109 = vld [vmem:[%s1 + $0x170] sm:$0xf]
    %v110 = vld [vmem:[%s1 + $0x174] sm:$0xf]
    %v111 = vld [vmem:[%s1 + $0x178] sm:$0xf]
    %v112 = vld [vmem:[%s1 + $0x17c] sm:$0xf]
    %v113 = vld [vmem:[%s1 + $0x180] sm:$0xf]
    %v114 = vld [vmem:[%s1 + $0x184] sm:$0xf]
    %v115 = vld [vmem:[%s1 + $0x188] sm:$0xf]
    %v116 = vld [vmem:[%s1 + $0x18c] sm:$0xf]
    %v117 = vld [vmem:[%s1 + $0x190] sm:$0xf]
    %v118 = vld [vmem:[%s1 + $0x194] sm:$0xf]
    %v119 = vld [vmem:[%s1 + $0x198] sm:$0xf]
    %v120 = vld [vmem:[%s1 + $0x19c] sm:$0xf]
    %v121 = vld [vmem:[%s1 + $0x1a0] sm:$0xf]
    %v122 = vld [vmem:[%s1 + $0x1a4] sm:$0xf]
    %v123 = vld [vmem:[%s1 + $0x1a8] sm:$0xf]
    %v124 = vld [vmem:[%s1 + $0x1ac] sm:$0xf]
    %v125 = vld [vmem:[%s1 + $0x1b0] sm:$0xf]
    %v126 = vld [vmem:[%s1 + $0x1b4] sm:$0xf]
    %v127 = vld [vmem:[%s1 + $0x1b8] sm:$0xf]
    %v128 = vld [vmem:[%s1 + $0x1bc] sm:$0xf]
    %v129 = vld [vmem:[%s1 + $0x1c0] sm:$0xf]
    %v130 = vld [vmem:[%s1 + $0x1c4] sm:$0xf]
    %v131 = vld [vmem:[%s1 + $0x1c8] sm:$0xf]
    %v132 = vld [vmem:[%s1 + $0x1cc] sm:$0xf]
    %v133 = vld [vmem:[%s1 + $0x1d0] sm:$0xf]
    %v134 = vld [vmem:[%s1 + $0x1d4] sm:$0xf]
    %v135 = vld [vmem:[%s1 + $0x1d8] sm:$0xf]
    %v136 = vld [vmem:[%s1 + $0x1dc] sm:$0xf]
    %v137 = vld [vmem:[%s1 + $0x1e0] sm:$0xf]
    %v138 = vld [vmem:[%s1 + $0x1e4] sm:$0xf]
    %v139 = vld [vmem:[%s1 + $0x1e8] sm:$0xf]
    %v140 = vld [vmem:[%s1 + $0x1ec] sm:$0xf]
    %v141 = vld [vmem:[%s1 + $0x1f0] sm:$0xf]
    %v142 = vld [vmem:[%s1 + $0x1f4] sm:$0xf]
    %v143 = vld [vmem:[%s1 + $0x1f8] sm:$0xf]
    %v144 = vld [vmem:[%s1 + $0x1fc] sm:$0xf]
    %v145 = vld [vmem:[%s2] sm:$0x1]
    %v147 = vlaneseq
    %v148 = vshrl.u32 %v147, 7
    %v149 = vsub.s32 0, %v148
    %v150 = vrot.slane %v145, %v149
    %v153 = vcombine.high %v16, %v16
    %v155 = vunpack.c.l.s4 1966171168
    %v156 = vunpack.c.0.s8 %v155
    %v157 = vlaneseq
    %v158 = vshrl.u32 %v157, 7
    %v159 = vsub.s32 %v156, %v158
    %v160 = vrot.slane %v16, %v159
    %v162 = vunpack.c.l.s4 1966171168
    %v163 = vunpack.c.0.s8 %v162
    %v164 = vlaneseq
    %v165 = vshrl.u32 %v164, 7
    %v166 = vsub.s32 %v163, %v165
    %v167 = vrot.slane %v153, %v166
    %v168 = vcombine.high %v160, %v160
    %v169 = vcombine.high %v167, %v167
    %v171 = vunpack.c.l.s4 1966171168
    %v172 = vunpack.c.0.s8 %v171
    %v173 = vlaneseq
    %v174 = vshrl.u32 %v173, 7
    %v175 = vsub.s32 %v172, %v174
    %v176 = vrot.slane %v160, %v175
    %v178 = vunpack.c.l.s4 1966171168
    %v179 = vunpack.c.0.s8 %v178
    %v180 = vlaneseq
    %v181 = vshrl.u32 %v180, 7
    %v182 = vsub.s32 %v179, %v181
    %v183 = vrot.slane %v167, %v182
    %v185 = vunpack.c.l.s4 1966171168
    %v186 = vunpack.c.0.s8 %v185
    %v187 = vlaneseq
    %v188 = vshrl.u32 %v187, 7
    %v189 = vsub.s32 %v186, %v188
    %v190 = vrot.slane %v168, %v189
    %v192 = vunpack.c.l.s4 1966171168
    %v193 = vunpack.c.0.s8 %v192
    %v194 = vlaneseq
    %v195 = vshrl.u32 %v194, 7
    %v196 = vsub.s32 %v193, %v195
    %v197 = vrot.slane %v169, %v196
    %v198 = vcombine.high %v176, %v176
    %v199 = vcombine.high %v183, %v183
    %v200 = vcombine.high %v190, %v190
    %v201 = vcombine.high %v197, %v197
    %v338 = vunpack.c.l.b16 %v17
    %v339 = vunpack.c.l.b16 %v18
    %v340 = vunpack.c.l.b16 %v19
    %v341 = vunpack.c.l.b16 %v20
    %v342 = vunpack.c.l.b16 %v21
    %v343 = vunpack.c.l.b16 %v22
    %v344 = vunpack.c.l.b16 %v23
    %v345 = vunpack.c.l.b16 %v24
    %v346 = vunpack.c.l.b16 %v25
    %v347 = vunpack.c.l.b16 %v26
    %v348 = vunpack.c.l.b16 %v27
    %v349 = vunpack.c.l.b16 %v28
    %v350 = vunpack.c.l.b16 %v29
    %v351 = vunpack.c.l.b16 %v30
    %v352 = vunpack.c.l.b16 %v31
    %v353 = vunpack.c.l.b16 %v32
    %v354 = vunpack.c.l.b16 %v33
    %v355 = vunpack.c.l.b16 %v34
    %v356 = vunpack.c.l.b16 %v35
    %v357 = vunpack.c.l.b16 %v36
    %v358 = vunpack.c.l.b16 %v37
    %v359 = vunpack.c.l.b16 %v38
    %v360 = vunpack.c.l.b16 %v39
    %v361 = vunpack.c.l.b16 %v40
    %v362 = vunpack.c.l.b16 %v41
    %v363 = vunpack.c.l.b16 %v42
    %v364 = vunpack.c.l.b16 %v43
    %v365 = vunpack.c.l.b16 %v44
    %v366 = vunpack.c.l.b16 %v45
    %v367 = vunpack.c.l.b16 %v46
    %v368 = vunpack.c.l.b16 %v47
    %v369 = vunpack.c.l.b16 %v48
    %v370 = vunpack.c.l.b16 %v49
    %v371 = vunpack.c.l.b16 %v50
    %v372 = vunpack.c.l.b16 %v51
    %v373 = vunpack.c.l.b16 %v52
    %v374 = vunpack.c.l.b16 %v53
    %v375 = vunpack.c.l.b16 %v54
    %v376 = vunpack.c.l.b16 %v55
    %v377 = vunpack.c.l.b16 %v56
    %v378 = vunpack.c.l.b16 %v57
    %v379 = vunpack.c.l.b16 %v58
    %v380 = vunpack.c.l.b16 %v59
    %v381 = vunpack.c.l.b16 %v60
    %v382 = vunpack.c.l.b16 %v61
    %v383 = vunpack.c.l.b16 %v62
    %v384 = vunpack.c.l.b16 %v63
    %v385 = vunpack.c.l.b16 %v64
    %v386 = vunpack.c.l.b16 %v65
    %v387 = vunpack.c.l.b16 %v66
    %v388 = vunpack.c.l.b16 %v67
    %v389 = vunpack.c.l.b16 %v68
    %v390 = vunpack.c.l.b16 %v69
    %v391 = vunpack.c.l.b16 %v70
    %v392 = vunpack.c.l.b16 %v71
    %v393 = vunpack.c.l.b16 %v72
    %v394 = vunpack.c.l.b16 %v73
    %v395 = vunpack.c.l.b16 %v74
    %v396 = vunpack.c.l.b16 %v75
    %v397 = vunpack.c.l.b16 %v76
    %v398 = vunpack.c.l.b16 %v77
    %v399 = vunpack.c.l.b16 %v78
    %v400 = vunpack.c.l.b16 %v79
    %v401 = vunpack.c.l.b16 %v80
    %v402 = vunpack.c.l.b16 %v81
    %v403 = vunpack.c.l.b16 %v82
    %v404 = vunpack.c.l.b16 %v83
    %v405 = vunpack.c.l.b16 %v84
    %v406 = vunpack.c.l.b16 %v85
    %v407 = vunpack.c.l.b16 %v86
    %v408 = vunpack.c.l.b16 %v87
    %v409 = vunpack.c.l.b16 %v88
    %v410 = vunpack.c.l.b16 %v89
    %v411 = vunpack.c.l.b16 %v90
    %v412 = vunpack.c.l.b16 %v91
    %v413 = vunpack.c.l.b16 %v92
    %v414 = vunpack.c.l.b16 %v93
    %v415 = vunpack.c.l.b16 %v94
    %v416 = vunpack.c.l.b16 %v95
    %v417 = vunpack.c.l.b16 %v96
    %v418 = vunpack.c.l.b16 %v97
    %v419 = vunpack.c.l.b16 %v98
    %v420 = vunpack.c.l.b16 %v99
    %v421 = vunpack.c.l.b16 %v100
    %v422 = vunpack.c.l.b16 %v101
    %v423 = vunpack.c.l.b16 %v102
    %v424 = vunpack.c.l.b16 %v103
    %v425 = vunpack.c.l.b16 %v104
    %v426 = vunpack.c.l.b16 %v105
    %v427 = vunpack.c.l.b16 %v106
    %v428 = vunpack.c.l.b16 %v107
    %v429 = vunpack.c.l.b16 %v108
    %v430 = vunpack.c.l.b16 %v109
    %v431 = vunpack.c.l.b16 %v110
    %v432 = vunpack.c.l.b16 %v111
    %v433 = vunpack.c.l.b16 %v112
    %v434 = vunpack.c.l.b16 %v113
    %v435 = vunpack.c.l.b16 %v114
    %v436 = vunpack.c.l.b16 %v115
    %v437 = vunpack.c.l.b16 %v116
    %v438 = vunpack.c.l.b16 %v117
    %v439 = vunpack.c.l.b16 %v118
    %v440 = vunpack.c.l.b16 %v119
    %v441 = vunpack.c.l.b16 %v120
    %v442 = vunpack.c.l.b16 %v121
    %v443 = vunpack.c.l.b16 %v122
    %v444 = vunpack.c.l.b16 %v123
    %v445 = vunpack.c.l.b16 %v124
    %v446 = vunpack.c.l.b16 %v125
    %v447 = vunpack.c.l.b16 %v126
    %v448 = vunpack.c.l.b16 %v127
    %v449 = vunpack.c.l.b16 %v128
    %v450 = vunpack.c.l.b16 %v129
    %v451 = vunpack.c.l.b16 %v130
    %v452 = vunpack.c.l.b16 %v131
    %v453 = vunpack.c.l.b16 %v132
    %v454 = vunpack.c.l.b16 %v133
    %v455 = vunpack.c.l.b16 %v134
    %v456 = vunpack.c.l.b16 %v135
    %v457 = vunpack.c.l.b16 %v136
    %v458 = vunpack.c.l.b16 %v137
    %v459 = vunpack.c.l.b16 %v138
    %v460 = vunpack.c.l.b16 %v139
    %v461 = vunpack.c.l.b16 %v140
    %v462 = vunpack.c.l.b16 %v141
    %v463 = vunpack.c.l.b16 %v142
    %v464 = vunpack.c.l.b16 %v143
    %v465 = vunpack.c.l.b16 %v144
    %v466 = vpack.c.b16 %v339, %v338
    %v467 = vpack.c.b16 %v341, %v340
    %v468 = vpack.c.b16 %v343, %v342
    %v469 = vpack.c.b16 %v345, %v344
    %v470 = vpack.c.b16 %v347, %v346
    %v471 = vpack.c.b16 %v349, %v348
    %v472 = vpack.c.b16 %v351, %v350
    %v473 = vpack.c.b16 %v353, %v352
    %v474 = vpack.c.b16 %v355, %v354
    %v475 = vpack.c.b16 %v357, %v356
    %v476 = vpack.c.b16 %v359, %v358
    %v477 = vpack.c.b16 %v361, %v360
    %v478 = vpack.c.b16 %v363, %v362
    %v479 = vpack.c.b16 %v365, %v364
    %v480 = vpack.c.b16 %v367, %v366
    %v481 = vpack.c.b16 %v369, %v368
    %v482 = vpack.c.b16 %v371, %v370
    %v483 = vpack.c.b16 %v373, %v372
    %v484 = vpack.c.b16 %v375, %v374
    %v485 = vpack.c.b16 %v377, %v376
    %v486 = vpack.c.b16 %v379, %v378
    %v487 = vpack.c.b16 %v381, %v380
    %v488 = vpack.c.b16 %v383, %v382
    %v489 = vpack.c.b16 %v385, %v384
    %v490 = vpack.c.b16 %v387, %v386
    %v491 = vpack.c.b16 %v389, %v388
    %v492 = vpack.c.b16 %v391, %v390
    %v493 = vpack.c.b16 %v393, %v392
    %v494 = vpack.c.b16 %v395, %v394
    %v495 = vpack.c.b16 %v397, %v396
    %v496 = vpack.c.b16 %v399, %v398
    %v497 = vpack.c.b16 %v401, %v400
    %v498 = vpack.c.b16 %v403, %v402
    %v499 = vpack.c.b16 %v405, %v404
    %v500 = vpack.c.b16 %v407, %v406
    %v501 = vpack.c.b16 %v409, %v408
    %v502 = vpack.c.b16 %v411, %v410
    %v503 = vpack.c.b16 %v413, %v412
    %v504 = vpack.c.b16 %v415, %v414
    %v505 = vpack.c.b16 %v417, %v416
    %v506 = vpack.c.b16 %v419, %v418
    %v507 = vpack.c.b16 %v421, %v420
    %v508 = vpack.c.b16 %v423, %v422
    %v509 = vpack.c.b16 %v425, %v424
    %v510 = vpack.c.b16 %v427, %v426
    %v511 = vpack.c.b16 %v429, %v428
    %v512 = vpack.c.b16 %v431, %v430
    %v513 = vpack.c.b16 %v433, %v432
    %v514 = vpack.c.b16 %v435, %v434
    %v515 = vpack.c.b16 %v437, %v436
    %v516 = vpack.c.b16 %v439, %v438
    %v517 = vpack.c.b16 %v441, %v440
    %v518 = vpack.c.b16 %v443, %v442
    %v519 = vpack.c.b16 %v445, %v444
    %v520 = vpack.c.b16 %v447, %v446
    %v521 = vpack.c.b16 %v449, %v448
    %v522 = vpack.c.b16 %v451, %v450
    %v523 = vpack.c.b16 %v453, %v452
    %v524 = vpack.c.b16 %v455, %v454
    %v525 = vpack.c.b16 %v457, %v456
    %v526 = vpack.c.b16 %v459, %v458
    %v527 = vpack.c.b16 %v461, %v460
    %v528 = vpack.c.b16 %v463, %v462
    %v529 = vpack.c.b16 %v465, %v464
    %594 = vmatprep.subr.bf16.mxu0 0
    %595 = vmatpush1.bf16.msra.mxu0 %v466
    %596 = vmatprep.subr.bf16.mxu0 0
    %597 = vmatpush1.bf16.msra.mxu0 %v467
    %598 = vmatprep.subr.bf16.mxu0 0
    %599 = vmatpush1.bf16.msra.mxu0 %v468
    %600 = vmatprep.subr.bf16.mxu0 0
    %601 = vmatpush1.bf16.msra.mxu0 %v469
    %602 = vmatprep.subr.bf16.mxu0 0
    %603 = vmatpush1.bf16.msra.mxu0 %v470
    %604 = vmatprep.subr.bf16.mxu0 0
    %605 = vmatpush1.bf16.msra.mxu0 %v471
    %606 = vmatprep.subr.bf16.mxu0 0
    %607 = vmatpush1.bf16.msra.mxu0 %v472
    %608 = vmatprep.subr.bf16.mxu0 0
    %609 = vmatpush1.bf16.msra.mxu0 %v473
    %610 = vmatprep.subr.bf16.mxu0 0
    %611 = vmatpush1.bf16.msra.mxu0 %v474
    %612 = vmatprep.subr.bf16.mxu0 0
    %613 = vmatpush1.bf16.msra.mxu0 %v475
    %614 = vmatprep.subr.bf16.mxu0 0
    %615 = vmatpush1.bf16.msra.mxu0 %v476
    %616 = vmatprep.subr.bf16.mxu0 0
    %617 = vmatpush1.bf16.msra.mxu0 %v477
    %618 = vmatprep.subr.bf16.mxu0 0
    %619 = vmatpush1.bf16.msra.mxu0 %v478
    %620 = vmatprep.subr.bf16.mxu0 0
    %621 = vmatpush1.bf16.msra.mxu0 %v479
    %622 = vmatprep.subr.bf16.mxu0 0
    %623 = vmatpush1.bf16.msra.mxu0 %v480
    %624 = vmatprep.subr.bf16.mxu0 0
    %625 = vmatpush1.bf16.msra.mxu0 %v481
    %626 = vmatprep.mubr.bf16.mxu0 %v190
    %627 = vmatmul.mubr.bf16.gmra.mrb[0].mxu0 %v176
    %v628 = vpop.f32.mrb[0].mxu0
    %v629 = vadd.f32 %v150, %v628
    %v630 = vpop.f32.mrb[0].mxu0
    %v631 = vpop.f32.mrb[0].mxu0
    %v632 = vpop.f32.mrb[0].mxu0
    %633 = vdwg.mxu0
    %634 = vmatprep.subr.bf16.mxu0 0
    %635 = vmatpush1.bf16.msra.mxu0 %v482
    %636 = vmatprep.subr.bf16.mxu0 0
    %637 = vmatpush1.bf16.msra.mxu0 %v483
    %638 = vmatprep.subr.bf16.mxu0 0
    %639 = vmatpush1.bf16.msra.mxu0 %v484
    %640 = vmatprep.subr.bf16.mxu0 0
    %641 = vmatpush1.bf16.msra.mxu0 %v485
    %642 = vmatprep.subr.bf16.mxu0 0
    %643 = vmatpush1.bf16.msra.mxu0 %v486
    %644 = vmatprep.subr.bf16.mxu0 0
    %645 = vmatpush1.bf16.msra.mxu0 %v487
    %646 = vmatprep.subr.bf16.mxu0 0
    %647 = vmatpush1.bf16.msra.mxu0 %v488
    %648 = vmatprep.subr.bf16.mxu0 0
    %649 = vmatpush1.bf16.msra.mxu0 %v489
    %650 = vmatprep.subr.bf16.mxu0 0
    %651 = vmatpush1.bf16.msra.mxu0 %v490
    %652 = vmatprep.subr.bf16.mxu0 0
    %653 = vmatpush1.bf16.msra.mxu0 %v491
    %654 = vmatprep.subr.bf16.mxu0 0
    %655 = vmatpush1.bf16.msra.mxu0 %v492
    %656 = vmatprep.subr.bf16.mxu0 0
    %657 = vmatpush1.bf16.msra.mxu0 %v493
    %658 = vmatprep.subr.bf16.mxu0 0
    %659 = vmatpush1.bf16.msra.mxu0 %v494
    %660 = vmatprep.subr.bf16.mxu0 0
    %661 = vmatpush1.bf16.msra.mxu0 %v495
    %662 = vmatprep.subr.bf16.mxu0 0
    %663 = vmatpush1.bf16.msra.mxu0 %v496
    %664 = vmatprep.subr.bf16.mxu0 0
    %665 = vmatpush1.bf16.msra.mxu0 %v497
    %666 = vmatprep.mubr.bf16.mxu0 %v200
    %667 = vmatmul.mubr.bf16.gmra.mrb[0].mxu0 %v198
    %v668 = vpop.f32.mrb[0].mxu0
    %v669 = vadd.f32 %v629, %v668
    %v670 = vpop.f32.mrb[0].mxu0
    %v671 = vpop.f32.mrb[0].mxu0
    %v672 = vpop.f32.mrb[0].mxu0
    %673 = vdwg.mxu0
    %674 = vmatprep.subr.bf16.mxu0 0
    %675 = vmatpush1.bf16.msra.mxu0 %v498
    %676 = vmatprep.subr.bf16.mxu0 0
    %677 = vmatpush1.bf16.msra.mxu0 %v499
    %678 = vmatprep.subr.bf16.mxu0 0
    %679 = vmatpush1.bf16.msra.mxu0 %v500
    %680 = vmatprep.subr.bf16.mxu0 0
    %681 = vmatpush1.bf16.msra.mxu0 %v501
    %682 = vmatprep.subr.bf16.mxu0 0
    %683 = vmatpush1.bf16.msra.mxu0 %v502
    %684 = vmatprep.subr.bf16.mxu0 0
    %685 = vmatpush1.bf16.msra.mxu0 %v503
    %686 = vmatprep.subr.bf16.mxu0 0
    %687 = vmatpush1.bf16.msra.mxu0 %v504
    %688 = vmatprep.subr.bf16.mxu0 0
    %689 = vmatpush1.bf16.msra.mxu0 %v505
    %690 = vmatprep.subr.bf16.mxu0 0
    %691 = vmatpush1.bf16.msra.mxu0 %v506
    %692 = vmatprep.subr.bf16.mxu0 0
    %693 = vmatpush1.bf16.msra.mxu0 %v507
    %694 = vmatprep.subr.bf16.mxu0 0
    %695 = vmatpush1.bf16.msra.mxu0 %v508
    %696 = vmatprep.subr.bf16.mxu0 0
    %697 = vmatpush1.bf16.msra.mxu0 %v509
    %698 = vmatprep.subr.bf16.mxu0 0
    %699 = vmatpush1.bf16.msra.mxu0 %v510
    %700 = vmatprep.subr.bf16.mxu0 0
    %701 = vmatpush1.bf16.msra.mxu0 %v511
    %702 = vmatprep.subr.bf16.mxu0 0
    %703 = vmatpush1.bf16.msra.mxu0 %v512
    %704 = vmatprep.subr.bf16.mxu0 0
    %705 = vmatpush1.bf16.msra.mxu0 %v513
    %706 = vmatprep.mubr.bf16.mxu0 %v197
    %707 = vmatmul.mubr.bf16.gmra.mrb[0].mxu0 %v183
    %v708 = vpop.f32.mrb[0].mxu0
    %v709 = vadd.f32 %v669, %v708
    %v710 = vpop.f32.mrb[0].mxu0
    %v711 = vpop.f32.mrb[0].mxu0
    %v712 = vpop.f32.mrb[0].mxu0
    %713 = vdwg.mxu0
    %714 = vmatprep.subr.bf16.mxu0 0
    %715 = vmatpush1.bf16.msra.mxu0 %v514
    %716 = vmatprep.subr.bf16.mxu0 0
    %717 = vmatpush1.bf16.msra.mxu0 %v515
    %718 = vmatprep.subr.bf16.mxu0 0
    %719 = vmatpush1.bf16.msra.mxu0 %v516
    %720 = vmatprep.subr.bf16.mxu0 0
    %721 = vmatpush1.bf16.msra.mxu0 %v517
    %722 = vmatprep.subr.bf16.mxu0 0
    %723 = vmatpush1.bf16.msra.mxu0 %v518
    %724 = vmatprep.subr.bf16.mxu0 0
    %725 = vmatpush1.bf16.msra.mxu0 %v519
    %726 = vmatprep.subr.bf16.mxu0 0
    %727 = vmatpush1.bf16.msra.mxu0 %v520
    %728 = vmatprep.subr.bf16.mxu0 0
    %729 = vmatpush1.bf16.msra.mxu0 %v521
    %730 = vmatprep.subr.bf16.mxu0 0
    %731 = vmatpush1.bf16.msra.mxu0 %v522
    %732 = vmatprep.subr.bf16.mxu0 0
    %733 = vmatpush1.bf16.msra.mxu0 %v523
    %734 = vmatprep.subr.bf16.mxu0 0
    %735 = vmatpush1.bf16.msra.mxu0 %v524
    %736 = vmatprep.subr.bf16.mxu0 0
    %737 = vmatpush1.bf16.msra.mxu0 %v525
    %738 = vmatprep.subr.bf16.mxu0 0
    %739 = vmatpush1.bf16.msra.mxu0 %v526
    %740 = vmatprep.subr.bf16.mxu0 0
    %741 = vmatpush1.bf16.msra.mxu0 %v527
    %742 = vmatprep.subr.bf16.mxu0 0
    %743 = vmatpush1.bf16.msra.mxu0 %v528
    %744 = vmatprep.subr.bf16.mxu0 0
    %745 = vmatpush1.bf16.msra.mxu0 %v529
    %746 = vmatprep.mubr.bf16.mxu0 %v201
    %747 = vmatmul.mubr.bf16.gmra.mrb[0].mxu0 %v199
    %v748 = vpop.f32.mrb[0].mxu0
    %v749 = vadd.f32 %v709, %v748
    %v750 = vpop.f32.mrb[0].mxu0
    %v751 = vpop.f32.mrb[0].mxu0
    %v752 = vpop.f32.mrb[0].mxu0
    %753 = vdwg.mxu0
    %vm754 = vcmask 517120
    %755 = vst.msk [vmem:[#allocation2] sm:$0x3] %vm754, %v749
    // Predicated region
    $region14: #{model_image_scratch_forward.9} parent=1 // pred_check
      _
    $region15: #{model_image_scratch_forward.9} parent=1 // pred_check_branch
      %757 = sbr.rel (0) target = $region17
    $region16: #{model_image_scratch_forward.9} parent=1 // pred_region
      %s759 = ssub.s32 32, 32
      %760 = vsyncadd [#allocation3], %s759
      %s762 = sshll.u32 [#allocation2], 4
      %s763 = int_to_ptr.vmem [resolvable:$true] %s762
      %765 = dma.vmem_to_hbm [thread:$0]  %s763, 32, %s3, [#allocation3]
    $region17: #{model_image_scratch_forward.9} parent=1 // pred_fallthru
      _
    // Predicated region
    $region18: #{model_image_scratch_forward.9} parent=1 // pred_check
      _
    $region19: #{model_image_scratch_forward.9} parent=1 // pred_check_branch
      %767 = sbr.rel (0) target = $region21
    $region20: #{model_image_scratch_forward.9} parent=1 // pred_region
      %768 = dma.done [#allocation3], 32
    $region21: #{model_image_scratch_forward.9} parent=1 // pred_fallthru
      _
    %769 = vsyncpa [#allocation3], 1

// kernel: model_image_scratch_forward.8
$region0: #{model_image_scratch_forward.8}
  #allocation0 [shape = 'u32[]', space=smem, size = 0x4, offset = 0x4, fixed_abs, tag = 'smem constant byte address 0x4 - core index']
  #allocation1 [shape = 'u32[144,128]{1,0:T(1,128)}', space=vmem, size = 0x12000, scoped, tag = 'internal scratch']
  %s0 = inlined_call_operand.vmem [shape: bf16[8,2048], index: 0, kind: input, shape index: {}]
  %s1 = inlined_call_operand.vmem [shape: bf16[2048,256], index: 1, kind: input, shape index: {}]
  %s2 = inlined_call_operand.vmem [shape: f32[1,256], index: 2, kind: input, shape index: {}]
  %s3 = inlined_call_operand.vmem [shape: bf16[8,256], index: 3, kind: output, shape index: {}]
  %s4 = sld [smem:[#allocation0]]
  $region86: #{model_image_scratch_forward.8} parent=0
    _
  %s6 = ssub.s32 1, %s4
  %s7 = scalar_select 0, %s6, %s4
  $region1: #{model_image_scratch_forward.8} parent=0
    #allocation2 [shape = 'u8[1048576]{0}', space=vmem, size = 0x100000, scoped, tag = 'input window, operand 1']
    loop: start=0, step=1, limit=4
    $region2: #{model_image_scratch_forward.8} parent=1 // loop_pre_header
      _
    $region3: #{model_image_scratch_forward.8} parent=1 // loop_header
      %s9 = sphi 0, %s13
      %p10 = scmp.ge.s32.totalorder %s9, 4
      %s16 = sphi 0, %s28
      %s17 = sphi 0, %s24
      %s18 = sphi 0, %s16
      %s19 = sphi 0, %s17
      %s20 = sphi 0, %s18
      %s21 = sphi 0, %s19
      %s31 = sphi 0, %s33
      %s34 = sphi 0, %s31
      %s35 = sphi 0, %s34
      %s51 = sphi 0, %s35
      %s57 = sphi 0, %s59
      %s60 = sphi 0, %s57
      %s61 = sphi 0, %s60
      %s77 = sphi 0, %s61
      %s83 = sphi 0, %s85
      %s86 = sphi 0, %s83
      %s87 = sphi 0, %s86
      %s103 = sphi 0, %s87
      %s111 = sphi 0, %s113
      %s114 = sphi 0, %s111
      %s115 = sphi 0, %s114
      %s131 = sphi 0, %s115
    $region4: #{model_image_scratch_forward.8} parent=1 // loop_header_branch
      %12 = sbr.rel (%p10) target = $region8
    $region5: #{model_image_scratch_forward.8} parent=1 // loop_body
      %s14 = ssub.s32 %s9, 1
      %s15 = ssub.s32 %s9, 2
      %s22 = sadd.s32 1, %s17
      %p23 = scmp.ge.s32.totalorder %s22, 2
      %s24 = scalar_select %p23, 0, %s22
      %s25 = sadd.s32 1, %s16
      %s26 = scalar_select %p23, %s25, %s16
      %p27 = scmp.ge.s32.totalorder %s26, 1
      %s28 = scalar_select %p27, 0, %s26
      %s29 = ssub.s32 %s16, %s28
      %p30 = scmp.eq.s32.totalorder %s29, 0
      %s32 = sadd.s32 %s31, 1
      %s33 = scalar_select %p30, %s31, %s32
      %p36 = pneg %p30
      %p37 = scmp.eq.s32.totalorder %s9, 1
      %p38 = por %p36, %p37
      %p39 = scmp.ne.s32.totalorder %s31, %s34
      %p40 = scmp.eq.s32.totalorder %s9, 0
      %p41 = por %p39, %p40
      %p42 = scmp.ne.s32.totalorder %s31, %s34
      %p43 = scmp.eq.s32.totalorder %s14, 1
      %p44 = por %p42, %p43
      %p45 = scmp.ne.s32.totalorder %s34, %s35
      %p46 = scmp.eq.s32.totalorder %s14, 0
      %p47 = por %p45, %p46
      %p48 = scmp.ne.s32.totalorder %s34, %s35
      %p49 = scmp.eq.s32.totalorder %s15, 1
      %p50 = por %p48, %p49
      %p52 = scmp.ne.s32.totalorder %s35, %s51
      %p53 = scmp.eq.s32.totalorder %s15, 0
      %p54 = por %p52, %p53
      %s55 = ssub.s32 %s17, %s24
      %p56 = scmp.eq.s32.totalorder %s55, 0
      %s58 = sadd.s32 %s57, 1
      %s59 = scalar_select %p56, %s57, %s58
      %p62 = pneg %p56
      %p63 = scmp.eq.s32.totalorder %s9, 1
      %p64 = por %p62, %p63
      %p65 = scmp.ne.s32.totalorder %s57, %s60
      %p66 = scmp.eq.s32.totalorder %s9, 0
      %p67 = por %p65, %p66
      %p68 = scmp.ne.s32.totalorder %s57, %s60
      %p69 = scmp.eq.s32.totalorder %s14, 1
      %p70 = por %p68, %p69
      %p71 = scmp.ne.s32.totalorder %s60, %s61
      %p72 = scmp.eq.s32.totalorder %s14, 0
      %p73 = por %p71, %p72
      %p74 = scmp.ne.s32.totalorder %s60, %s61
      %p75 = scmp.eq.s32.totalorder %s15, 1
      %p76 = por %p74, %p75
      %p78 = scmp.ne.s32.totalorder %s61, %s77
      %p79 = scmp.eq.s32.totalorder %s15, 0
      %p80 = por %p78, %p79
      %s81 = ssub.s32 %s17, %s24
      %p82 = scmp.eq.s32.totalorder %s81, 0
      %s84 = sadd.s32 %s83, 1
      %s85 = scalar_select %p82, %s83, %s84
      %p88 = pneg %p82
      %p89 = scmp.eq.s32.totalorder %s9, 1
      %p90 = por %p88, %p89
      %p91 = scmp.ne.s32.totalorder %s83, %s86
      %p92 = scmp.eq.s32.totalorder %s9, 0
      %p93 = por %p91, %p92
      %p94 = scmp.ne.s32.totalorder %s83, %s86
      %p95 = scmp.eq.s32.totalorder %s14, 1
      %p96 = por %p94, %p95
      %p97 = scmp.ne.s32.totalorder %s86, %s87
      %p98 = scmp.eq.s32.totalorder %s14, 0
      %p99 = por %p97, %p98
      %p100 = scmp.ne.s32.totalorder %s86, %s87
      %p101 = scmp.eq.s32.totalorder %s15, 1
      %p102 = por %p100, %p101
      %p104 = scmp.ne.s32.totalorder %s87, %s103
      %p105 = scmp.eq.s32.totalorder %s15, 0
      %p106 = por %p104, %p105
      %s107 = ssub.s32 %s16, %s28
      %s108 = ssub.s32 %s17, %s24
      %s109 = sor.u32 %s107, %s108
      %p110 = scmp.eq.s32.totalorder %s109, 0
      %s112 = sadd.s32 %s111, 1
      %s113 = scalar_select %p110, %s111, %s112
      %p116 = pneg %p110
      %p117 = scmp.eq.s32.totalorder %s9, 1
      %p118 = por %p116, %p117
      %p119 = scmp.ne.s32.totalorder %s111, %s114
      %p120 = scmp.eq.s32.totalorder %s9, 0
      %p121 = por %p119, %p120
      %p122 = scmp.ne.s32.totalorder %s111, %s114
      %p123 = scmp.eq.s32.totalorder %s14, 1
      %p124 = por %p122, %p123
      %p125 = scmp.ne.s32.totalorder %s114, %s115
      %p126 = scmp.eq.s32.totalorder %s14, 0
      %p127 = por %p125, %p126
      %p128 = scmp.ne.s32.totalorder %s114, %s115
      %p129 = scmp.eq.s32.totalorder %s15, 1
      %p130 = por %p128, %p129
      %p132 = scmp.ne.s32.totalorder %s115, %s131
      %p133 = scmp.eq.s32.totalorder %s15, 0
      %p134 = por %p132, %p133
      %p135 = scmp.le.s32.totalorder 1, %s9
      %p136 = scmp.lt.s32.totalorder %s9, 3
      %p137 = pnand %p135, %p136
      %p138 = pneg %p137
      // Predicated region
      $region9: #{model_image_scratch_forward.8} parent=5 // pred_check
        _
      $region10: #{model_image_scratch_forward.8} parent=5 // pred_check_branch
        %140 = sbr.rel (%p137) target = $region12
      $region11: #{model_image_scratch_forward.8} parent=5 // pred_region
        %s141 = ssub.s32 %s9, 1
        // Predicated region
        $region13: #{model_image_scratch_forward.8} parent=11 // pred_check
          %p142 = pneg %p47
        $region14: #{model_image_scratch_forward.8} parent=11 // pred_check_branch
          %144 = sbr.rel (%p142) target = $region16
        $region15: #{model_image_scratch_forward.8} parent=11 // pred_region
          %p145 = scmp.lt.s32.totalorder %s18, 0
          %s146 = scalar_select %p145, %s18, 0
          %s147 = smul.addr %s146, 16
          %s148 = smul.addr %s147, 4
          %s149 = scalar_lea.vmem %s0, %s148
        $region16: #{model_image_scratch_forward.8} parent=11 // pred_fallthru
          _
      $region12: #{model_image_scratch_forward.8} parent=5 // pred_fallthru
        _
      %p150 = scmp.lt.s32.totalorder %s9, 2
      // Predicated region
      $region17: #{model_image_scratch_forward.8} parent=5 // pred_check
        %p151 = pneg %p150
      $region18: #{model_image_scratch_forward.8} parent=5 // pred_check_branch
        %153 = sbr.rel (%p151) target = $region20
      $region19: #{model_image_scratch_forward.8} parent=5 // pred_region
        // Predicated region
        $region21: #{model_image_scratch_forward.8} parent=19 // pred_check
          %p154 = pneg %p67
        $region22: #{model_image_scratch_forward.8} parent=19 // pred_check_branch
          %156 = sbr.rel (%p154) target = $region24
        $region23: #{model_image_scratch_forward.8} parent=19 // pred_region
          %s157 = sand.u32 %s57, 1
          %s158 = sand.u32 %s57, 1
          %s159 = smul.addr %s158, 1024
          %s160 = scalar_lea.vmem [#allocation2], %s159
          %s161 = smul.addr %s17, 4
          %s162 = scalar_lea.vmem %s1, %s161
          // Predicated region
          $region25: #{model_image_scratch_forward.8} parent=23 // pred_check
            _
          $region26: #{model_image_scratch_forward.8} parent=23 // pred_check_branch
            %164 = sbr.rel (0) target = $region28
          $region27: #{model_image_scratch_forward.8} parent=23 // pred_region
            // Predicated region
            $region29: #{model_image_scratch_forward.8} parent=27 // pred_check
              _
            $region30: #{model_image_scratch_forward.8} parent=27 // pred_check_branch
              %166 = sbr.rel target = $region32
            $region31: #{model_image_scratch_forward.8} parent=27 // pred_region
              // Predicated region
              $region44: #{model_image_scratch_forward.8} parent=31 // pred_check
                _
              $region45: #{model_image_scratch_forward.8} parent=31 // pred_check_branch
                %691 = sbr.rel (0) target = $region47
              $region46: #{model_image_scratch_forward.8} parent=31 // pred_region
                loop: start=0, step=1, limit=1
                $region48: #{model_image_scratch_forward.8} parent=46 // loop_pre_header
                  _
                $region49: #{model_image_scratch_forward.8} parent=46 // loop_header
                  %s693 = sphi 0, %s697
                  %p694 = scmp.ge.s32.totalorder %s693, 1
                  %s698 = sphi %s162, %s162
                  %s699 = sphi %s160, %s160
                $region50: #{model_image_scratch_forward.8} parent=46 // loop_header_branch
                  %696 = sbr.rel (%p694) target = $region54
                $region51: #{model_image_scratch_forward.8} parent=46 // loop_body
                  _
                $region52: #{model_image_scratch_forward.8} parent=46 // loop_footer
                  %s697 = sadd.s32 1, %s693
                $region53: #{model_image_scratch_forward.8} parent=46 // loop_footer_branch
                  %692 = sbr.rel target = $region49
                $region54: #{model_image_scratch_forward.8} parent=46 // loop_exit
                  _
                loop: start=0, step=1, limit=1
                $region55: #{model_image_scratch_forward.8} parent=46 // loop_pre_header
                  _
                $region56: #{model_image_scratch_forward.8} parent=46 // loop_header
                  %s702 = sphi 0, %s706
                  %p703 = scmp.ge.s32.totalorder %s702, 1
                  %s707 = sphi %s162, %s162
                  %s708 = sphi %s160, %s160
                $region57: #{model_image_scratch_forward.8} parent=46 // loop_header_branch
                  %705 = sbr.rel (%p703) target = $region61
                $region58: #{model_image_scratch_forward.8} parent=46 // loop_body
                  %v709 = vld [vmem:[%s707] sm:$0xf]
                  %710 = vst [vmem:[%s708] sm:$0xf] %v709
                  %v711 = vld [vmem:[%s707 + $0x8] sm:$0xf]
                  %712 = vst [vmem:[%s708 + $0x4] sm:$0xf] %v711
                  %v713 = vld [vmem:[%s707 + $0x10] sm:$0xf]
                  %714 = vst [vmem:[%s708 + $0x8] sm:$0xf] %v713
                  %v715 = vld [vmem:[%s707 + $0x18] sm:$0xf]
                  %716 = vst [vmem:[%s708 + $0xc] sm:$0xf] %v715
                  %v717 = vld [vmem:[%s707 + $0x20] sm:$0xf]
                  %718 = vst [vmem:[%s708 + $0x10] sm:$0xf] %v717
                  %v719 = vld [vmem:[%s707 + $0x28] sm:$0xf]
                  %720 = vst [vmem:[%s708 + $0x14] sm:$0xf] %v719
                  %v721 = vld [vmem:[%s707 + $0x30] sm:$0xf]
                  %722 = vst [vmem:[%s708 + $0x18] sm:$0xf] %v721
                  %v723 = vld [vmem:[%s707 + $0x38] sm:$0xf]
                  %724 = vst [vmem:[%s708 + $0x1c] sm:$0xf] %v723
                  %v725 = vld [vmem:[%s707 + $0x40] sm:$0xf]
                  %726 = vst [vmem:[%s708 + $0x20] sm:$0xf] %v725
                  %v727 = vld [vmem:[%s707 + $0x48] sm:$0xf]
                  %728 = vst [vmem:[%s708 + $0x24] sm:$0xf] %v727
                  %v729 = vld [vmem:[%s707 + $0x50] sm:$0xf]
                  %730 = vst [vmem:[%s708 + $0x28] sm:$0xf] %v729
                  %v731 = vld [vmem:[%s707 + $0x58] sm:$0xf]
                  %732 = vst [vmem:[%s708 + $0x2c] sm:$0xf] %v731
                  %v733 = vld [vmem:[%s707 + $0x60] sm:$0xf]
                  %734 = vst [vmem:[%s708 + $0x30] sm:$0xf] %v733
                  %v735 = vld [vmem:[%s707 + $0x68] sm:$0xf]
                  %736 = vst [vmem:[%s708 + $0x34] sm:$0xf] %v735
                  %v737 = vld [vmem:[%s707 + $0x70] sm:$0xf]
                  %738 = vst [vmem:[%s708 + $0x38] sm:$0xf] %v737
                  %v739 = vld [vmem:[%s707 + $0x78] sm:$0xf]
                  %740 = vst [vmem:[%s708 + $0x3c] sm:$0xf] %v739
                  %v741 = vld [vmem:[%s707 + $0x80] sm:$0xf]
                  %742 = vst [vmem:[%s708 + $0x40] sm:$0xf] %v741
                  %v743 = vld [vmem:[%s707 + $0x88] sm:$0xf]
                  %744 = vst [vmem:[%s708 + $0x44] sm:$0xf] %v743
                  %v745 = vld [vmem:[%s707 + $0x90] sm:$0xf]
                  %746 = vst [vmem:[%s708 + $0x48] sm:$0xf] %v745
                  %v747 = vld [vmem:[%s707 + $0x98] sm:$0xf]
                  %748 = vst [vmem:[%s708 + $0x4c] sm:$0xf] %v747
                  %v749 = vld [vmem:[%s707 + $0xa0] sm:$0xf]
                  %750 = vst [vmem:[%s708 + $0x50] sm:$0xf] %v749
                  %v751 = vld [vmem:[%s707 + $0xa8] sm:$0xf]
                  %752 = vst [vmem:[%s708 + $0x54] sm:$0xf] %v751
                  %v753 = vld [vmem:[%s707 + $0xb0] sm:$0xf]
                  %754 = vst [vmem:[%s708 + $0x58] sm:$0xf] %v753
                  %v755 = vld [vmem:[%s707 + $0xb8] sm:$0xf]
                  %756 = vst [vmem:[%s708 + $0x5c] sm:$0xf] %v755
                  %v757 = vld [vmem:[%s707 + $0xc0] sm:$0xf]
                  %758 = vst [vmem:[%s708 + $0x60] sm:$0xf] %v757
                  %v759 = vld [vmem:[%s707 + $0xc8] sm:$0xf]
                  %760 = vst [vmem:[%s708 + $0x64] sm:$0xf] %v759
                  %v761 = vld [vmem:[%s707 + $0xd0] sm:$0xf]
                  %762 = vst [vmem:[%s708 + $0x68] sm:$0xf] %v761
                  %v763 = vld [vmem:[%s707 + $0xd8] sm:$0xf]
                  %764 = vst [vmem:[%s708 + $0x6c] sm:$0xf] %v763
                  %v765 = vld [vmem:[%s707 + $0xe0] sm:$0xf]
                  %766 = vst [vmem:[%s708 + $0x70] sm:$0xf] %v765
                  %v767 = vld [vmem:[%s707 + $0xe8] sm:$0xf]
                  %768 = vst [vmem:[%s708 + $0x74] sm:$0xf] %v767
                  %v769 = vld [vmem:[%s707 + $0xf0] sm:$0xf]
                  %770 = vst [vmem:[%s708 + $0x78] sm:$0xf] %v769
                  %v771 = vld [vmem:[%s707 + $0xf8] sm:$0xf]
                  %772 = vst [vmem:[%s708 + $0x7c] sm:$0xf] %v771
                  %v773 = vld [vmem:[%s707 + $0x100] sm:$0xf]
                  %774 = vst [vmem:[%s708 + $0x80] sm:$0xf] %v773
                  %v775 = vld [vmem:[%s707 + $0x108] sm:$0xf]
                  %776 = vst [vmem:[%s708 + $0x84] sm:$0xf] %v775
                  %v777 = vld [vmem:[%s707 + $0x110] sm:$0xf]
                  %778 = vst [vmem:[%s708 + $0x88] sm:$0xf] %v777
                  %v779 = vld [vmem:[%s707 + $0x118] sm:$0xf]
                  %780 = vst [vmem:[%s708 + $0x8c] sm:$0xf] %v779
                  %v781 = vld [vmem:[%s707 + $0x120] sm:$0xf]
                  %782 = vst [vmem:[%s708 + $0x90] sm:$0xf] %v781
                  %v783 = vld [vmem:[%s707 + $0x128] sm:$0xf]
                  %784 = vst [vmem:[%s708 + $0x94] sm:$0xf] %v783
                  %v785 = vld [vmem:[%s707 + $0x130] sm:$0xf]
                  %786 = vst [vmem:[%s708 + $0x98] sm:$0xf] %v785
                  %v787 = vld [vmem:[%s707 + $0x138] sm:$0xf]
                  %788 = vst [vmem:[%s708 + $0x9c] sm:$0xf] %v787
                  %v789 = vld [vmem:[%s707 + $0x140] sm:$0xf]
                  %790 = vst [vmem:[%s708 + $0xa0] sm:$0xf] %v789
                  %v791 = vld [vmem:[%s707 + $0x148] sm:$0xf]
                  %792 = vst [vmem:[%s708 + $0xa4] sm:$0xf] %v791
                  %v793 = vld [vmem:[%s707 + $0x150] sm:$0xf]
                  %794 = vst [vmem:[%s708 + $0xa8] sm:$0xf] %v793
                  %v795 = vld [vmem:[%s707 + $0x158] sm:$0xf]
                  %796 = vst [vmem:[%s708 + $0xac] sm:$0xf] %v795
                  %v797 = vld [vmem:[%s707 + $0x160] sm:$0xf]
                  %798 = vst [vmem:[%s708 + $0xb0] sm:$0xf] %v797
                  %v799 = vld [vmem:[%s707 + $0x168] sm:$0xf]
                  %800 = vst [vmem:[%s708 + $0xb4] sm:$0xf] %v799
                  %v801 = vld [vmem:[%s707 + $0x170] sm:$0xf]
                  %802 = vst [vmem:[%s708 + $0xb8] sm:$0xf] %v801
                  %v803 = vld [vmem:[%s707 + $0x178] sm:$0xf]
                  %804 = vst [vmem:[%s708 + $0xbc] sm:$0xf] %v803
                  %v805 = vld [vmem:[%s707 + $0x180] sm:$0xf]
                  %806 = vst [vmem:[%s708 + $0xc0] sm:$0xf] %v805
                  %v807 = vld [vmem:[%s707 + $0x188] sm:$0xf]
                  %808 = vst [vmem:[%s708 + $0xc4] sm:$0xf] %v807
                  %v809 = vld [vmem:[%s707 + $0x190] sm:$0xf]
                  %810 = vst [vmem:[%s708 + $0xc8] sm:$0xf] %v809
                  %v811 = vld [vmem:[%s707 + $0x198] sm:$0xf]
                  %812 = vst [vmem:[%s708 + $0xcc] sm:$0xf] %v811
                  %v813 = vld [vmem:[%s707 + $0x1a0] sm:$0xf]
                  %814 = vst [vmem:[%s708 + $0xd0] sm:$0xf] %v813
                  %v815 = vld [vmem:[%s707 + $0x1a8] sm:$0xf]
                  %816 = vst [vmem:[%s708 + $0xd4] sm:$0xf] %v815
                  %v817 = vld [vmem:[%s707 + $0x1b0] sm:$0xf]
                  %818 = vst [vmem:[%s708 + $0xd8] sm:$0xf] %v817
                  %v819 = vld [vmem:[%s707 + $0x1b8] sm:$0xf]
                  %820 = vst [vmem:[%s708 + $0xdc] sm:$0xf] %v819
                  %v821 = vld [vmem:[%s707 + $0x1c0] sm:$0xf]
                  %822 = vst [vmem:[%s708 + $0xe0] sm:$0xf] %v821
                  %v823 = vld [vmem:[%s707 + $0x1c8] sm:$0xf]
                  %824 = vst [vmem:[%s708 + $0xe4] sm:$0xf] %v823
                  %v825 = vld [vmem:[%s707 + $0x1d0] sm:$0xf]
                  %826 = vst [vmem:[%s708 + $0xe8] sm:$0xf] %v825
                  %v827 = vld [vmem:[%s707 + $0x1d8] sm:$0xf]
                  %828 = vst [vmem:[%s708 + $0xec] sm:$0xf] %v827
                  %v829 = vld [vmem:[%s707 + $0x1e0] sm:$0xf]
                  %830 = vst [vmem:[%s708 + $0xf0] sm:$0xf] %v829
                  %v831 = vld [vmem:[%s707 + $0x1e8] sm:$0xf]
                  %832 = vst [vmem:[%s708 + $0xf4] sm:$0xf] %v831
                  %v833 = vld [vmem:[%s707 + $0x1f0] sm:$0xf]
                  %834 = vst [vmem:[%s708 + $0xf8] sm:$0xf] %v833
                  %v835 = vld [vmem:[%s707 + $0x1f8] sm:$0xf]
                  %836 = vst [vmem:[%s708 + $0xfc] sm:$0xf] %v835
                  %v837 = vld [vmem:[%s707 + $0x200] sm:$0xf]
                  %838 = vst [vmem:[%s708 + $0x100] sm:$0xf] %v837
                  %v839 = vld [vmem:[%s707 + $0x208] sm:$0xf]
                  %840 = vst [vmem:[%s708 + $0x104] sm:$0xf] %v839
                  %v841 = vld [vmem:[%s707 + $0x210] sm:$0xf]
                  %842 = vst [vmem:[%s708 + $0x108] sm:$0xf] %v841
                  %v843 = vld [vmem:[%s707 + $0x218] sm:$0xf]
                  %844 = vst [vmem:[%s708 + $0x10c] sm:$0xf] %v843
                  %v845 = vld [vmem:[%s707 + $0x220] sm:$0xf]
                  %846 = vst [vmem:[%s708 + $0x110] sm:$0xf] %v845
                  %v847 = vld [vmem:[%s707 + $0x228] sm:$0xf]
                  %848 = vst [vmem:[%s708 + $0x114] sm:$0xf] %v847
                  %v849 = vld [vmem:[%s707 + $0x230] sm:$0xf]
                  %850 = vst [vmem:[%s708 + $0x118] sm:$0xf] %v849
                  %v851 = vld [vmem:[%s707 + $0x238] sm:$0xf]
                  %852 = vst [vmem:[%s708 + $0x11c] sm:$0xf] %v851
                  %v853 = vld [vmem:[%s707 + $0x240] sm:$0xf]
                  %854 = vst [vmem:[%s708 + $0x120] sm:$0xf] %v853
                  %v855 = vld [vmem:[%s707 + $0x248] sm:$0xf]
                  %856 = vst [vmem:[%s708 + $0x124] sm:$0xf] %v855
                  %v857 = vld [vmem:[%s707 + $0x250] sm:$0xf]
                  %858 = vst [vmem:[%s708 + $0x128] sm:$0xf] %v857
                  %v859 = vld [vmem:[%s707 + $0x258] sm:$0xf]
                  %860 = vst [vmem:[%s708 + $0x12c] sm:$0xf] %v859
                  %v861 = vld [vmem:[%s707 + $0x260] sm:$0xf]
                  %862 = vst [vmem:[%s708 + $0x130] sm:$0xf] %v861
                  %v863 = vld [vmem:[%s707 + $0x268] sm:$0xf]
                  %864 = vst [vmem:[%s708 + $0x134] sm:$0xf] %v863
                  %v865 = vld [vmem:[%s707 + $0x270] sm:$0xf]
                  %866 = vst [vmem:[%s708 + $0x138] sm:$0xf] %v865
                  %v867 = vld [vmem:[%s707 + $0x278] sm:$0xf]
                  %868 = vst [vmem:[%s708 + $0x13c] sm:$0xf] %v867
                  %v869 = vld [vmem:[%s707 + $0x280] sm:$0xf]
                  %870 = vst [vmem:[%s708 + $0x140] sm:$0xf] %v869
                  %v871 = vld [vmem:[%s707 + $0x288] sm:$0xf]
                  %872 = vst [vmem:[%s708 + $0x144] sm:$0xf] %v871
                  %v873 = vld [vmem:[%s707 + $0x290] sm:$0xf]
                  %874 = vst [vmem:[%s708 + $0x148] sm:$0xf] %v873
                  %v875 = vld [vmem:[%s707 + $0x298] sm:$0xf]
                  %876 = vst [vmem:[%s708 + $0x14c] sm:$0xf] %v875
                  %v877 = vld [vmem:[%s707 + $0x2a0] sm:$0xf]
                  %878 = vst [vmem:[%s708 + $0x150] sm:$0xf] %v877
                  %v879 = vld [vmem:[%s707 + $0x2a8] sm:$0xf]
                  %880 = vst [vmem:[%s708 + $0x154] sm:$0xf] %v879
                  %v881 = vld [vmem:[%s707 + $0x2b0] sm:$0xf]
                  %882 = vst [vmem:[%s708 + $0x158] sm:$0xf] %v881
                  %v883 = vld [vmem:[%s707 + $0x2b8] sm:$0xf]
                  %884 = vst [vmem:[%s708 + $0x15c] sm:$0xf] %v883
                  %v885 = vld [vmem:[%s707 + $0x2c0] sm:$0xf]
                  %886 = vst [vmem:[%s708 + $0x160] sm:$0xf] %v885
                  %v887 = vld [vmem:[%s707 + $0x2c8] sm:$0xf]
                  %888 = vst [vmem:[%s708 + $0x164] sm:$0xf] %v887
                  %v889 = vld [vmem:[%s707 + $0x2d0] sm:$0xf]
                  %890 = vst [vmem:[%s708 + $0x168] sm:$0xf] %v889
                  %v891 = vld [vmem:[%s707 + $0x2d8] sm:$0xf]
                  %892 = vst [vmem:[%s708 + $0x16c] sm:$0xf] %v891
                  %v893 = vld [vmem:[%s707 + $0x2e0] sm:$0xf]
                  %894 = vst [vmem:[%s708 + $0x170] sm:$0xf] %v893
                  %v895 = vld [vmem:[%s707 + $0x2e8] sm:$0xf]
                  %896 = vst [vmem:[%s708 + $0x174] sm:$0xf] %v895
                  %v897 = vld [vmem:[%s707 + $0x2f0] sm:$0xf]
                  %898 = vst [vmem:[%s708 + $0x178] sm:$0xf] %v897
                  %v899 = vld [vmem:[%s707 + $0x2f8] sm:$0xf]
                  %900 = vst [vmem:[%s708 + $0x17c] sm:$0xf] %v899
                  %v901 = vld [vmem:[%s707 + $0x300] sm:$0xf]
                  %902 = vst [vmem:[%s708 + $0x180] sm:$0xf] %v901
                  %v903 = vld [vmem:[%s707 + $0x308] sm:$0xf]
                  %904 = vst [vmem:[%s708 + $0x184] sm:$0xf] %v903
                  %v905 = vld [vmem:[%s707 + $0x310] sm:$0xf]
                  %906 = vst [vmem:[%s708 + $0x188] sm:$0xf] %v905
                  %v907 = vld [vmem:[%s707 + $0x318] sm:$0xf]
                  %908 = vst [vmem:[%s708 + $0x18c] sm:$0xf] %v907
                  %v909 = vld [vmem:[%s707 + $0x320] sm:$0xf]
                  %910 = vst [vmem:[%s708 + $0x190] sm:$0xf] %v909
                  %v911 = vld [vmem:[%s707 + $0x328] sm:$0xf]
                  %912 = vst [vmem:[%s708 + $0x194] sm:$0xf] %v911
                  %v913 = vld [vmem:[%s707 + $0x330] sm:$0xf]
                  %914 = vst [vmem:[%s708 + $0x198] sm:$0xf] %v913
                  %v915 = vld [vmem:[%s707 + $0x338] sm:$0xf]
                  %916 = vst [vmem:[%s708 + $0x19c] sm:$0xf] %v915
                  %v917 = vld [vmem:[%s707 + $0x340] sm:$0xf]
                  %918 = vst [vmem:[%s708 + $0x1a0] sm:$0xf] %v917
                  %v919 = vld [vmem:[%s707 + $0x348] sm:$0xf]
                  %920 = vst [vmem:[%s708 + $0x1a4] sm:$0xf] %v919
                  %v921 = vld [vmem:[%s707 + $0x350] sm:$0xf]
                  %922 = vst [vmem:[%s708 + $0x1a8] sm:$0xf] %v921
                  %v923 = vld [vmem:[%s707 + $0x358] sm:$0xf]
                  %924 = vst [vmem:[%s708 + $0x1ac] sm:$0xf] %v923
                  %v925 = vld [vmem:[%s707 + $0x360] sm:$0xf]
                  %926 = vst [vmem:[%s708 + $0x1b0] sm:$0xf] %v925
                  %v927 = vld [vmem:[%s707 + $0x368] sm:$0xf]
                  %928 = vst [vmem:[%s708 + $0x1b4] sm:$0xf] %v927
                  %v929 = vld [vmem:[%s707 + $0x370] sm:$0xf]
                  %930 = vst [vmem:[%s708 + $0x1b8] sm:$0xf] %v929
                  %v931 = vld [vmem:[%s707 + $0x378] sm:$0xf]
                  %932 = vst [vmem:[%s708 + $0x1bc] sm:$0xf] %v931
                  %v933 = vld [vmem:[%s707 + $0x380] sm:$0xf]
                  %934 = vst [vmem:[%s708 + $0x1c0] sm:$0xf] %v933
                  %v935 = vld [vmem:[%s707 + $0x388] sm:$0xf]
                  %936 = vst [vmem:[%s708 + $0x1c4] sm:$0xf] %v935
                  %v937 = vld [vmem:[%s707 + $0x390] sm:$0xf]
                  %938 = vst [vmem:[%s708 + $0x1c8] sm:$0xf] %v937
                  %v939 = vld [vmem:[%s707 + $0x398] sm:$0xf]
                  %940 = vst [vmem:[%s708 + $0x1cc] sm:$0xf] %v939
                  %v941 = vld [vmem:[%s707 + $0x3a0] sm:$0xf]
                  %942 = vst [vmem:[%s708 + $0x1d0] sm:$0xf] %v941
                  %v943 = vld [vmem:[%s707 + $0x3a8] sm:$0xf]
                  %944 = vst [vmem:[%s708 + $0x1d4] sm:$0xf] %v943
                  %v945 = vld [vmem:[%s707 + $0x3b0] sm:$0xf]
                  %946 = vst [vmem:[%s708 + $0x1d8] sm:$0xf] %v945
                  %v947 = vld [vmem:[%s707 + $0x3b8] sm:$0xf]
                  %948 = vst [vmem:[%s708 + $0x1dc] sm:$0xf] %v947
                  %v949 = vld [vmem:[%s707 + $0x3c0] sm:$0xf]
                  %950 = vst [vmem:[%s708 + $0x1e0] sm:$0xf] %v949
                  %v951 = vld [vmem:[%s707 + $0x3c8] sm:$0xf]
                  %952 = vst [vmem:[%s708 + $0x1e4] sm:$0xf] %v951
                  %v953 = vld [vmem:[%s707 + $0x3d0] sm:$0xf]
                  %954 = vst [vmem:[%s708 + $0x1e8] sm:$0xf] %v953
                  %v955 = vld [vmem:[%s707 + $0x3d8] sm:$0xf]
                  %956 = vst [vmem:[%s708 + $0x1ec] sm:$0xf] %v955
                  %v957 = vld [vmem:[%s707 + $0x3e0] sm:$0xf]
                  %958 = vst [vmem:[%s708 + $0x1f0] sm:$0xf] %v957
                  %v959 = vld [vmem:[%s707 + $0x3e8] sm:$0xf]
                  %960 = vst [vmem:[%s708 + $0x1f4] sm:$0xf] %v959
                  %v961 = vld [vmem:[%s707 + $0x3f0] sm:$0xf]
                  %962 = vst [vmem:[%s708 + $0x1f8] sm:$0xf] %v961
                  %v963 = vld [vmem:[%s707 + $0x3f8] sm:$0xf]
                  %964 = vst [vmem:[%s708 + $0x1fc] sm:$0xf] %v963
                  %v965 = vld [vmem:[%s707 + $0x400] sm:$0xf]
                  %966 = vst [vmem:[%s708 + $0x200] sm:$0xf] %v965
                  %v967 = vld [vmem:[%s707 + $0x408] sm:$0xf]
                  %968 = vst [vmem:[%s708 + $0x204] sm:$0xf] %v967
                  %v969 = vld [vmem:[%s707 + $0x410] sm:$0xf]
                  %970 = vst [vmem:[%s708 + $0x208] sm:$0xf] %v969
                  %v971 = vld [vmem:[%s707 + $0x418] sm:$0xf]
                  %972 = vst [vmem:[%s708 + $0x20c] sm:$0xf] %v971
                  %v973 = vld [vmem:[%s707 + $0x420] sm:$0xf]
                  %974 = vst [vmem:[%s708 + $0x210] sm:$0xf] %v973
                  %v975 = vld [vmem:[%s707 + $0x428] sm:$0xf]
                  %976 = vst [vmem:[%s708 + $0x214] sm:$0xf] %v975
                  %v977 = vld [vmem:[%s707 + $0x430] sm:$0xf]
                  %978 = vst [vmem:[%s708 + $0x218] sm:$0xf] %v977
                  %v979 = vld [vmem:[%s707 + $0x438] sm:$0xf]
                  %980 = vst [vmem:[%s708 + $0x21c] sm:$0xf] %v979
                  %v981 = vld [vmem:[%s707 + $0x440] sm:$0xf]
                  %982 = vst [vmem:[%s708 + $0x220] sm:$0xf] %v981
                  %v983 = vld [vmem:[%s707 + $0x448] sm:$0xf]
                  %984 = vst [vmem:[%s708 + $0x224] sm:$0xf] %v983
                  %v985 = vld [vmem:[%s707 + $0x450] sm:$0xf]
                  %986 = vst [vmem:[%s708 + $0x228] sm:$0xf] %v985
                  %v987 = vld [vmem:[%s707 + $0x458] sm:$0xf]
                  %988 = vst [vmem:[%s708 + $0x22c] sm:$0xf] %v987
                  %v989 = vld [vmem:[%s707 + $0x460] sm:$0xf]
                  %990 = vst [vmem:[%s708 + $0x230] sm:$0xf] %v989
                  %v991 = vld [vmem:[%s707 + $0x468] sm:$0xf]
                  %992 = vst [vmem:[%s708 + $0x234] sm:$0xf] %v991
                  %v993 = vld [vmem:[%s707 + $0x470] sm:$0xf]
                  %994 = vst [vmem:[%s708 + $0x238] sm:$0xf] %v993
                  %v995 = vld [vmem:[%s707 + $0x478] sm:$0xf]
                  %996 = vst [vmem:[%s708 + $0x23c] sm:$0xf] %v995
                  %v997 = vld [vmem:[%s707 + $0x480] sm:$0xf]
                  %998 = vst [vmem:[%s708 + $0x240] sm:$0xf] %v997
                  %v999 = vld [vmem:[%s707 + $0x488] sm:$0xf]
                  %1000 = vst [vmem:[%s708 + $0x244] sm:$0xf] %v999
                  %v1001 = vld [vmem:[%s707 + $0x490] sm:$0xf]
                  %1002 = vst [vmem:[%s708 + $0x248] sm:$0xf] %v1001
                  %v1003 = vld [vmem:[%s707 + $0x498] sm:$0xf]
                  %1004 = vst [vmem:[%s708 + $0x24c] sm:$0xf] %v1003
                  %v1005 = vld [vmem:[%s707 + $0x4a0] sm:$0xf]
                  %1006 = vst [vmem:[%s708 + $0x250] sm:$0xf] %v1005
                  %v1007 = vld [vmem:[%s707 + $0x4a8] sm:$0xf]
                  %1008 = vst [vmem:[%s708 + $0x254] sm:$0xf] %v1007
                  %v1009 = vld [vmem:[%s707 + $0x4b0] sm:$0xf]
                  %1010 = vst [vmem:[%s708 + $0x258] sm:$0xf] %v1009
                  %v1011 = vld [vmem:[%s707 + $0x4b8] sm:$0xf]
                  %1012 = vst [vmem:[%s708 + $0x25c] sm:$0xf] %v1011
                  %v1013 = vld [vmem:[%s707 + $0x4c0] sm:$0xf]
                  %1014 = vst [vmem:[%s708 + $0x260] sm:$0xf] %v1013
                  %v1015 = vld [vmem:[%s707 + $0x4c8] sm:$0xf]
                  %1016 = vst [vmem:[%s708 + $0x264] sm:$0xf] %v1015
                  %v1017 = vld [vmem:[%s707 + $0x4d0] sm:$0xf]
                  %1018 = vst [vmem:[%s708 + $0x268] sm:$0xf] %v1017
                  %v1019 = vld [vmem:[%s707 + $0x4d8] sm:$0xf]
                  %1020 = vst [vmem:[%s708 + $0x26c] sm:$0xf] %v1019
                  %v1021 = vld [vmem:[%s707 + $0x4e0] sm:$0xf]
                  %1022 = vst [vmem:[%s708 + $0x270] sm:$0xf] %v1021
                  %v1023 = vld [vmem:[%s707 + $0x4e8] sm:$0xf]
                  %1024 = vst [vmem:[%s708 + $0x274] sm:$0xf] %v1023
                  %v1025 = vld [vmem:[%s707 + $0x4f0] sm:$0xf]
                  %1026 = vst [vmem:[%s708 + $0x278] sm:$0xf] %v1025
                  %v1027 = vld [vmem:[%s707 + $0x4f8] sm:$0xf]
                  %1028 = vst [vmem:[%s708 + $0x27c] sm:$0xf] %v1027
                  %v1029 = vld [vmem:[%s707 + $0x500] sm:$0xf]
                  %1030 = vst [vmem:[%s708 + $0x280] sm:$0xf] %v1029
                  %v1031 = vld [vmem:[%s707 + $0x508] sm:$0xf]
                  %1032 = vst [vmem:[%s708 + $0x284] sm:$0xf] %v1031
                  %v1033 = vld [vmem:[%s707 + $0x510] sm:$0xf]
                  %1034 = vst [vmem:[%s708 + $0x288] sm:$0xf] %v1033
                  %v1035 = vld [vmem:[%s707 + $0x518] sm:$0xf]
                  %1036 = vst [vmem:[%s708 + $0x28c] sm:$0xf] %v1035
                  %v1037 = vld [vmem:[%s707 + $0x520] sm:$0xf]
                  %1038 = vst [vmem:[%s708 + $0x290] sm:$0xf] %v1037
                  %v1039 = vld [vmem:[%s707 + $0x528] sm:$0xf]
                  %1040 = vst [vmem:[%s708 + $0x294] sm:$0xf] %v1039
                  %v1041 = vld [vmem:[%s707 + $0x530] sm:$0xf]
                  %1042 = vst [vmem:[%s708 + $0x298] sm:$0xf] %v1041
                  %v1043 = vld [vmem:[%s707 + $0x538] sm:$0xf]
                  %1044 = vst [vmem:[%s708 + $0x29c] sm:$0xf] %v1043
                  %v1045 = vld [vmem:[%s707 + $0x540] sm:$0xf]
                  %1046 = vst [vmem:[%s708 + $0x2a0] sm:$0xf] %v1045
                  %v1047 = vld [vmem:[%s707 + $0x548] sm:$0xf]
                  %1048 = vst [vmem:[%s708 + $0x2a4] sm:$0xf] %v1047
                  %v1049 = vld [vmem:[%s707 + $0x550] sm:$0xf]
                  %1050 = vst [vmem:[%s708 + $0x2a8] sm:$0xf] %v1049
                  %v1051 = vld [vmem:[%s707 + $0x558] sm:$0xf]
                  %1052 = vst [vmem:[%s708 + $0x2ac] sm:$0xf] %v1051
                  %v1053 = vld [vmem:[%s707 + $0x560] sm:$0xf]
                  %1054 = vst [vmem:[%s708 + $0x2b0] sm:$0xf] %v1053
                  %v1055 = vld [vmem:[%s707 + $0x568] sm:$0xf]
                  %1056 = vst [vmem:[%s708 + $0x2b4] sm:$0xf] %v1055
                  %v1057 = vld [vmem:[%s707 + $0x570] sm:$0xf]
                  %1058 = vst [vmem:[%s708 + $0x2b8] sm:$0xf] %v1057
                  %v1059 = vld [vmem:[%s707 + $0x578] sm:$0xf]
                  %1060 = vst [vmem:[%s708 + $0x2bc] sm:$0xf] %v1059
                  %v1061 = vld [vmem:[%s707 + $0x580] sm:$0xf]
                  %1062 = vst [vmem:[%s708 + $0x2c0] sm:$0xf] %v1061
                  %v1063 = vld [vmem:[%s707 + $0x588] sm:$0xf]
                  %1064 = vst [vmem:[%s708 + $0x2c4] sm:$0xf] %v1063
                  %v1065 = vld [vmem:[%s707 + $0x590] sm:$0xf]
                  %1066 = vst [vmem:[%s708 + $0x2c8] sm:$0xf] %v1065
                  %v1067 = vld [vmem:[%s707 + $0x598] sm:$0xf]
                  %1068 = vst [vmem:[%s708 + $0x2cc] sm:$0xf] %v1067
                  %v1069 = vld [vmem:[%s707 + $0x5a0] sm:$0xf]
                  %1070 = vst [vmem:[%s708 + $0x2d0] sm:$0xf] %v1069
                  %v1071 = vld [vmem:[%s707 + $0x5a8] sm:$0xf]
                  %1072 = vst [vmem:[%s708 + $0x2d4] sm:$0xf] %v1071
                  %v1073 = vld [vmem:[%s707 + $0x5b0] sm:$0xf]
                  %1074 = vst [vmem:[%s708 + $0x2d8] sm:$0xf] %v1073
                  %v1075 = vld [vmem:[%s707 + $0x5b8] sm:$0xf]
                  %1076 = vst [vmem:[%s708 + $0x2dc] sm:$0xf] %v1075
                  %v1077 = vld [vmem:[%s707 + $0x5c0] sm:$0xf]
                  %1078 = vst [vmem:[%s708 + $0x2e0] sm:$0xf] %v1077
                  %v1079 = vld [vmem:[%s707 + $0x5c8] sm:$0xf]
                  %1080 = vst [vmem:[%s708 + $0x2e4] sm:$0xf] %v1079
                  %v1081 = vld [vmem:[%s707 + $0x5d0] sm:$0xf]
                  %1082 = vst [vmem:[%s708 + $0x2e8] sm:$0xf] %v1081
                  %v1083 = vld [vmem:[%s707 + $0x5d8] sm:$0xf]
                  %1084 = vst [vmem:[%s708 + $0x2ec] sm:$0xf] %v1083
                  %v1085 = vld [vmem:[%s707 + $0x5e0] sm:$0xf]
                  %1086 = vst [vmem:[%s708 + $0x2f0] sm:$0xf] %v1085
                  %v1087 = vld [vmem:[%s707 + $0x5e8] sm:$0xf]
                  %1088 = vst [vmem:[%s708 + $0x2f4] sm:$0xf] %v1087
                  %v1089 = vld [vmem:[%s707 + $0x5f0] sm:$0xf]
                  %1090 = vst [vmem:[%s708 + $0x2f8] sm:$0xf] %v1089
                  %v1091 = vld [vmem:[%s707 + $0x5f8] sm:$0xf]
                  %1092 = vst [vmem:[%s708 + $0x2fc] sm:$0xf] %v1091
                  %v1093 = vld [vmem:[%s707 + $0x600] sm:$0xf]
                  %1094 = vst [vmem:[%s708 + $0x300] sm:$0xf] %v1093
                  %v1095 = vld [vmem:[%s707 + $0x608] sm:$0xf]
                  %1096 = vst [vmem:[%s708 + $0x304] sm:$0xf] %v1095
                  %v1097 = vld [vmem:[%s707 + $0x610] sm:$0xf]
                  %1098 = vst [vmem:[%s708 + $0x308] sm:$0xf] %v1097
                  %v1099 = vld [vmem:[%s707 + $0x618] sm:$0xf]
                  %1100 = vst [vmem:[%s708 + $0x30c] sm:$0xf] %v1099
                  %v1101 = vld [vmem:[%s707 + $0x620] sm:$0xf]
                  %1102 = vst [vmem:[%s708 + $0x310] sm:$0xf] %v1101
                  %v1103 = vld [vmem:[%s707 + $0x628] sm:$0xf]
                  %1104 = vst [vmem:[%s708 + $0x314] sm:$0xf] %v1103
                  %v1105 = vld [vmem:[%s707 + $0x630] sm:$0xf]
                  %1106 = vst [vmem:[%s708 + $0x318] sm:$0xf] %v1105
                  %v1107 = vld [vmem:[%s707 + $0x638] sm:$0xf]
                  %1108 = vst [vmem:[%s708 + $0x31c] sm:$0xf] %v1107
                  %v1109 = vld [vmem:[%s707 + $0x640] sm:$0xf]
                  %1110 = vst [vmem:[%s708 + $0x320] sm:$0xf] %v1109
                  %v1111 = vld [vmem:[%s707 + $0x648] sm:$0xf]
                  %1112 = vst [vmem:[%s708 + $0x324] sm:$0xf] %v1111
                  %v1113 = vld [vmem:[%s707 + $0x650] sm:$0xf]
                  %1114 = vst [vmem:[%s708 + $0x328] sm:$0xf] %v1113
                  %v1115 = vld [vmem:[%s707 + $0x658] sm:$0xf]
                  %1116 = vst [vmem:[%s708 + $0x32c] sm:$0xf] %v1115
                  %v1117 = vld [vmem:[%s707 + $0x660] sm:$0xf]
                  %1118 = vst [vmem:[%s708 + $0x330] sm:$0xf] %v1117
                  %v1119 = vld [vmem:[%s707 + $0x668] sm:$0xf]
                  %1120 = vst [vmem:[%s708 + $0x334] sm:$0xf] %v1119
                  %v1121 = vld [vmem:[%s707 + $0x670] sm:$0xf]
                  %1122 = vst [vmem:[%s708 + $0x338] sm:$0xf] %v1121
                  %v1123 = vld [vmem:[%s707 + $0x678] sm:$0xf]
                  %1124 = vst [vmem:[%s708 + $0x33c] sm:$0xf] %v1123
                  %v1125 = vld [vmem:[%s707 + $0x680] sm:$0xf]
                  %1126 = vst [vmem:[%s708 + $0x340] sm:$0xf] %v1125
                  %v1127 = vld [vmem:[%s707 + $0x688] sm:$0xf]
                  %1128 = vst [vmem:[%s708 + $0x344] sm:$0xf] %v1127
                  %v1129 = vld [vmem:[%s707 + $0x690] sm:$0xf]
                  %1130 = vst [vmem:[%s708 + $0x348] sm:$0xf] %v1129
                  %v1131 = vld [vmem:[%s707 + $0x698] sm:$0xf]
                  %1132 = vst [vmem:[%s708 + $0x34c] sm:$0xf] %v1131
                  %v1133 = vld [vmem:[%s707 + $0x6a0] sm:$0xf]
                  %1134 = vst [vmem:[%s708 + $0x350] sm:$0xf] %v1133
                  %v1135 = vld [vmem:[%s707 + $0x6a8] sm:$0xf]
                  %1136 = vst [vmem:[%s708 + $0x354] sm:$0xf] %v1135
                  %v1137 = vld [vmem:[%s707 + $0x6b0] sm:$0xf]
                  %1138 = vst [vmem:[%s708 + $0x358] sm:$0xf] %v1137
                  %v1139 = vld [vmem:[%s707 + $0x6b8] sm:$0xf]
                  %1140 = vst [vmem:[%s708 + $0x35c] sm:$0xf] %v1139
                  %v1141 = vld [vmem:[%s707 + $0x6c0] sm:$0xf]
                  %1142 = vst [vmem:[%s708 + $0x360] sm:$0xf] %v1141
                  %v1143 = vld [vmem:[%s707 + $0x6c8] sm:$0xf]
                  %1144 = vst [vmem:[%s708 + $0x364] sm:$0xf] %v1143
                  %v1145 = vld [vmem:[%s707 + $0x6d0] sm:$0xf]
                  %1146 = vst [vmem:[%s708 + $0x368] sm:$0xf] %v1145
                  %v1147 = vld [vmem:[%s707 + $0x6d8] sm:$0xf]
                  %1148 = vst [vmem:[%s708 + $0x36c] sm:$0xf] %v1147
                  %v1149 = vld [vmem:[%s707 + $0x6e0] sm:$0xf]
                  %1150 = vst [vmem:[%s708 + $0x370] sm:$0xf] %v1149
                  %v1151 = vld [vmem:[%s707 + $0x6e8] sm:$0xf]
                  %1152 = vst [vmem:[%s708 + $0x374] sm:$0xf] %v1151
                  %v1153 = vld [vmem:[%s707 + $0x6f0] sm:$0xf]
                  %1154 = vst [vmem:[%s708 + $0x378] sm:$0xf] %v1153
                  %v1155 = vld [vmem:[%s707 + $0x6f8] sm:$0xf]
                  %1156 = vst [vmem:[%s708 + $0x37c] sm:$0xf] %v1155
                  %v1157 = vld [vmem:[%s707 + $0x700] sm:$0xf]
                  %1158 = vst [vmem:[%s708 + $0x380] sm:$0xf] %v1157
                  %v1159 = vld [vmem:[%s707 + $0x708] sm:$0xf]
                  %1160 = vst [vmem:[%s708 + $0x384] sm:$0xf] %v1159
                  %v1161 = vld [vmem:[%s707 + $0x710] sm:$0xf]
                  %1162 = vst [vmem:[%s708 + $0x388] sm:$0xf] %v1161
                  %v1163 = vld [vmem:[%s707 + $0x718] sm:$0xf]
                  %1164 = vst [vmem:[%s708 + $0x38c] sm:$0xf] %v1163
                  %v1165 = vld [vmem:[%s707 + $0x720] sm:$0xf]
                  %1166 = vst [vmem:[%s708 + $0x390] sm:$0xf] %v1165
                  %v1167 = vld [vmem:[%s707 + $0x728] sm:$0xf]
                  %1168 = vst [vmem:[%s708 + $0x394] sm:$0xf] %v1167
                  %v1169 = vld [vmem:[%s707 + $0x730] sm:$0xf]
                  %1170 = vst [vmem:[%s708 + $0x398] sm:$0xf] %v1169
                  %v1171 = vld [vmem:[%s707 + $0x738] sm:$0xf]
                  %1172 = vst [vmem:[%s708 + $0x39c] sm:$0xf] %v1171
                  %v1173 = vld [vmem:[%s707 + $0x740] sm:$0xf]
                  %1174 = vst [vmem:[%s708 + $0x3a0] sm:$0xf] %v1173
                  %v1175 = vld [vmem:[%s707 + $0x748] sm:$0xf]
                  %1176 = vst [vmem:[%s708 + $0x3a4] sm:$0xf] %v1175
                  %v1177 = vld [vmem:[%s707 + $0x750] sm:$0xf]
                  %1178 = vst [vmem:[%s708 + $0x3a8] sm:$0xf] %v1177
                  %v1179 = vld [vmem:[%s707 + $0x758] sm:$0xf]
                  %1180 = vst [vmem:[%s708 + $0x3ac] sm:$0xf] %v1179
                  %v1181 = vld [vmem:[%s707 + $0x760] sm:$0xf]
                  %1182 = vst [vmem:[%s708 + $0x3b0] sm:$0xf] %v1181
                  %v1183 = vld [vmem:[%s707 + $0x768] sm:$0xf]
                  %1184 = vst [vmem:[%s708 + $0x3b4] sm:$0xf] %v1183
                  %v1185 = vld [vmem:[%s707 + $0x770] sm:$0xf]
                  %1186 = vst [vmem:[%s708 + $0x3b8] sm:$0xf] %v1185
                  %v1187 = vld [vmem:[%s707 + $0x778] sm:$0xf]
                  %1188 = vst [vmem:[%s708 + $0x3bc] sm:$0xf] %v1187
                  %v1189 = vld [vmem:[%s707 + $0x780] sm:$0xf]
                  %1190 = vst [vmem:[%s708 + $0x3c0] sm:$0xf] %v1189
                  %v1191 = vld [vmem:[%s707 + $0x788] sm:$0xf]
                  %1192 = vst [vmem:[%s708 + $0x3c4] sm:$0xf] %v1191
                  %v1193 = vld [vmem:[%s707 + $0x790] sm:$0xf]
                  %1194 = vst [vmem:[%s708 + $0x3c8] sm:$0xf] %v1193
                  %v1195 = vld [vmem:[%s707 + $0x798] sm:$0xf]
                  %1196 = vst [vmem:[%s708 + $0x3cc] sm:$0xf] %v1195
                  %v1197 = vld [vmem:[%s707 + $0x7a0] sm:$0xf]
                  %1198 = vst [vmem:[%s708 + $0x3d0] sm:$0xf] %v1197
                  %v1199 = vld [vmem:[%s707 + $0x7a8] sm:$0xf]
                  %1200 = vst [vmem:[%s708 + $0x3d4] sm:$0xf] %v1199
                  %v1201 = vld [vmem:[%s707 + $0x7b0] sm:$0xf]
                  %1202 = vst [vmem:[%s708 + $0x3d8] sm:$0xf] %v1201
                  %v1203 = vld [vmem:[%s707 + $0x7b8] sm:$0xf]
                  %1204 = vst [vmem:[%s708 + $0x3dc] sm:$0xf] %v1203
                  %v1205 = vld [vmem:[%s707 + $0x7c0] sm:$0xf]
                  %1206 = vst [vmem:[%s708 + $0x3e0] sm:$0xf] %v1205
                  %v1207 = vld [vmem:[%s707 + $0x7c8] sm:$0xf]
                  %1208 = vst [vmem:[%s708 + $0x3e4] sm:$0xf] %v1207
                  %v1209 = vld [vmem:[%s707 + $0x7d0] sm:$0xf]
                  %1210 = vst [vmem:[%s708 + $0x3e8] sm:$0xf] %v1209
                  %v1211 = vld [vmem:[%s707 + $0x7d8] sm:$0xf]
                  %1212 = vst [vmem:[%s708 + $0x3ec] sm:$0xf] %v1211
                  %v1213 = vld [vmem:[%s707 + $0x7e0] sm:$0xf]
                  %1214 = vst [vmem:[%s708 + $0x3f0] sm:$0xf] %v1213
                  %v1215 = vld [vmem:[%s707 + $0x7e8] sm:$0xf]
                  %1216 = vst [vmem:[%s708 + $0x3f4] sm:$0xf] %v1215
                  %v1217 = vld [vmem:[%s707 + $0x7f0] sm:$0xf]
                  %1218 = vst [vmem:[%s708 + $0x3f8] sm:$0xf] %v1217
                  %v1219 = vld [vmem:[%s707 + $0x7f8] sm:$0xf]
                  %1220 = vst [vmem:[%s708 + $0x3fc] sm:$0xf] %v1219
                $region59: #{model_image_scratch_forward.8} parent=46 // loop_footer
                  %s706 = sadd.s32 1, %s702
                $region60: #{model_image_scratch_forward.8} parent=46 // loop_footer_branch
                  %701 = sbr.rel target = $region56
                $region61: #{model_image_scratch_forward.8} parent=46 // loop_exit
                  _
              $region47: #{model_image_scratch_forward.8} parent=31 // pred_fallthru
                _
            $region32: #{model_image_scratch_forward.8} parent=27 // pred_fallthru
              _
            // Predicated region
            $region33: #{model_image_scratch_forward.8} parent=27 // pred_check
              _
            $region34: #{model_image_scratch_forward.8} parent=27 // pred_check_branch
              %168 = sbr.rel (0) target = $region36
            $region35: #{model_image_scratch_forward.8} parent=27 // pred_region
              loop: start=0, step=1, limit=1
              $region37: #{model_image_scratch_forward.8} parent=35 // loop_pre_header
                _
              $region38: #{model_image_scratch_forward.8} parent=35 // loop_header
                %s171 = sphi 0, %s175
                %p172 = scmp.ge.s32.totalorder %s171, 1
                %s176 = sphi %s162, %s162
                %s177 = sphi %s160, %s160
              $region39: #{model_image_scratch_forward.8} parent=35 // loop_header_branch
                %174 = sbr.rel (%p172) target = $region43
              $region40: #{model_image_scratch_forward.8} parent=35 // loop_body
                %v178 = vld [vmem:[%s176] sm:$0xf]
                %179 = vst [vmem:[%s177] sm:$0xf] %v178
                %v180 = vld [vmem:[%s176 + $0x8] sm:$0xf]
                %181 = vst [vmem:[%s177 + $0x4] sm:$0xf] %v180
                %v182 = vld [vmem:[%s176 + $0x10] sm:$0xf]
                %183 = vst [vmem:[%s177 + $0x8] sm:$0xf] %v182
                %v184 = vld [vmem:[%s176 + $0x18] sm:$0xf]
                %185 = vst [vmem:[%s177 + $0xc] sm:$0xf] %v184
                %v186 = vld [vmem:[%s176 + $0x20] sm:$0xf]
                %187 = vst [vmem:[%s177 + $0x10] sm:$0xf] %v186
                %v188 = vld [vmem:[%s176 + $0x28] sm:$0xf]
                %189 = vst [vmem:[%s177 + $0x14] sm:$0xf] %v188
                %v190 = vld [vmem:[%s176 + $0x30] sm:$0xf]
                %191 = vst [vmem:[%s177 + $0x18] sm:$0xf] %v190
                %v192 = vld [vmem:[%s176 + $0x38] sm:$0xf]
                %193 = vst [vmem:[%s177 + $0x1c] sm:$0xf] %v192
                %v194 = vld [vmem:[%s176 + $0x40] sm:$0xf]
                %195 = vst [vmem:[%s177 + $0x20] sm:$0xf] %v194
                %v196 = vld [vmem:[%s176 + $0x48] sm:$0xf]
                %197 = vst [vmem:[%s177 + $0x24] sm:$0xf] %v196
                %v198 = vld [vmem:[%s176 + $0x50] sm:$0xf]
                %199 = vst [vmem:[%s177 + $0x28] sm:$0xf] %v198
                %v200 = vld [vmem:[%s176 + $0x58] sm:$0xf]
                %201 = vst [vmem:[%s177 + $0x2c] sm:$0xf] %v200
                %v202 = vld [vmem:[%s176 + $0x60] sm:$0xf]
                %203 = vst [vmem:[%s177 + $0x30] sm:$0xf] %v202
                %v204 = vld [vmem:[%s176 + $0x68] sm:$0xf]
                %205 = vst [vmem:[%s177 + $0x34] sm:$0xf] %v204
                %v206 = vld [vmem:[%s176 + $0x70] sm:$0xf]
                %207 = vst [vmem:[%s177 + $0x38] sm:$0xf] %v206
                %v208 = vld [vmem:[%s176 + $0x78] sm:$0xf]
                %209 = vst [vmem:[%s177 + $0x3c] sm:$0xf] %v208
                %v210 = vld [vmem:[%s176 + $0x80] sm:$0xf]
                %211 = vst [vmem:[%s177 + $0x40] sm:$0xf] %v210
                %v212 = vld [vmem:[%s176 + $0x88] sm:$0xf]
                %213 = vst [vmem:[%s177 + $0x44] sm:$0xf] %v212
                %v214 = vld [vmem:[%s176 + $0x90] sm:$0xf]
                %215 = vst [vmem:[%s177 + $0x48] sm:$0xf] %v214
                %v216 = vld [vmem:[%s176 + $0x98] sm:$0xf]
                %217 = vst [vmem:[%s177 + $0x4c] sm:$0xf] %v216
                %v218 = vld [vmem:[%s176 + $0xa0] sm:$0xf]
                %219 = vst [vmem:[%s177 + $0x50] sm:$0xf] %v218
                %v220 = vld [vmem:[%s176 + $0xa8] sm:$0xf]
                %221 = vst [vmem:[%s177 + $0x54] sm:$0xf] %v220
                %v222 = vld [vmem:[%s176 + $0xb0] sm:$0xf]
                %223 = vst [vmem:[%s177 + $0x58] sm:$0xf] %v222
                %v224 = vld [vmem:[%s176 + $0xb8] sm:$0xf]
                %225 = vst [vmem:[%s177 + $0x5c] sm:$0xf] %v224
                %v226 = vld [vmem:[%s176 + $0xc0] sm:$0xf]
                %227 = vst [vmem:[%s177 + $0x60] sm:$0xf] %v226
                %v228 = vld [vmem:[%s176 + $0xc8] sm:$0xf]
                %229 = vst [vmem:[%s177 + $0x64] sm:$0xf] %v228
                %v230 = vld [vmem:[%s176 + $0xd0] sm:$0xf]
                %231 = vst [vmem:[%s177 + $0x68] sm:$0xf] %v230
                %v232 = vld [vmem:[%s176 + $0xd8] sm:$0xf]
                %233 = vst [vmem:[%s177 + $0x6c] sm:$0xf] %v232
                %v234 = vld [vmem:[%s176 + $0xe0] sm:$0xf]
                %235 = vst [vmem:[%s177 + $0x70] sm:$0xf] %v234
                %v236 = vld [vmem:[%s176 + $0xe8] sm:$0xf]
                %237 = vst [vmem:[%s177 + $0x74] sm:$0xf] %v236
                %v238 = vld [vmem:[%s176 + $0xf0] sm:$0xf]
                %239 = vst [vmem:[%s177 + $0x78] sm:$0xf] %v238
                %v240 = vld [vmem:[%s176 + $0xf8] sm:$0xf]
                %241 = vst [vmem:[%s177 + $0x7c] sm:$0xf] %v240
                %v242 = vld [vmem:[%s176 + $0x100] sm:$0xf]
                %243 = vst [vmem:[%s177 + $0x80] sm:$0xf] %v242
                %v244 = vld [vmem:[%s176 + $0x108] sm:$0xf]
                %245 = vst [vmem:[%s177 + $0x84] sm:$0xf] %v244
                %v246 = vld [vmem:[%s176 + $0x110] sm:$0xf]
                %247 = vst [vmem:[%s177 + $0x88] sm:$0xf] %v246
                %v248 = vld [vmem:[%s176 + $0x118] sm:$0xf]
                %249 = vst [vmem:[%s177 + $0x8c] sm:$0xf] %v248
                %v250 = vld [vmem:[%s176 + $0x120] sm:$0xf]
                %251 = vst [vmem:[%s177 + $0x90] sm:$0xf] %v250
                %v252 = vld [vmem:[%s176 + $0x128] sm:$0xf]
                %253 = vst [vmem:[%s177 + $0x94] sm:$0xf] %v252
                %v254 = vld [vmem:[%s176 + $0x130] sm:$0xf]
                %255 = vst [vmem:[%s177 + $0x98] sm:$0xf] %v254
                %v256 = vld [vmem:[%s176 + $0x138] sm:$0xf]
                %257 = vst [vmem:[%s177 + $0x9c] sm:$0xf] %v256
                %v258 = vld [vmem:[%s176 + $0x140] sm:$0xf]
                %259 = vst [vmem:[%s177 + $0xa0] sm:$0xf] %v258
                %v260 = vld [vmem:[%s176 + $0x148] sm:$0xf]
                %261 = vst [vmem:[%s177 + $0xa4] sm:$0xf] %v260
                %v262 = vld [vmem:[%s176 + $0x150] sm:$0xf]
                %263 = vst [vmem:[%s177 + $0xa8] sm:$0xf] %v262
                %v264 = vld [vmem:[%s176 + $0x158] sm:$0xf]
                %265 = vst [vmem:[%s177 + $0xac] sm:$0xf] %v264
                %v266 = vld [vmem:[%s176 + $0x160] sm:$0xf]
                %267 = vst [vmem:[%s177 + $0xb0] sm:$0xf] %v266
                %v268 = vld [vmem:[%s176 + $0x168] sm:$0xf]
                %269 = vst [vmem:[%s177 + $0xb4] sm:$0xf] %v268
                %v270 = vld [vmem:[%s176 + $0x170] sm:$0xf]
                %271 = vst [vmem:[%s177 + $0xb8] sm:$0xf] %v270
                %v272 = vld [vmem:[%s176 + $0x178] sm:$0xf]
                %273 = vst [vmem:[%s177 + $0xbc] sm:$0xf] %v272
                %v274 = vld [vmem:[%s176 + $0x180] sm:$0xf]
                %275 = vst [vmem:[%s177 + $0xc0] sm:$0xf] %v274
                %v276 = vld [vmem:[%s176 + $0x188] sm:$0xf]
                %277 = vst [vmem:[%s177 + $0xc4] sm:$0xf] %v276
                %v278 = vld [vmem:[%s176 + $0x190] sm:$0xf]
                %279 = vst [vmem:[%s177 + $0xc8] sm:$0xf] %v278
                %v280 = vld [vmem:[%s176 + $0x198] sm:$0xf]
                %281 = vst [vmem:[%s177 + $0xcc] sm:$0xf] %v280
                %v282 = vld [vmem:[%s176 + $0x1a0] sm:$0xf]
                %283 = vst [vmem:[%s177 + $0xd0] sm:$0xf] %v282
                %v284 = vld [vmem:[%s176 + $0x1a8] sm:$0xf]
                %285 = vst [vmem:[%s177 + $0xd4] sm:$0xf] %v284
                %v286 = vld [vmem:[%s176 + $0x1b0] sm:$0xf]
                %287 = vst [vmem:[%s177 + $0xd8] sm:$0xf] %v286
                %v288 = vld [vmem:[%s176 + $0x1b8] sm:$0xf]
                %289 = vst [vmem:[%s177 + $0xdc] sm:$0xf] %v288
                %v290 = vld [vmem:[%s176 + $0x1c0] sm:$0xf]
                %291 = vst [vmem:[%s177 + $0xe0] sm:$0xf] %v290
                %v292 = vld [vmem:[%s176 + $0x1c8] sm:$0xf]
                %293 = vst [vmem:[%s177 + $0xe4] sm:$0xf] %v292
                %v294 = vld [vmem:[%s176 + $0x1d0] sm:$0xf]
                %295 = vst [vmem:[%s177 + $0xe8] sm:$0xf] %v294
                %v296 = vld [vmem:[%s176 + $0x1d8] sm:$0xf]
                %297 = vst [vmem:[%s177 + $0xec] sm:$0xf] %v296
                %v298 = vld [vmem:[%s176 + $0x1e0] sm:$0xf]
                %299 = vst [vmem:[%s177 + $0xf0] sm:$0xf] %v298
                %v300 = vld [vmem:[%s176 + $0x1e8] sm:$0xf]
                %301 = vst [vmem:[%s177 + $0xf4] sm:$0xf] %v300
                %v302 = vld [vmem:[%s176 + $0x1f0] sm:$0xf]
                %303 = vst [vmem:[%s177 + $0xf8] sm:$0xf] %v302
                %v304 = vld [vmem:[%s176 + $0x1f8] sm:$0xf]
                %305 = vst [vmem:[%s177 + $0xfc] sm:$0xf] %v304
                %v306 = vld [vmem:[%s176 + $0x200] sm:$0xf]
                %307 = vst [vmem:[%s177 + $0x100] sm:$0xf] %v306
                %v308 = vld [vmem:[%s176 + $0x208] sm:$0xf]
                %309 = vst [vmem:[%s177 + $0x104] sm:$0xf] %v308
                %v310 = vld [vmem:[%s176 + $0x210] sm:$0xf]
                %311 = vst [vmem:[%s177 + $0x108] sm:$0xf] %v310
                %v312 = vld [vmem:[%s176 + $0x218] sm:$0xf]
                %313 = vst [vmem:[%s177 + $0x10c] sm:$0xf] %v312
                %v314 = vld [vmem:[%s176 + $0x220] sm:$0xf]
                %315 = vst [vmem:[%s177 + $0x110] sm:$0xf] %v314
                %v316 = vld [vmem:[%s176 + $0x228] sm:$0xf]
                %317 = vst [vmem:[%s177 + $0x114] sm:$0xf] %v316
                %v318 = vld [vmem:[%s176 + $0x230] sm:$0xf]
                %319 = vst [vmem:[%s177 + $0x118] sm:$0xf] %v318
                %v320 = vld [vmem:[%s176 + $0x238] sm:$0xf]
                %321 = vst [vmem:[%s177 + $0x11c] sm:$0xf] %v320
                %v322 = vld [vmem:[%s176 + $0x240] sm:$0xf]
                %323 = vst [vmem:[%s177 + $0x120] sm:$0xf] %v322
                %v324 = vld [vmem:[%s176 + $0x248] sm:$0xf]
                %325 = vst [vmem:[%s177 + $0x124] sm:$0xf] %v324
                %v326 = vld [vmem:[%s176 + $0x250] sm:$0xf]
                %327 = vst [vmem:[%s177 + $0x128] sm:$0xf] %v326
                %v328 = vld [vmem:[%s176 + $0x258] sm:$0xf]
                %329 = vst [vmem:[%s177 + $0x12c] sm:$0xf] %v328
                %v330 = vld [vmem:[%s176 + $0x260] sm:$0xf]
                %331 = vst [vmem:[%s177 + $0x130] sm:$0xf] %v330
                %v332 = vld [vmem:[%s176 + $0x268] sm:$0xf]
                %333 = vst [vmem:[%s177 + $0x134] sm:$0xf] %v332
                %v334 = vld [vmem:[%s176 + $0x270] sm:$0xf]
                %335 = vst [vmem:[%s177 + $0x138] sm:$0xf] %v334
                %v336 = vld [vmem:[%s176 + $0x278] sm:$0xf]
                %337 = vst [vmem:[%s177 + $0x13c] sm:$0xf] %v336
                %v338 = vld [vmem:[%s176 + $0x280] sm:$0xf]
                %339 = vst [vmem:[%s177 + $0x140] sm:$0xf] %v338
                %v340 = vld [vmem:[%s176 + $0x288] sm:$0xf]
                %341 = vst [vmem:[%s177 + $0x144] sm:$0xf] %v340
                %v342 = vld [vmem:[%s176 + $0x290] sm:$0xf]
                %343 = vst [vmem:[%s177 + $0x148] sm:$0xf] %v342
                %v344 = vld [vmem:[%s176 + $0x298] sm:$0xf]
                %345 = vst [vmem:[%s177 + $0x14c] sm:$0xf] %v344
                %v346 = vld [vmem:[%s176 + $0x2a0] sm:$0xf]
                %347 = vst [vmem:[%s177 + $0x150] sm:$0xf] %v346
                %v348 = vld [vmem:[%s176 + $0x2a8] sm:$0xf]
                %349 = vst [vmem:[%s177 + $0x154] sm:$0xf] %v348
                %v350 = vld [vmem:[%s176 + $0x2b0] sm:$0xf]
                %351 = vst [vmem:[%s177 + $0x158] sm:$0xf] %v350
                %v352 = vld [vmem:[%s176 + $0x2b8] sm:$0xf]
                %353 = vst [vmem:[%s177 + $0x15c] sm:$0xf] %v352
                %v354 = vld [vmem:[%s176 + $0x2c0] sm:$0xf]
                %355 = vst [vmem:[%s177 + $0x160] sm:$0xf] %v354
                %v356 = vld [vmem:[%s176 + $0x2c8] sm:$0xf]
                %357 = vst [vmem:[%s177 + $0x164] sm:$0xf] %v356
                %v358 = vld [vmem:[%s176 + $0x2d0] sm:$0xf]
                %359 = vst [vmem:[%s177 + $0x168] sm:$0xf] %v358
                %v360 = vld [vmem:[%s176 + $0x2d8] sm:$0xf]
                %361 = vst [vmem:[%s177 + $0x16c] sm:$0xf] %v360
                %v362 = vld [vmem:[%s176 + $0x2e0] sm:$0xf]
                %363 = vst [vmem:[%s177 + $0x170] sm:$0xf] %v362
                %v364 = vld [vmem:[%s176 + $0x2e8] sm:$0xf]
                %365 = vst [vmem:[%s177 + $0x174] sm:$0xf] %v364
                %v366 = vld [vmem:[%s176 + $0x2f0] sm:$0xf]
                %367 = vst [vmem:[%s177 + $0x178] sm:$0xf] %v366
                %v368 = vld [vmem:[%s176 + $0x2f8] sm:$0xf]
                %369 = vst [vmem:[%s177 + $0x17c] sm:$0xf] %v368
                %v370 = vld [vmem:[%s176 + $0x300] sm:$0xf]
                %371 = vst [vmem:[%s177 + $0x180] sm:$0xf] %v370
                %v372 = vld [vmem:[%s176 + $0x308] sm:$0xf]
                %373 = vst [vmem:[%s177 + $0x184] sm:$0xf] %v372
                %v374 = vld [vmem:[%s176 + $0x310] sm:$0xf]
                %375 = vst [vmem:[%s177 + $0x188] sm:$0xf] %v374
                %v376 = vld [vmem:[%s176 + $0x318] sm:$0xf]
                %377 = vst [vmem:[%s177 + $0x18c] sm:$0xf] %v376
                %v378 = vld [vmem:[%s176 + $0x320] sm:$0xf]
                %379 = vst [vmem:[%s177 + $0x190] sm:$0xf] %v378
                %v380 = vld [vmem:[%s176 + $0x328] sm:$0xf]
                %381 = vst [vmem:[%s177 + $0x194] sm:$0xf] %v380
                %v382 = vld [vmem:[%s176 + $0x330] sm:$0xf]
                %383 = vst [vmem:[%s177 + $0x198] sm:$0xf] %v382
                %v384 = vld [vmem:[%s176 + $0x338] sm:$0xf]
                %385 = vst [vmem:[%s177 + $0x19c] sm:$0xf] %v384
                %v386 = vld [vmem:[%s176 + $0x340] sm:$0xf]
                %387 = vst [vmem:[%s177 + $0x1a0] sm:$0xf] %v386
                %v388 = vld [vmem:[%s176 + $0x348] sm:$0xf]
                %389 = vst [vmem:[%s177 + $0x1a4] sm:$0xf] %v388
                %v390 = vld [vmem:[%s176 + $0x350] sm:$0xf]
                %391 = vst [vmem:[%s177 + $0x1a8] sm:$0xf] %v390
                %v392 = vld [vmem:[%s176 + $0x358] sm:$0xf]
                %393 = vst [vmem:[%s177 + $0x1ac] sm:$0xf] %v392
                %v394 = vld [vmem:[%s176 + $0x360] sm:$0xf]
                %395 = vst [vmem:[%s177 + $0x1b0] sm:$0xf] %v394
                %v396 = vld [vmem:[%s176 + $0x368] sm:$0xf]
                %397 = vst [vmem:[%s177 + $0x1b4] sm:$0xf] %v396
                %v398 = vld [vmem:[%s176 + $0x370] sm:$0xf]
                %399 = vst [vmem:[%s177 + $0x1b8] sm:$0xf] %v398
                %v400 = vld [vmem:[%s176 + $0x378] sm:$0xf]
                %401 = vst [vmem:[%s177 + $0x1bc] sm:$0xf] %v400
                %v402 = vld [vmem:[%s176 + $0x380] sm:$0xf]
                %403 = vst [vmem:[%s177 + $0x1c0] sm:$0xf] %v402
                %v404 = vld [vmem:[%s176 + $0x388] sm:$0xf]
                %405 = vst [vmem:[%s177 + $0x1c4] sm:$0xf] %v404
                %v406 = vld [vmem:[%s176 + $0x390] sm:$0xf]
                %407 = vst [vmem:[%s177 + $0x1c8] sm:$0xf] %v406
                %v408 = vld [vmem:[%s176 + $0x398] sm:$0xf]
                %409 = vst [vmem:[%s177 + $0x1cc] sm:$0xf] %v408
                %v410 = vld [vmem:[%s176 + $0x3a0] sm:$0xf]
                %411 = vst [vmem:[%s177 + $0x1d0] sm:$0xf] %v410
                %v412 = vld [vmem:[%s176 + $0x3a8] sm:$0xf]
                %413 = vst [vmem:[%s177 + $0x1d4] sm:$0xf] %v412
                %v414 = vld [vmem:[%s176 + $0x3b0] sm:$0xf]
                %415 = vst [vmem:[%s177 + $0x1d8] sm:$0xf] %v414
                %v416 = vld [vmem:[%s176 + $0x3b8] sm:$0xf]
                %417 = vst [vmem:[%s177 + $0x1dc] sm:$0xf] %v416
                %v418 = vld [vmem:[%s176 + $0x3c0] sm:$0xf]
                %419 = vst [vmem:[%s177 + $0x1e0] sm:$0xf] %v418
                %v420 = vld [vmem:[%s176 + $0x3c8] sm:$0xf]
                %421 = vst [vmem:[%s177 + $0x1e4] sm:$0xf] %v420
                %v422 = vld [vmem:[%s176 + $0x3d0] sm:$0xf]
                %423 = vst [vmem:[%s177 + $0x1e8] sm:$0xf] %v422
                %v424 = vld [vmem:[%s176 + $0x3d8] sm:$0xf]
                %425 = vst [vmem:[%s177 + $0x1ec] sm:$0xf] %v424
                %v426 = vld [vmem:[%s176 + $0x3e0] sm:$0xf]
                %427 = vst [vmem:[%s177 + $0x1f0] sm:$0xf] %v426
                %v428 = vld [vmem:[%s176 + $0x3e8] sm:$0xf]
                %429 = vst [vmem:[%s177 + $0x1f4] sm:$0xf] %v428
                %v430 = vld [vmem:[%s176 + $0x3f0] sm:$0xf]
                %431 = vst [vmem:[%s177 + $0x1f8] sm:$0xf] %v430
                %v432 = vld [vmem:[%s176 + $0x3f8] sm:$0xf]
                %433 = vst [vmem:[%s177 + $0x1fc] sm:$0xf] %v432
                %v434 = vld [vmem:[%s176 + $0x400] sm:$0xf]
                %435 = vst [vmem:[%s177 + $0x200] sm:$0xf] %v434
                %v436 = vld [vmem:[%s176 + $0x408] sm:$0xf]
                %437 = vst [vmem:[%s177 + $0x204] sm:$0xf] %v436
                %v438 = vld [vmem:[%s176 + $0x410] sm:$0xf]
                %439 = vst [vmem:[%s177 + $0x208] sm:$0xf] %v438
                %v440 = vld [vmem:[%s176 + $0x418] sm:$0xf]
                %441 = vst [vmem:[%s177 + $0x20c] sm:$0xf] %v440
                %v442 = vld [vmem:[%s176 + $0x420] sm:$0xf]
                %443 = vst [vmem:[%s177 + $0x210] sm:$0xf] %v442
                %v444 = vld [vmem:[%s176 + $0x428] sm:$0xf]
                %445 = vst [vmem:[%s177 + $0x214] sm:$0xf] %v444
                %v446 = vld [vmem:[%s176 + $0x430] sm:$0xf]
                %447 = vst [vmem:[%s177 + $0x218] sm:$0xf] %v446
                %v448 = vld [vmem:[%s176 + $0x438] sm:$0xf]
                %449 = vst [vmem:[%s177 + $0x21c] sm:$0xf] %v448
                %v450 = vld [vmem:[%s176 + $0x440] sm:$0xf]
                %451 = vst [vmem:[%s177 + $0x220] sm:$0xf] %v450
                %v452 = vld [vmem:[%s176 + $0x448] sm:$0xf]
                %453 = vst [vmem:[%s177 + $0x224] sm:$0xf] %v452
                %v454 = vld [vmem:[%s176 + $0x450] sm:$0xf]
                %455 = vst [vmem:[%s177 + $0x228] sm:$0xf] %v454
                %v456 = vld [vmem:[%s176 + $0x458] sm:$0xf]
                %457 = vst [vmem:[%s177 + $0x22c] sm:$0xf] %v456
                %v458 = vld [vmem:[%s176 + $0x460] sm:$0xf]
                %459 = vst [vmem:[%s177 + $0x230] sm:$0xf] %v458
                %v460 = vld [vmem:[%s176 + $0x468] sm:$0xf]
                %461 = vst [vmem:[%s177 + $0x234] sm:$0xf] %v460
                %v462 = vld [vmem:[%s176 + $0x470] sm:$0xf]
                %463 = vst [vmem:[%s177 + $0x238] sm:$0xf] %v462
                %v464 = vld [vmem:[%s176 + $0x478] sm:$0xf]
                %465 = vst [vmem:[%s177 + $0x23c] sm:$0xf] %v464
                %v466 = vld [vmem:[%s176 + $0x480] sm:$0xf]
                %467 = vst [vmem:[%s177 + $0x240] sm:$0xf] %v466
                %v468 = vld [vmem:[%s176 + $0x488] sm:$0xf]
                %469 = vst [vmem:[%s177 + $0x244] sm:$0xf] %v468
                %v470 = vld [vmem:[%s176 + $0x490] sm:$0xf]
                %471 = vst [vmem:[%s177 + $0x248] sm:$0xf] %v470
                %v472 = vld [vmem:[%s176 + $0x498] sm:$0xf]
                %473 = vst [vmem:[%s177 + $0x24c] sm:$0xf] %v472
                %v474 = vld [vmem:[%s176 + $0x4a0] sm:$0xf]
                %475 = vst [vmem:[%s177 + $0x250] sm:$0xf] %v474
                %v476 = vld [vmem:[%s176 + $0x4a8] sm:$0xf]
                %477 = vst [vmem:[%s177 + $0x254] sm:$0xf] %v476
                %v478 = vld [vmem:[%s176 + $0x4b0] sm:$0xf]
                %479 = vst [vmem:[%s177 + $0x258] sm:$0xf] %v478
                %v480 = vld [vmem:[%s176 + $0x4b8] sm:$0xf]
                %481 = vst [vmem:[%s177 + $0x25c] sm:$0xf] %v480
                %v482 = vld [vmem:[%s176 + $0x4c0] sm:$0xf]
                %483 = vst [vmem:[%s177 + $0x260] sm:$0xf] %v482
                %v484 = vld [vmem:[%s176 + $0x4c8] sm:$0xf]
                %485 = vst [vmem:[%s177 + $0x264] sm:$0xf] %v484
                %v486 = vld [vmem:[%s176 + $0x4d0] sm:$0xf]
                %487 = vst [vmem:[%s177 + $0x268] sm:$0xf] %v486
                %v488 = vld [vmem:[%s176 + $0x4d8] sm:$0xf]
                %489 = vst [vmem:[%s177 + $0x26c] sm:$0xf] %v488
                %v490 = vld [vmem:[%s176 + $0x4e0] sm:$0xf]
                %491 = vst [vmem:[%s177 + $0x270] sm:$0xf] %v490
                %v492 = vld [vmem:[%s176 + $0x4e8] sm:$0xf]
                %493 = vst [vmem:[%s177 + $0x274] sm:$0xf] %v492
                %v494 = vld [vmem:[%s176 + $0x4f0] sm:$0xf]
                %495 = vst [vmem:[%s177 + $0x278] sm:$0xf] %v494
                %v496 = vld [vmem:[%s176 + $0x4f8] sm:$0xf]
                %497 = vst [vmem:[%s177 + $0x27c] sm:$0xf] %v496
                %v498 = vld [vmem:[%s176 + $0x500] sm:$0xf]
                %499 = vst [vmem:[%s177 + $0x280] sm:$0xf] %v498
                %v500 = vld [vmem:[%s176 + $0x508] sm:$0xf]
                %501 = vst [vmem:[%s177 + $0x284] sm:$0xf] %v500
                %v502 = vld [vmem:[%s176 + $0x510] sm:$0xf]
                %503 = vst [vmem:[%s177 + $0x288] sm:$0xf] %v502
                %v504 = vld [vmem:[%s176 + $0x518] sm:$0xf]
                %505 = vst [vmem:[%s177 + $0x28c] sm:$0xf] %v504
                %v506 = vld [vmem:[%s176 + $0x520] sm:$0xf]
                %507 = vst [vmem:[%s177 + $0x290] sm:$0xf] %v506
                %v508 = vld [vmem:[%s176 + $0x528] sm:$0xf]
                %509 = vst [vmem:[%s177 + $0x294] sm:$0xf] %v508
                %v510 = vld [vmem:[%s176 + $0x530] sm:$0xf]
                %511 = vst [vmem:[%s177 + $0x298] sm:$0xf] %v510
                %v512 = vld [vmem:[%s176 + $0x538] sm:$0xf]
                %513 = vst [vmem:[%s177 + $0x29c] sm:$0xf] %v512
                %v514 = vld [vmem:[%s176 + $0x540] sm:$0xf]
                %515 = vst [vmem:[%s177 + $0x2a0] sm:$0xf] %v514
                %v516 = vld [vmem:[%s176 + $0x548] sm:$0xf]
                %517 = vst [vmem:[%s177 + $0x2a4] sm:$0xf] %v516
                %v518 = vld [vmem:[%s176 + $0x550] sm:$0xf]
                %519 = vst [vmem:[%s177 + $0x2a8] sm:$0xf] %v518
                %v520 = vld [vmem:[%s176 + $0x558] sm:$0xf]
                %521 = vst [vmem:[%s177 + $0x2ac] sm:$0xf] %v520
                %v522 = vld [vmem:[%s176 + $0x560] sm:$0xf]
                %523 = vst [vmem:[%s177 + $0x2b0] sm:$0xf] %v522
                %v524 = vld [vmem:[%s176 + $0x568] sm:$0xf]
                %525 = vst [vmem:[%s177 + $0x2b4] sm:$0xf] %v524
                %v526 = vld [vmem:[%s176 + $0x570] sm:$0xf]
                %527 = vst [vmem:[%s177 + $0x2b8] sm:$0xf] %v526
                %v528 = vld [vmem:[%s176 + $0x578] sm:$0xf]
                %529 = vst [vmem:[%s177 + $0x2bc] sm:$0xf] %v528
                %v530 = vld [vmem:[%s176 + $0x580] sm:$0xf]
                %531 = vst [vmem:[%s177 + $0x2c0] sm:$0xf] %v530
                %v532 = vld [vmem:[%s176 + $0x588] sm:$0xf]
                %533 = vst [vmem:[%s177 + $0x2c4] sm:$0xf] %v532
                %v534 = vld [vmem:[%s176 + $0x590] sm:$0xf]
                %535 = vst [vmem:[%s177 + $0x2c8] sm:$0xf] %v534
                %v536 = vld [vmem:[%s176 + $0x598] sm:$0xf]
                %537 = vst [vmem:[%s177 + $0x2cc] sm:$0xf] %v536
                %v538 = vld [vmem:[%s176 + $0x5a0] sm:$0xf]
                %539 = vst [vmem:[%s177 + $0x2d0] sm:$0xf] %v538
                %v540 = vld [vmem:[%s176 + $0x5a8] sm:$0xf]
                %541 = vst [vmem:[%s177 + $0x2d4] sm:$0xf] %v540
                %v542 = vld [vmem:[%s176 + $0x5b0] sm:$0xf]
                %543 = vst [vmem:[%s177 + $0x2d8] sm:$0xf] %v542
                %v544 = vld [vmem:[%s176 + $0x5b8] sm:$0xf]
                %545 = vst [vmem:[%s177 + $0x2dc] sm:$0xf] %v544
                %v546 = vld [vmem:[%s176 + $0x5c0] sm:$0xf]
                %547 = vst [vmem:[%s177 + $0x2e0] sm:$0xf] %v546
                %v548 = vld [vmem:[%s176 + $0x5c8] sm:$0xf]
                %549 = vst [vmem:[%s177 + $0x2e4] sm:$0xf] %v548
                %v550 = vld [vmem:[%s176 + $0x5d0] sm:$0xf]
                %551 = vst [vmem:[%s177 + $0x2e8] sm:$0xf] %v550
                %v552 = vld [vmem:[%s176 + $0x5d8] sm:$0xf]
                %553 = vst [vmem:[%s177 + $0x2ec] sm:$0xf] %v552
                %v554 = vld [vmem:[%s176 + $0x5e0] sm:$0xf]
                %555 = vst [vmem:[%s177 + $0x2f0] sm:$0xf] %v554
                %v556 = vld [vmem:[%s176 + $0x5e8] sm:$0xf]
                %557 = vst [vmem:[%s177 + $0x2f4] sm:$0xf] %v556
                %v558 = vld [vmem:[%s176 + $0x5f0] sm:$0xf]
                %559 = vst [vmem:[%s177 + $0x2f8] sm:$0xf] %v558
                %v560 = vld [vmem:[%s176 + $0x5f8] sm:$0xf]
                %561 = vst [vmem:[%s177 + $0x2fc] sm:$0xf] %v560
                %v562 = vld [vmem:[%s176 + $0x600] sm:$0xf]
                %563 = vst [vmem:[%s177 + $0x300] sm:$0xf] %v562
                %v564 = vld [vmem:[%s176 + $0x608] sm:$0xf]
                %565 = vst [vmem:[%s177 + $0x304] sm:$0xf] %v564
                %v566 = vld [vmem:[%s176 + $0x610] sm:$0xf]
                %567 = vst [vmem:[%s177 + $0x308] sm:$0xf] %v566
                %v568 = vld [vmem:[%s176 + $0x618] sm:$0xf]
                %569 = vst [vmem:[%s177 + $0x30c] sm:$0xf] %v568
                %v570 = vld [vmem:[%s176 + $0x620] sm:$0xf]
                %571 = vst [vmem:[%s177 + $0x310] sm:$0xf] %v570
                %v572 = vld [vmem:[%s176 + $0x628] sm:$0xf]
                %573 = vst [vmem:[%s177 + $0x314] sm:$0xf] %v572
                %v574 = vld [vmem:[%s176 + $0x630] sm:$0xf]
                %575 = vst [vmem:[%s177 + $0x318] sm:$0xf] %v574
                %v576 = vld [vmem:[%s176 + $0x638] sm:$0xf]
                %577 = vst [vmem:[%s177 + $0x31c] sm:$0xf] %v576
                %v578 = vld [vmem:[%s176 + $0x640] sm:$0xf]
                %579 = vst [vmem:[%s177 + $0x320] sm:$0xf] %v578
                %v580 = vld [vmem:[%s176 + $0x648] sm:$0xf]
                %581 = vst [vmem:[%s177 + $0x324] sm:$0xf] %v580
                %v582 = vld [vmem:[%s176 + $0x650] sm:$0xf]
                %583 = vst [vmem:[%s177 + $0x328] sm:$0xf] %v582
                %v584 = vld [vmem:[%s176 + $0x658] sm:$0xf]
                %585 = vst [vmem:[%s177 + $0x32c] sm:$0xf] %v584
                %v586 = vld [vmem:[%s176 + $0x660] sm:$0xf]
                %587 = vst [vmem:[%s177 + $0x330] sm:$0xf] %v586
                %v588 = vld [vmem:[%s176 + $0x668] sm:$0xf]
                %589 = vst [vmem:[%s177 + $0x334] sm:$0xf] %v588
                %v590 = vld [vmem:[%s176 + $0x670] sm:$0xf]
                %591 = vst [vmem:[%s177 + $0x338] sm:$0xf] %v590
                %v592 = vld [vmem:[%s176 + $0x678] sm:$0xf]
                %593 = vst [vmem:[%s177 + $0x33c] sm:$0xf] %v592
                %v594 = vld [vmem:[%s176 + $0x680] sm:$0xf]
                %595 = vst [vmem:[%s177 + $0x340] sm:$0xf] %v594
                %v596 = vld [vmem:[%s176 + $0x688] sm:$0xf]
                %597 = vst [vmem:[%s177 + $0x344] sm:$0xf] %v596
                %v598 = vld [vmem:[%s176 + $0x690] sm:$0xf]
                %599 = vst [vmem:[%s177 + $0x348] sm:$0xf] %v598
                %v600 = vld [vmem:[%s176 + $0x698] sm:$0xf]
                %601 = vst [vmem:[%s177 + $0x34c] sm:$0xf] %v600
                %v602 = vld [vmem:[%s176 + $0x6a0] sm:$0xf]
                %603 = vst [vmem:[%s177 + $0x350] sm:$0xf] %v602
                %v604 = vld [vmem:[%s176 + $0x6a8] sm:$0xf]
                %605 = vst [vmem:[%s177 + $0x354] sm:$0xf] %v604
                %v606 = vld [vmem:[%s176 + $0x6b0] sm:$0xf]
                %607 = vst [vmem:[%s177 + $0x358] sm:$0xf] %v606
                %v608 = vld [vmem:[%s176 + $0x6b8] sm:$0xf]
                %609 = vst [vmem:[%s177 + $0x35c] sm:$0xf] %v608
                %v610 = vld [vmem:[%s176 + $0x6c0] sm:$0xf]
                %611 = vst [vmem:[%s177 + $0x360] sm:$0xf] %v610
                %v612 = vld [vmem:[%s176 + $0x6c8] sm:$0xf]
                %613 = vst [vmem:[%s177 + $0x364] sm:$0xf] %v612
                %v614 = vld [vmem:[%s176 + $0x6d0] sm:$0xf]
                %615 = vst [vmem:[%s177 + $0x368] sm:$0xf] %v614
                %v616 = vld [vmem:[%s176 + $0x6d8] sm:$0xf]
                %617 = vst [vmem:[%s177 + $0x36c] sm:$0xf] %v616
                %v618 = vld [vmem:[%s176 + $0x6e0] sm:$0xf]
                %619 = vst [vmem:[%s177 + $0x370] sm:$0xf] %v618
                %v620 = vld [vmem:[%s176 + $0x6e8] sm:$0xf]
                %621 = vst [vmem:[%s177 + $0x374] sm:$0xf] %v620
                %v622 = vld [vmem:[%s176 + $0x6f0] sm:$0xf]
                %623 = vst [vmem:[%s177 + $0x378] sm:$0xf] %v622
                %v624 = vld [vmem:[%s176 + $0x6f8] sm:$0xf]
                %625 = vst [vmem:[%s177 + $0x37c] sm:$0xf] %v624
                %v626 = vld [vmem:[%s176 + $0x700] sm:$0xf]
                %627 = vst [vmem:[%s177 + $0x380] sm:$0xf] %v626
                %v628 = vld [vmem:[%s176 + $0x708] sm:$0xf]
                %629 = vst [vmem:[%s177 + $0x384] sm:$0xf] %v628
                %v630 = vld [vmem:[%s176 + $0x710] sm:$0xf]
                %631 = vst [vmem:[%s177 + $0x388] sm:$0xf] %v630
                %v632 = vld [vmem:[%s176 + $0x718] sm:$0xf]
                %633 = vst [vmem:[%s177 + $0x38c] sm:$0xf] %v632
                %v634 = vld [vmem:[%s176 + $0x720] sm:$0xf]
                %635 = vst [vmem:[%s177 + $0x390] sm:$0xf] %v634
                %v636 = vld [vmem:[%s176 + $0x728] sm:$0xf]
                %637 = vst [vmem:[%s177 + $0x394] sm:$0xf] %v636
                %v638 = vld [vmem:[%s176 + $0x730] sm:$0xf]
                %639 = vst [vmem:[%s177 + $0x398] sm:$0xf] %v638
                %v640 = vld [vmem:[%s176 + $0x738] sm:$0xf]
                %641 = vst [vmem:[%s177 + $0x39c] sm:$0xf] %v640
                %v642 = vld [vmem:[%s176 + $0x740] sm:$0xf]
                %643 = vst [vmem:[%s177 + $0x3a0] sm:$0xf] %v642
                %v644 = vld [vmem:[%s176 + $0x748] sm:$0xf]
                %645 = vst [vmem:[%s177 + $0x3a4] sm:$0xf] %v644
                %v646 = vld [vmem:[%s176 + $0x750] sm:$0xf]
                %647 = vst [vmem:[%s177 + $0x3a8] sm:$0xf] %v646
                %v648 = vld [vmem:[%s176 + $0x758] sm:$0xf]
                %649 = vst [vmem:[%s177 + $0x3ac] sm:$0xf] %v648
                %v650 = vld [vmem:[%s176 + $0x760] sm:$0xf]
                %651 = vst [vmem:[%s177 + $0x3b0] sm:$0xf] %v650
                %v652 = vld [vmem:[%s176 + $0x768] sm:$0xf]
                %653 = vst [vmem:[%s177 + $0x3b4] sm:$0xf] %v652
                %v654 = vld [vmem:[%s176 + $0x770] sm:$0xf]
                %655 = vst [vmem:[%s177 + $0x3b8] sm:$0xf] %v654
                %v656 = vld [vmem:[%s176 + $0x778] sm:$0xf]
                %657 = vst [vmem:[%s177 + $0x3bc] sm:$0xf] %v656
                %v658 = vld [vmem:[%s176 + $0x780] sm:$0xf]
                %659 = vst [vmem:[%s177 + $0x3c0] sm:$0xf] %v658
                %v660 = vld [vmem:[%s176 + $0x788] sm:$0xf]
                %661 = vst [vmem:[%s177 + $0x3c4] sm:$0xf] %v660
                %v662 = vld [vmem:[%s176 + $0x790] sm:$0xf]
                %663 = vst [vmem:[%s177 + $0x3c8] sm:$0xf] %v662
                %v664 = vld [vmem:[%s176 + $0x798] sm:$0xf]
                %665 = vst [vmem:[%s177 + $0x3cc] sm:$0xf] %v664
                %v666 = vld [vmem:[%s176 + $0x7a0] sm:$0xf]
                %667 = vst [vmem:[%s177 + $0x3d0] sm:$0xf] %v666
                %v668 = vld [vmem:[%s176 + $0x7a8] sm:$0xf]
                %669 = vst [vmem:[%s177 + $0x3d4] sm:$0xf] %v668
                %v670 = vld [vmem:[%s176 + $0x7b0] sm:$0xf]
                %671 = vst [vmem:[%s177 + $0x3d8] sm:$0xf] %v670
                %v672 = vld [vmem:[%s176 + $0x7b8] sm:$0xf]
                %673 = vst [vmem:[%s177 + $0x3dc] sm:$0xf] %v672
                %v674 = vld [vmem:[%s176 + $0x7c0] sm:$0xf]
                %675 = vst [vmem:[%s177 + $0x3e0] sm:$0xf] %v674
                %v676 = vld [vmem:[%s176 + $0x7c8] sm:$0xf]
                %677 = vst [vmem:[%s177 + $0x3e4] sm:$0xf] %v676
                %v678 = vld [vmem:[%s176 + $0x7d0] sm:$0xf]
                %679 = vst [vmem:[%s177 + $0x3e8] sm:$0xf] %v678
                %v680 = vld [vmem:[%s176 + $0x7d8] sm:$0xf]
                %681 = vst [vmem:[%s177 + $0x3ec] sm:$0xf] %v680
                %v682 = vld [vmem:[%s176 + $0x7e0] sm:$0xf]
                %683 = vst [vmem:[%s177 + $0x3f0] sm:$0xf] %v682
                %v684 = vld [vmem:[%s176 + $0x7e8] sm:$0xf]
                %685 = vst [vmem:[%s177 + $0x3f4] sm:$0xf] %v684
                %v686 = vld [vmem:[%s176 + $0x7f0] sm:$0xf]
                %687 = vst [vmem:[%s177 + $0x3f8] sm:$0xf] %v686
                %v688 = vld [vmem:[%s176 + $0x7f8] sm:$0xf]
                %689 = vst [vmem:[%s177 + $0x3fc] sm:$0xf] %v688
              $region41: #{model_image_scratch_forward.8} parent=35 // loop_footer
                %s175 = sadd.s32 1, %s171
              $region42: #{model_image_scratch_forward.8} parent=35 // loop_footer_branch
                %170 = sbr.rel target = $region38
              $region43: #{model_image_scratch_forward.8} parent=35 // loop_exit
                _
            $region36: #{model_image_scratch_forward.8} parent=27 // pred_fallthru
              _
          $region28: #{model_image_scratch_forward.8} parent=23 // pred_fallthru
            _
          %1221 = vnop
        $region24: #{model_image_scratch_forward.8} parent=19 // pred_fallthru
          _
        // Predicated region
        $region62: #{model_image_scratch_forward.8} parent=19 // pred_check
          %p1222 = pneg %p93
        $region63: #{model_image_scratch_forward.8} parent=19 // pred_check_branch
          %1224 = sbr.rel (%p1222) target = $region65
        $region64: #{model_image_scratch_forward.8} parent=19 // pred_region
          %p1225 = scmp.lt.s32.totalorder %s17, 1
          %s1226 = scalar_select %p1225, %s17, 1
          %s1227 = scalar_lea.vmem %s2, %s1226
        $region65: #{model_image_scratch_forward.8} parent=19 // pred_fallthru
          _
      $region20: #{model_image_scratch_forward.8} parent=5 // pred_fallthru
        _
      %p1228 = scmp.le.s32.totalorder 1, %s9
      %p1229 = scmp.lt.s32.totalorder %s9, 3
      %p1230 = pnand %p1228, %p1229
      %p1231 = pneg %p1230
      // Predicated region
      $region66: #{model_image_scratch_forward.8} parent=5 // pred_check
        _
      $region67: #{model_image_scratch_forward.8} parent=5 // pred_check_branch
        %1233 = sbr.rel (%p1230) target = $region69
      $region68: #{model_image_scratch_forward.8} parent=5 // pred_region
        %s1234 = ssub.s32 %s9, 1
        %s1235 = sand.u32 %s60, 1
        %s1236 = sand.u32 %s60, 1
        %s1237 = smul.addr %s1236, 1024
        %s1238 = scalar_lea.vmem [#allocation2], %s1237
        // Predicated region
        $region70: #{model_image_scratch_forward.8} parent=68 // pred_check
          %p1239 = pneg %p73
        $region71: #{model_image_scratch_forward.8} parent=68 // pred_check_branch
          %1241 = sbr.rel (%p1239) target = $region73
        $region72: #{model_image_scratch_forward.8} parent=68 // pred_region
          _
        $region73: #{model_image_scratch_forward.8} parent=68 // pred_fallthru
          _
        %p1242 = scmp.lt.s32.totalorder %s18, 0
        %s1243 = scalar_select %p1242, %s18, 0
        %s1244 = smul.addr %s1243, 16
        %s1245 = smul.addr %s1244, 4
        %s1246 = scalar_lea.vmem %s0, %s1245
        %p1247 = pneg %p47
        %p1248 = pneg %p44
        %s1249 = sand.u32 %s60, 1
        %s1250 = sand.u32 %s60, 1
        %s1251 = smul.addr %s1250, 1024
        %s1252 = scalar_lea.vmem [#allocation2], %s1251
        %p1253 = pneg %p73
        %p1254 = pneg %p70
        %p1255 = scmp.lt.s32.totalorder %s19, 1
        %s1256 = scalar_select %p1255, %s19, 1
        %s1257 = scalar_lea.vmem %s2, %s1256
        %p1258 = pneg %p99
        %p1259 = pneg %p96
        %p1260 = pneg %p127
        %p1261 = pneg %p124
        %p1262 = scmp.lt.s32.totalorder %s18, 0
        %s1263 = scalar_select %p1262, %s18, 0
        %p1264 = scmp.lt.s32.totalorder %s19, 1
        %s1265 = scalar_select %p1264, %s19, 1
        %s1266 = smul.addr %s1263, 2
        %s1267 = sadd.s32 %s1265, %s1266
        %s1268 = smul.addr %s1267, 4
        %s1269 = scalar_lea.vmem %s3, %s1268
        %p1270 = scmp.lt.s32.totalorder %s18, 0
        %s1271 = scalar_select %p1270, %s18, 0
        %s1272 = smul.addr %s1271, 16
        %s1273 = smul.addr %s1272, 4
        %s1274 = scalar_lea.vmem %s0, %s1273
        %p1275 = scmp.lt.s32.totalorder %s19, 1
        %s1276 = scalar_select %p1275, %s19, 1
        %s1277 = scalar_lea.vmem %s2, %s1276
        %p1278 = scmp.lt.s32.totalorder %s18, 0
        %s1279 = scalar_select %p1278, %s18, 0
        %p1280 = scmp.lt.s32.totalorder %s19, 1
        %s1281 = scalar_select %p1280, %s19, 1
        %s1282 = smul.addr %s1279, 2
        %s1283 = sadd.s32 %s1281, %s1282
        %s1284 = smul.addr %s1283, 4
        %s1285 = scalar_lea.vmem %s3, %s1284
        %v1287 = vld [vmem:[%s1274] sm:$0xff]
        %v1288 = vld [vmem:[%s1274 + $0x8] sm:$0xff]
        %v1289 = vld [vmem:[%s1274 + $0x10] sm:$0xff]
        %v1290 = vld [vmem:[%s1274 + $0x18] sm:$0xff]
        %v1291 = vld [vmem:[%s1274 + $0x20] sm:$0xff]
        %v1292 = vld [vmem:[%s1274 + $0x28] sm:$0xff]
        %v1293 = vld [vmem:[%s1274 + $0x30] sm:$0xff]
        %v1294 = vld [vmem:[%s1274 + $0x38] sm:$0xff]
        %v1295 = vld [vmem:[%s1238] sm:$0xf]
        %v1296 = vld [vmem:[%s1238 + $0x4] sm:$0xf]
        %v1297 = vld [vmem:[%s1238 + $0x8] sm:$0xf]
        %v1298 = vld [vmem:[%s1238 + $0xc] sm:$0xf]
        %v1299 = vld [vmem:[%s1238 + $0x10] sm:$0xf]
        %v1300 = vld [vmem:[%s1238 + $0x14] sm:$0xf]
        %v1301 = vld [vmem:[%s1238 + $0x18] sm:$0xf]
        %v1302 = vld [vmem:[%s1238 + $0x1c] sm:$0xf]
        %v1303 = vld [vmem:[%s1238 + $0x20] sm:$0xf]
        %v1304 = vld [vmem:[%s1238 + $0x24] sm:$0xf]
        %v1305 = vld [vmem:[%s1238 + $0x28] sm:$0xf]
        %v1306 = vld [vmem:[%s1238 + $0x2c] sm:$0xf]
        %v1307 = vld [vmem:[%s1238 + $0x30] sm:$0xf]
        %v1308 = vld [vmem:[%s1238 + $0x34] sm:$0xf]
        %v1309 = vld [vmem:[%s1238 + $0x38] sm:$0xf]
        %v1310 = vld [vmem:[%s1238 + $0x3c] sm:$0xf]
        %v1311 = vld [vmem:[%s1238 + $0x40] sm:$0xf]
        %v1312 = vld [vmem:[%s1238 + $0x44] sm:$0xf]
        %v1313 = vld [vmem:[%s1238 + $0x48] sm:$0xf]
        %v1314 = vld [vmem:[%s1238 + $0x4c] sm:$0xf]
        %v1315 = vld [vmem:[%s1238 + $0x50] sm:$0xf]
        %v1316 = vld [vmem:[%s1238 + $0x54] sm:$0xf]
        %v1317 = vld [vmem:[%s1238 + $0x58] sm:$0xf]
        %v1318 = vld [vmem:[%s1238 + $0x5c] sm:$0xf]
        %v1319 = vld [vmem:[%s1238 + $0x60] sm:$0xf]
        %v1320 = vld [vmem:[%s1238 + $0x64] sm:$0xf]
        %v1321 = vld [vmem:[%s1238 + $0x68] sm:$0xf]
        %v1322 = vld [vmem:[%s1238 + $0x6c] sm:$0xf]
        %v1323 = vld [vmem:[%s1238 + $0x70] sm:$0xf]
        %v1324 = vld [vmem:[%s1238 + $0x74] sm:$0xf]
        %v1325 = vld [vmem:[%s1238 + $0x78] sm:$0xf]
        %v1326 = vld [vmem:[%s1238 + $0x7c] sm:$0xf]
        %v1327 = vld [vmem:[%s1238 + $0x80] sm:$0xf]
        %v1328 = vld [vmem:[%s1238 + $0x84] sm:$0xf]
        %v1329 = vld [vmem:[%s1238 + $0x88] sm:$0xf]
        %v1330 = vld [vmem:[%s1238 + $0x8c] sm:$0xf]
        %v1331 = vld [vmem:[%s1238 + $0x90] sm:$0xf]
        %v1332 = vld [vmem:[%s1238 + $0x94] sm:$0xf]
        %v1333 = vld [vmem:[%s1238 + $0x98] sm:$0xf]
        %v1334 = vld [vmem:[%s1238 + $0x9c] sm:$0xf]
        %v1335 = vld [vmem:[%s1238 + $0xa0] sm:$0xf]
        %v1336 = vld [vmem:[%s1238 + $0xa4] sm:$0xf]
        %v1337 = vld [vmem:[%s1238 + $0xa8] sm:$0xf]
        %v1338 = vld [vmem:[%s1238 + $0xac] sm:$0xf]
        %v1339 = vld [vmem:[%s1238 + $0xb0] sm:$0xf]
        %v1340 = vld [vmem:[%s1238 + $0xb4] sm:$0xf]
        %v1341 = vld [vmem:[%s1238 + $0xb8] sm:$0xf]
        %v1342 = vld [vmem:[%s1238 + $0xbc] sm:$0xf]
        %v1343 = vld [vmem:[%s1238 + $0xc0] sm:$0xf]
        %v1344 = vld [vmem:[%s1238 + $0xc4] sm:$0xf]
        %v1345 = vld [vmem:[%s1238 + $0xc8] sm:$0xf]
        %v1346 = vld [vmem:[%s1238 + $0xcc] sm:$0xf]
        %v1347 = vld [vmem:[%s1238 + $0xd0] sm:$0xf]
        %v1348 = vld [vmem:[%s1238 + $0xd4] sm:$0xf]
        %v1349 = vld [vmem:[%s1238 + $0xd8] sm:$0xf]
        %v1350 = vld [vmem:[%s1238 + $0xdc] sm:$0xf]
        %v1351 = vld [vmem:[%s1238 + $0xe0] sm:$0xf]
        %v1352 = vld [vmem:[%s1238 + $0xe4] sm:$0xf]
        %v1353 = vld [vmem:[%s1238 + $0xe8] sm:$0xf]
        %v1354 = vld [vmem:[%s1238 + $0xec] sm:$0xf]
        %v1355 = vld [vmem:[%s1238 + $0xf0] sm:$0xf]
        %v1356 = vld [vmem:[%s1238 + $0xf4] sm:$0xf]
        %v1357 = vld [vmem:[%s1238 + $0xf8] sm:$0xf]
        %v1358 = vld [vmem:[%s1238 + $0xfc] sm:$0xf]
        %v1359 = vld [vmem:[%s1238 + $0x100] sm:$0xf]
        %v1360 = vld [vmem:[%s1238 + $0x104] sm:$0xf]
        %v1361 = vld [vmem:[%s1238 + $0x108] sm:$0xf]
        %v1362 = vld [vmem:[%s1238 + $0x10c] sm:$0xf]
        %v1363 = vld [vmem:[%s1238 + $0x110] sm:$0xf]
        %v1364 = vld [vmem:[%s1238 + $0x114] sm:$0xf]
        %v1365 = vld [vmem:[%s1238 + $0x118] sm:$0xf]
        %v1366 = vld [vmem:[%s1238 + $0x11c] sm:$0xf]
        %v1367 = vld [vmem:[%s1238 + $0x120] sm:$0xf]
        %v1368 = vld [vmem:[%s1238 + $0x124] sm:$0xf]
        %v1369 = vld [vmem:[%s1238 + $0x128] sm:$0xf]
        %v1370 = vld [vmem:[%s1238 + $0x12c] sm:$0xf]
        %v1371 = vld [vmem:[%s1238 + $0x130] sm:$0xf]
        %v1372 = vld [vmem:[%s1238 + $0x134] sm:$0xf]
        %v1373 = vld [vmem:[%s1238 + $0x138] sm:$0xf]
        %v1374 = vld [vmem:[%s1238 + $0x13c] sm:$0xf]
        %v1375 = vld [vmem:[%s1238 + $0x140] sm:$0xf]
        %v1376 = vld [vmem:[%s1238 + $0x144] sm:$0xf]
        %v1377 = vld [vmem:[%s1238 + $0x148] sm:$0xf]
        %v1378 = vld [vmem:[%s1238 + $0x14c] sm:$0xf]
        %v1379 = vld [vmem:[%s1238 + $0x150] sm:$0xf]
        %v1380 = vld [vmem:[%s1238 + $0x154] sm:$0xf]
        %v1381 = vld [vmem:[%s1238 + $0x158] sm:$0xf]
        %v1382 = vld [vmem:[%s1238 + $0x15c] sm:$0xf]
        %v1383 = vld [vmem:[%s1238 + $0x160] sm:$0xf]
        %v1384 = vld [vmem:[%s1238 + $0x164] sm:$0xf]
        %v1385 = vld [vmem:[%s1238 + $0x168] sm:$0xf]
        %v1386 = vld [vmem:[%s1238 + $0x16c] sm:$0xf]
        %v1387 = vld [vmem:[%s1238 + $0x170] sm:$0xf]
        %v1388 = vld [vmem:[%s1238 + $0x174] sm:$0xf]
        %v1389 = vld [vmem:[%s1238 + $0x178] sm:$0xf]
        %v1390 = vld [vmem:[%s1238 + $0x17c] sm:$0xf]
        %v1391 = vld [vmem:[%s1238 + $0x180] sm:$0xf]
        %v1392 = vld [vmem:[%s1238 + $0x184] sm:$0xf]
        %v1393 = vld [vmem:[%s1238 + $0x188] sm:$0xf]
        %v1394 = vld [vmem:[%s1238 + $0x18c] sm:$0xf]
        %v1395 = vld [vmem:[%s1238 + $0x190] sm:$0xf]
        %v1396 = vld [vmem:[%s1238 + $0x194] sm:$0xf]
        %v1397 = vld [vmem:[%s1238 + $0x198] sm:$0xf]
        %v1398 = vld [vmem:[%s1238 + $0x19c] sm:$0xf]
        %v1399 = vld [vmem:[%s1238 + $0x1a0] sm:$0xf]
        %v1400 = vld [vmem:[%s1238 + $0x1a4] sm:$0xf]
        %v1401 = vld [vmem:[%s1238 + $0x1a8] sm:$0xf]
        %v1402 = vld [vmem:[%s1238 + $0x1ac] sm:$0xf]
        %v1403 = vld [vmem:[%s1238 + $0x1b0] sm:$0xf]
        %v1404 = vld [vmem:[%s1238 + $0x1b4] sm:$0xf]
        %v1405 = vld [vmem:[%s1238 + $0x1b8] sm:$0xf]
        %v1406 = vld [vmem:[%s1238 + $0x1bc] sm:$0xf]
        %v1407 = vld [vmem:[%s1238 + $0x1c0] sm:$0xf]
        %v1408 = vld [vmem:[%s1238 + $0x1c4] sm:$0xf]
        %v1409 = vld [vmem:[%s1238 + $0x1c8] sm:$0xf]
        %v1410 = vld [vmem:[%s1238 + $0x1cc] sm:$0xf]
        %v1411 = vld [vmem:[%s1238 + $0x1d0] sm:$0xf]
        %v1412 = vld [vmem:[%s1238 + $0x1d4] sm:$0xf]
        %v1413 = vld [vmem:[%s1238 + $0x1d8] sm:$0xf]
        %v1414 = vld [vmem:[%s1238 + $0x1dc] sm:$0xf]
        %v1415 = vld [vmem:[%s1238 + $0x1e0] sm:$0xf]
        %v1416 = vld [vmem:[%s1238 + $0x1e4] sm:$0xf]
        %v1417 = vld [vmem:[%s1238 + $0x1e8] sm:$0xf]
        %v1418 = vld [vmem:[%s1238 + $0x1ec] sm:$0xf]
        %v1419 = vld [vmem:[%s1238 + $0x1f0] sm:$0xf]
        %v1420 = vld [vmem:[%s1238 + $0x1f4] sm:$0xf]
        %v1421 = vld [vmem:[%s1238 + $0x1f8] sm:$0xf]
        %v1422 = vld [vmem:[%s1238 + $0x1fc] sm:$0xf]
        %v1423 = vld [vmem:[%s1238 + $0x200] sm:$0xf]
        %v1424 = vld [vmem:[%s1238 + $0x204] sm:$0xf]
        %v1425 = vld [vmem:[%s1238 + $0x208] sm:$0xf]
        %v1426 = vld [vmem:[%s1238 + $0x20c] sm:$0xf]
        %v1427 = vld [vmem:[%s1238 + $0x210] sm:$0xf]
        %v1428 = vld [vmem:[%s1238 + $0x214] sm:$0xf]
        %v1429 = vld [vmem:[%s1238 + $0x218] sm:$0xf]
        %v1430 = vld [vmem:[%s1238 + $0x21c] sm:$0xf]
        %v1431 = vld [vmem:[%s1238 + $0x220] sm:$0xf]
        %v1432 = vld [vmem:[%s1238 + $0x224] sm:$0xf]
        %v1433 = vld [vmem:[%s1238 + $0x228] sm:$0xf]
        %v1434 = vld [vmem:[%s1238 + $0x22c] sm:$0xf]
        %v1435 = vld [vmem:[%s1238 + $0x230] sm:$0xf]
        %v1436 = vld [vmem:[%s1238 + $0x234] sm:$0xf]
        %v1437 = vld [vmem:[%s1238 + $0x238] sm:$0xf]
        %v1438 = vld [vmem:[%s1238 + $0x23c] sm:$0xf]
        %v1439 = vld [vmem:[%s1238 + $0x240] sm:$0xf]
        %v1440 = vld [vmem:[%s1238 + $0x244] sm:$0xf]
        %v1441 = vld [vmem:[%s1238 + $0x248] sm:$0xf]
        %v1442 = vld [vmem:[%s1238 + $0x24c] sm:$0xf]
        %v1443 = vld [vmem:[%s1238 + $0x250] sm:$0xf]
        %v1444 = vld [vmem:[%s1238 + $0x254] sm:$0xf]
        %v1445 = vld [vmem:[%s1238 + $0x258] sm:$0xf]
        %v1446 = vld [vmem:[%s1238 + $0x25c] sm:$0xf]
        %v1447 = vld [vmem:[%s1238 + $0x260] sm:$0xf]
        %v1448 = vld [vmem:[%s1238 + $0x264] sm:$0xf]
        %v1449 = vld [vmem:[%s1238 + $0x268] sm:$0xf]
        %v1450 = vld [vmem:[%s1238 + $0x26c] sm:$0xf]
        %v1451 = vld [vmem:[%s1238 + $0x270] sm:$0xf]
        %v1452 = vld [vmem:[%s1238 + $0x274] sm:$0xf]
        %v1453 = vld [vmem:[%s1238 + $0x278] sm:$0xf]
        %v1454 = vld [vmem:[%s1238 + $0x27c] sm:$0xf]
        %v1455 = vld [vmem:[%s1238 + $0x280] sm:$0xf]
        %v1456 = vld [vmem:[%s1238 + $0x284] sm:$0xf]
        %v1457 = vld [vmem:[%s1238 + $0x288] sm:$0xf]
        %v1458 = vld [vmem:[%s1238 + $0x28c] sm:$0xf]
        %v1459 = vld [vmem:[%s1238 + $0x290] sm:$0xf]
        %v1460 = vld [vmem:[%s1238 + $0x294] sm:$0xf]
        %v1461 = vld [vmem:[%s1238 + $0x298] sm:$0xf]
        %v1462 = vld [vmem:[%s1238 + $0x29c] sm:$0xf]
        %v1463 = vld [vmem:[%s1238 + $0x2a0] sm:$0xf]
        %v1464 = vld [vmem:[%s1238 + $0x2a4] sm:$0xf]
        %v1465 = vld [vmem:[%s1238 + $0x2a8] sm:$0xf]
        %v1466 = vld [vmem:[%s1238 + $0x2ac] sm:$0xf]
        %v1467 = vld [vmem:[%s1238 + $0x2b0] sm:$0xf]
        %v1468 = vld [vmem:[%s1238 + $0x2b4] sm:$0xf]
        %v1469 = vld [vmem:[%s1238 + $0x2b8] sm:$0xf]
        %v1470 = vld [vmem:[%s1238 + $0x2bc] sm:$0xf]
        %v1471 = vld [vmem:[%s1238 + $0x2c0] sm:$0xf]
        %v1472 = vld [vmem:[%s1238 + $0x2c4] sm:$0xf]
        %v1473 = vld [vmem:[%s1238 + $0x2c8] sm:$0xf]
        %v1474 = vld [vmem:[%s1238 + $0x2cc] sm:$0xf]
        %v1475 = vld [vmem:[%s1238 + $0x2d0] sm:$0xf]
        %v1476 = vld [vmem:[%s1238 + $0x2d4] sm:$0xf]
        %v1477 = vld [vmem:[%s1238 + $0x2d8] sm:$0xf]
        %v1478 = vld [vmem:[%s1238 + $0x2dc] sm:$0xf]
        %v1479 = vld [vmem:[%s1238 + $0x2e0] sm:$0xf]
        %v1480 = vld [vmem:[%s1238 + $0x2e4] sm:$0xf]
        %v1481 = vld [vmem:[%s1238 + $0x2e8] sm:$0xf]
        %v1482 = vld [vmem:[%s1238 + $0x2ec] sm:$0xf]
        %v1483 = vld [vmem:[%s1238 + $0x2f0] sm:$0xf]
        %v1484 = vld [vmem:[%s1238 + $0x2f4] sm:$0xf]
        %v1485 = vld [vmem:[%s1238 + $0x2f8] sm:$0xf]
        %v1486 = vld [vmem:[%s1238 + $0x2fc] sm:$0xf]
        %v1487 = vld [vmem:[%s1238 + $0x300] sm:$0xf]
        %v1488 = vld [vmem:[%s1238 + $0x304] sm:$0xf]
        %v1489 = vld [vmem:[%s1238 + $0x308] sm:$0xf]
        %v1490 = vld [vmem:[%s1238 + $0x30c] sm:$0xf]
        %v1491 = vld [vmem:[%s1238 + $0x310] sm:$0xf]
        %v1492 = vld [vmem:[%s1238 + $0x314] sm:$0xf]
        %v1493 = vld [vmem:[%s1238 + $0x318] sm:$0xf]
        %v1494 = vld [vmem:[%s1238 + $0x31c] sm:$0xf]
        %v1495 = vld [vmem:[%s1238 + $0x320] sm:$0xf]
        %v1496 = vld [vmem:[%s1238 + $0x324] sm:$0xf]
        %v1497 = vld [vmem:[%s1238 + $0x328] sm:$0xf]
        %v1498 = vld [vmem:[%s1238 + $0x32c] sm:$0xf]
        %v1499 = vld [vmem:[%s1238 + $0x330] sm:$0xf]
        %v1500 = vld [vmem:[%s1238 + $0x334] sm:$0xf]
        %v1501 = vld [vmem:[%s1238 + $0x338] sm:$0xf]
        %v1502 = vld [vmem:[%s1238 + $0x33c] sm:$0xf]
        %v1503 = vld [vmem:[%s1238 + $0x340] sm:$0xf]
        %v1504 = vld [vmem:[%s1238 + $0x344] sm:$0xf]
        %v1505 = vld [vmem:[%s1238 + $0x348] sm:$0xf]
        %v1506 = vld [vmem:[%s1238 + $0x34c] sm:$0xf]
        %v1507 = vld [vmem:[%s1238 + $0x350] sm:$0xf]
        %v1508 = vld [vmem:[%s1238 + $0x354] sm:$0xf]
        %v1509 = vld [vmem:[%s1238 + $0x358] sm:$0xf]
        %v1510 = vld [vmem:[%s1238 + $0x35c] sm:$0xf]
        %v1511 = vld [vmem:[%s1238 + $0x360] sm:$0xf]
        %v1512 = vld [vmem:[%s1238 + $0x364] sm:$0xf]
        %v1513 = vld [vmem:[%s1238 + $0x368] sm:$0xf]
        %v1514 = vld [vmem:[%s1238 + $0x36c] sm:$0xf]
        %v1515 = vld [vmem:[%s1238 + $0x370] sm:$0xf]
        %v1516 = vld [vmem:[%s1238 + $0x374] sm:$0xf]
        %v1517 = vld [vmem:[%s1238 + $0x378] sm:$0xf]
        %v1518 = vld [vmem:[%s1238 + $0x37c] sm:$0xf]
        %v1519 = vld [vmem:[%s1238 + $0x380] sm:$0xf]
        %v1520 = vld [vmem:[%s1238 + $0x384] sm:$0xf]
        %v1521 = vld [vmem:[%s1238 + $0x388] sm:$0xf]
        %v1522 = vld [vmem:[%s1238 + $0x38c] sm:$0xf]
        %v1523 = vld [vmem:[%s1238 + $0x390] sm:$0xf]
        %v1524 = vld [vmem:[%s1238 + $0x394] sm:$0xf]
        %v1525 = vld [vmem:[%s1238 + $0x398] sm:$0xf]
        %v1526 = vld [vmem:[%s1238 + $0x39c] sm:$0xf]
        %v1527 = vld [vmem:[%s1238 + $0x3a0] sm:$0xf]
        %v1528 = vld [vmem:[%s1238 + $0x3a4] sm:$0xf]
        %v1529 = vld [vmem:[%s1238 + $0x3a8] sm:$0xf]
        %v1530 = vld [vmem:[%s1238 + $0x3ac] sm:$0xf]
        %v1531 = vld [vmem:[%s1238 + $0x3b0] sm:$0xf]
        %v1532 = vld [vmem:[%s1238 + $0x3b4] sm:$0xf]
        %v1533 = vld [vmem:[%s1238 + $0x3b8] sm:$0xf]
        %v1534 = vld [vmem:[%s1238 + $0x3bc] sm:$0xf]
        %v1535 = vld [vmem:[%s1238 + $0x3c0] sm:$0xf]
        %v1536 = vld [vmem:[%s1238 + $0x3c4] sm:$0xf]
        %v1537 = vld [vmem:[%s1238 + $0x3c8] sm:$0xf]
        %v1538 = vld [vmem:[%s1238 + $0x3cc] sm:$0xf]
        %v1539 = vld [vmem:[%s1238 + $0x3d0] sm:$0xf]
        %v1540 = vld [vmem:[%s1238 + $0x3d4] sm:$0xf]
        %v1541 = vld [vmem:[%s1238 + $0x3d8] sm:$0xf]
        %v1542 = vld [vmem:[%s1238 + $0x3dc] sm:$0xf]
        %v1543 = vld [vmem:[%s1238 + $0x3e0] sm:$0xf]
        %v1544 = vld [vmem:[%s1238 + $0x3e4] sm:$0xf]
        %v1545 = vld [vmem:[%s1238 + $0x3e8] sm:$0xf]
        %v1546 = vld [vmem:[%s1238 + $0x3ec] sm:$0xf]
        %v1547 = vld [vmem:[%s1238 + $0x3f0] sm:$0xf]
        %v1548 = vld [vmem:[%s1238 + $0x3f4] sm:$0xf]
        %v1549 = vld [vmem:[%s1238 + $0x3f8] sm:$0xf]
        %v1550 = vld [vmem:[%s1238 + $0x3fc] sm:$0xf]
        %v1551 = vld [vmem:[%s1277] sm:$0x1]
        %v1553 = vlaneseq
        %v1554 = vshrl.u32 %v1553, 7
        %v1555 = vsub.s32 0, %v1554
        %v1556 = vrot.slane %v1551, %v1555
        %v1566 = vunpack.c.l.b16 %v1287
        %v1567 = vunpack.c.h.b16 %v1287
        %v1568 = vunpack.c.l.b16 %v1288
        %v1569 = vunpack.c.h.b16 %v1288
        %v1570 = vunpack.c.l.b16 %v1289
        %v1571 = vunpack.c.h.b16 %v1289
        %v1572 = vunpack.c.l.b16 %v1290
        %v1573 = vunpack.c.h.b16 %v1290
        %v1574 = vunpack.c.l.b16 %v1291
        %v1575 = vunpack.c.h.b16 %v1291
        %v1576 = vunpack.c.l.b16 %v1292
        %v1577 = vunpack.c.h.b16 %v1292
        %v1578 = vunpack.c.l.b16 %v1293
        %v1579 = vunpack.c.h.b16 %v1293
        %v1580 = vunpack.c.l.b16 %v1294
        %v1581 = vunpack.c.h.b16 %v1294
        %v1582 = vpack.c.b16 %v1566, %v1566
        %v1583 = vpack.c.b16 %v1567, %v1567
        %v1584 = vpack.c.b16 %v1568, %v1568
        %v1585 = vpack.c.b16 %v1569, %v1569
        %v1586 = vpack.c.b16 %v1570, %v1570
        %v1587 = vpack.c.b16 %v1571, %v1571
        %v1588 = vpack.c.b16 %v1572, %v1572
        %v1589 = vpack.c.b16 %v1573, %v1573
        %v1590 = vpack.c.b16 %v1574, %v1574
        %v1591 = vpack.c.b16 %v1575, %v1575
        %v1592 = vpack.c.b16 %v1576, %v1576
        %v1593 = vpack.c.b16 %v1577, %v1577
        %v1594 = vpack.c.b16 %v1578, %v1578
        %v1595 = vpack.c.b16 %v1579, %v1579
        %v1596 = vpack.c.b16 %v1580, %v1580
        %v1597 = vpack.c.b16 %v1581, %v1581
        %v1870 = vunpack.c.l.b16 %v1295
        %v1871 = vunpack.c.l.b16 %v1296
        %v1872 = vunpack.c.l.b16 %v1297
        %v1873 = vunpack.c.l.b16 %v1298
        %v1874 = vunpack.c.l.b16 %v1299
        %v1875 = vunpack.c.l.b16 %v1300
        %v1876 = vunpack.c.l.b16 %v1301
        %v1877 = vunpack.c.l.b16 %v1302
        %v1878 = vunpack.c.l.b16 %v1303
        %v1879 = vunpack.c.l.b16 %v1304
        %v1880 = vunpack.c.l.b16 %v1305
        %v1881 = vunpack.c.l.b16 %v1306
        %v1882 = vunpack.c.l.b16 %v1307
        %v1883 = vunpack.c.l.b16 %v1308
        %v1884 = vunpack.c.l.b16 %v1309
        %v1885 = vunpack.c.l.b16 %v1310
        %v1886 = vunpack.c.l.b16 %v1311
        %v1887 = vunpack.c.l.b16 %v1312
        %v1888 = vunpack.c.l.b16 %v1313
        %v1889 = vunpack.c.l.b16 %v1314
        %v1890 = vunpack.c.l.b16 %v1315
        %v1891 = vunpack.c.l.b16 %v1316
        %v1892 = vunpack.c.l.b16 %v1317
        %v1893 = vunpack.c.l.b16 %v1318
        %v1894 = vunpack.c.l.b16 %v1319
        %v1895 = vunpack.c.l.b16 %v1320
        %v1896 = vunpack.c.l.b16 %v1321
        %v1897 = vunpack.c.l.b16 %v1322
        %v1898 = vunpack.c.l.b16 %v1323
        %v1899 = vunpack.c.l.b16 %v1324
        %v1900 = vunpack.c.l.b16 %v1325
        %v1901 = vunpack.c.l.b16 %v1326
        %v1902 = vunpack.c.l.b16 %v1327
        %v1903 = vunpack.c.l.b16 %v1328
        %v1904 = vunpack.c.l.b16 %v1329
        %v1905 = vunpack.c.l.b16 %v1330
        %v1906 = vunpack.c.l.b16 %v1331
        %v1907 = vunpack.c.l.b16 %v1332
        %v1908 = vunpack.c.l.b16 %v1333
        %v1909 = vunpack.c.l.b16 %v1334
        %v1910 = vunpack.c.l.b16 %v1335
        %v1911 = vunpack.c.l.b16 %v1336
        %v1912 = vunpack.c.l.b16 %v1337
        %v1913 = vunpack.c.l.b16 %v1338
        %v1914 = vunpack.c.l.b16 %v1339
        %v1915 = vunpack.c.l.b16 %v1340
        %v1916 = vunpack.c.l.b16 %v1341
        %v1917 = vunpack.c.l.b16 %v1342
        %v1918 = vunpack.c.l.b16 %v1343
        %v1919 = vunpack.c.l.b16 %v1344
        %v1920 = vunpack.c.l.b16 %v1345
        %v1921 = vunpack.c.l.b16 %v1346
        %v1922 = vunpack.c.l.b16 %v1347
        %v1923 = vunpack.c.l.b16 %v1348
        %v1924 = vunpack.c.l.b16 %v1349
        %v1925 = vunpack.c.l.b16 %v1350
        %v1926 = vunpack.c.l.b16 %v1351
        %v1927 = vunpack.c.l.b16 %v1352
        %v1928 = vunpack.c.l.b16 %v1353
        %v1929 = vunpack.c.l.b16 %v1354
        %v1930 = vunpack.c.l.b16 %v1355
        %v1931 = vunpack.c.l.b16 %v1356
        %v1932 = vunpack.c.l.b16 %v1357
        %v1933 = vunpack.c.l.b16 %v1358
        %v1934 = vunpack.c.l.b16 %v1359
        %v1935 = vunpack.c.l.b16 %v1360
        %v1936 = vunpack.c.l.b16 %v1361
        %v1937 = vunpack.c.l.b16 %v1362
        %v1938 = vunpack.c.l.b16 %v1363
        %v1939 = vunpack.c.l.b16 %v1364
        %v1940 = vunpack.c.l.b16 %v1365
        %v1941 = vunpack.c.l.b16 %v1366
        %v1942 = vunpack.c.l.b16 %v1367
        %v1943 = vunpack.c.l.b16 %v1368
        %v1944 = vunpack.c.l.b16 %v1369
        %v1945 = vunpack.c.l.b16 %v1370
        %v1946 = vunpack.c.l.b16 %v1371
        %v1947 = vunpack.c.l.b16 %v1372
        %v1948 = vunpack.c.l.b16 %v1373
        %v1949 = vunpack.c.l.b16 %v1374
        %v1950 = vunpack.c.l.b16 %v1375
        %v1951 = vunpack.c.l.b16 %v1376
        %v1952 = vunpack.c.l.b16 %v1377
        %v1953 = vunpack.c.l.b16 %v1378
        %v1954 = vunpack.c.l.b16 %v1379
        %v1955 = vunpack.c.l.b16 %v1380
        %v1956 = vunpack.c.l.b16 %v1381
        %v1957 = vunpack.c.l.b16 %v1382
        %v1958 = vunpack.c.l.b16 %v1383
        %v1959 = vunpack.c.l.b16 %v1384
        %v1960 = vunpack.c.l.b16 %v1385
        %v1961 = vunpack.c.l.b16 %v1386
        %v1962 = vunpack.c.l.b16 %v1387
        %v1963 = vunpack.c.l.b16 %v1388
        %v1964 = vunpack.c.l.b16 %v1389
        %v1965 = vunpack.c.l.b16 %v1390
        %v1966 = vunpack.c.l.b16 %v1391
        %v1967 = vunpack.c.l.b16 %v1392
        %v1968 = vunpack.c.l.b16 %v1393
        %v1969 = vunpack.c.l.b16 %v1394
        %v1970 = vunpack.c.l.b16 %v1395
        %v1971 = vunpack.c.l.b16 %v1396
        %v1972 = vunpack.c.l.b16 %v1397
        %v1973 = vunpack.c.l.b16 %v1398
        %v1974 = vunpack.c.l.b16 %v1399
        %v1975 = vunpack.c.l.b16 %v1400
        %v1976 = vunpack.c.l.b16 %v1401
        %v1977 = vunpack.c.l.b16 %v1402
        %v1978 = vunpack.c.l.b16 %v1403
        %v1979 = vunpack.c.l.b16 %v1404
        %v1980 = vunpack.c.l.b16 %v1405
        %v1981 = vunpack.c.l.b16 %v1406
        %v1982 = vunpack.c.l.b16 %v1407
        %v1983 = vunpack.c.l.b16 %v1408
        %v1984 = vunpack.c.l.b16 %v1409
        %v1985 = vunpack.c.l.b16 %v1410
        %v1986 = vunpack.c.l.b16 %v1411
        %v1987 = vunpack.c.l.b16 %v1412
        %v1988 = vunpack.c.l.b16 %v1413
        %v1989 = vunpack.c.l.b16 %v1414
        %v1990 = vunpack.c.l.b16 %v1415
        %v1991 = vunpack.c.l.b16 %v1416
        %v1992 = vunpack.c.l.b16 %v1417
        %v1993 = vunpack.c.l.b16 %v1418
        %v1994 = vunpack.c.l.b16 %v1419
        %v1995 = vunpack.c.l.b16 %v1420
        %v1996 = vunpack.c.l.b16 %v1421
        %v1997 = vunpack.c.l.b16 %v1422
        %v1998 = vunpack.c.l.b16 %v1423
        %v1999 = vunpack.c.l.b16 %v1424
        %v2000 = vunpack.c.l.b16 %v1425
        %v2001 = vunpack.c.l.b16 %v1426
        %v2002 = vunpack.c.l.b16 %v1427
        %v2003 = vunpack.c.l.b16 %v1428
        %v2004 = vunpack.c.l.b16 %v1429
        %v2005 = vunpack.c.l.b16 %v1430
        %v2006 = vunpack.c.l.b16 %v1431
        %v2007 = vunpack.c.l.b16 %v1432
        %v2008 = vunpack.c.l.b16 %v1433
        %v2009 = vunpack.c.l.b16 %v1434
        %v2010 = vunpack.c.l.b16 %v1435
        %v2011 = vunpack.c.l.b16 %v1436
        %v2012 = vunpack.c.l.b16 %v1437
        %v2013 = vunpack.c.l.b16 %v1438
        %v2014 = vunpack.c.l.b16 %v1439
        %v2015 = vunpack.c.l.b16 %v1440
        %v2016 = vunpack.c.l.b16 %v1441
        %v2017 = vunpack.c.l.b16 %v1442
        %v2018 = vunpack.c.l.b16 %v1443
        %v2019 = vunpack.c.l.b16 %v1444
        %v2020 = vunpack.c.l.b16 %v1445
        %v2021 = vunpack.c.l.b16 %v1446
        %v2022 = vunpack.c.l.b16 %v1447
        %v2023 = vunpack.c.l.b16 %v1448
        %v2024 = vunpack.c.l.b16 %v1449
        %v2025 = vunpack.c.l.b16 %v1450
        %v2026 = vunpack.c.l.b16 %v1451
        %v2027 = vunpack.c.l.b16 %v1452
        %v2028 = vunpack.c.l.b16 %v1453
        %v2029 = vunpack.c.l.b16 %v1454
        %v2030 = vunpack.c.l.b16 %v1455
        %v2031 = vunpack.c.l.b16 %v1456
        %v2032 = vunpack.c.l.b16 %v1457
        %v2033 = vunpack.c.l.b16 %v1458
        %v2034 = vunpack.c.l.b16 %v1459
        %v2035 = vunpack.c.l.b16 %v1460
        %v2036 = vunpack.c.l.b16 %v1461
        %v2037 = vunpack.c.l.b16 %v1462
        %v2038 = vunpack.c.l.b16 %v1463
        %v2039 = vunpack.c.l.b16 %v1464
        %v2040 = vunpack.c.l.b16 %v1465
        %v2041 = vunpack.c.l.b16 %v1466
        %v2042 = vunpack.c.l.b16 %v1467
        %v2043 = vunpack.c.l.b16 %v1468
        %v2044 = vunpack.c.l.b16 %v1469
        %v2045 = vunpack.c.l.b16 %v1470
        %v2046 = vunpack.c.l.b16 %v1471
        %v2047 = vunpack.c.l.b16 %v1472
        %v2048 = vunpack.c.l.b16 %v1473
        %v2049 = vunpack.c.l.b16 %v1474
        %v2050 = vunpack.c.l.b16 %v1475
        %v2051 = vunpack.c.l.b16 %v1476
        %v2052 = vunpack.c.l.b16 %v1477
        %v2053 = vunpack.c.l.b16 %v1478
        %v2054 = vunpack.c.l.b16 %v1479
        %v2055 = vunpack.c.l.b16 %v1480
        %v2056 = vunpack.c.l.b16 %v1481
        %v2057 = vunpack.c.l.b16 %v1482
        %v2058 = vunpack.c.l.b16 %v1483
        %v2059 = vunpack.c.l.b16 %v1484
        %v2060 = vunpack.c.l.b16 %v1485
        %v2061 = vunpack.c.l.b16 %v1486
        %v2062 = vunpack.c.l.b16 %v1487
        %v2063 = vunpack.c.l.b16 %v1488
        %v2064 = vunpack.c.l.b16 %v1489
        %v2065 = vunpack.c.l.b16 %v1490
        %v2066 = vunpack.c.l.b16 %v1491
        %v2067 = vunpack.c.l.b16 %v1492
        %v2068 = vunpack.c.l.b16 %v1493
        %v2069 = vunpack.c.l.b16 %v1494
        %v2070 = vunpack.c.l.b16 %v1495
        %v2071 = vunpack.c.l.b16 %v1496
        %v2072 = vunpack.c.l.b16 %v1497
        %v2073 = vunpack.c.l.b16 %v1498
        %v2074 = vunpack.c.l.b16 %v1499
        %v2075 = vunpack.c.l.b16 %v1500
        %v2076 = vunpack.c.l.b16 %v1501
        %v2077 = vunpack.c.l.b16 %v1502
        %v2078 = vunpack.c.l.b16 %v1503
        %v2079 = vunpack.c.l.b16 %v1504
        %v2080 = vunpack.c.l.b16 %v1505
        %v2081 = vunpack.c.l.b16 %v1506
        %v2082 = vunpack.c.l.b16 %v1507
        %v2083 = vunpack.c.l.b16 %v1508
        %v2084 = vunpack.c.l.b16 %v1509
        %v2085 = vunpack.c.l.b16 %v1510
        %v2086 = vunpack.c.l.b16 %v1511
        %v2087 = vunpack.c.l.b16 %v1512
        %v2088 = vunpack.c.l.b16 %v1513
        %v2089 = vunpack.c.l.b16 %v1514
        %v2090 = vunpack.c.l.b16 %v1515
        %v2091 = vunpack.c.l.b16 %v1516
        %v2092 = vunpack.c.l.b16 %v1517
        %v2093 = vunpack.c.l.b16 %v1518
        %v2094 = vunpack.c.l.b16 %v1519
        %v2095 = vunpack.c.l.b16 %v1520
        %v2096 = vunpack.c.l.b16 %v1521
        %v2097 = vunpack.c.l.b16 %v1522
        %v2098 = vunpack.c.l.b16 %v1523
        %v2099 = vunpack.c.l.b16 %v1524
        %v2100 = vunpack.c.l.b16 %v1525
        %v2101 = vunpack.c.l.b16 %v1526
        %v2102 = vunpack.c.l.b16 %v1527
        %v2103 = vunpack.c.l.b16 %v1528
        %v2104 = vunpack.c.l.b16 %v1529
        %v2105 = vunpack.c.l.b16 %v1530
        %v2106 = vunpack.c.l.b16 %v1531
        %v2107 = vunpack.c.l.b16 %v1532
        %v2108 = vunpack.c.l.b16 %v1533
        %v2109 = vunpack.c.l.b16 %v1534
        %v2110 = vunpack.c.l.b16 %v1535
        %v2111 = vunpack.c.l.b16 %v1536
        %v2112 = vunpack.c.l.b16 %v1537
        %v2113 = vunpack.c.l.b16 %v1538
        %v2114 = vunpack.c.l.b16 %v1539
        %v2115 = vunpack.c.l.b16 %v1540
        %v2116 = vunpack.c.l.b16 %v1541
        %v2117 = vunpack.c.l.b16 %v1542
        %v2118 = vunpack.c.l.b16 %v1543
        %v2119 = vunpack.c.l.b16 %v1544
        %v2120 = vunpack.c.l.b16 %v1545
        %v2121 = vunpack.c.l.b16 %v1546
        %v2122 = vunpack.c.l.b16 %v1547
        %v2123 = vunpack.c.l.b16 %v1548
        %v2124 = vunpack.c.l.b16 %v1549
        %v2125 = vunpack.c.l.b16 %v1550
        %v2126 = vpack.c.b16 %v1871, %v1870
        %v2127 = vpack.c.b16 %v1873, %v1872
        %v2128 = vpack.c.b16 %v1875, %v1874
        %v2129 = vpack.c.b16 %v1877, %v1876
        %v2130 = vpack.c.b16 %v1879, %v1878
        %v2131 = vpack.c.b16 %v1881, %v1880
        %v2132 = vpack.c.b16 %v1883, %v1882
        %v2133 = vpack.c.b16 %v1885, %v1884
        %v2134 = vpack.c.b16 %v1887, %v1886
        %v2135 = vpack.c.b16 %v1889, %v1888
        %v2136 = vpack.c.b16 %v1891, %v1890
        %v2137 = vpack.c.b16 %v1893, %v1892
        %v2138 = vpack.c.b16 %v1895, %v1894
        %v2139 = vpack.c.b16 %v1897, %v1896
        %v2140 = vpack.c.b16 %v1899, %v1898
        %v2141 = vpack.c.b16 %v1901, %v1900
        %v2142 = vpack.c.b16 %v1903, %v1902
        %v2143 = vpack.c.b16 %v1905, %v1904
        %v2144 = vpack.c.b16 %v1907, %v1906
        %v2145 = vpack.c.b16 %v1909, %v1908
        %v2146 = vpack.c.b16 %v1911, %v1910
        %v2147 = vpack.c.b16 %v1913, %v1912
        %v2148 = vpack.c.b16 %v1915, %v1914
        %v2149 = vpack.c.b16 %v1917, %v1916
        %v2150 = vpack.c.b16 %v1919, %v1918
        %v2151 = vpack.c.b16 %v1921, %v1920
        %v2152 = vpack.c.b16 %v1923, %v1922
        %v2153 = vpack.c.b16 %v1925, %v1924
        %v2154 = vpack.c.b16 %v1927, %v1926
        %v2155 = vpack.c.b16 %v1929, %v1928
        %v2156 = vpack.c.b16 %v1931, %v1930
        %v2157 = vpack.c.b16 %v1933, %v1932
        %v2158 = vpack.c.b16 %v1935, %v1934
        %v2159 = vpack.c.b16 %v1937, %v1936
        %v2160 = vpack.c.b16 %v1939, %v1938
        %v2161 = vpack.c.b16 %v1941, %v1940
        %v2162 = vpack.c.b16 %v1943, %v1942
        %v2163 = vpack.c.b16 %v1945, %v1944
        %v2164 = vpack.c.b16 %v1947, %v1946
        %v2165 = vpack.c.b16 %v1949, %v1948
        %v2166 = vpack.c.b16 %v1951, %v1950
        %v2167 = vpack.c.b16 %v1953, %v1952
        %v2168 = vpack.c.b16 %v1955, %v1954
        %v2169 = vpack.c.b16 %v1957, %v1956
        %v2170 = vpack.c.b16 %v1959, %v1958
        %v2171 = vpack.c.b16 %v1961, %v1960
        %v2172 = vpack.c.b16 %v1963, %v1962
        %v2173 = vpack.c.b16 %v1965, %v1964
        %v2174 = vpack.c.b16 %v1967, %v1966
        %v2175 = vpack.c.b16 %v1969, %v1968
        %v2176 = vpack.c.b16 %v1971, %v1970
        %v2177 = vpack.c.b16 %v1973, %v1972
        %v2178 = vpack.c.b16 %v1975, %v1974
        %v2179 = vpack.c.b16 %v1977, %v1976
        %v2180 = vpack.c.b16 %v1979, %v1978
        %v2181 = vpack.c.b16 %v1981, %v1980
        %v2182 = vpack.c.b16 %v1983, %v1982
        %v2183 = vpack.c.b16 %v1985, %v1984
        %v2184 = vpack.c.b16 %v1987, %v1986
        %v2185 = vpack.c.b16 %v1989, %v1988
        %v2186 = vpack.c.b16 %v1991, %v1990
        %v2187 = vpack.c.b16 %v1993, %v1992
        %v2188 = vpack.c.b16 %v1995, %v1994
        %v2189 = vpack.c.b16 %v1997, %v1996
        %v2190 = vpack.c.b16 %v1999, %v1998
        %v2191 = vpack.c.b16 %v2001, %v2000
        %v2192 = vpack.c.b16 %v2003, %v2002
        %v2193 = vpack.c.b16 %v2005, %v2004
        %v2194 = vpack.c.b16 %v2007, %v2006
        %v2195 = vpack.c.b16 %v2009, %v2008
        %v2196 = vpack.c.b16 %v2011, %v2010
        %v2197 = vpack.c.b16 %v2013, %v2012
        %v2198 = vpack.c.b16 %v2015, %v2014
        %v2199 = vpack.c.b16 %v2017, %v2016
        %v2200 = vpack.c.b16 %v2019, %v2018
        %v2201 = vpack.c.b16 %v2021, %v2020
        %v2202 = vpack.c.b16 %v2023, %v2022
        %v2203 = vpack.c.b16 %v2025, %v2024
        %v2204 = vpack.c.b16 %v2027, %v2026
        %v2205 = vpack.c.b16 %v2029, %v2028
        %v2206 = vpack.c.b16 %v2031, %v2030
        %v2207 = vpack.c.b16 %v2033, %v2032
        %v2208 = vpack.c.b16 %v2035, %v2034
        %v2209 = vpack.c.b16 %v2037, %v2036
        %v2210 = vpack.c.b16 %v2039, %v2038
        %v2211 = vpack.c.b16 %v2041, %v2040
        %v2212 = vpack.c.b16 %v2043, %v2042
        %v2213 = vpack.c.b16 %v2045, %v2044
        %v2214 = vpack.c.b16 %v2047, %v2046
        %v2215 = vpack.c.b16 %v2049, %v2048
        %v2216 = vpack.c.b16 %v2051, %v2050
        %v2217 = vpack.c.b16 %v2053, %v2052
        %v2218 = vpack.c.b16 %v2055, %v2054
        %v2219 = vpack.c.b16 %v2057, %v2056
        %v2220 = vpack.c.b16 %v2059, %v2058
        %v2221 = vpack.c.b16 %v2061, %v2060
        %v2222 = vpack.c.b16 %v2063, %v2062
        %v2223 = vpack.c.b16 %v2065, %v2064
        %v2224 = vpack.c.b16 %v2067, %v2066
        %v2225 = vpack.c.b16 %v2069, %v2068
        %v2226 = vpack.c.b16 %v2071, %v2070
        %v2227 = vpack.c.b16 %v2073, %v2072
        %v2228 = vpack.c.b16 %v2075, %v2074
        %v2229 = vpack.c.b16 %v2077, %v2076
        %v2230 = vpack.c.b16 %v2079, %v2078
        %v2231 = vpack.c.b16 %v2081, %v2080
        %v2232 = vpack.c.b16 %v2083, %v2082
        %v2233 = vpack.c.b16 %v2085, %v2084
        %v2234 = vpack.c.b16 %v2087, %v2086
        %v2235 = vpack.c.b16 %v2089, %v2088
        %v2236 = vpack.c.b16 %v2091, %v2090
        %v2237 = vpack.c.b16 %v2093, %v2092
        %v2238 = vpack.c.b16 %v2095, %v2094
        %v2239 = vpack.c.b16 %v2097, %v2096
        %v2240 = vpack.c.b16 %v2099, %v2098
        %v2241 = vpack.c.b16 %v2101, %v2100
        %v2242 = vpack.c.b16 %v2103, %v2102
        %v2243 = vpack.c.b16 %v2105, %v2104
        %v2244 = vpack.c.b16 %v2107, %v2106
        %v2245 = vpack.c.b16 %v2109, %v2108
        %v2246 = vpack.c.b16 %v2111, %v2110
        %v2247 = vpack.c.b16 %v2113, %v2112
        %v2248 = vpack.c.b16 %v2115, %v2114
        %v2249 = vpack.c.b16 %v2117, %v2116
        %v2250 = vpack.c.b16 %v2119, %v2118
        %v2251 = vpack.c.b16 %v2121, %v2120
        %v2252 = vpack.c.b16 %v2123, %v2122
        %v2253 = vpack.c.b16 %v2125, %v2124
        %2382 = vmatprep.subr.bf16.mxu0 0
        %2383 = vmatpush1.bf16.msra.mxu0 %v2126
        %2384 = vmatprep.subr.bf16.mxu0 0
        %2385 = vmatpush1.bf16.msra.mxu0 %v2127
        %2386 = vmatprep.subr.bf16.mxu0 0
        %2387 = vmatpush1.bf16.msra.mxu0 %v2128
        %2388 = vmatprep.subr.bf16.mxu0 0
        %2389 = vmatpush1.bf16.msra.mxu0 %v2129
        %2390 = vmatprep.subr.bf16.mxu0 0
        %2391 = vmatpush1.bf16.msra.mxu0 %v2130
        %2392 = vmatprep.subr.bf16.mxu0 0
        %2393 = vmatpush1.bf16.msra.mxu0 %v2131
        %2394 = vmatprep.subr.bf16.mxu0 0
        %2395 = vmatpush1.bf16.msra.mxu0 %v2132
        %2396 = vmatprep.subr.bf16.mxu0 0
        %2397 = vmatpush1.bf16.msra.mxu0 %v2133
        %2398 = vmatprep.subr.bf16.mxu0 0
        %2399 = vmatpush1.bf16.msra.mxu0 %v2134
        %2400 = vmatprep.subr.bf16.mxu0 0
        %2401 = vmatpush1.bf16.msra.mxu0 %v2135
        %2402 = vmatprep.subr.bf16.mxu0 0
        %2403 = vmatpush1.bf16.msra.mxu0 %v2136
        %2404 = vmatprep.subr.bf16.mxu0 0
        %2405 = vmatpush1.bf16.msra.mxu0 %v2137
        %2406 = vmatprep.subr.bf16.mxu0 0
        %2407 = vmatpush1.bf16.msra.mxu0 %v2138
        %2408 = vmatprep.subr.bf16.mxu0 0
        %2409 = vmatpush1.bf16.msra.mxu0 %v2139
        %2410 = vmatprep.subr.bf16.mxu0 0
        %2411 = vmatpush1.bf16.msra.mxu0 %v2140
        %2412 = vmatprep.subr.bf16.mxu0 0
        %2413 = vmatpush1.bf16.msra.mxu0 %v2141
        %2414 = vmatprep.mubr.bf16.mxu0 %v1583
        %2415 = vmatmul.mubr.bf16.gmra.mrb[0].mxu0 %v1582
        %v2416 = vpop.f32.mrb[0].mxu0
        %v2417 = vadd.f32 %v1556, %v2416
        %v2418 = vpop.f32.mrb[0].mxu0
        %v2419 = vpop.f32.mrb[0].mxu0
        %v2420 = vpop.f32.mrb[0].mxu0
        %2421 = vdwg.mxu0
        %2422 = vmatprep.subr.bf16.mxu0 0
        %2423 = vmatpush1.bf16.msra.mxu0 %v2142
        %2424 = vmatprep.subr.bf16.mxu0 0
        %2425 = vmatpush1.bf16.msra.mxu0 %v2143
        %2426 = vmatprep.subr.bf16.mxu0 0
        %2427 = vmatpush1.bf16.msra.mxu0 %v2144
        %2428 = vmatprep.subr.bf16.mxu0 0
        %2429 = vmatpush1.bf16.msra.mxu0 %v2145
        %2430 = vmatprep.subr.bf16.mxu0 0
        %2431 = vmatpush1.bf16.msra.mxu0 %v2146
        %2432 = vmatprep.subr.bf16.mxu0 0
        %2433 = vmatpush1.bf16.msra.mxu0 %v2147
        %2434 = vmatprep.subr.bf16.mxu0 0
        %2435 = vmatpush1.bf16.msra.mxu0 %v2148
        %2436 = vmatprep.subr.bf16.mxu0 0
        %2437 = vmatpush1.bf16.msra.mxu0 %v2149
        %2438 = vmatprep.subr.bf16.mxu0 0
        %2439 = vmatpush1.bf16.msra.mxu0 %v2150
        %2440 = vmatprep.subr.bf16.mxu0 0
        %2441 = vmatpush1.bf16.msra.mxu0 %v2151
        %2442 = vmatprep.subr.bf16.mxu0 0
        %2443 = vmatpush1.bf16.msra.mxu0 %v2152
        %2444 = vmatprep.subr.bf16.mxu0 0
        %2445 = vmatpush1.bf16.msra.mxu0 %v2153
        %2446 = vmatprep.subr.bf16.mxu0 0
        %2447 = vmatpush1.bf16.msra.mxu0 %v2154
        %2448 = vmatprep.subr.bf16.mxu0 0
        %2449 = vmatpush1.bf16.msra.mxu0 %v2155
        %2450 = vmatprep.subr.bf16.mxu0 0
        %2451 = vmatpush1.bf16.msra.mxu0 %v2156
        %2452 = vmatprep.subr.bf16.mxu0 0
        %2453 = vmatpush1.bf16.msra.mxu0 %v2157
        %2454 = vmatprep.mubr.bf16.mxu0 %v1585
        %2455 = vmatmul.mubr.bf16.gmra.mrb[0].mxu0 %v1584
        %v2456 = vpop.f32.mrb[0].mxu0
        %v2457 = vadd.f32 %v2417, %v2456
        %v2458 = vpop.f32.mrb[0].mxu0
        %v2459 = vpop.f32.mrb[0].mxu0
        %v2460 = vpop.f32.mrb[0].mxu0
        %2461 = vdwg.mxu0
        %2462 = vmatprep.subr.bf16.mxu0 0
        %2463 = vmatpush1.bf16.msra.mxu0 %v2158
        %2464 = vmatprep.subr.bf16.mxu0 0
        %2465 = vmatpush1.bf16.msra.mxu0 %v2159
        %2466 = vmatprep.subr.bf16.mxu0 0
        %2467 = vmatpush1.bf16.msra.mxu0 %v2160
        %2468 = vmatprep.subr.bf16.mxu0 0
        %2469 = vmatpush1.bf16.msra.mxu0 %v2161
        %2470 = vmatprep.subr.bf16.mxu0 0
        %2471 = vmatpush1.bf16.msra.mxu0 %v2162
        %2472 = vmatprep.subr.bf16.mxu0 0
        %2473 = vmatpush1.bf16.msra.mxu0 %v2163
        %2474 = vmatprep.subr.bf16.mxu0 0
        %2475 = vmatpush1.bf16.msra.mxu0 %v2164
        %2476 = vmatprep.subr.bf16.mxu0 0
        %2477 = vmatpush1.bf16.msra.mxu0 %v2165
        %2478 = vmatprep.subr.bf16.mxu0 0
        %2479 = vmatpush1.bf16.msra.mxu0 %v2166
        %2480 = vmatprep.subr.bf16.mxu0 0
        %2481 = vmatpush1.bf16.msra.mxu0 %v2167
        %2482 = vmatprep.subr.bf16.mxu0 0
        %2483 = vmatpush1.bf16.msra.mxu0 %v2168
        %2484 = vmatprep.subr.bf16.mxu0 0
        %2485 = vmatpush1.bf16.msra.mxu0 %v2169
        %2486 = vmatprep.subr.bf16.mxu0 0
        %2487 = vmatpush1.bf16.msra.mxu0 %v2170
        %2488 = vmatprep.subr.bf16.mxu0 0
        %2489 = vmatpush1.bf16.msra.mxu0 %v2171
        %2490 = vmatprep.subr.bf16.mxu0 0
        %2491 = vmatpush1.bf16.msra.mxu0 %v2172
        %2492 = vmatprep.subr.bf16.mxu0 0
        %2493 = vmatpush1.bf16.msra.mxu0 %v2173
        %2494 = vmatprep.mubr.bf16.mxu0 %v1587
        %2495 = vmatmul.mubr.bf16.gmra.mrb[0].mxu0 %v1586
        %v2496 = vpop.f32.mrb[0].mxu0
        %v2497 = vadd.f32 %v2457, %v2496
        %v2498 = vpop.f32.mrb[0].mxu0
        %v2499 = vpop.f32.mrb[0].mxu0
        %v2500 = vpop.f32.mrb[0].mxu0
        %2501 = vdwg.mxu0
        %2502 = vmatprep.subr.bf16.mxu0 0
        %2503 = vmatpush1.bf16.msra.mxu0 %v2174
        %2504 = vmatprep.subr.bf16.mxu0 0
        %2505 = vmatpush1.bf16.msra.mxu0 %v2175
        %2506 = vmatprep.subr.bf16.mxu0 0
        %2507 = vmatpush1.bf16.msra.mxu0 %v2176
        %2508 = vmatprep.subr.bf16.mxu0 0
        %2509 = vmatpush1.bf16.msra.mxu0 %v2177
        %2510 = vmatprep.subr.bf16.mxu0 0
        %2511 = vmatpush1.bf16.msra.mxu0 %v2178
        %2512 = vmatprep.subr.bf16.mxu0 0
        %2513 = vmatpush1.bf16.msra.mxu0 %v2179
        %2514 = vmatprep.subr.bf16.mxu0 0
        %2515 = vmatpush1.bf16.msra.mxu0 %v2180
        %2516 = vmatprep.subr.bf16.mxu0 0
        %2517 = vmatpush1.bf16.msra.mxu0 %v2181
        %2518 = vmatprep.subr.bf16.mxu0 0
        %2519 = vmatpush1.bf16.msra.mxu0 %v2182
        %2520 = vmatprep.subr.bf16.mxu0 0
        %2521 = vmatpush1.bf16.msra.mxu0 %v2183
        %2522 = vmatprep.subr.bf16.mxu0 0
        %2523 = vmatpush1.bf16.msra.mxu0 %v2184
        %2524 = vmatprep.subr.bf16.mxu0 0
        %2525 = vmatpush1.bf16.msra.mxu0 %v2185
        %2526 = vmatprep.subr.bf16.mxu0 0
        %2527 = vmatpush1.bf16.msra.mxu0 %v2186
        %2528 = vmatprep.subr.bf16.mxu0 0
        %2529 = vmatpush1.bf16.msra.mxu0 %v2187
        %2530 = vmatprep.subr.bf16.mxu0 0
        %2531 = vmatpush1.bf16.msra.mxu0 %v2188
        %2532 = vmatprep.subr.bf16.mxu0 0
        %2533 = vmatpush1.bf16.msra.mxu0 %v2189
        %2534 = vmatprep.mubr.bf16.mxu0 %v1589
        %2535 = vmatmul.mubr.bf16.gmra.mrb[0].mxu0 %v1588
        %v2536 = vpop.f32.mrb[0].mxu0
        %v2537 = vadd.f32 %v2497, %v2536
        %v2538 = vpop.f32.mrb[0].mxu0
        %v2539 = vpop.f32.mrb[0].mxu0
        %v2540 = vpop.f32.mrb[0].mxu0
        %2541 = vdwg.mxu0
        %2542 = vmatprep.subr.bf16.mxu0 0
        %2543 = vmatpush1.bf16.msra.mxu0 %v2190
        %2544 = vmatprep.subr.bf16.mxu0 0
        %2545 = vmatpush1.bf16.msra.mxu0 %v2191
        %2546 = vmatprep.subr.bf16.mxu0 0
        %2547 = vmatpush1.bf16.msra.mxu0 %v2192
        %2548 = vmatprep.subr.bf16.mxu0 0
        %2549 = vmatpush1.bf16.msra.mxu0 %v2193
        %2550 = vmatprep.subr.bf16.mxu0 0
        %2551 = vmatpush1.bf16.msra.mxu0 %v2194
        %2552 = vmatprep.subr.bf16.mxu0 0
        %2553 = vmatpush1.bf16.msra.mxu0 %v2195
        %2554 = vmatprep.subr.bf16.mxu0 0
        %2555 = vmatpush1.bf16.msra.mxu0 %v2196
        %2556 = vmatprep.subr.bf16.mxu0 0
        %2557 = vmatpush1.bf16.msra.mxu0 %v2197
        %2558 = vmatprep.subr.bf16.mxu0 0
        %2559 = vmatpush1.bf16.msra.mxu0 %v2198
        %2560 = vmatprep.subr.bf16.mxu0 0
        %2561 = vmatpush1.bf16.msra.mxu0 %v2199
        %2562 = vmatprep.subr.bf16.mxu0 0
        %2563 = vmatpush1.bf16.msra.mxu0 %v2200
        %2564 = vmatprep.subr.bf16.mxu0 0
        %2565 = vmatpush1.bf16.msra.mxu0 %v2201
        %2566 = vmatprep.subr.bf16.mxu0 0
        %2567 = vmatpush1.bf16.msra.mxu0 %v2202
        %2568 = vmatprep.subr.bf16.mxu0 0
        %2569 = vmatpush1.bf16.msra.mxu0 %v2203
        %2570 = vmatprep.subr.bf16.mxu0 0
        %2571 = vmatpush1.bf16.msra.mxu0 %v2204
        %2572 = vmatprep.subr.bf16.mxu0 0
        %2573 = vmatpush1.bf16.msra.mxu0 %v2205
        %2574 = vmatprep.mubr.bf16.mxu0 %v1591
        %2575 = vmatmul.mubr.bf16.gmra.mrb[0].mxu0 %v1590
        %v2576 = vpop.f32.mrb[0].mxu0
        %v2577 = vadd.f32 %v2537, %v2576
        %v2578 = vpop.f32.mrb[0].mxu0
        %v2579 = vpop.f32.mrb[0].mxu0
        %v2580 = vpop.f32.mrb[0].mxu0
        %2581 = vdwg.mxu0
        %2582 = vmatprep.subr.bf16.mxu0 0
        %2583 = vmatpush1.bf16.msra.mxu0 %v2206
        %2584 = vmatprep.subr.bf16.mxu0 0
        %2585 = vmatpush1.bf16.msra.mxu0 %v2207
        %2586 = vmatprep.subr.bf16.mxu0 0
        %2587 = vmatpush1.bf16.msra.mxu0 %v2208
        %2588 = vmatprep.subr.bf16.mxu0 0
        %2589 = vmatpush1.bf16.msra.mxu0 %v2209
        %2590 = vmatprep.subr.bf16.mxu0 0
        %2591 = vmatpush1.bf16.msra.mxu0 %v2210
        %2592 = vmatprep.subr.bf16.mxu0 0
        %2593 = vmatpush1.bf16.msra.mxu0 %v2211
        %2594 = vmatprep.subr.bf16.mxu0 0
        %2595 = vmatpush1.bf16.msra.mxu0 %v2212
        %2596 = vmatprep.subr.bf16.mxu0 0
        %2597 = vmatpush1.bf16.msra.mxu0 %v2213
        %2598 = vmatprep.subr.bf16.mxu0 0
        %2599 = vmatpush1.bf16.msra.mxu0 %v2214
        %2600 = vmatprep.subr.bf16.mxu0 0
        %2601 = vmatpush1.bf16.msra.mxu0 %v2215
        %2602 = vmatprep.subr.bf16.mxu0 0
        %2603 = vmatpush1.bf16.msra.mxu0 %v2216
        %2604 = vmatprep.subr.bf16.mxu0 0
        %2605 = vmatpush1.bf16.msra.mxu0 %v2217
        %2606 = vmatprep.subr.bf16.mxu0 0
        %2607 = vmatpush1.bf16.msra.mxu0 %v2218
        %2608 = vmatprep.subr.bf16.mxu0 0
        %2609 = vmatpush1.bf16.msra.mxu0 %v2219
        %2610 = vmatprep.subr.bf16.mxu0 0
        %2611 = vmatpush1.bf16.msra.mxu0 %v2220
        %2612 = vmatprep.subr.bf16.mxu0 0
        %2613 = vmatpush1.bf16.msra.mxu0 %v2221
        %2614 = vmatprep.mubr.bf16.mxu0 %v1593
        %2615 = vmatmul.mubr.bf16.gmra.mrb[0].mxu0 %v1592
        %v2616 = vpop.f32.mrb[0].mxu0
        %v2617 = vadd.f32 %v2577, %v2616
        %v2618 = vpop.f32.mrb[0].mxu0
        %v2619 = vpop.f32.mrb[0].mxu0
        %v2620 = vpop.f32.mrb[0].mxu0
        %2621 = vdwg.mxu0
        %2622 = vmatprep.subr.bf16.mxu0 0
        %2623 = vmatpush1.bf16.msra.mxu0 %v2222
        %2624 = vmatprep.subr.bf16.mxu0 0
        %2625 = vmatpush1.bf16.msra.mxu0 %v2223
        %2626 = vmatprep.subr.bf16.mxu0 0
        %2627 = vmatpush1.bf16.msra.mxu0 %v2224
        %2628 = vmatprep.subr.bf16.mxu0 0
        %2629 = vmatpush1.bf16.msra.mxu0 %v2225
        %2630 = vmatprep.subr.bf16.mxu0 0
        %2631 = vmatpush1.bf16.msra.mxu0 %v2226
        %2632 = vmatprep.subr.bf16.mxu0 0
        %2633 = vmatpush1.bf16.msra.mxu0 %v2227
        %2634 = vmatprep.subr.bf16.mxu0 0
        %2635 = vmatpush1.bf16.msra.mxu0 %v2228
        %2636 = vmatprep.subr.bf16.mxu0 0
        %2637 = vmatpush1.bf16.msra.mxu0 %v2229
        %2638 = vmatprep.subr.bf16.mxu0 0
        %2639 = vmatpush1.bf16.msra.mxu0 %v2230
        %2640 = vmatprep.subr.bf16.mxu0 0
        %2641 = vmatpush1.bf16.msra.mxu0 %v2231
        %2642 = vmatprep.subr.bf16.mxu0 0
        %2643 = vmatpush1.bf16.msra.mxu0 %v2232
        %2644 = vmatprep.subr.bf16.mxu0 0
        %2645 = vmatpush1.bf16.msra.mxu0 %v2233
        %2646 = vmatprep.subr.bf16.mxu0 0
        %2647 = vmatpush1.bf16.msra.mxu0 %v2234
        %2648 = vmatprep.subr.bf16.mxu0 0
        %2649 = vmatpush1.bf16.msra.mxu0 %v2235
        %2650 = vmatprep.subr.bf16.mxu0 0
        %2651 = vmatpush1.bf16.msra.mxu0 %v2236
        %2652 = vmatprep.subr.bf16.mxu0 0
        %2653 = vmatpush1.bf16.msra.mxu0 %v2237
        %2654 = vmatprep.mubr.bf16.mxu0 %v1595
        %2655 = vmatmul.mubr.bf16.gmra.mrb[0].mxu0 %v1594
        %v2656 = vpop.f32.mrb[0].mxu0
        %v2657 = vadd.f32 %v2617, %v2656
        %v2658 = vpop.f32.mrb[0].mxu0
        %v2659 = vpop.f32.mrb[0].mxu0
        %v2660 = vpop.f32.mrb[0].mxu0
        %2661 = vdwg.mxu0
        %2662 = vmatprep.subr.bf16.mxu0 0
        %2663 = vmatpush1.bf16.msra.mxu0 %v2238
        %2664 = vmatprep.subr.bf16.mxu0 0
        %2665 = vmatpush1.bf16.msra.mxu0 %v2239
        %2666 = vmatprep.subr.bf16.mxu0 0
        %2667 = vmatpush1.bf16.msra.mxu0 %v2240
        %2668 = vmatprep.subr.bf16.mxu0 0
        %2669 = vmatpush1.bf16.msra.mxu0 %v2241
        %2670 = vmatprep.subr.bf16.mxu0 0
        %2671 = vmatpush1.bf16.msra.mxu0 %v2242
        %2672 = vmatprep.subr.bf16.mxu0 0
        %2673 = vmatpush1.bf16.msra.mxu0 %v2243
        %2674 = vmatprep.subr.bf16.mxu0 0
        %2675 = vmatpush1.bf16.msra.mxu0 %v2244
        %2676 = vmatprep.subr.bf16.mxu0 0
        %2677 = vmatpush1.bf16.msra.mxu0 %v2245
        %2678 = vmatprep.subr.bf16.mxu0 0
        %2679 = vmatpush1.bf16.msra.mxu0 %v2246
        %2680 = vmatprep.subr.bf16.mxu0 0
        %2681 = vmatpush1.bf16.msra.mxu0 %v2247
        %2682 = vmatprep.subr.bf16.mxu0 0
        %2683 = vmatpush1.bf16.msra.mxu0 %v2248
        %2684 = vmatprep.subr.bf16.mxu0 0
        %2685 = vmatpush1.bf16.msra.mxu0 %v2249
        %2686 = vmatprep.subr.bf16.mxu0 0
        %2687 = vmatpush1.bf16.msra.mxu0 %v2250
        %2688 = vmatprep.subr.bf16.mxu0 0
        %2689 = vmatpush1.bf16.msra.mxu0 %v2251
        %2690 = vmatprep.subr.bf16.mxu0 0
        %2691 = vmatpush1.bf16.msra.mxu0 %v2252
        %2692 = vmatprep.subr.bf16.mxu0 0
        %2693 = vmatpush1.bf16.msra.mxu0 %v2253
        %2694 = vmatprep.mubr.bf16.mxu0 %v1597
        %2695 = vmatmul.mubr.bf16.gmra.mrb[0].mxu0 %v1596
        %v2696 = vpop.f32.mrb[0].mxu0
        %v2697 = vadd.f32 %v2657, %v2696
        %v2698 = vpop.f32.mrb[0].mxu0
        %v2699 = vpop.f32.mrb[0].mxu0
        %v2700 = vpop.f32.mrb[0].mxu0
        %2701 = vdwg.mxu0
        %v2702 = vmax.f32 %v2697, 0.0
        %v2703 = vpack.c.bf16 %v2702, %v2702
        %2704 = vst [vmem:[%s1285] sm:$0xf] %v2703
        %p2705 = scmp.lt.s32.totalorder %s18, 0
        %s2706 = scalar_select %p2705, %s18, 0
        %p2707 = scmp.lt.s32.totalorder %s19, 1
        %s2708 = scalar_select %p2707, %s19, 1
        %s2709 = smul.addr %s2706, 2
        %s2710 = sadd.s32 %s2708, %s2709
        %s2711 = smul.addr %s2710, 4
        %s2712 = scalar_lea.vmem %s3, %s2711
        // Predicated region
        $region74: #{model_image_scratch_forward.8} parent=68 // pred_check
          %p2713 = pneg %p124
        $region75: #{model_image_scratch_forward.8} parent=68 // pred_check_branch
          %2715 = sbr.rel (%p2713) target = $region77
        $region76: #{model_image_scratch_forward.8} parent=68 // pred_region
          _
        $region77: #{model_image_scratch_forward.8} parent=68 // pred_fallthru
          _
      $region69: #{model_image_scratch_forward.8} parent=5 // pred_fallthru
        _
      %p2716 = scmp.le.s32.totalorder 2, %s9
      // Predicated region
      $region78: #{model_image_scratch_forward.8} parent=5 // pred_check
        %p2717 = pneg %p2716
      $region79: #{model_image_scratch_forward.8} parent=5 // pred_check_branch
        %2719 = sbr.rel (%p2717) target = $region81
      $region80: #{model_image_scratch_forward.8} parent=5 // pred_region
        %s2720 = ssub.s32 %s9, 2
        // Predicated region
        $region82: #{model_image_scratch_forward.8} parent=80 // pred_check
          %p2721 = pneg %p130
        $region83: #{model_image_scratch_forward.8} parent=80 // pred_check_branch
          %2723 = sbr.rel (%p2721) target = $region85
        $region84: #{model_image_scratch_forward.8} parent=80 // pred_region
          %p2724 = scmp.lt.s32.totalorder %s20, 0
          %s2725 = scalar_select %p2724, %s20, 0
          %p2726 = scmp.lt.s32.totalorder %s21, 1
          %s2727 = scalar_select %p2726, %s21, 1
          %s2728 = smul.addr %s2725, 2
          %s2729 = sadd.s32 %s2727, %s2728
          %s2730 = smul.addr %s2729, 4
          %s2731 = scalar_lea.vmem %s3, %s2730
        $region85: #{model_image_scratch_forward.8} parent=80 // pred_fallthru
          _
      $region81: #{model_image_scratch_forward.8} parent=5 // pred_fallthru
        _
    $region6: #{model_image_scratch_forward.8} parent=1 // loop_footer
      %s13 = sadd.s32 1, %s9
    $region7: #{model_image_scratch_forward.8} parent=1 // loop_footer_branch
      %8 = sbr.rel target = $region3
    $region8: #{model_image_scratch_forward.8} parent=1 // loop_exit
      _

</llo_original>
